<compile_context>
chip_gen: v5e
topology: v5e:2x2
jax: 0.10.0
libtpu: 0.0.40
codegen_flags: <defaults>
</compile_context>

<pallas_src>
import math
import functools

import jax
import jax.numpy as jnp
from jax.experimental import pallas as pl
from jax.experimental.pallas import tpu as pltpu

NEG_INF = -1e30


def _round_up(x, m):
    return (x + m - 1) // m * m


# ------------------------------ fused kernel ------------------------------

def _decoder_layer_kernel(xq_ref, xkv_ref, mask_ref,
                          wq_ref, bq_ref, wkv_ref, bkv_ref,
                          w1_ref, b1_ref, w2_ref, b2_ref,
                          g_att_ref, b_att_ref, g_ffn_ref, b_ffn_ref,
                          o_ref,
                          q_ref, acc_p_ref, acc_n_ref, l_p_ref, l_n_ref, m_ref,
                          *, heads, hd):
    ki = pl.program_id(2)
    nk = pl.num_programs(2)
    dh = hd // heads

    x_q = xq_ref[0]                                   # (Tq, C) f32, own branch
    x_kv = xkv_ref[0]                                 # (Tk, C) f32, other side

    @pl.when(ki == 0)
    def _():
        # q projection once per (branch, q-tile); scale folded into Wq/bq.
        q = jnp.dot(x_q.astype(jnp.bfloat16), wq_ref[...],
                    preferred_element_type=jnp.float32) + bq_ref[...]
        q_ref[...] = q.astype(jnp.bfloat16)
        acc_p_ref[...] = jnp.zeros(acc_p_ref.shape, jnp.float32)
        acc_n_ref[...] = jnp.zeros(acc_n_ref.shape, jnp.float32)
        l_p_ref[...] = jnp.zeros(l_p_ref.shape, jnp.float32)
        l_n_ref[...] = jnp.zeros(l_n_ref.shape, jnp.float32)
        m_ref[...] = jnp.full(m_ref.shape, NEG_INF, jnp.float32)

    # k/v projection for this kv tile (other side's rows).
    kv = jnp.dot(x_kv.astype(jnp.bfloat16), wkv_ref[...],
                 preferred_element_type=jnp.float32) + bkv_ref[...]
    k = kv[:, :hd].astype(jnp.bfloat16)               # (Tk, hd)
    v = kv[:, hd:].astype(jnp.bfloat16)               # (Tk, hd)
    qb = q_ref[...]                                   # (Tq, hd) bf16

    mask_f = mask_ref[0].astype(jnp.float32)          # (2, Tq, Tk) {0,1}
    m_pos = mask_f[0]
    m_neg = mask_f[1]
    union = (m_pos + m_neg) > 0.0                     # edge in either set

    for h in range(heads):                            # heads static & small
        lo, hi = h * dh, (h + 1) * dh
        # q @ k^T without an explicit transpose (NT contraction on the MXU).
        s = jax.lax.dot_general(
            qb[:, lo:hi], k[:, lo:hi], (((1,), (1,)), ((), ())),
            preferred_element_type=jnp.float32)       # (Tq, Tk)

        m_old = m_ref[:, h:h + 1]                     # (Tq, 1) running max
        m_new = jnp.maximum(
            m_old,
            jnp.max(jnp.where(union, s, NEG_INF), axis=-1, keepdims=True))
        corr = jnp.exp(m_old - m_new)                 # (Tq, 1) rescale factor
        # One exp per head; the clamp keeps masked lanes finite even when a
        # row has no valid edge anywhere (m_new stays -1e30).
        e = jnp.exp(jnp.minimum(s - m_new, 0.0))      # (Tq, Tk)
        p_pos = e * m_pos
        p_neg = e * m_neg

        # Online-softmax state, accumulated directly into dh-wide slices.
        l_p_ref[:, lo:hi] = (corr * l_p_ref[:, lo:hi]
                             + jnp.sum(p_pos, axis=-1, keepdims=True))
        l_n_ref[:, lo:hi] = (corr * l_n_ref[:, lo:hi]
                             + jnp.sum(p_neg, axis=-1, keepdims=True))
        acc_p_ref[:, lo:hi] = corr * acc_p_ref[:, lo:hi] + jnp.dot(
            p_pos.astype(jnp.bfloat16), v[:, lo:hi],
            preferred_element_type=jnp.float32)
        acc_n_ref[:, lo:hi] = corr * acc_n_ref[:, lo:hi] + jnp.dot(
            p_neg.astype(jnp.bfloat16), v[:, lo:hi],
            preferred_element_type=jnp.float32)
        m_ref[:, h:h + 1] = m_new

    @pl.when(ki == nk - 1)
    def _():
        l_p = l_p_ref[...]
        l_n = l_n_ref[...]
        # spmm semantics: rows with no edge in a set contribute exact zeros.
        att = (jnp.where(l_p > 0.0,
                         acc_p_ref[...] *
                         pl.reciprocal(jnp.maximum(l_p, 1e-30), approx=True),
                         0.0)
               + jnp.where(l_n > 0.0,
                           acc_n_ref[...] *
                           pl.reciprocal(jnp.maximum(l_n, 1e-30), approx=True),
                           0.0))                      # (Tq, hd)

        def layer_norm(z, g, b):
            mu = jnp.mean(z, axis=-1, keepdims=True)
            var = jnp.mean((z - mu) ** 2, axis=-1, keepdims=True)
            return (z - mu) * jax.lax.rsqrt(var + 1e-5) * g + b

        # AddNorm after attention.
        x1 = layer_norm(att + x_q, g_att_ref[0], b_att_ref[0])
        # FeedForward: Linear -> GELU (exact erf) -> Linear.
        h1 = jnp.dot(x1.astype(jnp.bfloat16), w1_ref[0],
                     preferred_element_type=jnp.float32) + b1_ref[0]
        h1 = 0.5 * h1 * (1.0 + jax.lax.erf(h1 * (1.0 / math.sqrt(2.0))))
        ffn = jnp.dot(h1.astype(jnp.bfloat16), w2_ref[0],
                      preferred_element_type=jnp.float32) + b2_ref[0]
        # AddNorm after FFN.
        o_ref[0] = layer_norm(ffn + x1, g_ffn_ref[0], b_ffn_ref[0])


# --------------------------- parameters & forward ---------------------------

def init_params(key, in_channels, hd_channels):
    ks = jax.random.split(key, 6)

    def lin(k, fan_in, fan_out):
        bound = 1.0 / math.sqrt(fan_in)
        kw, kb = jax.random.split(k)
        w = jax.random.uniform(kw, (fan_in, fan_out), jnp.float32, -bound, bound)
        b = jax.random.uniform(kb, (fan_out,), jnp.float32, -bound, bound)
        return w, b

    p = {}
    # nn.ModuleList([module] * 2) repeats the SAME module object, so the q/kv
    # projections are shared across the pos/neg branches -> one weight set.
    p["Wq"], p["bq"] = lin(ks[0], in_channels, hd_channels)
    p["Wkv"], p["bkv"] = lin(ks[1], in_channels, 2 * hd_channels)
    p["ffn_var_w1"], p["ffn_var_b1"] = lin(ks[2], hd_channels, hd_channels)
    p["ffn_var_w2"], p["ffn_var_b2"] = lin(ks[3], hd_channels, hd_channels)
    p["ffn_cls_w1"], p["ffn_cls_b1"] = lin(ks[4], hd_channels, hd_channels)
    p["ffn_cls_w2"], p["ffn_cls_b2"] = lin(ks[5], hd_channels, hd_channels)
    for name in ("ln_att_var", "ln_ffn_var", "ln_att_cls", "ln_ffn_cls"):
        p[name + "_g"] = jnp.ones((hd_channels,), jnp.float32)
        p[name + "_b"] = jnp.zeros((hd_channels,), jnp.float32)
    return p


def _edge_mask(adj, q_row, k_row, lmax):
    """int8 {0,1} mask: 1 where an edge exists (queries along rows)."""
    m = jnp.zeros((lmax, lmax), jnp.int8)
    return m.at[adj[q_row], adj[k_row]].set(1)


def decoder_layer_forward(params, v, c, adj_pos, adj_neg, heads,
                          *, tq=128, tk=128):
    n_var, C = v.shape
    n_cls = c.shape[0]
    hd = params["Wq"].shape[1]
    assert hd % heads == 0
    assert C == hd, "AddNorm residual requires in_channels == hd_channels"
    dh = hd // heads

    # Lane-dense padding: round the padded length to a multiple of 128.
    lmax = _round_up(max(n_var, n_cls, 1), 128)
    tq = min(tq, lmax)
    tk = min(tk, lmax)

    def pad_rows(x):
        return jnp.pad(x, ((0, lmax - x.shape[0]), (0, 0)))

    # Branch 0 = variables, branch 1 = clauses.
    x_all = jnp.stack([pad_rows(v), pad_rows(c)])          # (2, lmax, C) f32

    # (branch, adjacency-set, queries, keys) int8 masks.
    # var queries attend to cls keys (transposed edges); cls queries to var keys.
    mask_all = jnp.stack([
        jnp.stack([_edge_mask(adj_pos, 1, 0, lmax),
                   _edge_mask(adj_neg, 1, 0, lmax)]),
        jnp.stack([_edge_mask(adj_pos, 0, 1, lmax),
                   _edge_mask(adj_neg, 0, 1, lmax)]),
    ])                                                     # (2, 2, lmax, lmax)

    # Fold the softmax temperature into the q projection; bf16 MXU operands.
    scale = 1.0 / math.sqrt(dh)
    wq = (params["Wq"] * scale).astype(jnp.bfloat16)       # (C, hd)
    bq = (params["bq"] * scale).reshape(1, hd)             # f32
    wkv = params["Wkv"].astype(jnp.bfloat16)               # (C, 2*hd)
    bkv = params["bkv"].reshape(1, 2 * hd)

    w1 = jnp.stack([params["ffn_var_w1"], params["ffn_cls_w1"]]).astype(jnp.bfloat16)
    b1 = jnp.stack([params["ffn_var_b1"], params["ffn_cls_b1"]]).reshape(2, 1, hd)
    w2 = jnp.stack([params["ffn_var_w2"], params["ffn_cls_w2"]]).astype(jnp.bfloat16)
    b2 = jnp.stack([params["ffn_var_b2"], params["ffn_cls_b2"]]).reshape(2, 1, hd)
    g_att = jnp.stack([params["ln_att_var_g"], params["ln_att_cls_g"]]).reshape(2, 1, hd)
    b_att = jnp.stack([params["ln_att_var_b"], params["ln_att_cls_b"]]).reshape(2, 1, hd)
    g_ffn = jnp.stack([params["ln_ffn_var_g"], params["ln_ffn_cls_g"]]).reshape(2, 1, hd)
    b_ffn = jnp.stack([params["ln_ffn_var_b"], params["ln_ffn_cls_b"]]).reshape(2, 1, hd)

    grid = (2, lmax // tq, lmax // tk)

    out = pl.pallas_call(
        functools.partial(_decoder_layer_kernel, heads=heads, hd=hd),
        grid=grid,
        in_specs=[
            pl.BlockSpec((1, tq, C), lambda b, qi, ki: (b, qi, 0)),       # own q rows
            pl.BlockSpec((1, tk, C), lambda b, qi, ki: (1 - b, ki, 0)),   # other kv rows
            pl.BlockSpec((1, 2, tq, tk), lambda b, qi, ki: (b, 0, qi, ki)),  # int8 masks
            pl.BlockSpec((C, hd), lambda b, qi, ki: (0, 0)),              # Wq (scaled)
            pl.BlockSpec((1, hd), lambda b, qi, ki: (0, 0)),              # bq (scaled)
            pl.BlockSpec((C, 2 * hd), lambda b, qi, ki: (0, 0)),          # Wkv
            pl.BlockSpec((1, 2 * hd), lambda b, qi, ki: (0, 0)),          # bkv
            pl.BlockSpec((1, hd, hd), lambda b, qi, ki: (b, 0, 0)),       # ffn w1
            pl.BlockSpec((1, 1, hd), lambda b, qi, ki: (b, 0, 0)),        # ffn b1
            pl.BlockSpec((1, hd, hd), lambda b, qi, ki: (b, 0, 0)),       # ffn w2
            pl.BlockSpec((1, 1, hd), lambda b, qi, ki: (b, 0, 0)),        # ffn b2
            pl.BlockSpec((1, 1, hd), lambda b, qi, ki: (b, 0, 0)),        # ln att g
            pl.BlockSpec((1, 1, hd), lambda b, qi, ki: (b, 0, 0)),        # ln att b
            pl.BlockSpec((1, 1, hd), lambda b, qi, ki: (b, 0, 0)),        # ln ffn g
            pl.BlockSpec((1, 1, hd), lambda b, qi, ki: (b, 0, 0)),        # ln ffn b
        ],
        out_specs=pl.BlockSpec((1, tq, hd), lambda b, qi, ki: (b, qi, 0)),
        out_shape=jax.ShapeDtypeStruct((2, lmax, hd), jnp.float32),
        scratch_shapes=[
            pltpu.VMEM((tq, hd), jnp.bfloat16),   # cached q projection
            pltpu.VMEM((tq, hd), jnp.float32),    # acc (pos)
            pltpu.VMEM((tq, hd), jnp.float32),    # acc (neg)
            pltpu.VMEM((tq, hd), jnp.float32),    # softmax denom (pos), per-head replicated
            pltpu.VMEM((tq, hd), jnp.float32),    # softmax denom (neg)
            pltpu.VMEM((tq, heads), jnp.float32), # shared running max per head
        ],
        compiler_params=pltpu.CompilerParams(
            dimension_semantics=("parallel", "parallel", "arbitrary"),
            vmem_limit_bytes=32 * 1024 * 1024),
    )(x_all, x_all, mask_all, wq, bq, wkv, bkv, w1, b1, w2, b2,
      g_att, b_att, g_ffn, b_ffn)

    return out[0, :n_var], out[1, :n_cls]


if __name__ == "__main__":
    key = jax.random.PRNGKey(0)
    n_var, n_cls = 16, 8
    in_channels = hd_channels = 32   # residual add in AddNorm requires in == hd
    heads = 4
    n_edges = 24

    k_v, k_c, k_ep, k_en, k_p = jax.random.split(key, 5)
    v = jax.random.normal(k_v, (n_var, in_channels), jnp.float32)
    c = jax.random.normal(k_c, (n_cls, in_channels), jnp.float32)
    adj_pos = jnp.stack([
        jax.random.randint(jax.random.fold_in(k_ep, 0), (n_edges,), 0, n_cls),
        jax.random.randint(jax.random.fold_in(k_ep, 1), (n_edges,), 0, n_var),
    ]).astype(jnp.int32)
    adj_neg = jnp.stack([
        jax.random.randint(jax.random.fold_in(k_en, 0), (n_edges,), 0, n_cls),
        jax.random.randint(jax.random.fold_in(k_en, 1), (n_edges,), 0, n_var),
    ]).astype(jnp.int32)

    params = init_params(k_p, in_channels, hd_channels)

    fwd = jax.jit(functools.partial(decoder_layer_forward, heads=heads))
    out_v, out_c = fwd(params, v, c, adj_pos, adj_neg)
    jax.block_until_ready((out_v, out_c))

    assert out_v.shape == (n_var, hd_channels)
    assert out_c.shape == (n_cls, hd_channels)
    assert bool(jnp.all(jnp.isfinite(out_v))) and bool(jnp.all(jnp.isfinite(out_c)))
    print("KERNEL_OK")
</pallas_src>

<mosaic_0001>
module attributes {stable_mosaic.version = 11 : i64} {
  func.func @_decoder_layer_kernel(%arg0: i32, %arg1: i32, %arg2: i32, %arg3: memref<1x128x32xf32, #tpu.memory_space<vmem>>, %arg4: memref<1x128x32xf32, #tpu.memory_space<vmem>>, %arg5: memref<1x2x128x128xi8, #tpu.memory_space<vmem>>, %arg6: memref<32x32xbf16, #tpu.memory_space<vmem>>, %arg7: memref<1x32xf32, #tpu.memory_space<vmem>>, %arg8: memref<32x64xbf16, #tpu.memory_space<vmem>>, %arg9: memref<1x64xf32, #tpu.memory_space<vmem>>, %arg10: memref<1x32x32xbf16, #tpu.memory_space<vmem>>, %arg11: memref<1x1x32xf32, #tpu.memory_space<vmem>>, %arg12: memref<1x32x32xbf16, #tpu.memory_space<vmem>>, %arg13: memref<1x1x32xf32, #tpu.memory_space<vmem>>, %arg14: memref<1x1x32xf32, #tpu.memory_space<vmem>>, %arg15: memref<1x1x32xf32, #tpu.memory_space<vmem>>, %arg16: memref<1x1x32xf32, #tpu.memory_space<vmem>>, %arg17: memref<1x1x32xf32, #tpu.memory_space<vmem>>, %arg18: memref<1x128x32xf32, #tpu.memory_space<vmem>>, %arg19: memref<128x32xbf16, #tpu.memory_space<vmem>>, %arg20: memref<128x32xf32, #tpu.memory_space<vmem>>, %arg21: memref<128x32xf32, #tpu.memory_space<vmem>>, %arg22: memref<128x32xf32, #tpu.memory_space<vmem>>, %arg23: memref<128x32xf32, #tpu.memory_space<vmem>>, %arg24: memref<128x4xf32, #tpu.memory_space<vmem>>) attributes {dimension_semantics = [#tpu.dimension_semantics<parallel>, #tpu.dimension_semantics<parallel>, #tpu.dimension_semantics<arbitrary>], iteration_bounds = array<i64: 2, 1, 1>, scalar_prefetch = 0 : i64, scratch_operands = 6 : i64, tpu.core_type = #tpu.core_type<tc>, window_params = [{transform_indices = @transform_0, window_bounds = array<i64: 1, 128, 32>}, {transform_indices = @transform_1, window_bounds = array<i64: 1, 128, 32>}, {transform_indices = @transform_2, window_bounds = array<i64: 1, 2, 128, 128>}, {pipeline_mode = #tpu.pipeline_mode<synchronous>, transform_indices = @transform_3, window_bounds = array<i64: 32, 32>}, {pipeline_mode = #tpu.pipeline_mode<synchronous>, transform_indices = @transform_4, window_bounds = array<i64: 1, 32>}, {pipeline_mode = #tpu.pipeline_mode<synchronous>, transform_indices = @transform_5, window_bounds = array<i64: 32, 64>}, {pipeline_mode = #tpu.pipeline_mode<synchronous>, transform_indices = @transform_6, window_bounds = array<i64: 1, 64>}, {transform_indices = @transform_7, window_bounds = array<i64: 1, 32, 32>}, {transform_indices = @transform_8, window_bounds = array<i64: 1, 1, 32>}, {transform_indices = @transform_9, window_bounds = array<i64: 1, 32, 32>}, {transform_indices = @transform_10, window_bounds = array<i64: 1, 1, 32>}, {transform_indices = @transform_11, window_bounds = array<i64: 1, 1, 32>}, {transform_indices = @transform_12, window_bounds = array<i64: 1, 1, 32>}, {transform_indices = @transform_13, window_bounds = array<i64: 1, 1, 32>}, {transform_indices = @transform_14, window_bounds = array<i64: 1, 1, 32>}, {transform_indices = @transform_15, window_bounds = array<i64: 1, 128, 32>}]} {
    %c0 = arith.constant 0 : index
    %c0_0 = arith.constant 0 : index
    %c0_1 = arith.constant 0 : index
    %0 = vector.load %arg3[%c0, %c0_0, %c0_1] : memref<1x128x32xf32, #tpu.memory_space<vmem>>, vector<1x128x32xf32>
    %1 = vector.shape_cast %0 : vector<1x128x32xf32> to vector<128x32xf32>
    %c0_2 = arith.constant 0 : index
    %c0_3 = arith.constant 0 : index
    %c0_4 = arith.constant 0 : index
    %2 = vector.load %arg4[%c0_2, %c0_3, %c0_4] : memref<1x128x32xf32, #tpu.memory_space<vmem>>, vector<1x128x32xf32>
    %3 = vector.shape_cast %2 : vector<1x128x32xf32> to vector<128x32xf32>
    %c0_i32 = arith.constant 0 : i32
    %4 = arith.cmpi eq, %arg2, %c0_i32 : i32
    %5 = arith.extui %4 : i1 to i32
    %c0_i32_5 = arith.constant 0 : i32
    %6 = arith.cmpi ne, %5, %c0_i32_5 : i32
    scf.if %6 {
      %235 = arith.truncf %1 : vector<128x32xf32> to vector<128x32xbf16>
      %c0_125 = arith.constant 0 : index
      %c0_126 = arith.constant 0 : index
      %236 = vector.load %arg6[%c0_125, %c0_126] : memref<32x32xbf16, #tpu.memory_space<vmem>>, vector<32x32xbf16>
      %cst_127 = arith.constant dense<0.000000e+00> : vector<128x32xf32>
      %237 = tpu.matmul %235, %236, %cst_127 {dimension_numbers = #tpu.dot_dimension_numbers<[1], [0], [0], [1], [0, 0, 1, 1], [], []>} : vector<128x32xbf16>, vector<32x32xbf16>, vector<128x32xf32> -> vector<128x32xf32>
      %c0_128 = arith.constant 0 : index
      %c0_129 = arith.constant 0 : index
      %238 = vector.load %arg7[%c0_128, %c0_129] : memref<1x32xf32, #tpu.memory_space<vmem>>, vector<1x32xf32>
      %239 = vector.broadcast %238 : vector<1x32xf32> to vector<128x32xf32>
      %240 = arith.addf %237, %239 : vector<128x32xf32>
      %241 = arith.truncf %240 : vector<128x32xf32> to vector<128x32xbf16>
      %c0_130 = arith.constant 0 : index
      %c0_131 = arith.constant 0 : index
      %242 = vector.load %arg19[%c0_130, %c0_131] : memref<128x32xbf16, #tpu.memory_space<vmem>>, vector<128x32xbf16>
      tpu.vector_store %arg19[%c0_130, %c0_131], %241 {strides = array<i32>} : memref<128x32xbf16, #tpu.memory_space<vmem>>, vector<128x32xbf16>,
      %cst_132 = arith.constant 0.000000e+00 : f32
      %243 = vector.broadcast %cst_132 : f32 to vector<128x32xf32>
      %c0_133 = arith.constant 0 : index
      %c0_134 = arith.constant 0 : index
      %244 = vector.load %arg20[%c0_133, %c0_134] : memref<128x32xf32, #tpu.memory_space<vmem>>, vector<128x32xf32>
      tpu.vector_store %arg20[%c0_133, %c0_134], %243 {strides = array<i32>} : memref<128x32xf32, #tpu.memory_space<vmem>>, vector<128x32xf32>,
      %cst_135 = arith.constant 0.000000e+00 : f32
      %245 = vector.broadcast %cst_135 : f32 to vector<128x32xf32>
      %c0_136 = arith.constant 0 : index
      %c0_137 = arith.constant 0 : index
      %246 = vector.load %arg21[%c0_136, %c0_137] : memref<128x32xf32, #tpu.memory_space<vmem>>, vector<128x32xf32>
      tpu.vector_store %arg21[%c0_136, %c0_137], %245 {strides = array<i32>} : memref<128x32xf32, #tpu.memory_space<vmem>>, vector<128x32xf32>,
      %cst_138 = arith.constant 0.000000e+00 : f32
      %247 = vector.broadcast %cst_138 : f32 to vector<128x32xf32>
      %c0_139 = arith.constant 0 : index
      %c0_140 = arith.constant 0 : index
      %248 = vector.load %arg22[%c0_139, %c0_140] : memref<128x32xf32, #tpu.memory_space<vmem>>, vector<128x32xf32>
      tpu.vector_store %arg22[%c0_139, %c0_140], %247 {strides = array<i32>} : memref<128x32xf32, #tpu.memory_space<vmem>>, vector<128x32xf32>,
      %cst_141 = arith.constant 0.000000e+00 : f32
      %249 = vector.broadcast %cst_141 : f32 to vector<128x32xf32>
      %c0_142 = arith.constant 0 : index
      %c0_143 = arith.constant 0 : index
      %250 = vector.load %arg23[%c0_142, %c0_143] : memref<128x32xf32, #tpu.memory_space<vmem>>, vector<128x32xf32>
      tpu.vector_store %arg23[%c0_142, %c0_143], %249 {strides = array<i32>} : memref<128x32xf32, #tpu.memory_space<vmem>>, vector<128x32xf32>,
      %cst_144 = arith.constant -1.000000e+30 : f32
      %251 = vector.broadcast %cst_144 : f32 to vector<128x4xf32>
      %c0_145 = arith.constant 0 : index
      %c0_146 = arith.constant 0 : index
      %252 = vector.load %arg24[%c0_145, %c0_146] : memref<128x4xf32, #tpu.memory_space<vmem>>, vector<128x4xf32>
      tpu.vector_store %arg24[%c0_145, %c0_146], %251 {strides = array<i32>} : memref<128x4xf32, #tpu.memory_space<vmem>>, vector<128x4xf32>,
    } else {
    }
    %7 = arith.truncf %3 : vector<128x32xf32> to vector<128x32xbf16>
    %c0_6 = arith.constant 0 : index
    %c0_7 = arith.constant 0 : index
    %8 = vector.load %arg8[%c0_6, %c0_7] : memref<32x64xbf16, #tpu.memory_space<vmem>>, vector<32x64xbf16>
    %cst = arith.constant dense<0.000000e+00> : vector<128x64xf32>
    %9 = tpu.matmul %7, %8, %cst {dimension_numbers = #tpu.dot_dimension_numbers<[1], [0], [0], [1], [0, 0, 1, 1], [], []>} : vector<128x32xbf16>, vector<32x64xbf16>, vector<128x64xf32> -> vector<128x64xf32>
    %c0_8 = arith.constant 0 : index
    %c0_9 = arith.constant 0 : index
    %10 = vector.load %arg9[%c0_8, %c0_9] : memref<1x64xf32, #tpu.memory_space<vmem>>, vector<1x64xf32>
    %11 = vector.broadcast %10 : vector<1x64xf32> to vector<128x64xf32>
    %12 = arith.addf %9, %11 : vector<128x64xf32>
    %13 = vector.extract_strided_slice %12 {offsets = [0, 0], sizes = [128, 32], strides = [1, 1]} : vector<128x64xf32> to vector<128x32xf32>
    %14 = arith.truncf %13 : vector<128x32xf32> to vector<128x32xbf16>
    %15 = vector.extract_strided_slice %12 {offsets = [0, 32], sizes = [128, 32], strides = [1, 1]} : vector<128x64xf32> to vector<128x32xf32>
    %16 = arith.truncf %15 : vector<128x32xf32> to vector<128x32xbf16>
    %c0_10 = arith.constant 0 : index
    %c0_11 = arith.constant 0 : index
    %17 = vector.load %arg19[%c0_10, %c0_11] : memref<128x32xbf16, #tpu.memory_space<vmem>>, vector<128x32xbf16>
    %c0_12 = arith.constant 0 : index
    %c0_13 = arith.constant 0 : index
    %c0_14 = arith.constant 0 : index
    %c0_15 = arith.constant 0 : index
    %18 = vector.load %arg5[%c0_12, %c0_13, %c0_14, %c0_15] : memref<1x2x128x128xi8, #tpu.memory_space<vmem>>, vector<1x2x128x128xi8>
    %19 = vector.shape_cast %18 : vector<1x2x128x128xi8> to vector<2x128x128xi8>
    %20 = arith.sitofp %19 : vector<2x128x128xi8> to vector<2x128x128xf32>
    %21 = vector.extract_strided_slice %20 {offsets = [0, 0, 0], sizes = [1, 128, 128], strides = [1, 1, 1]} : vector<2x128x128xf32> to vector<1x128x128xf32>
    %22 = vector.shape_cast %21 : vector<1x128x128xf32> to vector<128x128xf32>
    %23 = vector.extract_strided_slice %20 {offsets = [1, 0, 0], sizes = [1, 128, 128], strides = [1, 1, 1]} : vector<2x128x128xf32> to vector<1x128x128xf32>
    %24 = vector.shape_cast %23 : vector<1x128x128xf32> to vector<128x128xf32>
    %25 = arith.addf %22, %24 : vector<128x128xf32>
    %cst_16 = arith.constant 0.000000e+00 : f32
    %26 = vector.broadcast %cst_16 : f32 to vector<128x128xf32>
    %27 = arith.cmpf ogt, %25, %26 : vector<128x128xf32>
    %28 = vector.extract_strided_slice %17 {offsets = [0, 0], sizes = [128, 8], strides = [1, 1]} : vector<128x32xbf16> to vector<128x8xbf16>
    %29 = vector.extract_strided_slice %14 {offsets = [0, 0], sizes = [128, 8], strides = [1, 1]} : vector<128x32xbf16> to vector<128x8xbf16>
    %cst_17 = arith.constant dense<0.000000e+00> : vector<128x128xf32>
    %30 = tpu.matmul %28, %29, %cst_17 {dimension_numbers = #tpu.dot_dimension_numbers<[1], [1], [0], [0], [0, 0, 1, 0], [], []>} : vector<128x8xbf16>, vector<128x8xbf16>, vector<128x128xf32> -> vector<128x128xf32>
    %c0_18 = arith.constant 0 : index
    %c0_19 = arith.constant 0 : index
    %31 = vector.load %arg24[%c0_18, %c0_19] : memref<128x4xf32, #tpu.memory_space<vmem>>, vector<128x1xf32>
    %cst_20 = arith.constant -1.000000e+30 : f32
    %32 = vector.broadcast %cst_20 : f32 to vector<128x128xf32>
    %33 = arith.select %27, %30, %32 : vector<128x128xi1>, vector<128x128xf32>
    %cst_21 = arith.constant dense<0xFF800000> : vector<128xf32>
    %34 = vector.multi_reduction <maximumf>, %33, %cst_21 [1] : vector<128x128xf32> to vector<128xf32>
    %35 = vector.shape_cast %34 : vector<128xf32> to vector<128x1xf32>
    %36 = arith.maximumf %31, %35 : vector<128x1xf32>
    %37 = arith.subf %31, %36 : vector<128x1xf32>
    %38 = math.exp %37 : vector<128x1xf32>
    %39 = vector.broadcast %36 : vector<128x1xf32> to vector<128x128xf32>
    %40 = arith.subf %30, %39 : vector<128x128xf32>
    %cst_22 = arith.constant 0.000000e+00 : f32
    %41 = vector.broadcast %cst_22 : f32 to vector<128x128xf32>
    %42 = arith.minimumf %40, %41 : vector<128x128xf32>
    %43 = math.exp %42 : vector<128x128xf32>
    %44 = arith.mulf %43, %22 : vector<128x128xf32>
    %45 = arith.mulf %43, %24 : vector<128x128xf32>
    %c0_23 = arith.constant 0 : index
    %c0_24 = arith.constant 0 : index
    %46 = vector.load %arg22[%c0_23, %c0_24] : memref<128x32xf32, #tpu.memory_space<vmem>>, vector<128x8xf32>
    %47 = vector.broadcast %38 : vector<128x1xf32> to vector<128x8xf32>
    %48 = arith.mulf %47, %46 : vector<128x8xf32>
    %cst_25 = arith.constant dense<0.000000e+00> : vector<128xf32>
    %49 = vector.multi_reduction <add>, %44, %cst_25 [1] : vector<128x128xf32> to vector<128xf32>
    %50 = vector.shape_cast %49 : vector<128xf32> to vector<128x1xf32>
    %51 = vector.broadcast %50 : vector<128x1xf32> to vector<128x8xf32>
    %52 = arith.addf %48, %51 : vector<128x8xf32>
    %c0_26 = arith.constant 0 : index
    %c0_27 = arith.constant 0 : index
    %53 = vector.load %arg22[%c0_26, %c0_27] : memref<128x32xf32, #tpu.memory_space<vmem>>, vector<128x8xf32>
    tpu.vector_store %arg22[%c0_26, %c0_27], %52 {strides = array<i32>} : memref<128x32xf32, #tpu.memory_space<vmem>>, vector<128x8xf32>,
    %c0_28 = arith.constant 0 : index
    %c0_29 = arith.constant 0 : index
    %54 = vector.load %arg23[%c0_28, %c0_29] : memref<128x32xf32, #tpu.memory_space<vmem>>, vector<128x8xf32>
    %55 = vector.broadcast %38 : vector<128x1xf32> to vector<128x8xf32>
    %56 = arith.mulf %55, %54 : vector<128x8xf32>
    %cst_30 = arith.constant dense<0.000000e+00> : vector<128xf32>
    %57 = vector.multi_reduction <add>, %45, %cst_30 [1] : vector<128x128xf32> to vector<128xf32>
    %58 = vector.shape_cast %57 : vector<128xf32> to vector<128x1xf32>
    %59 = vector.broadcast %58 : vector<128x1xf32> to vector<128x8xf32>
    %60 = arith.addf %56, %59 : vector<128x8xf32>
    %c0_31 = arith.constant 0 : index
    %c0_32 = arith.constant 0 : index
    %61 = vector.load %arg23[%c0_31, %c0_32] : memref<128x32xf32, #tpu.memory_space<vmem>>, vector<128x8xf32>
    tpu.vector_store %arg23[%c0_31, %c0_32], %60 {strides = array<i32>} : memref<128x32xf32, #tpu.memory_space<vmem>>, vector<128x8xf32>,
    %c0_33 = arith.constant 0 : index
    %c0_34 = arith.constant 0 : index
    %62 = vector.load %arg20[%c0_33, %c0_34] : memref<128x32xf32, #tpu.memory_space<vmem>>, vector<128x8xf32>
    %63 = vector.broadcast %38 : vector<128x1xf32> to vector<128x8xf32>
    %64 = arith.mulf %63, %62 : vector<128x8xf32>
    %65 = arith.truncf %44 : vector<128x128xf32> to vector<128x128xbf16>
    %66 = vector.extract_strided_slice %16 {offsets = [0, 0], sizes = [128, 8], strides = [1, 1]} : vector<128x32xbf16> to vector<128x8xbf16>
    %cst_35 = arith.constant dense<0.000000e+00> : vector<128x8xf32>
    %67 = tpu.matmul %65, %66, %cst_35 {dimension_numbers = #tpu.dot_dimension_numbers<[1], [0], [0], [1], [0, 0, 1, 1], [], []>} : vector<128x128xbf16>, vector<128x8xbf16>, vector<128x8xf32> -> vector<128x8xf32>
    %68 = arith.addf %64, %67 : vector<128x8xf32>
    %c0_36 = arith.constant 0 : index
    %c0_37 = arith.constant 0 : index
    %69 = vector.load %arg20[%c0_36, %c0_37] : memref<128x32xf32, #tpu.memory_space<vmem>>, vector<128x8xf32>
    tpu.vector_store %arg20[%c0_36, %c0_37], %68 {strides = array<i32>} : memref<128x32xf32, #tpu.memory_space<vmem>>, vector<128x8xf32>,
    %c0_38 = arith.constant 0 : index
    %c0_39 = arith.constant 0 : index
    %70 = vector.load %arg21[%c0_38, %c0_39] : memref<128x32xf32, #tpu.memory_space<vmem>>, vector<128x8xf32>
    %71 = vector.broadcast %38 : vector<128x1xf32> to vector<128x8xf32>
    %72 = arith.mulf %71, %70 : vector<128x8xf32>
    %73 = arith.truncf %45 : vector<128x128xf32> to vector<128x128xbf16>
    %74 = vector.extract_strided_slice %16 {offsets = [0, 0], sizes = [128, 8], strides = [1, 1]} : vector<128x32xbf16> to vector<128x8xbf16>
    %cst_40 = arith.constant dense<0.000000e+00> : vector<128x8xf32>
    %75 = tpu.matmul %73, %74, %cst_40 {dimension_numbers = #tpu.dot_dimension_numbers<[1], [0], [0], [1], [0, 0, 1, 1], [], []>} : vector<128x128xbf16>, vector<128x8xbf16>, vector<128x8xf32> -> vector<128x8xf32>
    %76 = arith.addf %72, %75 : vector<128x8xf32>
    %c0_41 = arith.constant 0 : index
    %c0_42 = arith.constant 0 : index
    %77 = vector.load %arg21[%c0_41, %c0_42] : memref<128x32xf32, #tpu.memory_space<vmem>>, vector<128x8xf32>
    tpu.vector_store %arg21[%c0_41, %c0_42], %76 {strides = array<i32>} : memref<128x32xf32, #tpu.memory_space<vmem>>, vector<128x8xf32>,
    %c0_43 = arith.constant 0 : index
    %c0_44 = arith.constant 0 : index
    %78 = vector.load %arg24[%c0_43, %c0_44] : memref<128x4xf32, #tpu.memory_space<vmem>>, vector<128x1xf32>
    tpu.vector_store %arg24[%c0_43, %c0_44], %36 {strides = array<i32>} : memref<128x4xf32, #tpu.memory_space<vmem>>, vector<128x1xf32>,
    %79 = vector.extract_strided_slice %17 {offsets = [0, 8], sizes = [128, 8], strides = [1, 1]} : vector<128x32xbf16> to vector<128x8xbf16>
    %80 = vector.extract_strided_slice %14 {offsets = [0, 8], sizes = [128, 8], strides = [1, 1]} : vector<128x32xbf16> to vector<128x8xbf16>
    %cst_45 = arith.constant dense<0.000000e+00> : vector<128x128xf32>
    %81 = tpu.matmul %79, %80, %cst_45 {dimension_numbers = #tpu.dot_dimension_numbers<[1], [1], [0], [0], [0, 0, 1, 0], [], []>} : vector<128x8xbf16>, vector<128x8xbf16>, vector<128x128xf32> -> vector<128x128xf32>
    %c0_46 = arith.constant 0 : index
    %c1 = arith.constant 1 : index
    %82 = vector.load %arg24[%c0_46, %c1] : memref<128x4xf32, #tpu.memory_space<vmem>>, vector<128x1xf32>
    %cst_47 = arith.constant -1.000000e+30 : f32
    %83 = vector.broadcast %cst_47 : f32 to vector<128x128xf32>
    %84 = arith.select %27, %81, %83 : vector<128x128xi1>, vector<128x128xf32>
    %cst_48 = arith.constant dense<0xFF800000> : vector<128xf32>
    %85 = vector.multi_reduction <maximumf>, %84, %cst_48 [1] : vector<128x128xf32> to vector<128xf32>
    %86 = vector.shape_cast %85 : vector<128xf32> to vector<128x1xf32>
    %87 = arith.maximumf %82, %86 : vector<128x1xf32>
    %88 = arith.subf %82, %87 : vector<128x1xf32>
    %89 = math.exp %88 : vector<128x1xf32>
    %90 = vector.broadcast %87 : vector<128x1xf32> to vector<128x128xf32>
    %91 = arith.subf %81, %90 : vector<128x128xf32>
    %cst_49 = arith.constant 0.000000e+00 : f32
    %92 = vector.broadcast %cst_49 : f32 to vector<128x128xf32>
    %93 = arith.minimumf %91, %92 : vector<128x128xf32>
    %94 = math.exp %93 : vector<128x128xf32>
    %95 = arith.mulf %94, %22 : vector<128x128xf32>
    %96 = arith.mulf %94, %24 : vector<128x128xf32>
    %c0_50 = arith.constant 0 : index
    %c8 = arith.constant 8 : index
    %97 = vector.load %arg22[%c0_50, %c8] : memref<128x32xf32, #tpu.memory_space<vmem>>, vector<128x8xf32>
    %98 = vector.broadcast %89 : vector<128x1xf32> to vector<128x8xf32>
    %99 = arith.mulf %98, %97 : vector<128x8xf32>
    %cst_51 = arith.constant dense<0.000000e+00> : vector<128xf32>
    %100 = vector.multi_reduction <add>, %95, %cst_51 [1] : vector<128x128xf32> to vector<128xf32>
    %101 = vector.shape_cast %100 : vector<128xf32> to vector<128x1xf32>
    %102 = vector.broadcast %101 : vector<128x1xf32> to vector<128x8xf32>
    %103 = arith.addf %99, %102 : vector<128x8xf32>
    %c0_52 = arith.constant 0 : index
    %c8_53 = arith.constant 8 : index
    %104 = vector.load %arg22[%c0_52, %c8_53] : memref<128x32xf32, #tpu.memory_space<vmem>>, vector<128x8xf32>
    tpu.vector_store %arg22[%c0_52, %c8_53], %103 {strides = array<i32>} : memref<128x32xf32, #tpu.memory_space<vmem>>, vector<128x8xf32>,
    %c0_54 = arith.constant 0 : index
    %c8_55 = arith.constant 8 : index
    %105 = vector.load %arg23[%c0_54, %c8_55] : memref<128x32xf32, #tpu.memory_space<vmem>>, vector<128x8xf32>
    %106 = vector.broadcast %89 : vector<128x1xf32> to vector<128x8xf32>
    %107 = arith.mulf %106, %105 : vector<128x8xf32>
    %cst_56 = arith.constant dense<0.000000e+00> : vector<128xf32>
    %108 = vector.multi_reduction <add>, %96, %cst_56 [1] : vector<128x128xf32> to vector<128xf32>
    %109 = vector.shape_cast %108 : vector<128xf32> to vector<128x1xf32>
    %110 = vector.broadcast %109 : vector<128x1xf32> to vector<128x8xf32>
    %111 = arith.addf %107, %110 : vector<128x8xf32>
    %c0_57 = arith.constant 0 : index
    %c8_58 = arith.constant 8 : index
    %112 = vector.load %arg23[%c0_57, %c8_58] : memref<128x32xf32, #tpu.memory_space<vmem>>, vector<128x8xf32>
    tpu.vector_store %arg23[%c0_57, %c8_58], %111 {strides = array<i32>} : memref<128x32xf32, #tpu.memory_space<vmem>>, vector<128x8xf32>,
    %c0_59 = arith.constant 0 : index
    %c8_60 = arith.constant 8 : index
    %113 = vector.load %arg20[%c0_59, %c8_60] : memref<128x32xf32, #tpu.memory_space<vmem>>, vector<128x8xf32>
    %114 = vector.broadcast %89 : vector<128x1xf32> to vector<128x8xf32>
    %115 = arith.mulf %114, %113 : vector<128x8xf32>
    %116 = arith.truncf %95 : vector<128x128xf32> to vector<128x128xbf16>
    %117 = vector.extract_strided_slice %16 {offsets = [0, 8], sizes = [128, 8], strides = [1, 1]} : vector<128x32xbf16> to vector<128x8xbf16>
    %cst_61 = arith.constant dense<0.000000e+00> : vector<128x8xf32>
    %118 = tpu.matmul %116, %117, %cst_61 {dimension_numbers = #tpu.dot_dimension_numbers<[1], [0], [0], [1], [0, 0, 1, 1], [], []>} : vector<128x128xbf16>, vector<128x8xbf16>, vector<128x8xf32> -> vector<128x8xf32>
    %119 = arith.addf %115, %118 : vector<128x8xf32>
    %c0_62 = arith.constant 0 : index
    %c8_63 = arith.constant 8 : index
    %120 = vector.load %arg20[%c0_62, %c8_63] : memref<128x32xf32, #tpu.memory_space<vmem>>, vector<128x8xf32>
    tpu.vector_store %arg20[%c0_62, %c8_63], %119 {strides = array<i32>} : memref<128x32xf32, #tpu.memory_space<vmem>>, vector<128x8xf32>,
    %c0_64 = arith.constant 0 : index
    %c8_65 = arith.constant 8 : index
    %121 = vector.load %arg21[%c0_64, %c8_65] : memref<128x32xf32, #tpu.memory_space<vmem>>, vector<128x8xf32>
    %122 = vector.broadcast %89 : vector<128x1xf32> to vector<128x8xf32>
    %123 = arith.mulf %122, %121 : vector<128x8xf32>
    %124 = arith.truncf %96 : vector<128x128xf32> to vector<128x128xbf16>
    %125 = vector.extract_strided_slice %16 {offsets = [0, 8], sizes = [128, 8], strides = [1, 1]} : vector<128x32xbf16> to vector<128x8xbf16>
    %cst_66 = arith.constant dense<0.000000e+00> : vector<128x8xf32>
    %126 = tpu.matmul %124, %125, %cst_66 {dimension_numbers = #tpu.dot_dimension_numbers<[1], [0], [0], [1], [0, 0, 1, 1], [], []>} : vector<128x128xbf16>, vector<128x8xbf16>, vector<128x8xf32> -> vector<128x8xf32>
    %127 = arith.addf %123, %126 : vector<128x8xf32>
    %c0_67 = arith.constant 0 : index
    %c8_68 = arith.constant 8 : index
    %128 = vector.load %arg21[%c0_67, %c8_68] : memref<128x32xf32, #tpu.memory_space<vmem>>, vector<128x8xf32>
    tpu.vector_store %arg21[%c0_67, %c8_68], %127 {strides = array<i32>} : memref<128x32xf32, #tpu.memory_space<vmem>>, vector<128x8xf32>,
    %c0_69 = arith.constant 0 : index
    %c1_70 = arith.constant 1 : index
    %129 = vector.load %arg24[%c0_69, %c1_70] : memref<128x4xf32, #tpu.memory_space<vmem>>, vector<128x1xf32>
    tpu.vector_store %arg24[%c0_69, %c1_70], %87 {strides = array<i32>} : memref<128x4xf32, #tpu.memory_space<vmem>>, vector<128x1xf32>,
    %130 = vector.extract_strided_slice %17 {offsets = [0, 16], sizes = [128, 8], strides = [1, 1]} : vector<128x32xbf16> to vector<128x8xbf16>
    %131 = vector.extract_strided_slice %14 {offsets = [0, 16], sizes = [128, 8], strides = [1, 1]} : vector<128x32xbf16> to vector<128x8xbf16>
    %cst_71 = arith.constant dense<0.000000e+00> : vector<128x128xf32>
    %132 = tpu.matmul %130, %131, %cst_71 {dimension_numbers = #tpu.dot_dimension_numbers<[1], [1], [0], [0], [0, 0, 1, 0], [], []>} : vector<128x8xbf16>, vector<128x8xbf16>, vector<128x128xf32> -> vector<128x128xf32>
    %c0_72 = arith.constant 0 : index
    %c2 = arith.constant 2 : index
    %133 = vector.load %arg24[%c0_72, %c2] : memref<128x4xf32, #tpu.memory_space<vmem>>, vector<128x1xf32>
    %cst_73 = arith.constant -1.000000e+30 : f32
    %134 = vector.broadcast %cst_73 : f32 to vector<128x128xf32>
    %135 = arith.select %27, %132, %134 : vector<128x128xi1>, vector<128x128xf32>
    %cst_74 = arith.constant dense<0xFF800000> : vector<128xf32>
    %136 = vector.multi_reduction <maximumf>, %135, %cst_74 [1] : vector<128x128xf32> to vector<128xf32>
    %137 = vector.shape_cast %136 : vector<128xf32> to vector<128x1xf32>
    %138 = arith.maximumf %133, %137 : vector<128x1xf32>
    %139 = arith.subf %133, %138 : vector<128x1xf32>
    %140 = math.exp %139 : vector<128x1xf32>
    %141 = vector.broadcast %138 : vector<128x1xf32> to vector<128x128xf32>
    %142 = arith.subf %132, %141 : vector<128x128xf32>
    %cst_75 = arith.constant 0.000000e+00 : f32
    %143 = vector.broadcast %cst_75 : f32 to vector<128x128xf32>
    %144 = arith.minimumf %142, %143 : vector<128x128xf32>
    %145 = math.exp %144 : vector<128x128xf32>
    %146 = arith.mulf %145, %22 : vector<128x128xf32>
    %147 = arith.mulf %145, %24 : vector<128x128xf32>
    %c0_76 = arith.constant 0 : index
    %c16 = arith.constant 16 : index
    %148 = vector.load %arg22[%c0_76, %c16] : memref<128x32xf32, #tpu.memory_space<vmem>>, vector<128x8xf32>
    %149 = vector.broadcast %140 : vector<128x1xf32> to vector<128x8xf32>
    %150 = arith.mulf %149, %148 : vector<128x8xf32>
    %cst_77 = arith.constant dense<0.000000e+00> : vector<128xf32>
    %151 = vector.multi_reduction <add>, %146, %cst_77 [1] : vector<128x128xf32> to vector<128xf32>
    %152 = vector.shape_cast %151 : vector<128xf32> to vector<128x1xf32>
    %153 = vector.broadcast %152 : vector<128x1xf32> to vector<128x8xf32>
    %154 = arith.addf %150, %153 : vector<128x8xf32>
    %c0_78 = arith.constant 0 : index
    %c16_79 = arith.constant 16 : index
    %155 = vector.load %arg22[%c0_78, %c16_79] : memref<128x32xf32, #tpu.memory_space<vmem>>, vector<128x8xf32>
    tpu.vector_store %arg22[%c0_78, %c16_79], %154 {strides = array<i32>} : memref<128x32xf32, #tpu.memory_space<vmem>>, vector<128x8xf32>,
    %c0_80 = arith.constant 0 : index
    %c16_81 = arith.constant 16 : index
    %156 = vector.load %arg23[%c0_80, %c16_81] : memref<128x32xf32, #tpu.memory_space<vmem>>, vector<128x8xf32>
    %157 = vector.broadcast %140 : vector<128x1xf32> to vector<128x8xf32>
    %158 = arith.mulf %157, %156 : vector<128x8xf32>
    %cst_82 = arith.constant dense<0.000000e+00> : vector<128xf32>
    %159 = vector.multi_reduction <add>, %147, %cst_82 [1] : vector<128x128xf32> to vector<128xf32>
    %160 = vector.shape_cast %159 : vector<128xf32> to vector<128x1xf32>
    %161 = vector.broadcast %160 : vector<128x1xf32> to vector<128x8xf32>
    %162 = arith.addf %158, %161 : vector<128x8xf32>
    %c0_83 = arith.constant 0 : index
    %c16_84 = arith.constant 16 : index
    %163 = vector.load %arg23[%c0_83, %c16_84] : memref<128x32xf32, #tpu.memory_space<vmem>>, vector<128x8xf32>
    tpu.vector_store %arg23[%c0_83, %c16_84], %162 {strides = array<i32>} : memref<128x32xf32, #tpu.memory_space<vmem>>, vector<128x8xf32>,
    %c0_85 = arith.constant 0 : index
    %c16_86 = arith.constant 16 : index
    %164 = vector.load %arg20[%c0_85, %c16_86] : memref<128x32xf32, #tpu.memory_space<vmem>>, vector<128x8xf32>
    %165 = vector.broadcast %140 : vector<128x1xf32> to vector<128x8xf32>
    %166 = arith.mulf %165, %164 : vector<128x8xf32>
    %167 = arith.truncf %146 : vector<128x128xf32> to vector<128x128xbf16>
    %168 = vector.extract_strided_slice %16 {offsets = [0, 16], sizes = [128, 8], strides = [1, 1]} : vector<128x32xbf16> to vector<128x8xbf16>
    %cst_87 = arith.constant dense<0.000000e+00> : vector<128x8xf32>
    %169 = tpu.matmul %167, %168, %cst_87 {dimension_numbers = #tpu.dot_dimension_numbers<[1], [0], [0], [1], [0, 0, 1, 1], [], []>} : vector<128x128xbf16>, vector<128x8xbf16>, vector<128x8xf32> -> vector<128x8xf32>
    %170 = arith.addf %166, %169 : vector<128x8xf32>
    %c0_88 = arith.constant 0 : index
    %c16_89 = arith.constant 16 : index
    %171 = vector.load %arg20[%c0_88, %c16_89] : memref<128x32xf32, #tpu.memory_space<vmem>>, vector<128x8xf32>
    tpu.vector_store %arg20[%c0_88, %c16_89], %170 {strides = array<i32>} : memref<128x32xf32, #tpu.memory_space<vmem>>, vector<128x8xf32>,
    %c0_90 = arith.constant 0 : index
    %c16_91 = arith.constant 16 : index
    %172 = vector.load %arg21[%c0_90, %c16_91] : memref<128x32xf32, #tpu.memory_space<vmem>>, vector<128x8xf32>
    %173 = vector.broadcast %140 : vector<128x1xf32> to vector<128x8xf32>
    %174 = arith.mulf %173, %172 : vector<128x8xf32>
    %175 = arith.truncf %147 : vector<128x128xf32> to vector<128x128xbf16>
    %176 = vector.extract_strided_slice %16 {offsets = [0, 16], sizes = [128, 8], strides = [1, 1]} : vector<128x32xbf16> to vector<128x8xbf16>
    %cst_92 = arith.constant dense<0.000000e+00> : vector<128x8xf32>
    %177 = tpu.matmul %175, %176, %cst_92 {dimension_numbers = #tpu.dot_dimension_numbers<[1], [0], [0], [1], [0, 0, 1, 1], [], []>} : vector<128x128xbf16>, vector<128x8xbf16>, vector<128x8xf32> -> vector<128x8xf32>
    %178 = arith.addf %174, %177 : vector<128x8xf32>
    %c0_93 = arith.constant 0 : index
    %c16_94 = arith.constant 16 : index
    %179 = vector.load %arg21[%c0_93, %c16_94] : memref<128x32xf32, #tpu.memory_space<vmem>>, vector<128x8xf32>
    tpu.vector_store %arg21[%c0_93, %c16_94], %178 {strides = array<i32>} : memref<128x32xf32, #tpu.memory_space<vmem>>, vector<128x8xf32>,
    %c0_95 = arith.constant 0 : index
    %c2_96 = arith.constant 2 : index
    %180 = vector.load %arg24[%c0_95, %c2_96] : memref<128x4xf32, #tpu.memory_space<vmem>>, vector<128x1xf32>
    tpu.vector_store %arg24[%c0_95, %c2_96], %138 {strides = array<i32>} : memref<128x4xf32, #tpu.memory_space<vmem>>, vector<128x1xf32>,
    %181 = vector.extract_strided_slice %17 {offsets = [0, 24], sizes = [128, 8], strides = [1, 1]} : vector<128x32xbf16> to vector<128x8xbf16>
    %182 = vector.extract_strided_slice %14 {offsets = [0, 24], sizes = [128, 8], strides = [1, 1]} : vector<128x32xbf16> to vector<128x8xbf16>
    %cst_97 = arith.constant dense<0.000000e+00> : vector<128x128xf32>
    %183 = tpu.matmul %181, %182, %cst_97 {dimension_numbers = #tpu.dot_dimension_numbers<[1], [1], [0], [0], [0, 0, 1, 0], [], []>} : vector<128x8xbf16>, vector<128x8xbf16>, vector<128x128xf32> -> vector<128x128xf32>
    %c0_98 = arith.constant 0 : index
    %c3 = arith.constant 3 : index
    %184 = vector.load %arg24[%c0_98, %c3] : memref<128x4xf32, #tpu.memory_space<vmem>>, vector<128x1xf32>
    %cst_99 = arith.constant -1.000000e+30 : f32
    %185 = vector.broadcast %cst_99 : f32 to vector<128x128xf32>
    %186 = arith.select %27, %183, %185 : vector<128x128xi1>, vector<128x128xf32>
    %cst_100 = arith.constant dense<0xFF800000> : vector<128xf32>
    %187 = vector.multi_reduction <maximumf>, %186, %cst_100 [1] : vector<128x128xf32> to vector<128xf32>
    %188 = vector.shape_cast %187 : vector<128xf32> to vector<128x1xf32>
    %189 = arith.maximumf %184, %188 : vector<128x1xf32>
    %190 = arith.subf %184, %189 : vector<128x1xf32>
    %191 = math.exp %190 : vector<128x1xf32>
    %192 = vector.broadcast %189 : vector<128x1xf32> to vector<128x128xf32>
    %193 = arith.subf %183, %192 : vector<128x128xf32>
    %cst_101 = arith.constant 0.000000e+00 : f32
    %194 = vector.broadcast %cst_101 : f32 to vector<128x128xf32>
    %195 = arith.minimumf %193, %194 : vector<128x128xf32>
    %196 = math.exp %195 : vector<128x128xf32>
    %197 = arith.mulf %196, %22 : vector<128x128xf32>
    %198 = arith.mulf %196, %24 : vector<128x128xf32>
    %c0_102 = arith.constant 0 : index
    %c24 = arith.constant 24 : index
    %199 = vector.load %arg22[%c0_102, %c24] : memref<128x32xf32, #tpu.memory_space<vmem>>, vector<128x8xf32>
    %200 = vector.broadcast %191 : vector<128x1xf32> to vector<128x8xf32>
    %201 = arith.mulf %200, %199 : vector<128x8xf32>
    %cst_103 = arith.constant dense<0.000000e+00> : vector<128xf32>
    %202 = vector.multi_reduction <add>, %197, %cst_103 [1] : vector<128x128xf32> to vector<128xf32>
    %203 = vector.shape_cast %202 : vector<128xf32> to vector<128x1xf32>
    %204 = vector.broadcast %203 : vector<128x1xf32> to vector<128x8xf32>
    %205 = arith.addf %201, %204 : vector<128x8xf32>
    %c0_104 = arith.constant 0 : index
    %c24_105 = arith.constant 24 : index
    %206 = vector.load %arg22[%c0_104, %c24_105] : memref<128x32xf32, #tpu.memory_space<vmem>>, vector<128x8xf32>
    tpu.vector_store %arg22[%c0_104, %c24_105], %205 {strides = array<i32>} : memref<128x32xf32, #tpu.memory_space<vmem>>, vector<128x8xf32>,
    %c0_106 = arith.constant 0 : index
    %c24_107 = arith.constant 24 : index
    %207 = vector.load %arg23[%c0_106, %c24_107] : memref<128x32xf32, #tpu.memory_space<vmem>>, vector<128x8xf32>
    %208 = vector.broadcast %191 : vector<128x1xf32> to vector<128x8xf32>
    %209 = arith.mulf %208, %207 : vector<128x8xf32>
    %cst_108 = arith.constant dense<0.000000e+00> : vector<128xf32>
    %210 = vector.multi_reduction <add>, %198, %cst_108 [1] : vector<128x128xf32> to vector<128xf32>
    %211 = vector.shape_cast %210 : vector<128xf32> to vector<128x1xf32>
    %212 = vector.broadcast %211 : vector<128x1xf32> to vector<128x8xf32>
    %213 = arith.addf %209, %212 : vector<128x8xf32>
    %c0_109 = arith.constant 0 : index
    %c24_110 = arith.constant 24 : index
    %214 = vector.load %arg23[%c0_109, %c24_110] : memref<128x32xf32, #tpu.memory_space<vmem>>, vector<128x8xf32>
    tpu.vector_store %arg23[%c0_109, %c24_110], %213 {strides = array<i32>} : memref<128x32xf32, #tpu.memory_space<vmem>>, vector<128x8xf32>,
    %c0_111 = arith.constant 0 : index
    %c24_112 = arith.constant 24 : index
    %215 = vector.load %arg20[%c0_111, %c24_112] : memref<128x32xf32, #tpu.memory_space<vmem>>, vector<128x8xf32>
    %216 = vector.broadcast %191 : vector<128x1xf32> to vector<128x8xf32>
    %217 = arith.mulf %216, %215 : vector<128x8xf32>
    %218 = arith.truncf %197 : vector<128x128xf32> to vector<128x128xbf16>
    %219 = vector.extract_strided_slice %16 {offsets = [0, 24], sizes = [128, 8], strides = [1, 1]} : vector<128x32xbf16> to vector<128x8xbf16>
    %cst_113 = arith.constant dense<0.000000e+00> : vector<128x8xf32>
    %220 = tpu.matmul %218, %219, %cst_113 {dimension_numbers = #tpu.dot_dimension_numbers<[1], [0], [0], [1], [0, 0, 1, 1], [], []>} : vector<128x128xbf16>, vector<128x8xbf16>, vector<128x8xf32> -> vector<128x8xf32>
    %221 = arith.addf %217, %220 : vector<128x8xf32>
    %c0_114 = arith.constant 0 : index
    %c24_115 = arith.constant 24 : index
    %222 = vector.load %arg20[%c0_114, %c24_115] : memref<128x32xf32, #tpu.memory_space<vmem>>, vector<128x8xf32>
    tpu.vector_store %arg20[%c0_114, %c24_115], %221 {strides = array<i32>} : memref<128x32xf32, #tpu.memory_space<vmem>>, vector<128x8xf32>,
    %c0_116 = arith.constant 0 : index
    %c24_117 = arith.constant 24 : index
    %223 = vector.load %arg21[%c0_116, %c24_117] : memref<128x32xf32, #tpu.memory_space<vmem>>, vector<128x8xf32>
    %224 = vector.broadcast %191 : vector<128x1xf32> to vector<128x8xf32>
    %225 = arith.mulf %224, %223 : vector<128x8xf32>
    %226 = arith.truncf %198 : vector<128x128xf32> to vector<128x128xbf16>
    %227 = vector.extract_strided_slice %16 {offsets = [0, 24], sizes = [128, 8], strides = [1, 1]} : vector<128x32xbf16> to vector<128x8xbf16>
    %cst_118 = arith.constant dense<0.000000e+00> : vector<128x8xf32>
    %228 = tpu.matmul %226, %227, %cst_118 {dimension_numbers = #tpu.dot_dimension_numbers<[1], [0], [0], [1], [0, 0, 1, 1], [], []>} : vector<128x128xbf16>, vector<128x8xbf16>, vector<128x8xf32> -> vector<128x8xf32>
    %229 = arith.addf %225, %228 : vector<128x8xf32>
    %c0_119 = arith.constant 0 : index
    %c24_120 = arith.constant 24 : index
    %230 = vector.load %arg21[%c0_119, %c24_120] : memref<128x32xf32, #tpu.memory_space<vmem>>, vector<128x8xf32>
    tpu.vector_store %arg21[%c0_119, %c24_120], %229 {strides = array<i32>} : memref<128x32xf32, #tpu.memory_space<vmem>>, vector<128x8xf32>,
    %c0_121 = arith.constant 0 : index
    %c3_122 = arith.constant 3 : index
    %231 = vector.load %arg24[%c0_121, %c3_122] : memref<128x4xf32, #tpu.memory_space<vmem>>, vector<128x1xf32>
    tpu.vector_store %arg24[%c0_121, %c3_122], %189 {strides = array<i32>} : memref<128x4xf32, #tpu.memory_space<vmem>>, vector<128x1xf32>,
    %c0_i32_123 = arith.constant 0 : i32
    %232 = arith.cmpi eq, %arg2, %c0_i32_123 : i32
    %233 = arith.extui %232 : i1 to i32
    %c0_i32_124 = arith.constant 0 : i32
    %234 = arith.cmpi ne, %233, %c0_i32_124 : i32
    scf.if %234 {
      %c0_125 = arith.constant 0 : index
      %c0_126 = arith.constant 0 : index
      %235 = vector.load %arg22[%c0_125, %c0_126] : memref<128x32xf32, #tpu.memory_space<vmem>>, vector<128x32xf32>
      %c0_127 = arith.constant 0 : index
      %c0_128 = arith.constant 0 : index
      %236 = vector.load %arg23[%c0_127, %c0_128] : memref<128x32xf32, #tpu.memory_space<vmem>>, vector<128x32xf32>
      %cst_129 = arith.constant 0.000000e+00 : f32
      %237 = vector.broadcast %cst_129 : f32 to vector<128x32xf32>
      %238 = arith.cmpf ogt, %235, %237 : vector<128x32xf32>
      %c0_130 = arith.constant 0 : index
      %c0_131 = arith.constant 0 : index
      %239 = vector.load %arg20[%c0_130, %c0_131] : memref<128x32xf32, #tpu.memory_space<vmem>>, vector<128x32xf32>
      %cst_132 = arith.constant 1.000000e-30 : f32
      %240 = vector.broadcast %cst_132 : f32 to vector<128x32xf32>
      %241 = arith.maximumf %235, %240 : vector<128x32xf32>
      %242 = tpu.reciprocal %241 {approx = true} : vector<128x32xf32> -> vector<128x32xf32>
      %243 = arith.mulf %239, %242 : vector<128x32xf32>
      %cst_133 = arith.constant 0.000000e+00 : f32
      %244 = vector.broadcast %cst_133 : f32 to vector<128x32xf32>
      %245 = arith.select %238, %243, %244 : vector<128x32xi1>, vector<128x32xf32>
      %cst_134 = arith.constant 0.000000e+00 : f32
      %246 = vector.broadcast %cst_134 : f32 to vector<128x32xf32>
      %247 = arith.cmpf ogt, %236, %246 : vector<128x32xf32>
      %c0_135 = arith.constant 0 : index
      %c0_136 = arith.constant 0 : index
      %248 = vector.load %arg21[%c0_135, %c0_136] : memref<128x32xf32, #tpu.memory_space<vmem>>, vector<128x32xf32>
      %cst_137 = arith.constant 1.000000e-30 : f32
      %249 = vector.broadcast %cst_137 : f32 to vector<128x32xf32>
      %250 = arith.maximumf %236, %249 : vector<128x32xf32>
      %251 = tpu.reciprocal %250 {approx = true} : vector<128x32xf32> -> vector<128x32xf32>
      %252 = arith.mulf %248, %251 : vector<128x32xf32>
      %cst_138 = arith.constant 0.000000e+00 : f32
      %253 = vector.broadcast %cst_138 : f32 to vector<128x32xf32>
      %254 = arith.select %247, %252, %253 : vector<128x32xi1>, vector<128x32xf32>
      %255 = arith.addf %245, %254 : vector<128x32xf32>
      %256 = arith.addf %255, %1 : vector<128x32xf32>
      %c0_139 = arith.constant 0 : index
      %c0_140 = arith.constant 0 : index
      %c0_141 = arith.constant 0 : index
      %257 = vector.load %arg14[%c0_139, %c0_140, %c0_141] : memref<1x1x32xf32, #tpu.memory_space<vmem>>, vector<1x1x32xf32>
      %258 = vector.shape_cast %257 : vector<1x1x32xf32> to vector<1x32xf32>
      %c0_142 = arith.constant 0 : index
      %c0_143 = arith.constant 0 : index
      %c0_144 = arith.constant 0 : index
      %259 = vector.load %arg15[%c0_142, %c0_143, %c0_144] : memref<1x1x32xf32, #tpu.memory_space<vmem>>, vector<1x1x32xf32>
      %260 = vector.shape_cast %259 : vector<1x1x32xf32> to vector<1x32xf32>
      %cst_145 = arith.constant dense<0.000000e+00> : vector<128xf32>
      %261 = vector.multi_reduction <add>, %256, %cst_145 [1] : vector<128x32xf32> to vector<128xf32>
      %262 = vector.shape_cast %261 : vector<128xf32> to vector<128x1xf32>
      %cst_146 = arith.constant 3.200000e+01 : f32
      %263 = vector.broadcast %cst_146 : f32 to vector<128x1xf32>
      %264 = arith.divf %262, %263 : vector<128x1xf32>
      %265 = vector.broadcast %264 : vector<128x1xf32> to vector<128x32xf32>
      %266 = arith.subf %256, %265 : vector<128x32xf32>
      %267 = arith.mulf %266, %266 : vector<128x32xf32>
      %cst_147 = arith.constant dense<0.000000e+00> : vector<128xf32>
      %268 = vector.multi_reduction <add>, %267, %cst_147 [1] : vector<128x32xf32> to vector<128xf32>
      %269 = vector.shape_cast %268 : vector<128xf32> to vector<128x1xf32>
      %cst_148 = arith.constant 3.200000e+01 : f32
      %270 = vector.broadcast %cst_148 : f32 to vector<128x1xf32>
      %271 = arith.divf %269, %270 : vector<128x1xf32>
      %272 = vector.broadcast %264 : vector<128x1xf32> to vector<128x32xf32>
      %273 = arith.subf %256, %272 : vector<128x32xf32>
      %cst_149 = arith.constant 9.99999974E-6 : f32
      %274 = vector.broadcast %cst_149 : f32 to vector<128x1xf32>
      %275 = arith.addf %271, %274 : vector<128x1xf32>
      %276 = math.rsqrt %275 : vector<128x1xf32>
      %277 = vector.broadcast %276 : vector<128x1xf32> to vector<128x32xf32>
      %278 = arith.mulf %273, %277 : vector<128x32xf32>
      %279 = vector.broadcast %258 : vector<1x32xf32> to vector<128x32xf32>
      %280 = arith.mulf %278, %279 : vector<128x32xf32>
      %281 = vector.broadcast %260 : vector<1x32xf32> to vector<128x32xf32>
      %282 = arith.addf %280, %281 : vector<128x32xf32>
      %283 = arith.truncf %282 : vector<128x32xf32> to vector<128x32xbf16>
      %c0_150 = arith.constant 0 : index
      %c0_151 = arith.constant 0 : index
      %c0_152 = arith.constant 0 : index
      %284 = vector.load %arg10[%c0_150, %c0_151, %c0_152] : memref<1x32x32xbf16, #tpu.memory_space<vmem>>, vector<1x32x32xbf16>
      %285 = vector.shape_cast %284 : vector<1x32x32xbf16> to vector<32x32xbf16>
      %cst_153 = arith.constant dense<0.000000e+00> : vector<128x32xf32>
      %286 = tpu.matmul %283, %285, %cst_153 {dimension_numbers = #tpu.dot_dimension_numbers<[1], [0], [0], [1], [0, 0, 1, 1], [], []>} : vector<128x32xbf16>, vector<32x32xbf16>, vector<128x32xf32> -> vector<128x32xf32>
      %c0_154 = arith.constant 0 : index
      %c0_155 = arith.constant 0 : index
      %c0_156 = arith.constant 0 : index
      %287 = vector.load %arg11[%c0_154, %c0_155, %c0_156] : memref<1x1x32xf32, #tpu.memory_space<vmem>>, vector<1x1x32xf32>
      %288 = vector.shape_cast %287 : vector<1x1x32xf32> to vector<1x32xf32>
      %289 = vector.broadcast %288 : vector<1x32xf32> to vector<128x32xf32>
      %290 = arith.addf %286, %289 : vector<128x32xf32>
      %cst_157 = arith.constant 5.000000e-01 : f32
      %291 = vector.broadcast %cst_157 : f32 to vector<128x32xf32>
      %292 = arith.mulf %291, %290 : vector<128x32xf32>
      %cst_158 = arith.constant 0.707106769 : f32
      %293 = vector.broadcast %cst_158 : f32 to vector<128x32xf32>
      %294 = arith.mulf %290, %293 : vector<128x32xf32>
      %295 = math.erf %294 : vector<128x32xf32>
      %cst_159 = arith.constant 1.000000e+00 : f32
      %296 = vector.broadcast %cst_159 : f32 to vector<128x32xf32>
      %297 = arith.addf %296, %295 : vector<128x32xf32>
      %298 = arith.mulf %292, %297 : vector<128x32xf32>
      %299 = arith.truncf %298 : vector<128x32xf32> to vector<128x32xbf16>
      %c0_160 = arith.constant 0 : index
      %c0_161 = arith.constant 0 : index
      %c0_162 = arith.constant 0 : index
      %300 = vector.load %arg12[%c0_160, %c0_161, %c0_162] : memref<1x32x32xbf16, #tpu.memory_space<vmem>>, vector<1x32x32xbf16>
      %301 = vector.shape_cast %300 : vector<1x32x32xbf16> to vector<32x32xbf16>
      %cst_163 = arith.constant dense<0.000000e+00> : vector<128x32xf32>
      %302 = tpu.matmul %299, %301, %cst_163 {dimension_numbers = #tpu.dot_dimension_numbers<[1], [0], [0], [1], [0, 0, 1, 1], [], []>} : vector<128x32xbf16>, vector<32x32xbf16>, vector<128x32xf32> -> vector<128x32xf32>
      %c0_164 = arith.constant 0 : index
      %c0_165 = arith.constant 0 : index
      %c0_166 = arith.constant 0 : index
      %303 = vector.load %arg13[%c0_164, %c0_165, %c0_166] : memref<1x1x32xf32, #tpu.memory_space<vmem>>, vector<1x1x32xf32>
      %304 = vector.shape_cast %303 : vector<1x1x32xf32> to vector<1x32xf32>
      %305 = vector.broadcast %304 : vector<1x32xf32> to vector<128x32xf32>
      %306 = arith.addf %302, %305 : vector<128x32xf32>
      %307 = arith.addf %306, %282 : vector<128x32xf32>
      %c0_167 = arith.constant 0 : index
      %c0_168 = arith.constant 0 : index
      %c0_169 = arith.constant 0 : index
      %308 = vector.load %arg16[%c0_167, %c0_168, %c0_169] : memref<1x1x32xf32, #tpu.memory_space<vmem>>, vector<1x1x32xf32>
      %309 = vector.shape_cast %308 : vector<1x1x32xf32> to vector<1x32xf32>
      %c0_170 = arith.constant 0 : index
      %c0_171 = arith.constant 0 : index
      %c0_172 = arith.constant 0 : index
      %310 = vector.load %arg17[%c0_170, %c0_171, %c0_172] : memref<1x1x32xf32, #tpu.memory_space<vmem>>, vector<1x1x32xf32>
      %311 = vector.shape_cast %310 : vector<1x1x32xf32> to vector<1x32xf32>
      %cst_173 = arith.constant dense<0.000000e+00> : vector<128xf32>
      %312 = vector.multi_reduction <add>, %307, %cst_173 [1] : vector<128x32xf32> to vector<128xf32>
      %313 = vector.shape_cast %312 : vector<128xf32> to vector<128x1xf32>
      %cst_174 = arith.constant 3.200000e+01 : f32
      %314 = vector.broadcast %cst_174 : f32 to vector<128x1xf32>
      %315 = arith.divf %313, %314 : vector<128x1xf32>
      %316 = vector.broadcast %315 : vector<128x1xf32> to vector<128x32xf32>
      %317 = arith.subf %307, %316 : vector<128x32xf32>
      %318 = arith.mulf %317, %317 : vector<128x32xf32>
      %cst_175 = arith.constant dense<0.000000e+00> : vector<128xf32>
      %319 = vector.multi_reduction <add>, %318, %cst_175 [1] : vector<128x32xf32> to vector<128xf32>
      %320 = vector.shape_cast %319 : vector<128xf32> to vector<128x1xf32>
      %cst_176 = arith.constant 3.200000e+01 : f32
      %321 = vector.broadcast %cst_176 : f32 to vector<128x1xf32>
      %322 = arith.divf %320, %321 : vector<128x1xf32>
      %323 = vector.broadcast %315 : vector<128x1xf32> to vector<128x32xf32>
      %324 = arith.subf %307, %323 : vector<128x32xf32>
      %cst_177 = arith.constant 9.99999974E-6 : f32
      %325 = vector.broadcast %cst_177 : f32 to vector<128x1xf32>
      %326 = arith.addf %322, %325 : vector<128x1xf32>
      %327 = math.rsqrt %326 : vector<128x1xf32>
      %328 = vector.broadcast %327 : vector<128x1xf32> to vector<128x32xf32>
      %329 = arith.mulf %324, %328 : vector<128x32xf32>
      %330 = vector.broadcast %309 : vector<1x32xf32> to vector<128x32xf32>
      %331 = arith.mulf %329, %330 : vector<128x32xf32>
      %332 = vector.broadcast %311 : vector<1x32xf32> to vector<128x32xf32>
      %333 = arith.addf %331, %332 : vector<128x32xf32>
      %c0_178 = arith.constant 0 : index
      %c0_179 = arith.constant 0 : index
      %c0_180 = arith.constant 0 : index
      %334 = vector.load %arg18[%c0_178, %c0_179, %c0_180] : memref<1x128x32xf32, #tpu.memory_space<vmem>>, vector<1x128x32xf32>
      %335 = vector.shape_cast %334 : vector<1x128x32xf32> to vector<128x32xf32>
      %336 = vector.shape_cast %333 : vector<128x32xf32> to vector<1x128x32xf32>
      tpu.vector_store %arg18[%c0_178, %c0_179, %c0_180], %336 {strides = array<i32>} : memref<1x128x32xf32, #tpu.memory_space<vmem>>, vector<1x128x32xf32>,
    } else {
    }
    return
  }
  func.func @transform_0(%arg0: i32, %arg1: i32, %arg2: i32) -> (i32, i32, i32) {
    %c0_i32 = arith.constant 0 : i32
    %c0_i32_0 = arith.constant 0 : i32
    return %arg0, %arg1, %c0_i32 : i32, i32, i32
  }
  func.func @transform_1(%arg0: i32, %arg1: i32, %arg2: i32) -> (i32, i32, i32) {
    %c1_i32 = arith.constant 1 : i32
    %0 = arith.subi %c1_i32, %arg0 : i32
    %c0_i32 = arith.constant 0 : i32
    %c0_i32_0 = arith.constant 0 : i32
    return %0, %arg2, %c0_i32 : i32, i32, i32
  }
  func.func @transform_2(%arg0: i32, %arg1: i32, %arg2: i32) -> (i32, i32, i32, i32) {
    %c0_i32 = arith.constant 0 : i32
    %c0_i32_0 = arith.constant 0 : i32
    return %arg0, %c0_i32, %arg1, %arg2 : i32, i32, i32, i32
  }
  func.func @transform_3(%arg0: i32, %arg1: i32, %arg2: i32) -> (i32, i32) {
    %c0_i32 = arith.constant 0 : i32
    %c0_i32_0 = arith.constant 0 : i32
    %c0_i32_1 = arith.constant 0 : i32
    return %c0_i32, %c0_i32_0 : i32, i32
  }
  func.func @transform_4(%arg0: i32, %arg1: i32, %arg2: i32) -> (i32, i32) {
    %c0_i32 = arith.constant 0 : i32
    %c0_i32_0 = arith.constant 0 : i32
    %c0_i32_1 = arith.constant 0 : i32
    return %c0_i32, %c0_i32_0 : i32, i32
  }
  func.func @transform_5(%arg0: i32, %arg1: i32, %arg2: i32) -> (i32, i32) {
    %c0_i32 = arith.constant 0 : i32
    %c0_i32_0 = arith.constant 0 : i32
    %c0_i32_1 = arith.constant 0 : i32
    return %c0_i32, %c0_i32_0 : i32, i32
  }
  func.func @transform_6(%arg0: i32, %arg1: i32, %arg2: i32) -> (i32, i32) {
    %c0_i32 = arith.constant 0 : i32
    %c0_i32_0 = arith.constant 0 : i32
    %c0_i32_1 = arith.constant 0 : i32
    return %c0_i32, %c0_i32_0 : i32, i32
  }
  func.func @transform_7(%arg0: i32, %arg1: i32, %arg2: i32) -> (i32, i32, i32) {
    %c0_i32 = arith.constant 0 : i32
    %c0_i32_0 = arith.constant 0 : i32
    %c0_i32_1 = arith.constant 0 : i32
    return %arg0, %c0_i32, %c0_i32_0 : i32, i32, i32
  }
  func.func @transform_8(%arg0: i32, %arg1: i32, %arg2: i32) -> (i32, i32, i32) {
    %c0_i32 = arith.constant 0 : i32
    %c0_i32_0 = arith.constant 0 : i32
    %c0_i32_1 = arith.constant 0 : i32
    return %arg0, %c0_i32, %c0_i32_0 : i32, i32, i32
  }
  func.func @transform_9(%arg0: i32, %arg1: i32, %arg2: i32) -> (i32, i32, i32) {
    %c0_i32 = arith.constant 0 : i32
    %c0_i32_0 = arith.constant 0 : i32
    %c0_i32_1 = arith.constant 0 : i32
    return %arg0, %c0_i32, %c0_i32_0 : i32, i32, i32
  }
  func.func @transform_10(%arg0: i32, %arg1: i32, %arg2: i32) -> (i32, i32, i32) {
    %c0_i32 = arith.constant 0 : i32
    %c0_i32_0 = arith.constant 0 : i32
    %c0_i32_1 = arith.constant 0 : i32
    return %arg0, %c0_i32, %c0_i32_0 : i32, i32, i32
  }
  func.func @transform_11(%arg0: i32, %arg1: i32, %arg2: i32) -> (i32, i32, i32) {
    %c0_i32 = arith.constant 0 : i32
    %c0_i32_0 = arith.constant 0 : i32
    %c0_i32_1 = arith.constant 0 : i32
    return %arg0, %c0_i32, %c0_i32_0 : i32, i32, i32
  }
  func.func @transform_12(%arg0: i32, %arg1: i32, %arg2: i32) -> (i32, i32, i32) {
    %c0_i32 = arith.constant 0 : i32
    %c0_i32_0 = arith.constant 0 : i32
    %c0_i32_1 = arith.constant 0 : i32
    return %arg0, %c0_i32, %c0_i32_0 : i32, i32, i32
  }
  func.func @transform_13(%arg0: i32, %arg1: i32, %arg2: i32) -> (i32, i32, i32) {
    %c0_i32 = arith.constant 0 : i32
    %c0_i32_0 = arith.constant 0 : i32
    %c0_i32_1 = arith.constant 0 : i32
    return %arg0, %c0_i32, %c0_i32_0 : i32, i32, i32
  }
  func.func @transform_14(%arg0: i32, %arg1: i32, %arg2: i32) -> (i32, i32, i32) {
    %c0_i32 = arith.constant 0 : i32
    %c0_i32_0 = arith.constant 0 : i32
    %c0_i32_1 = arith.constant 0 : i32
    return %arg0, %c0_i32, %c0_i32_0 : i32, i32, i32
  }
  func.func @transform_15(%arg0: i32, %arg1: i32, %arg2: i32) -> (i32, i32, i32) {
    %c0_i32 = arith.constant 0 : i32
    %c0_i32_0 = arith.constant 0 : i32
    return %arg0, %arg1, %c0_i32 : i32, i32, i32
  }
}

</mosaic_0001>

<llo_original>
// kernel: decoder_layer_forward.1
$region0: #{decoder_layer_forward.1}
  #allocation0 [shape = 'u32[]', space=smem, size = 0x4, offset = 0x4, fixed_abs, tag = 'smem constant byte address 0x4 - core index']
  #allocation1 [shape = 'u32[72,128]{1,0:T(1,128)}', space=vmem, size = 0x9000, scoped, tag = 'internal scratch']
  #allocation2 [shape = 'bf16[128,32]{1,0:T(8,128)(2,1)}', space=vmem, size = 0x8000, scoped, tag = 'scratch operand']
  #allocation3 [shape = 'f32[128,32]{1,0:T(8,128)}', space=vmem, size = 0x10000, scoped, tag = 'scratch operand']
  #allocation4 [shape = 'f32[128,32]{1,0:T(8,128)}', space=vmem, size = 0x10000, scoped, tag = 'scratch operand']
  #allocation5 [shape = 'f32[128,32]{1,0:T(8,128)}', space=vmem, size = 0x10000, scoped, tag = 'scratch operand']
  #allocation6 [shape = 'f32[128,32]{1,0:T(8,128)}', space=vmem, size = 0x10000, scoped, tag = 'scratch operand']
  #allocation7 [shape = 'f32[128,4]{1,0:T(8,128)}', space=vmem, size = 0x10000, scoped, tag = 'scratch operand']
  %s0 = inlined_call_operand.vmem [shape: f32[2,128,32], index: 0, kind: input, shape index: {}, may-alias: {0,1}]
  %s1 = inlined_call_operand.vmem [shape: f32[2,128,32], index: 1, kind: input, shape index: {}, may-alias: {0,1}]
  %s2 = inlined_call_operand.vmem [shape: s8[2,2,128,128], index: 2, kind: input, shape index: {}]
  %s3 = inlined_call_operand.vmem [shape: bf16[32,32], index: 3, kind: input, shape index: {}]
  %s4 = inlined_call_operand.vmem [shape: f32[1,32], index: 4, kind: input, shape index: {}]
  %s5 = inlined_call_operand.vmem [shape: bf16[32,64], index: 5, kind: input, shape index: {}]
  %s6 = inlined_call_operand.vmem [shape: f32[1,64], index: 6, kind: input, shape index: {}]
  %s7 = inlined_call_operand.vmem [shape: bf16[2,32,32], index: 7, kind: input, shape index: {}]
  %s8 = inlined_call_operand.vmem [shape: f32[2,1,32], index: 8, kind: input, shape index: {}]
  %s9 = inlined_call_operand.vmem [shape: bf16[2,32,32], index: 9, kind: input, shape index: {}]
  %s10 = inlined_call_operand.vmem [shape: f32[2,1,32], index: 10, kind: input, shape index: {}]
  %s11 = inlined_call_operand.vmem [shape: f32[2,1,32], index: 11, kind: input, shape index: {}]
  %s12 = inlined_call_operand.vmem [shape: f32[2,1,32], index: 12, kind: input, shape index: {}]
  %s13 = inlined_call_operand.vmem [shape: f32[2,1,32], index: 13, kind: input, shape index: {}]
  %s14 = inlined_call_operand.vmem [shape: f32[2,1,32], index: 14, kind: input, shape index: {}]
  %s15 = inlined_call_operand.vmem [shape: f32[2,128,32], index: 15, kind: output, shape index: {}]
  %s16 = sld [smem:[#allocation0]]
  $region101: #{decoder_layer_forward.1} parent=0
    _
  %s18 = ssub.s32 1, %s16
  %s19 = scalar_select 0, %s18, %s16
  loop: start=0, step=1, limit=4
  $region2: #{decoder_layer_forward.1} parent=0 // loop_pre_header
    _
  $region3: #{decoder_layer_forward.1} parent=0 // loop_header
    %s21 = sphi 0, %s25
    %p22 = scmp.ge.s32.totalorder %s21, 4
    %s28 = sphi 0, %s47
    %s29 = sphi 0, %s43
    %s30 = sphi 0, %s39
    %s31 = sphi 0, %s28
    %s32 = sphi 0, %s29
    %s33 = sphi 0, %s30
    %s34 = sphi 0, %s31
    %s35 = sphi 0, %s32
    %s36 = sphi 0, %s33
    %s52 = sphi 0, %s54
    %s55 = sphi 0, %s52
    %s56 = sphi 0, %s55
    %s72 = sphi 0, %s56
    %s82 = sphi 0, %s84
    %s85 = sphi 0, %s82
    %s86 = sphi 0, %s85
    %s102 = sphi 0, %s86
    %s112 = sphi 0, %s114
    %s115 = sphi 0, %s112
    %s116 = sphi 0, %s115
    %s132 = sphi 0, %s116
    %s136 = sphi 0, %s136
    %s138 = sphi 0, %s136
    %s139 = sphi 0, %s138
    %s153 = sphi 0, %s139
    %s157 = sphi 0, %s157
    %s159 = sphi 0, %s157
    %s160 = sphi 0, %s159
    %s174 = sphi 0, %s160
    %s178 = sphi 0, %s178
    %s180 = sphi 0, %s178
    %s181 = sphi 0, %s180
    %s195 = sphi 0, %s181
    %s199 = sphi 0, %s199
    %s201 = sphi 0, %s199
    %s202 = sphi 0, %s201
    %s216 = sphi 0, %s202
    %s222 = sphi 0, %s224
    %s225 = sphi 0, %s222
    %s226 = sphi 0, %s225
    %s242 = sphi 0, %s226
    %s248 = sphi 0, %s250
    %s251 = sphi 0, %s248
    %s252 = sphi 0, %s251
    %s268 = sphi 0, %s252
    %s274 = sphi 0, %s276
    %s277 = sphi 0, %s274
    %s278 = sphi 0, %s277
    %s294 = sphi 0, %s278
    %s300 = sphi 0, %s302
    %s303 = sphi 0, %s300
    %s304 = sphi 0, %s303
    %s320 = sphi 0, %s304
    %s326 = sphi 0, %s328
    %s329 = sphi 0, %s326
    %s330 = sphi 0, %s329
    %s346 = sphi 0, %s330
    %s352 = sphi 0, %s354
    %s355 = sphi 0, %s352
    %s356 = sphi 0, %s355
    %s372 = sphi 0, %s356
    %s378 = sphi 0, %s380
    %s381 = sphi 0, %s378
    %s382 = sphi 0, %s381
    %s398 = sphi 0, %s382
    %s404 = sphi 0, %s406
    %s407 = sphi 0, %s404
    %s408 = sphi 0, %s407
    %s424 = sphi 0, %s408
    %s432 = sphi 0, %s434
    %s435 = sphi 0, %s432
    %s436 = sphi 0, %s435
    %s452 = sphi 0, %s436
  $region4: #{decoder_layer_forward.1} parent=0 // loop_header_branch
    %24 = sbr.rel (%p22) target = $region8
  $region5: #{decoder_layer_forward.1} parent=0 // loop_body
    %s26 = ssub.s32 %s21, 1
    %s27 = ssub.s32 %s21, 2
    %s37 = sadd.s32 1, %s30
    %p38 = scmp.ge.s32.totalorder %s37, 1
    %s39 = scalar_select %p38, 0, %s37
    %s40 = sadd.s32 1, %s29
    %s41 = scalar_select %p38, %s40, %s29
    %p42 = scmp.ge.s32.totalorder %s41, 1
    %s43 = scalar_select %p42, 0, %s41
    %s44 = sadd.s32 1, %s28
    %s45 = scalar_select %p42, %s44, %s28
    %p46 = scmp.ge.s32.totalorder %s45, 2
    %s47 = scalar_select %p46, 0, %s45
    %s48 = ssub.s32 %s28, %s47
    %s49 = ssub.s32 %s29, %s43
    %s50 = sor.u32 %s48, %s49
    %p51 = scmp.eq.s32.totalorder %s50, 0
    %s53 = sadd.s32 %s52, 1
    %s54 = scalar_select %p51, %s52, %s53
    %p57 = pneg %p51
    %p58 = scmp.eq.s32.totalorder %s21, 1
    %p59 = por %p57, %p58
    %p60 = scmp.ne.s32.totalorder %s52, %s55
    %p61 = scmp.eq.s32.totalorder %s21, 0
    %p62 = por %p60, %p61
    %p63 = scmp.ne.s32.totalorder %s52, %s55
    %p64 = scmp.eq.s32.totalorder %s26, 1
    %p65 = por %p63, %p64
    %p66 = scmp.ne.s32.totalorder %s55, %s56
    %p67 = scmp.eq.s32.totalorder %s26, 0
    %p68 = por %p66, %p67
    %p69 = scmp.ne.s32.totalorder %s55, %s56
    %p70 = scmp.eq.s32.totalorder %s27, 1
    %p71 = por %p69, %p70
    %p73 = scmp.ne.s32.totalorder %s56, %s72
    %p74 = scmp.eq.s32.totalorder %s27, 0
    %p75 = por %p73, %p74
    %s76 = ssub.s32 1, %s28
    %s77 = ssub.s32 1, %s47
    %s78 = ssub.s32 %s76, %s77
    %s79 = ssub.s32 %s30, %s39
    %s80 = sor.u32 %s78, %s79
    %p81 = scmp.eq.s32.totalorder %s80, 0
    %s83 = sadd.s32 %s82, 1
    %s84 = scalar_select %p81, %s82, %s83
    %p87 = pneg %p81
    %p88 = scmp.eq.s32.totalorder %s21, 1
    %p89 = por %p87, %p88
    %p90 = scmp.ne.s32.totalorder %s82, %s85
    %p91 = scmp.eq.s32.totalorder %s21, 0
    %p92 = por %p90, %p91
    %p93 = scmp.ne.s32.totalorder %s82, %s85
    %p94 = scmp.eq.s32.totalorder %s26, 1
    %p95 = por %p93, %p94
    %p96 = scmp.ne.s32.totalorder %s85, %s86
    %p97 = scmp.eq.s32.totalorder %s26, 0
    %p98 = por %p96, %p97
    %p99 = scmp.ne.s32.totalorder %s85, %s86
    %p100 = scmp.eq.s32.totalorder %s27, 1
    %p101 = por %p99, %p100
    %p103 = scmp.ne.s32.totalorder %s86, %s102
    %p104 = scmp.eq.s32.totalorder %s27, 0
    %p105 = por %p103, %p104
    %s106 = ssub.s32 %s28, %s47
    %s107 = ssub.s32 %s29, %s43
    %s108 = sor.u32 %s106, %s107
    %s109 = ssub.s32 %s30, %s39
    %s110 = sor.u32 %s108, %s109
    %p111 = scmp.eq.s32.totalorder %s110, 0
    %s113 = sadd.s32 %s112, 1
    %s114 = scalar_select %p111, %s112, %s113
    %p117 = pneg %p111
    %p118 = scmp.eq.s32.totalorder %s21, 1
    %p119 = por %p117, %p118
    %p120 = scmp.ne.s32.totalorder %s112, %s115
    %p121 = scmp.eq.s32.totalorder %s21, 0
    %p122 = por %p120, %p121
    %p123 = scmp.ne.s32.totalorder %s112, %s115
    %p124 = scmp.eq.s32.totalorder %s26, 1
    %p125 = por %p123, %p124
    %p126 = scmp.ne.s32.totalorder %s115, %s116
    %p127 = scmp.eq.s32.totalorder %s26, 0
    %p128 = por %p126, %p127
    %p129 = scmp.ne.s32.totalorder %s115, %s116
    %p130 = scmp.eq.s32.totalorder %s27, 1
    %p131 = por %p129, %p130
    %p133 = scmp.ne.s32.totalorder %s116, %s132
    %p134 = scmp.eq.s32.totalorder %s27, 0
    %p135 = por %p133, %p134
    %s137 = sadd.s32 %s136, 1
    %p140 = scmp.eq.s32.totalorder %s21, 1
    %p141 = scmp.ne.s32.totalorder %s136, %s138
    %p142 = scmp.eq.s32.totalorder %s21, 0
    %p143 = por %p141, %p142
    %p144 = scmp.ne.s32.totalorder %s136, %s138
    %p145 = scmp.eq.s32.totalorder %s26, 1
    %p146 = por %p144, %p145
    %p147 = scmp.ne.s32.totalorder %s138, %s139
    %p148 = scmp.eq.s32.totalorder %s26, 0
    %p149 = por %p147, %p148
    %p150 = scmp.ne.s32.totalorder %s138, %s139
    %p151 = scmp.eq.s32.totalorder %s27, 1
    %p152 = por %p150, %p151
    %p154 = scmp.ne.s32.totalorder %s139, %s153
    %p155 = scmp.eq.s32.totalorder %s27, 0
    %p156 = por %p154, %p155
    %s158 = sadd.s32 %s157, 1
    %p161 = scmp.eq.s32.totalorder %s21, 1
    %p162 = scmp.ne.s32.totalorder %s157, %s159
    %p163 = scmp.eq.s32.totalorder %s21, 0
    %p164 = por %p162, %p163
    %p165 = scmp.ne.s32.totalorder %s157, %s159
    %p166 = scmp.eq.s32.totalorder %s26, 1
    %p167 = por %p165, %p166
    %p168 = scmp.ne.s32.totalorder %s159, %s160
    %p169 = scmp.eq.s32.totalorder %s26, 0
    %p170 = por %p168, %p169
    %p171 = scmp.ne.s32.totalorder %s159, %s160
    %p172 = scmp.eq.s32.totalorder %s27, 1
    %p173 = por %p171, %p172
    %p175 = scmp.ne.s32.totalorder %s160, %s174
    %p176 = scmp.eq.s32.totalorder %s27, 0
    %p177 = por %p175, %p176
    %s179 = sadd.s32 %s178, 1
    %p182 = scmp.eq.s32.totalorder %s21, 1
    %p183 = scmp.ne.s32.totalorder %s178, %s180
    %p184 = scmp.eq.s32.totalorder %s21, 0
    %p185 = por %p183, %p184
    %p186 = scmp.ne.s32.totalorder %s178, %s180
    %p187 = scmp.eq.s32.totalorder %s26, 1
    %p188 = por %p186, %p187
    %p189 = scmp.ne.s32.totalorder %s180, %s181
    %p190 = scmp.eq.s32.totalorder %s26, 0
    %p191 = por %p189, %p190
    %p192 = scmp.ne.s32.totalorder %s180, %s181
    %p193 = scmp.eq.s32.totalorder %s27, 1
    %p194 = por %p192, %p193
    %p196 = scmp.ne.s32.totalorder %s181, %s195
    %p197 = scmp.eq.s32.totalorder %s27, 0
    %p198 = por %p196, %p197
    %s200 = sadd.s32 %s199, 1
    %p203 = scmp.eq.s32.totalorder %s21, 1
    %p204 = scmp.ne.s32.totalorder %s199, %s201
    %p205 = scmp.eq.s32.totalorder %s21, 0
    %p206 = por %p204, %p205
    %p207 = scmp.ne.s32.totalorder %s199, %s201
    %p208 = scmp.eq.s32.totalorder %s26, 1
    %p209 = por %p207, %p208
    %p210 = scmp.ne.s32.totalorder %s201, %s202
    %p211 = scmp.eq.s32.totalorder %s26, 0
    %p212 = por %p210, %p211
    %p213 = scmp.ne.s32.totalorder %s201, %s202
    %p214 = scmp.eq.s32.totalorder %s27, 1
    %p215 = por %p213, %p214
    %p217 = scmp.ne.s32.totalorder %s202, %s216
    %p218 = scmp.eq.s32.totalorder %s27, 0
    %p219 = por %p217, %p218
    %s220 = ssub.s32 %s28, %s47
    %p221 = scmp.eq.s32.totalorder %s220, 0
    %s223 = sadd.s32 %s222, 1
    %s224 = scalar_select %p221, %s222, %s223
    %p227 = pneg %p221
    %p228 = scmp.eq.s32.totalorder %s21, 1
    %p229 = por %p227, %p228
    %p230 = scmp.ne.s32.totalorder %s222, %s225
    %p231 = scmp.eq.s32.totalorder %s21, 0
    %p232 = por %p230, %p231
    %p233 = scmp.ne.s32.totalorder %s222, %s225
    %p234 = scmp.eq.s32.totalorder %s26, 1
    %p235 = por %p233, %p234
    %p236 = scmp.ne.s32.totalorder %s225, %s226
    %p237 = scmp.eq.s32.totalorder %s26, 0
    %p238 = por %p236, %p237
    %p239 = scmp.ne.s32.totalorder %s225, %s226
    %p240 = scmp.eq.s32.totalorder %s27, 1
    %p241 = por %p239, %p240
    %p243 = scmp.ne.s32.totalorder %s226, %s242
    %p244 = scmp.eq.s32.totalorder %s27, 0
    %p245 = por %p243, %p244
    %s246 = ssub.s32 %s28, %s47
    %p247 = scmp.eq.s32.totalorder %s246, 0
    %s249 = sadd.s32 %s248, 1
    %s250 = scalar_select %p247, %s248, %s249
    %p253 = pneg %p247
    %p254 = scmp.eq.s32.totalorder %s21, 1
    %p255 = por %p253, %p254
    %p256 = scmp.ne.s32.totalorder %s248, %s251
    %p257 = scmp.eq.s32.totalorder %s21, 0
    %p258 = por %p256, %p257
    %p259 = scmp.ne.s32.totalorder %s248, %s251
    %p260 = scmp.eq.s32.totalorder %s26, 1
    %p261 = por %p259, %p260
    %p262 = scmp.ne.s32.totalorder %s251, %s252
    %p263 = scmp.eq.s32.totalorder %s26, 0
    %p264 = por %p262, %p263
    %p265 = scmp.ne.s32.totalorder %s251, %s252
    %p266 = scmp.eq.s32.totalorder %s27, 1
    %p267 = por %p265, %p266
    %p269 = scmp.ne.s32.totalorder %s252, %s268
    %p270 = scmp.eq.s32.totalorder %s27, 0
    %p271 = por %p269, %p270
    %s272 = ssub.s32 %s28, %s47
    %p273 = scmp.eq.s32.totalorder %s272, 0
    %s275 = sadd.s32 %s274, 1
    %s276 = scalar_select %p273, %s274, %s275
    %p279 = pneg %p273
    %p280 = scmp.eq.s32.totalorder %s21, 1
    %p281 = por %p279, %p280
    %p282 = scmp.ne.s32.totalorder %s274, %s277
    %p283 = scmp.eq.s32.totalorder %s21, 0
    %p284 = por %p282, %p283
    %p285 = scmp.ne.s32.totalorder %s274, %s277
    %p286 = scmp.eq.s32.totalorder %s26, 1
    %p287 = por %p285, %p286
    %p288 = scmp.ne.s32.totalorder %s277, %s278
    %p289 = scmp.eq.s32.totalorder %s26, 0
    %p290 = por %p288, %p289
    %p291 = scmp.ne.s32.totalorder %s277, %s278
    %p292 = scmp.eq.s32.totalorder %s27, 1
    %p293 = por %p291, %p292
    %p295 = scmp.ne.s32.totalorder %s278, %s294
    %p296 = scmp.eq.s32.totalorder %s27, 0
    %p297 = por %p295, %p296
    %s298 = ssub.s32 %s28, %s47
    %p299 = scmp.eq.s32.totalorder %s298, 0
    %s301 = sadd.s32 %s300, 1
    %s302 = scalar_select %p299, %s300, %s301
    %p305 = pneg %p299
    %p306 = scmp.eq.s32.totalorder %s21, 1
    %p307 = por %p305, %p306
    %p308 = scmp.ne.s32.totalorder %s300, %s303
    %p309 = scmp.eq.s32.totalorder %s21, 0
    %p310 = por %p308, %p309
    %p311 = scmp.ne.s32.totalorder %s300, %s303
    %p312 = scmp.eq.s32.totalorder %s26, 1
    %p313 = por %p311, %p312
    %p314 = scmp.ne.s32.totalorder %s303, %s304
    %p315 = scmp.eq.s32.totalorder %s26, 0
    %p316 = por %p314, %p315
    %p317 = scmp.ne.s32.totalorder %s303, %s304
    %p318 = scmp.eq.s32.totalorder %s27, 1
    %p319 = por %p317, %p318
    %p321 = scmp.ne.s32.totalorder %s304, %s320
    %p322 = scmp.eq.s32.totalorder %s27, 0
    %p323 = por %p321, %p322
    %s324 = ssub.s32 %s28, %s47
    %p325 = scmp.eq.s32.totalorder %s324, 0
    %s327 = sadd.s32 %s326, 1
    %s328 = scalar_select %p325, %s326, %s327
    %p331 = pneg %p325
    %p332 = scmp.eq.s32.totalorder %s21, 1
    %p333 = por %p331, %p332
    %p334 = scmp.ne.s32.totalorder %s326, %s329
    %p335 = scmp.eq.s32.totalorder %s21, 0
    %p336 = por %p334, %p335
    %p337 = scmp.ne.s32.totalorder %s326, %s329
    %p338 = scmp.eq.s32.totalorder %s26, 1
    %p339 = por %p337, %p338
    %p340 = scmp.ne.s32.totalorder %s329, %s330
    %p341 = scmp.eq.s32.totalorder %s26, 0
    %p342 = por %p340, %p341
    %p343 = scmp.ne.s32.totalorder %s329, %s330
    %p344 = scmp.eq.s32.totalorder %s27, 1
    %p345 = por %p343, %p344
    %p347 = scmp.ne.s32.totalorder %s330, %s346
    %p348 = scmp.eq.s32.totalorder %s27, 0
    %p349 = por %p347, %p348
    %s350 = ssub.s32 %s28, %s47
    %p351 = scmp.eq.s32.totalorder %s350, 0
    %s353 = sadd.s32 %s352, 1
    %s354 = scalar_select %p351, %s352, %s353
    %p357 = pneg %p351
    %p358 = scmp.eq.s32.totalorder %s21, 1
    %p359 = por %p357, %p358
    %p360 = scmp.ne.s32.totalorder %s352, %s355
    %p361 = scmp.eq.s32.totalorder %s21, 0
    %p362 = por %p360, %p361
    %p363 = scmp.ne.s32.totalorder %s352, %s355
    %p364 = scmp.eq.s32.totalorder %s26, 1
    %p365 = por %p363, %p364
    %p366 = scmp.ne.s32.totalorder %s355, %s356
    %p367 = scmp.eq.s32.totalorder %s26, 0
    %p368 = por %p366, %p367
    %p369 = scmp.ne.s32.totalorder %s355, %s356
    %p370 = scmp.eq.s32.totalorder %s27, 1
    %p371 = por %p369, %p370
    %p373 = scmp.ne.s32.totalorder %s356, %s372
    %p374 = scmp.eq.s32.totalorder %s27, 0
    %p375 = por %p373, %p374
    %s376 = ssub.s32 %s28, %s47
    %p377 = scmp.eq.s32.totalorder %s376, 0
    %s379 = sadd.s32 %s378, 1
    %s380 = scalar_select %p377, %s378, %s379
    %p383 = pneg %p377
    %p384 = scmp.eq.s32.totalorder %s21, 1
    %p385 = por %p383, %p384
    %p386 = scmp.ne.s32.totalorder %s378, %s381
    %p387 = scmp.eq.s32.totalorder %s21, 0
    %p388 = por %p386, %p387
    %p389 = scmp.ne.s32.totalorder %s378, %s381
    %p390 = scmp.eq.s32.totalorder %s26, 1
    %p391 = por %p389, %p390
    %p392 = scmp.ne.s32.totalorder %s381, %s382
    %p393 = scmp.eq.s32.totalorder %s26, 0
    %p394 = por %p392, %p393
    %p395 = scmp.ne.s32.totalorder %s381, %s382
    %p396 = scmp.eq.s32.totalorder %s27, 1
    %p397 = por %p395, %p396
    %p399 = scmp.ne.s32.totalorder %s382, %s398
    %p400 = scmp.eq.s32.totalorder %s27, 0
    %p401 = por %p399, %p400
    %s402 = ssub.s32 %s28, %s47
    %p403 = scmp.eq.s32.totalorder %s402, 0
    %s405 = sadd.s32 %s404, 1
    %s406 = scalar_select %p403, %s404, %s405
    %p409 = pneg %p403
    %p410 = scmp.eq.s32.totalorder %s21, 1
    %p411 = por %p409, %p410
    %p412 = scmp.ne.s32.totalorder %s404, %s407
    %p413 = scmp.eq.s32.totalorder %s21, 0
    %p414 = por %p412, %p413
    %p415 = scmp.ne.s32.totalorder %s404, %s407
    %p416 = scmp.eq.s32.totalorder %s26, 1
    %p417 = por %p415, %p416
    %p418 = scmp.ne.s32.totalorder %s407, %s408
    %p419 = scmp.eq.s32.totalorder %s26, 0
    %p420 = por %p418, %p419
    %p421 = scmp.ne.s32.totalorder %s407, %s408
    %p422 = scmp.eq.s32.totalorder %s27, 1
    %p423 = por %p421, %p422
    %p425 = scmp.ne.s32.totalorder %s408, %s424
    %p426 = scmp.eq.s32.totalorder %s27, 0
    %p427 = por %p425, %p426
    %s428 = ssub.s32 %s28, %s47
    %s429 = ssub.s32 %s29, %s43
    %s430 = sor.u32 %s428, %s429
    %p431 = scmp.eq.s32.totalorder %s430, 0
    %s433 = sadd.s32 %s432, 1
    %s434 = scalar_select %p431, %s432, %s433
    %p437 = pneg %p431
    %p438 = scmp.eq.s32.totalorder %s21, 1
    %p439 = por %p437, %p438
    %p440 = scmp.ne.s32.totalorder %s432, %s435
    %p441 = scmp.eq.s32.totalorder %s21, 0
    %p442 = por %p440, %p441
    %p443 = scmp.ne.s32.totalorder %s432, %s435
    %p444 = scmp.eq.s32.totalorder %s26, 1
    %p445 = por %p443, %p444
    %p446 = scmp.ne.s32.totalorder %s435, %s436
    %p447 = scmp.eq.s32.totalorder %s26, 0
    %p448 = por %p446, %p447
    %p449 = scmp.ne.s32.totalorder %s435, %s436
    %p450 = scmp.eq.s32.totalorder %s27, 1
    %p451 = por %p449, %p450
    %p453 = scmp.ne.s32.totalorder %s436, %s452
    %p454 = scmp.eq.s32.totalorder %s27, 0
    %p455 = por %p453, %p454
    %p456 = scmp.le.s32.totalorder 1, %s21
    %p457 = scmp.lt.s32.totalorder %s21, 3
    %p458 = pnand %p456, %p457
    %p459 = pneg %p458
    // Predicated region
    $region9: #{decoder_layer_forward.1} parent=5 // pred_check
      _
    $region10: #{decoder_layer_forward.1} parent=5 // pred_check_branch
      %461 = sbr.rel (%p458) target = $region12
    $region11: #{decoder_layer_forward.1} parent=5 // pred_region
      %s462 = ssub.s32 %s21, 1
      // Predicated region
      $region13: #{decoder_layer_forward.1} parent=11 // pred_check
        %p463 = pneg %p149
      $region14: #{decoder_layer_forward.1} parent=11 // pred_check_branch
        %465 = sbr.rel (%p463) target = $region16
      $region15: #{decoder_layer_forward.1} parent=11 // pred_region
        _
      $region16: #{decoder_layer_forward.1} parent=11 // pred_fallthru
        _
      // Predicated region
      $region17: #{decoder_layer_forward.1} parent=11 // pred_check
        %p466 = pneg %p170
      $region18: #{decoder_layer_forward.1} parent=11 // pred_check_branch
        %468 = sbr.rel (%p466) target = $region20
      $region19: #{decoder_layer_forward.1} parent=11 // pred_region
        _
      $region20: #{decoder_layer_forward.1} parent=11 // pred_fallthru
        _
      // Predicated region
      $region21: #{decoder_layer_forward.1} parent=11 // pred_check
        %p469 = pneg %p191
      $region22: #{decoder_layer_forward.1} parent=11 // pred_check_branch
        %471 = sbr.rel (%p469) target = $region24
      $region23: #{decoder_layer_forward.1} parent=11 // pred_region
        _
      $region24: #{decoder_layer_forward.1} parent=11 // pred_fallthru
        _
      // Predicated region
      $region25: #{decoder_layer_forward.1} parent=11 // pred_check
        %p472 = pneg %p212
      $region26: #{decoder_layer_forward.1} parent=11 // pred_check_branch
        %474 = sbr.rel (%p472) target = $region28
      $region27: #{decoder_layer_forward.1} parent=11 // pred_region
        _
      $region28: #{decoder_layer_forward.1} parent=11 // pred_fallthru
        _
    $region12: #{decoder_layer_forward.1} parent=5 // pred_fallthru
      _
    %p475 = scmp.lt.s32.totalorder %s21, 2
    // Predicated region
    $region29: #{decoder_layer_forward.1} parent=5 // pred_check
      %p476 = pneg %p475
    $region30: #{decoder_layer_forward.1} parent=5 // pred_check_branch
      %478 = sbr.rel (%p476) target = $region32
    $region31: #{decoder_layer_forward.1} parent=5 // pred_region
      // Predicated region
      $region33: #{decoder_layer_forward.1} parent=31 // pred_check
        %p479 = pneg %p62
      $region34: #{decoder_layer_forward.1} parent=31 // pred_check_branch
        %481 = sbr.rel (%p479) target = $region36
      $region35: #{decoder_layer_forward.1} parent=31 // pred_region
        %s482 = smul.u32 16, %s29
        %p483 = scmp.lt.s32.totalorder %s28, 1
        %s484 = scalar_select %p483, %s28, 1
        %p485 = scmp.lt.s32.totalorder %s482, 15
        %s486 = scalar_select %p485, %s482, 15
        %s487 = smul.addr %s484, 16
        %s488 = sadd.s32 %s486, %s487
        %s489 = smul.addr %s488, 8
        %s490 = scalar_lea.vmem %s0, %s489
        %s491 = smul.u32 16, %s29
      $region36: #{decoder_layer_forward.1} parent=31 // pred_fallthru
        _
      // Predicated region
      $region37: #{decoder_layer_forward.1} parent=31 // pred_check
        %p492 = pneg %p92
      $region38: #{decoder_layer_forward.1} parent=31 // pred_check_branch
        %494 = sbr.rel (%p492) target = $region40
      $region39: #{decoder_layer_forward.1} parent=31 // pred_region
        %s495 = ssub.s32 1, %s28
        %s496 = smul.u32 16, %s30
        %p497 = scmp.lt.s32.totalorder %s495, 1
        %s498 = scalar_select %p497, %s495, 1
        %p499 = scmp.lt.s32.totalorder %s496, 15
        %s500 = scalar_select %p499, %s496, 15
        %s501 = smul.addr %s498, 16
        %s502 = sadd.s32 %s500, %s501
        %s503 = smul.addr %s502, 8
        %s504 = scalar_lea.vmem %s1, %s503
        %s505 = ssub.s32 1, %s28
        %s506 = smul.u32 16, %s30
      $region40: #{decoder_layer_forward.1} parent=31 // pred_fallthru
        _
      // Predicated region
      $region41: #{decoder_layer_forward.1} parent=31 // pred_check
        %p507 = pneg %p122
      $region42: #{decoder_layer_forward.1} parent=31 // pred_check_branch
        %509 = sbr.rel (%p507) target = $region44
      $region43: #{decoder_layer_forward.1} parent=31 // pred_region
        %s510 = smul.u32 4, %s29
        %p511 = scmp.lt.s32.totalorder %s28, 1
        %s512 = scalar_select %p511, %s28, 1
        %p513 = scmp.lt.s32.totalorder %s510, 3
        %s514 = scalar_select %p513, %s510, 3
        %p515 = scmp.lt.s32.totalorder %s30, 0
        %s516 = scalar_select %p515, %s30, 0
        %s517 = sadd.s32 %s516, %s514
        %s518 = smul.addr %s512, 8
        %s519 = sadd.s32 %s517, %s518
        %s520 = smul.addr %s519, 8
        %s521 = scalar_lea.vmem %s2, %s520
        %s522 = smul.u32 4, %s29
      $region44: #{decoder_layer_forward.1} parent=31 // pred_fallthru
        _
      // Predicated region
      $region45: #{decoder_layer_forward.1} parent=31 // pred_check
        %p523 = pneg %p232
      $region46: #{decoder_layer_forward.1} parent=31 // pred_check_branch
        %525 = sbr.rel (%p523) target = $region48
      $region47: #{decoder_layer_forward.1} parent=31 // pred_region
        %p526 = scmp.lt.s32.totalorder %s28, 1
        %s527 = scalar_select %p526, %s28, 1
        %s528 = smul.addr %s527, 4
        %s529 = smul.addr %s528, 4
        %s530 = scalar_lea.vmem %s7, %s529
      $region48: #{decoder_layer_forward.1} parent=31 // pred_fallthru
        _
      // Predicated region
      $region49: #{decoder_layer_forward.1} parent=31 // pred_check
        %p531 = pneg %p258
      $region50: #{decoder_layer_forward.1} parent=31 // pred_check_branch
        %533 = sbr.rel (%p531) target = $region52
      $region51: #{decoder_layer_forward.1} parent=31 // pred_region
        %p534 = scmp.lt.s32.totalorder %s28, 1
        %s535 = scalar_select %p534, %s28, 1
        %s536 = scalar_lea.vmem %s8, %s535
      $region52: #{decoder_layer_forward.1} parent=31 // pred_fallthru
        _
      // Predicated region
      $region53: #{decoder_layer_forward.1} parent=31 // pred_check
        %p537 = pneg %p284
      $region54: #{decoder_layer_forward.1} parent=31 // pred_check_branch
        %539 = sbr.rel (%p537) target = $region56
      $region55: #{decoder_layer_forward.1} parent=31 // pred_region
        %p540 = scmp.lt.s32.totalorder %s28, 1
        %s541 = scalar_select %p540, %s28, 1
        %s542 = smul.addr %s541, 4
        %s543 = smul.addr %s542, 4
        %s544 = scalar_lea.vmem %s9, %s543
      $region56: #{decoder_layer_forward.1} parent=31 // pred_fallthru
        _
      // Predicated region
      $region57: #{decoder_layer_forward.1} parent=31 // pred_check
        %p545 = pneg %p310
      $region58: #{decoder_layer_forward.1} parent=31 // pred_check_branch
        %547 = sbr.rel (%p545) target = $region60
      $region59: #{decoder_layer_forward.1} parent=31 // pred_region
        %p548 = scmp.lt.s32.totalorder %s28, 1
        %s549 = scalar_select %p548, %s28, 1
        %s550 = scalar_lea.vmem %s10, %s549
      $region60: #{decoder_layer_forward.1} parent=31 // pred_fallthru
        _
      // Predicated region
      $region61: #{decoder_layer_forward.1} parent=31 // pred_check
        %p551 = pneg %p336
      $region62: #{decoder_layer_forward.1} parent=31 // pred_check_branch
        %553 = sbr.rel (%p551) target = $region64
      $region63: #{decoder_layer_forward.1} parent=31 // pred_region
        %p554 = scmp.lt.s32.totalorder %s28, 1
        %s555 = scalar_select %p554, %s28, 1
        %s556 = scalar_lea.vmem %s11, %s555
      $region64: #{decoder_layer_forward.1} parent=31 // pred_fallthru
        _
      // Predicated region
      $region65: #{decoder_layer_forward.1} parent=31 // pred_check
        %p557 = pneg %p362
      $region66: #{decoder_layer_forward.1} parent=31 // pred_check_branch
        %559 = sbr.rel (%p557) target = $region68
      $region67: #{decoder_layer_forward.1} parent=31 // pred_region
        %p560 = scmp.lt.s32.totalorder %s28, 1
        %s561 = scalar_select %p560, %s28, 1
        %s562 = scalar_lea.vmem %s12, %s561
      $region68: #{decoder_layer_forward.1} parent=31 // pred_fallthru
        _
      // Predicated region
      $region69: #{decoder_layer_forward.1} parent=31 // pred_check
        %p563 = pneg %p388
      $region70: #{decoder_layer_forward.1} parent=31 // pred_check_branch
        %565 = sbr.rel (%p563) target = $region72
      $region71: #{decoder_layer_forward.1} parent=31 // pred_region
        %p566 = scmp.lt.s32.totalorder %s28, 1
        %s567 = scalar_select %p566, %s28, 1
        %s568 = scalar_lea.vmem %s13, %s567
      $region72: #{decoder_layer_forward.1} parent=31 // pred_fallthru
        _
      // Predicated region
      $region73: #{decoder_layer_forward.1} parent=31 // pred_check
        %p569 = pneg %p414
      $region74: #{decoder_layer_forward.1} parent=31 // pred_check_branch
        %571 = sbr.rel (%p569) target = $region76
      $region75: #{decoder_layer_forward.1} parent=31 // pred_region
        %p572 = scmp.lt.s32.totalorder %s28, 1
        %s573 = scalar_select %p572, %s28, 1
        %s574 = scalar_lea.vmem %s14, %s573
      $region76: #{decoder_layer_forward.1} parent=31 // pred_fallthru
        _
    $region32: #{decoder_layer_forward.1} parent=5 // pred_fallthru
      _
    %p575 = scmp.le.s32.totalorder 1, %s21
    %p576 = scmp.lt.s32.totalorder %s21, 3
    %p577 = pnand %p575, %p576
    %p578 = pneg %p577
    // Predicated region
    $region77: #{decoder_layer_forward.1} parent=5 // pred_check
      _
    $region78: #{decoder_layer_forward.1} parent=5 // pred_check_branch
      %580 = sbr.rel (%p577) target = $region80
    $region79: #{decoder_layer_forward.1} parent=5 // pred_region
      %s581 = ssub.s32 %s21, 1
      %s582 = smul.u32 16, %s32
      %p583 = scmp.lt.s32.totalorder %s31, 1
      %s584 = scalar_select %p583, %s31, 1
      %p585 = scmp.lt.s32.totalorder %s582, 15
      %s586 = scalar_select %p585, %s582, 15
      %s587 = smul.addr %s584, 16
      %s588 = sadd.s32 %s586, %s587
      %s589 = smul.addr %s588, 8
      %s590 = scalar_lea.vmem %s0, %s589
      %p591 = pneg %p68
      %p592 = pneg %p65
      %s593 = ssub.s32 1, %s31
      %s594 = smul.u32 16, %s33
      %p595 = scmp.lt.s32.totalorder %s593, 1
      %s596 = scalar_select %p595, %s593, 1
      %p597 = scmp.lt.s32.totalorder %s594, 15
      %s598 = scalar_select %p597, %s594, 15
      %s599 = smul.addr %s596, 16
      %s600 = sadd.s32 %s598, %s599
      %s601 = smul.addr %s600, 8
      %s602 = scalar_lea.vmem %s1, %s601
      %p603 = pneg %p98
      %p604 = pneg %p95
      %s605 = smul.u32 4, %s32
      %p606 = scmp.lt.s32.totalorder %s31, 1
      %s607 = scalar_select %p606, %s31, 1
      %p608 = scmp.lt.s32.totalorder %s605, 3
      %s609 = scalar_select %p608, %s605, 3
      %p610 = scmp.lt.s32.totalorder %s33, 0
      %s611 = scalar_select %p610, %s33, 0
      %s612 = sadd.s32 %s611, %s609
      %s613 = smul.addr %s607, 8
      %s614 = sadd.s32 %s612, %s613
      %s615 = smul.addr %s614, 8
      %s616 = scalar_lea.vmem %s2, %s615
      %p617 = pneg %p128
      %p618 = pneg %p125
      %p619 = pneg %p149
      %p620 = pneg %p146
      %p621 = pneg %p170
      %p622 = pneg %p167
      %p623 = pneg %p191
      %p624 = pneg %p188
      %p625 = pneg %p212
      %p626 = pneg %p209
      %p627 = scmp.lt.s32.totalorder %s31, 1
      %s628 = scalar_select %p627, %s31, 1
      %s629 = smul.addr %s628, 4
      %s630 = smul.addr %s629, 4
      %s631 = scalar_lea.vmem %s7, %s630
      %p632 = pneg %p238
      %p633 = pneg %p235
      %p634 = scmp.lt.s32.totalorder %s31, 1
      %s635 = scalar_select %p634, %s31, 1
      %s636 = scalar_lea.vmem %s8, %s635
      %p637 = pneg %p264
      %p638 = pneg %p261
      %p639 = scmp.lt.s32.totalorder %s31, 1
      %s640 = scalar_select %p639, %s31, 1
      %s641 = smul.addr %s640, 4
      %s642 = smul.addr %s641, 4
      %s643 = scalar_lea.vmem %s9, %s642
      %p644 = pneg %p290
      %p645 = pneg %p287
      %p646 = scmp.lt.s32.totalorder %s31, 1
      %s647 = scalar_select %p646, %s31, 1
      %s648 = scalar_lea.vmem %s10, %s647
      %p649 = pneg %p316
      %p650 = pneg %p313
      %p651 = scmp.lt.s32.totalorder %s31, 1
      %s652 = scalar_select %p651, %s31, 1
      %s653 = scalar_lea.vmem %s11, %s652
      %p654 = pneg %p342
      %p655 = pneg %p339
      %p656 = scmp.lt.s32.totalorder %s31, 1
      %s657 = scalar_select %p656, %s31, 1
      %s658 = scalar_lea.vmem %s12, %s657
      %p659 = pneg %p368
      %p660 = pneg %p365
      %p661 = scmp.lt.s32.totalorder %s31, 1
      %s662 = scalar_select %p661, %s31, 1
      %s663 = scalar_lea.vmem %s13, %s662
      %p664 = pneg %p394
      %p665 = pneg %p391
      %p666 = scmp.lt.s32.totalorder %s31, 1
      %s667 = scalar_select %p666, %s31, 1
      %s668 = scalar_lea.vmem %s14, %s667
      %p669 = pneg %p420
      %p670 = pneg %p417
      %p671 = pneg %p448
      %p672 = pneg %p445
      %s673 = smul.u32 16, %s32
      %p674 = scmp.lt.s32.totalorder %s31, 1
      %s675 = scalar_select %p674, %s31, 1
      %p676 = scmp.lt.s32.totalorder %s673, 15
      %s677 = scalar_select %p676, %s673, 15
      %s678 = smul.addr %s675, 16
      %s679 = sadd.s32 %s677, %s678
      %s680 = smul.addr %s679, 8
      %s681 = scalar_lea.vmem %s15, %s680
      %s682 = smul.u32 16, %s32
      %p683 = scmp.lt.s32.totalorder %s31, 1
      %s684 = scalar_select %p683, %s31, 1
      %p685 = scmp.lt.s32.totalorder %s682, 15
      %s686 = scalar_select %p685, %s682, 15
      %s687 = smul.addr %s684, 16
      %s688 = sadd.s32 %s686, %s687
      %s689 = smul.addr %s688, 8
      %s690 = scalar_lea.vmem %s0, %s689
      %s691 = smul.u32 16, %s32
      %s692 = ssub.s32 1, %s31
      %s693 = smul.u32 16, %s33
      %p694 = scmp.lt.s32.totalorder %s692, 1
      %s695 = scalar_select %p694, %s692, 1
      %p696 = scmp.lt.s32.totalorder %s693, 15
      %s697 = scalar_select %p696, %s693, 15
      %s698 = smul.addr %s695, 16
      %s699 = sadd.s32 %s697, %s698
      %s700 = smul.addr %s699, 8
      %s701 = scalar_lea.vmem %s1, %s700
      %s702 = ssub.s32 1, %s31
      %s703 = smul.u32 16, %s33
      %s704 = smul.u32 4, %s32
      %p705 = scmp.lt.s32.totalorder %s31, 1
      %s706 = scalar_select %p705, %s31, 1
      %p707 = scmp.lt.s32.totalorder %s704, 3
      %s708 = scalar_select %p707, %s704, 3
      %p709 = scmp.lt.s32.totalorder %s33, 0
      %s710 = scalar_select %p709, %s33, 0
      %s711 = sadd.s32 %s710, %s708
      %s712 = smul.addr %s706, 8
      %s713 = sadd.s32 %s711, %s712
      %s714 = smul.addr %s713, 8
      %s715 = scalar_lea.vmem %s2, %s714
      %s716 = smul.u32 4, %s32
      %p717 = scmp.lt.s32.totalorder %s31, 1
      %s718 = scalar_select %p717, %s31, 1
      %s719 = smul.addr %s718, 4
      %s720 = smul.addr %s719, 4
      %s721 = scalar_lea.vmem %s7, %s720
      %p722 = scmp.lt.s32.totalorder %s31, 1
      %s723 = scalar_select %p722, %s31, 1
      %s724 = scalar_lea.vmem %s8, %s723
      %p725 = scmp.lt.s32.totalorder %s31, 1
      %s726 = scalar_select %p725, %s31, 1
      %s727 = smul.addr %s726, 4
      %s728 = smul.addr %s727, 4
      %s729 = scalar_lea.vmem %s9, %s728
      %p730 = scmp.lt.s32.totalorder %s31, 1
      %s731 = scalar_select %p730, %s31, 1
      %s732 = scalar_lea.vmem %s10, %s731
      %p733 = scmp.lt.s32.totalorder %s31, 1
      %s734 = scalar_select %p733, %s31, 1
      %s735 = scalar_lea.vmem %s11, %s734
      %p736 = scmp.lt.s32.totalorder %s31, 1
      %s737 = scalar_select %p736, %s31, 1
      %s738 = scalar_lea.vmem %s12, %s737
      %p739 = scmp.lt.s32.totalorder %s31, 1
      %s740 = scalar_select %p739, %s31, 1
      %s741 = scalar_lea.vmem %s13, %s740
      %p742 = scmp.lt.s32.totalorder %s31, 1
      %s743 = scalar_select %p742, %s31, 1
      %s744 = scalar_lea.vmem %s14, %s743
      %s745 = smul.u32 16, %s32
      %p746 = scmp.lt.s32.totalorder %s31, 1
      %s747 = scalar_select %p746, %s31, 1
      %p748 = scmp.lt.s32.totalorder %s745, 15
      %s749 = scalar_select %p748, %s745, 15
      %s750 = smul.addr %s747, 16
      %s751 = sadd.s32 %s749, %s750
      %s752 = smul.addr %s751, 8
      %s753 = scalar_lea.vmem %s15, %s752
      %s754 = smul.u32 16, %s32
      %v756 = vld [vmem:[%s690] sm:$0xff]
      %v757 = vld [vmem:[%s690 + $0x8] sm:$0xff]
      %v758 = vld [vmem:[%s690 + $0x10] sm:$0xff]
      %v759 = vld [vmem:[%s690 + $0x18] sm:$0xff]
      %v760 = vld [vmem:[%s690 + $0x20] sm:$0xff]
      %v761 = vld [vmem:[%s690 + $0x28] sm:$0xff]
      %v762 = vld [vmem:[%s690 + $0x30] sm:$0xff]
      %v763 = vld [vmem:[%s690 + $0x38] sm:$0xff]
      %v764 = vld [vmem:[%s690 + $0x40] sm:$0xff]
      %v765 = vld [vmem:[%s690 + $0x48] sm:$0xff]
      %v766 = vld [vmem:[%s690 + $0x50] sm:$0xff]
      %v767 = vld [vmem:[%s690 + $0x58] sm:$0xff]
      %v768 = vld [vmem:[%s690 + $0x60] sm:$0xff]
      %v769 = vld [vmem:[%s690 + $0x68] sm:$0xff]
      %v770 = vld [vmem:[%s690 + $0x70] sm:$0xff]
      %v771 = vld [vmem:[%s690 + $0x78] sm:$0xff]
      %v772 = vld [vmem:[%s701] sm:$0xff]
      %v773 = vld [vmem:[%s701 + $0x8] sm:$0xff]
      %v774 = vld [vmem:[%s701 + $0x10] sm:$0xff]
      %v775 = vld [vmem:[%s701 + $0x18] sm:$0xff]
      %v776 = vld [vmem:[%s701 + $0x20] sm:$0xff]
      %v777 = vld [vmem:[%s701 + $0x28] sm:$0xff]
      %v778 = vld [vmem:[%s701 + $0x30] sm:$0xff]
      %v779 = vld [vmem:[%s701 + $0x38] sm:$0xff]
      %v780 = vld [vmem:[%s701 + $0x40] sm:$0xff]
      %v781 = vld [vmem:[%s701 + $0x48] sm:$0xff]
      %v782 = vld [vmem:[%s701 + $0x50] sm:$0xff]
      %v783 = vld [vmem:[%s701 + $0x58] sm:$0xff]
      %v784 = vld [vmem:[%s701 + $0x60] sm:$0xff]
      %v785 = vld [vmem:[%s701 + $0x68] sm:$0xff]
      %v786 = vld [vmem:[%s701 + $0x70] sm:$0xff]
      %v787 = vld [vmem:[%s701 + $0x78] sm:$0xff]
      %p788 = scmp.eq.s32.totalorder %s33, 0
      // Predicated region
      $region81: #{decoder_layer_forward.1} parent=79 // pred_check
        %p789 = pneg %p788
      $region82: #{decoder_layer_forward.1} parent=79 // pred_check_branch
        %791 = sbr.rel (%p789) target = $region84
      $region83: #{decoder_layer_forward.1} parent=79 // pred_region
        %v792 = vpack.c.bf16 %v757, %v756
        %v793 = vpack.c.bf16 %v759, %v758
        %v794 = vpack.c.bf16 %v761, %v760
        %v795 = vpack.c.bf16 %v763, %v762
        %v796 = vpack.c.bf16 %v765, %v764
        %v797 = vpack.c.bf16 %v767, %v766
        %v798 = vpack.c.bf16 %v769, %v768
        %v799 = vpack.c.bf16 %v771, %v770
        %v800 = vld [vmem:[%s3] sm:$0xf]
        %v801 = vld [vmem:[%s3 + $0x4] sm:$0xf]
        %v802 = vld [vmem:[%s3 + $0x8] sm:$0xf]
        %v803 = vld [vmem:[%s3 + $0xc] sm:$0xf]
        %v804 = vld [vmem:[%s4] sm:$0x1]
        %v806 = vperm.slane %v804, 0
        %v812 = vunpack.c.l.b16 %v800
        %v813 = vunpack.c.l.b16 %v801
        %v814 = vunpack.c.l.b16 %v802
        %v815 = vunpack.c.l.b16 %v803
        %v816 = vpack.c.b16 %v813, %v812
        %v817 = vpack.c.b16 %v815, %v814
        %vm820 = vcmask 261120
        %v822 = vsel %vm820, %v792, 0
        %v825 = vsel %vm820, %v793, 0
        %v828 = vsel %vm820, %v794, 0
        %v831 = vsel %vm820, %v795, 0
        %v834 = vsel %vm820, %v796, 0
        %v837 = vsel %vm820, %v797, 0
        %v840 = vsel %vm820, %v798, 0
        %v843 = vsel %vm820, %v799, 0
        %845 = vmatpush.bf16.msra.mxu0 0
        %846 = vmatpush.bf16.msra.mxu0 0
        %847 = vmatpush.bf16.msra.mxu0 0
        %848 = vmatpush.bf16.msra.mxu0 0
        %849 = vmatpush.bf16.msra.mxu0 0
        %850 = vmatpush.bf16.msra.mxu0 0
        %851 = vmatpush.bf16.msra.mxu0 %v817
        %852 = vmatpush.bf16.msra.mxu0 %v816
        %853 = vmatmul.bf16.gmra.mxu0 %v822
        %v854 = vpop.f32.mrf.mxu0
        %v855 = vadd.f32 %v806, %v854
        %v856 = vpop.f32.mrf.mxu0
        %v857 = vadd.f32 %v806, %v856
        %858 = vmatmul.bf16.gmra.mxu0 %v825
        %v859 = vpop.f32.mrf.mxu0
        %v860 = vadd.f32 %v806, %v859
        %v861 = vpop.f32.mrf.mxu0
        %v862 = vadd.f32 %v806, %v861
        %863 = vmatmul.bf16.gmra.mxu0 %v828
        %v864 = vpop.f32.mrf.mxu0
        %v865 = vadd.f32 %v806, %v864
        %v866 = vpop.f32.mrf.mxu0
        %v867 = vadd.f32 %v806, %v866
        %868 = vmatmul.bf16.gmra.mxu0 %v831
        %v869 = vpop.f32.mrf.mxu0
        %v870 = vadd.f32 %v806, %v869
        %v871 = vpop.f32.mrf.mxu0
        %v872 = vadd.f32 %v806, %v871
        %873 = vmatmul.bf16.gmra.mxu0 %v834
        %v874 = vpop.f32.mrf.mxu0
        %v875 = vadd.f32 %v806, %v874
        %v876 = vpop.f32.mrf.mxu0
        %v877 = vadd.f32 %v806, %v876
        %878 = vmatmul.bf16.gmra.mxu0 %v837
        %v879 = vpop.f32.mrf.mxu0
        %v880 = vadd.f32 %v806, %v879
        %v881 = vpop.f32.mrf.mxu0
        %v882 = vadd.f32 %v806, %v881
        %883 = vmatmul.bf16.gmra.mxu0 %v840
        %v884 = vpop.f32.mrf.mxu0
        %v885 = vadd.f32 %v806, %v884
        %v886 = vpop.f32.mrf.mxu0
        %v887 = vadd.f32 %v806, %v886
        %888 = vmatmul.bf16.gmra.mxu0 %v843
        %v889 = vpop.f32.mrf.mxu0
        %v890 = vadd.f32 %v806, %v889
        %v891 = vpop.f32.mrf.mxu0
        %v892 = vadd.f32 %v806, %v891
        %893 = vdwg.mxu0
        %v894 = vpack.c.bf16 %v855, %v855
        %v895 = vpack.c.bf16 %v857, %v857
        %v896 = vpack.c.bf16 %v860, %v860
        %v897 = vpack.c.bf16 %v862, %v862
        %v898 = vpack.c.bf16 %v865, %v865
        %v899 = vpack.c.bf16 %v867, %v867
        %v900 = vpack.c.bf16 %v870, %v870
        %v901 = vpack.c.bf16 %v872, %v872
        %v902 = vpack.c.bf16 %v875, %v875
        %v903 = vpack.c.bf16 %v877, %v877
        %v904 = vpack.c.bf16 %v880, %v880
        %v905 = vpack.c.bf16 %v882, %v882
        %v906 = vpack.c.bf16 %v885, %v885
        %v907 = vpack.c.bf16 %v887, %v887
        %v908 = vpack.c.bf16 %v890, %v890
        %v909 = vpack.c.bf16 %v892, %v892
        %vm910 = vcmask 257024
        %911 = vst.msk [vmem:[#allocation2] sm:$0xf] %vm910, %v894
        %912 = vst.msk [vmem:[#allocation2 + $0x4] sm:$0xf] %vm910, %v895
        %913 = vst.msk [vmem:[#allocation2 + $0x8] sm:$0xf] %vm910, %v896
        %914 = vst.msk [vmem:[#allocation2 + $0xc] sm:$0xf] %vm910, %v897
        %915 = vst.msk [vmem:[#allocation2 + $0x10] sm:$0xf] %vm910, %v898
        %916 = vst.msk [vmem:[#allocation2 + $0x14] sm:$0xf] %vm910, %v899
        %917 = vst.msk [vmem:[#allocation2 + $0x18] sm:$0xf] %vm910, %v900
        %918 = vst.msk [vmem:[#allocation2 + $0x1c] sm:$0xf] %vm910, %v901
        %919 = vst.msk [vmem:[#allocation2 + $0x20] sm:$0xf] %vm910, %v902
        %920 = vst.msk [vmem:[#allocation2 + $0x24] sm:$0xf] %vm910, %v903
        %921 = vst.msk [vmem:[#allocation2 + $0x28] sm:$0xf] %vm910, %v904
        %922 = vst.msk [vmem:[#allocation2 + $0x2c] sm:$0xf] %vm910, %v905
        %923 = vst.msk [vmem:[#allocation2 + $0x30] sm:$0xf] %vm910, %v906
        %924 = vst.msk [vmem:[#allocation2 + $0x34] sm:$0xf] %vm910, %v907
        %925 = vst.msk [vmem:[#allocation2 + $0x38] sm:$0xf] %vm910, %v908
        %926 = vst.msk [vmem:[#allocation2 + $0x3c] sm:$0xf] %vm910, %v909
        %927 = vst.msk [vmem:[#allocation3] sm:$0xff] %vm820, 0.0
        %928 = vst.msk [vmem:[#allocation3 + $0x8] sm:$0xff] %vm820, 0.0
        %929 = vst.msk [vmem:[#allocation3 + $0x10] sm:$0xff] %vm820, 0.0
        %930 = vst.msk [vmem:[#allocation3 + $0x18] sm:$0xff] %vm820, 0.0
        %931 = vst.msk [vmem:[#allocation3 + $0x20] sm:$0xff] %vm820, 0.0
        %932 = vst.msk [vmem:[#allocation3 + $0x28] sm:$0xff] %vm820, 0.0
        %933 = vst.msk [vmem:[#allocation3 + $0x30] sm:$0xff] %vm820, 0.0
        %934 = vst.msk [vmem:[#allocation3 + $0x38] sm:$0xff] %vm820, 0.0
        %935 = vst.msk [vmem:[#allocation3 + $0x40] sm:$0xff] %vm820, 0.0
        %936 = vst.msk [vmem:[#allocation3 + $0x48] sm:$0xff] %vm820, 0.0
        %937 = vst.msk [vmem:[#allocation3 + $0x50] sm:$0xff] %vm820, 0.0
        %938 = vst.msk [vmem:[#allocation3 + $0x58] sm:$0xff] %vm820, 0.0
        %939 = vst.msk [vmem:[#allocation3 + $0x60] sm:$0xff] %vm820, 0.0
        %940 = vst.msk [vmem:[#allocation3 + $0x68] sm:$0xff] %vm820, 0.0
        %941 = vst.msk [vmem:[#allocation3 + $0x70] sm:$0xff] %vm820, 0.0
        %942 = vst.msk [vmem:[#allocation3 + $0x78] sm:$0xff] %vm820, 0.0
        %943 = vst.msk [vmem:[#allocation4] sm:$0xff] %vm820, 0.0
        %944 = vst.msk [vmem:[#allocation4 + $0x8] sm:$0xff] %vm820, 0.0
        %945 = vst.msk [vmem:[#allocation4 + $0x10] sm:$0xff] %vm820, 0.0
        %946 = vst.msk [vmem:[#allocation4 + $0x18] sm:$0xff] %vm820, 0.0
        %947 = vst.msk [vmem:[#allocation4 + $0x20] sm:$0xff] %vm820, 0.0
        %948 = vst.msk [vmem:[#allocation4 + $0x28] sm:$0xff] %vm820, 0.0
        %949 = vst.msk [vmem:[#allocation4 + $0x30] sm:$0xff] %vm820, 0.0
        %950 = vst.msk [vmem:[#allocation4 + $0x38] sm:$0xff] %vm820, 0.0
        %951 = vst.msk [vmem:[#allocation4 + $0x40] sm:$0xff] %vm820, 0.0
        %952 = vst.msk [vmem:[#allocation4 + $0x48] sm:$0xff] %vm820, 0.0
        %953 = vst.msk [vmem:[#allocation4 + $0x50] sm:$0xff] %vm820, 0.0
        %954 = vst.msk [vmem:[#allocation4 + $0x58] sm:$0xff] %vm820, 0.0
        %955 = vst.msk [vmem:[#allocation4 + $0x60] sm:$0xff] %vm820, 0.0
        %956 = vst.msk [vmem:[#allocation4 + $0x68] sm:$0xff] %vm820, 0.0
        %957 = vst.msk [vmem:[#allocation4 + $0x70] sm:$0xff] %vm820, 0.0
        %958 = vst.msk [vmem:[#allocation4 + $0x78] sm:$0xff] %vm820, 0.0
        %959 = vst.msk [vmem:[#allocation5] sm:$0xff] %vm820, 0.0
        %960 = vst.msk [vmem:[#allocation5 + $0x8] sm:$0xff] %vm820, 0.0
        %961 = vst.msk [vmem:[#allocation5 + $0x10] sm:$0xff] %vm820, 0.0
        %962 = vst.msk [vmem:[#allocation5 + $0x18] sm:$0xff] %vm820, 0.0
        %963 = vst.msk [vmem:[#allocation5 + $0x20] sm:$0xff] %vm820, 0.0
        %964 = vst.msk [vmem:[#allocation5 + $0x28] sm:$0xff] %vm820, 0.0
        %965 = vst.msk [vmem:[#allocation5 + $0x30] sm:$0xff] %vm820, 0.0
        %966 = vst.msk [vmem:[#allocation5 + $0x38] sm:$0xff] %vm820, 0.0
        %967 = vst.msk [vmem:[#allocation5 + $0x40] sm:$0xff] %vm820, 0.0
        %968 = vst.msk [vmem:[#allocation5 + $0x48] sm:$0xff] %vm820, 0.0
        %969 = vst.msk [vmem:[#allocation5 + $0x50] sm:$0xff] %vm820, 0.0
        %970 = vst.msk [vmem:[#allocation5 + $0x58] sm:$0xff] %vm820, 0.0
        %971 = vst.msk [vmem:[#allocation5 + $0x60] sm:$0xff] %vm820, 0.0
        %972 = vst.msk [vmem:[#allocation5 + $0x68] sm:$0xff] %vm820, 0.0
        %973 = vst.msk [vmem:[#allocation5 + $0x70] sm:$0xff] %vm820, 0.0
        %974 = vst.msk [vmem:[#allocation5 + $0x78] sm:$0xff] %vm820, 0.0
        %975 = vst.msk [vmem:[#allocation6] sm:$0xff] %vm820, 0.0
        %976 = vst.msk [vmem:[#allocation6 + $0x8] sm:$0xff] %vm820, 0.0
        %977 = vst.msk [vmem:[#allocation6 + $0x10] sm:$0xff] %vm820, 0.0
        %978 = vst.msk [vmem:[#allocation6 + $0x18] sm:$0xff] %vm820, 0.0
        %979 = vst.msk [vmem:[#allocation6 + $0x20] sm:$0xff] %vm820, 0.0
        %980 = vst.msk [vmem:[#allocation6 + $0x28] sm:$0xff] %vm820, 0.0
        %981 = vst.msk [vmem:[#allocation6 + $0x30] sm:$0xff] %vm820, 0.0
        %982 = vst.msk [vmem:[#allocation6 + $0x38] sm:$0xff] %vm820, 0.0
        %983 = vst.msk [vmem:[#allocation6 + $0x40] sm:$0xff] %vm820, 0.0
        %984 = vst.msk [vmem:[#allocation6 + $0x48] sm:$0xff] %vm820, 0.0
        %985 = vst.msk [vmem:[#allocation6 + $0x50] sm:$0xff] %vm820, 0.0
        %986 = vst.msk [vmem:[#allocation6 + $0x58] sm:$0xff] %vm820, 0.0
        %987 = vst.msk [vmem:[#allocation6 + $0x60] sm:$0xff] %vm820, 0.0
        %988 = vst.msk [vmem:[#allocation6 + $0x68] sm:$0xff] %vm820, 0.0
        %989 = vst.msk [vmem:[#allocation6 + $0x70] sm:$0xff] %vm820, 0.0
        %990 = vst.msk [vmem:[#allocation6 + $0x78] sm:$0xff] %vm820, 0.0
        %vm991 = vcmask 31744
        %992 = vst.msk [vmem:[#allocation7] sm:$0xff] %vm991, -1e+30
        %993 = vst.msk [vmem:[#allocation7 + $0x8] sm:$0xff] %vm991, -1e+30
        %994 = vst.msk [vmem:[#allocation7 + $0x10] sm:$0xff] %vm991, -1e+30
        %995 = vst.msk [vmem:[#allocation7 + $0x18] sm:$0xff] %vm991, -1e+30
        %996 = vst.msk [vmem:[#allocation7 + $0x20] sm:$0xff] %vm991, -1e+30
        %997 = vst.msk [vmem:[#allocation7 + $0x28] sm:$0xff] %vm991, -1e+30
        %998 = vst.msk [vmem:[#allocation7 + $0x30] sm:$0xff] %vm991, -1e+30
        %999 = vst.msk [vmem:[#allocation7 + $0x38] sm:$0xff] %vm991, -1e+30
        %1000 = vst.msk [vmem:[#allocation7 + $0x40] sm:$0xff] %vm991, -1e+30
        %1001 = vst.msk [vmem:[#allocation7 + $0x48] sm:$0xff] %vm991, -1e+30
        %1002 = vst.msk [vmem:[#allocation7 + $0x50] sm:$0xff] %vm991, -1e+30
        %1003 = vst.msk [vmem:[#allocation7 + $0x58] sm:$0xff] %vm991, -1e+30
        %1004 = vst.msk [vmem:[#allocation7 + $0x60] sm:$0xff] %vm991, -1e+30
        %1005 = vst.msk [vmem:[#allocation7 + $0x68] sm:$0xff] %vm991, -1e+30
        %1006 = vst.msk [vmem:[#allocation7 + $0x70] sm:$0xff] %vm991, -1e+30
        %1007 = vst.msk [vmem:[#allocation7 + $0x78] sm:$0xff] %vm991, -1e+30
      $region84: #{decoder_layer_forward.1} parent=79 // pred_fallthru
        _
      %v1008 = vpack.c.bf16 %v773, %v772
      %v1009 = vpack.c.bf16 %v775, %v774
      %v1010 = vpack.c.bf16 %v777, %v776
      %v1011 = vpack.c.bf16 %v779, %v778
      %v1012 = vpack.c.bf16 %v781, %v780
      %v1013 = vpack.c.bf16 %v783, %v782
      %v1014 = vpack.c.bf16 %v785, %v784
      %v1015 = vpack.c.bf16 %v787, %v786
      %v1016 = vld [vmem:[%s5] sm:$0xf]
      %v1017 = vld [vmem:[%s5 + $0x4] sm:$0xf]
      %v1018 = vld [vmem:[%s5 + $0x8] sm:$0xf]
      %v1019 = vld [vmem:[%s5 + $0xc] sm:$0xf]
      %v1020 = vld [vmem:[%s6] sm:$0x1]
      %v1022 = vperm.slane %v1020, 0
      %v1028 = vunpack.c.l.b16 %v1016
      %v1029 = vunpack.c.l.b16 %v1017
      %v1030 = vunpack.c.l.b16 %v1018
      %v1031 = vunpack.c.l.b16 %v1019
      %v1032 = vpack.c.b16 %v1029, %v1028
      %v1033 = vpack.c.b16 %v1031, %v1030
      %vm1036 = vcmask 261120
      %v1038 = vsel %vm1036, %v1008, 0
      %v1041 = vsel %vm1036, %v1009, 0
      %v1044 = vsel %vm1036, %v1010, 0
      %v1047 = vsel %vm1036, %v1011, 0
      %v1050 = vsel %vm1036, %v1012, 0
      %v1053 = vsel %vm1036, %v1013, 0
      %v1056 = vsel %vm1036, %v1014, 0
      %v1059 = vsel %vm1036, %v1015, 0
      %1061 = vmatpush.bf16.msra.mxu0 0
      %1062 = vmatpush.bf16.msra.mxu0 0
      %1063 = vmatpush.bf16.msra.mxu0 0
      %1064 = vmatpush.bf16.msra.mxu0 0
      %1065 = vmatpush.bf16.msra.mxu0 0
      %1066 = vmatpush.bf16.msra.mxu0 0
      %1067 = vmatpush.bf16.msra.mxu0 %v1033
      %1068 = vmatpush.bf16.msra.mxu0 %v1032
      %1069 = vmatmul.bf16.gmra.mxu0 %v1038
      %v1070 = vpop.f32.mrf.mxu0
      %v1071 = vadd.f32 %v1022, %v1070
      %v1072 = vpop.f32.mrf.mxu0
      %v1073 = vadd.f32 %v1022, %v1072
      %1074 = vmatmul.bf16.gmra.mxu0 %v1041
      %v1075 = vpop.f32.mrf.mxu0
      %v1076 = vadd.f32 %v1022, %v1075
      %v1077 = vpop.f32.mrf.mxu0
      %v1078 = vadd.f32 %v1022, %v1077
      %1079 = vmatmul.bf16.gmra.mxu0 %v1044
      %v1080 = vpop.f32.mrf.mxu0
      %v1081 = vadd.f32 %v1022, %v1080
      %v1082 = vpop.f32.mrf.mxu0
      %v1083 = vadd.f32 %v1022, %v1082
      %1084 = vmatmul.bf16.gmra.mxu0 %v1047
      %v1085 = vpop.f32.mrf.mxu0
      %v1086 = vadd.f32 %v1022, %v1085
      %v1087 = vpop.f32.mrf.mxu0
      %v1088 = vadd.f32 %v1022, %v1087
      %1089 = vmatmul.bf16.gmra.mxu0 %v1050
      %v1090 = vpop.f32.mrf.mxu0
      %v1091 = vadd.f32 %v1022, %v1090
      %v1092 = vpop.f32.mrf.mxu0
      %v1093 = vadd.f32 %v1022, %v1092
      %1094 = vmatmul.bf16.gmra.mxu0 %v1053
      %v1095 = vpop.f32.mrf.mxu0
      %v1096 = vadd.f32 %v1022, %v1095
      %v1097 = vpop.f32.mrf.mxu0
      %v1098 = vadd.f32 %v1022, %v1097
      %1099 = vmatmul.bf16.gmra.mxu0 %v1056
      %v1100 = vpop.f32.mrf.mxu0
      %v1101 = vadd.f32 %v1022, %v1100
      %v1102 = vpop.f32.mrf.mxu0
      %v1103 = vadd.f32 %v1022, %v1102
      %1104 = vmatmul.bf16.gmra.mxu0 %v1059
      %v1105 = vpop.f32.mrf.mxu0
      %v1106 = vadd.f32 %v1022, %v1105
      %v1107 = vpop.f32.mrf.mxu0
      %v1108 = vadd.f32 %v1022, %v1107
      %1109 = vdwg.mxu0
      %v1110 = vpack.c.bf16 %v1071, %v1071
      %v1111 = vpack.c.bf16 %v1073, %v1073
      %v1112 = vpack.c.bf16 %v1076, %v1076
      %v1113 = vpack.c.bf16 %v1078, %v1078
      %v1114 = vpack.c.bf16 %v1081, %v1081
      %v1115 = vpack.c.bf16 %v1083, %v1083
      %v1116 = vpack.c.bf16 %v1086, %v1086
      %v1117 = vpack.c.bf16 %v1088, %v1088
      %v1118 = vpack.c.bf16 %v1091, %v1091
      %v1119 = vpack.c.bf16 %v1093, %v1093
      %v1120 = vpack.c.bf16 %v1096, %v1096
      %v1121 = vpack.c.bf16 %v1098, %v1098
      %v1122 = vpack.c.bf16 %v1101, %v1101
      %v1123 = vpack.c.bf16 %v1103, %v1103
      %v1124 = vpack.c.bf16 %v1106, %v1106
      %v1125 = vpack.c.bf16 %v1108, %v1108
      %v1126 = vld [vmem:[#allocation2] sm:$0xf]
      %v1127 = vld [vmem:[#allocation2 + $0x4] sm:$0xf]
      %v1128 = vld [vmem:[#allocation2 + $0x8] sm:$0xf]
      %v1129 = vld [vmem:[#allocation2 + $0xc] sm:$0xf]
      %v1130 = vld [vmem:[#allocation2 + $0x10] sm:$0xf]
      %v1131 = vld [vmem:[#allocation2 + $0x14] sm:$0xf]
      %v1132 = vld [vmem:[#allocation2 + $0x18] sm:$0xf]
      %v1133 = vld [vmem:[#allocation2 + $0x1c] sm:$0xf]
      %v1134 = vld [vmem:[#allocation2 + $0x20] sm:$0xf]
      %v1135 = vld [vmem:[#allocation2 + $0x24] sm:$0xf]
      %v1136 = vld [vmem:[#allocation2 + $0x28] sm:$0xf]
      %v1137 = vld [vmem:[#allocation2 + $0x2c] sm:$0xf]
      %v1138 = vld [vmem:[#allocation2 + $0x30] sm:$0xf]
      %v1139 = vld [vmem:[#allocation2 + $0x34] sm:$0xf]
      %v1140 = vld [vmem:[#allocation2 + $0x38] sm:$0xf]
      %v1141 = vld [vmem:[#allocation2 + $0x3c] sm:$0xf]
      %v1142 = vld [vmem:[%s715] sm:$0xff]
      %v1143 = vld [vmem:[%s715 + $0x8] sm:$0xff]
      %v1144 = vld [vmem:[%s715 + $0x10] sm:$0xff]
      %v1145 = vld [vmem:[%s715 + $0x18] sm:$0xff]
      %v1146 = vld [vmem:[%s715 + $0x20] sm:$0xff]
      %v1147 = vld [vmem:[%s715 + $0x28] sm:$0xff]
      %v1148 = vld [vmem:[%s715 + $0x30] sm:$0xff]
      %v1149 = vld [vmem:[%s715 + $0x38] sm:$0xff]
      %v1150 = vunpack.c.0.s8 %v1142
      %v1151 = vunpack.c.1.s8 %v1142
      %v1152 = vunpack.c.2.s8 %v1142
      %v1153 = vunpack.c.3.s8 %v1142
      %v1154 = vunpack.c.0.s8 %v1143
      %v1155 = vunpack.c.1.s8 %v1143
      %v1156 = vunpack.c.2.s8 %v1143
      %v1157 = vunpack.c.3.s8 %v1143
      %v1158 = vunpack.c.0.s8 %v1144
      %v1159 = vunpack.c.1.s8 %v1144
      %v1160 = vunpack.c.2.s8 %v1144
      %v1161 = vunpack.c.3.s8 %v1144
      %v1162 = vunpack.c.0.s8 %v1145
      %v1163 = vunpack.c.1.s8 %v1145
      %v1164 = vunpack.c.2.s8 %v1145
      %v1165 = vunpack.c.3.s8 %v1145
      %v1166 = vunpack.c.0.s8 %v1146
      %v1167 = vunpack.c.1.s8 %v1146
      %v1168 = vunpack.c.2.s8 %v1146
      %v1169 = vunpack.c.3.s8 %v1146
      %v1170 = vunpack.c.0.s8 %v1147
      %v1171 = vunpack.c.1.s8 %v1147
      %v1172 = vunpack.c.2.s8 %v1147
      %v1173 = vunpack.c.3.s8 %v1147
      %v1174 = vunpack.c.0.s8 %v1148
      %v1175 = vunpack.c.1.s8 %v1148
      %v1176 = vunpack.c.2.s8 %v1148
      %v1177 = vunpack.c.3.s8 %v1148
      %v1178 = vunpack.c.0.s8 %v1149
      %v1179 = vunpack.c.1.s8 %v1149
      %v1180 = vunpack.c.2.s8 %v1149
      %v1181 = vunpack.c.3.s8 %v1149
      %v1182 = vcvt.s32.f32 %v1150
      %v1183 = vcvt.s32.f32 %v1151
      %v1184 = vcvt.s32.f32 %v1152
      %v1185 = vcvt.s32.f32 %v1153
      %v1186 = vcvt.s32.f32 %v1154
      %v1187 = vcvt.s32.f32 %v1155
      %v1188 = vcvt.s32.f32 %v1156
      %v1189 = vcvt.s32.f32 %v1157
      %v1190 = vcvt.s32.f32 %v1158
      %v1191 = vcvt.s32.f32 %v1159
      %v1192 = vcvt.s32.f32 %v1160
      %v1193 = vcvt.s32.f32 %v1161
      %v1194 = vcvt.s32.f32 %v1162
      %v1195 = vcvt.s32.f32 %v1163
      %v1196 = vcvt.s32.f32 %v1164
      %v1197 = vcvt.s32.f32 %v1165
      %v1198 = vcvt.s32.f32 %v1166
      %v1199 = vcvt.s32.f32 %v1167
      %v1200 = vcvt.s32.f32 %v1168
      %v1201 = vcvt.s32.f32 %v1169
      %v1202 = vcvt.s32.f32 %v1170
      %v1203 = vcvt.s32.f32 %v1171
      %v1204 = vcvt.s32.f32 %v1172
      %v1205 = vcvt.s32.f32 %v1173
      %v1206 = vcvt.s32.f32 %v1174
      %v1207 = vcvt.s32.f32 %v1175
      %v1208 = vcvt.s32.f32 %v1176
      %v1209 = vcvt.s32.f32 %v1177
      %v1210 = vcvt.s32.f32 %v1178
      %v1211 = vcvt.s32.f32 %v1179
      %v1212 = vcvt.s32.f32 %v1180
      %v1213 = vcvt.s32.f32 %v1181
      %v1214 = vadd.f32 %v1182, %v1198
      %v1215 = vadd.f32 %v1183, %v1199
      %v1216 = vadd.f32 %v1184, %v1200
      %v1217 = vadd.f32 %v1185, %v1201
      %v1218 = vadd.f32 %v1186, %v1202
      %v1219 = vadd.f32 %v1187, %v1203
      %v1220 = vadd.f32 %v1188, %v1204
      %v1221 = vadd.f32 %v1189, %v1205
      %v1222 = vadd.f32 %v1190, %v1206
      %v1223 = vadd.f32 %v1191, %v1207
      %v1224 = vadd.f32 %v1192, %v1208
      %v1225 = vadd.f32 %v1193, %v1209
      %v1226 = vadd.f32 %v1194, %v1210
      %v1227 = vadd.f32 %v1195, %v1211
      %v1228 = vadd.f32 %v1196, %v1212
      %v1229 = vadd.f32 %v1197, %v1213
      %vm1230 = vcmp.gt.f32.partialorder %v1214, 0.0
      %vm1231 = vcmp.gt.f32.partialorder %v1215, 0.0
      %vm1232 = vcmp.gt.f32.partialorder %v1216, 0.0
      %vm1233 = vcmp.gt.f32.partialorder %v1217, 0.0
      %vm1234 = vcmp.gt.f32.partialorder %v1218, 0.0
      %vm1235 = vcmp.gt.f32.partialorder %v1219, 0.0
      %vm1236 = vcmp.gt.f32.partialorder %v1220, 0.0
      %vm1237 = vcmp.gt.f32.partialorder %v1221, 0.0
      %vm1238 = vcmp.gt.f32.partialorder %v1222, 0.0
      %vm1239 = vcmp.gt.f32.partialorder %v1223, 0.0
      %vm1240 = vcmp.gt.f32.partialorder %v1224, 0.0
      %vm1241 = vcmp.gt.f32.partialorder %v1225, 0.0
      %vm1242 = vcmp.gt.f32.partialorder %v1226, 0.0
      %vm1243 = vcmp.gt.f32.partialorder %v1227, 0.0
      %vm1244 = vcmp.gt.f32.partialorder %v1228, 0.0
      %vm1245 = vcmp.gt.f32.partialorder %v1229, 0.0
      %v1262 = vunpack.c.l.b16 %v1126
      %v1263 = vunpack.c.l.b16 %v1127
      %v1264 = vunpack.c.l.b16 %v1128
      %v1265 = vunpack.c.l.b16 %v1129
      %v1266 = vunpack.c.l.b16 %v1130
      %v1267 = vunpack.c.l.b16 %v1131
      %v1268 = vunpack.c.l.b16 %v1132
      %v1269 = vunpack.c.l.b16 %v1133
      %v1270 = vunpack.c.l.b16 %v1134
      %v1271 = vunpack.c.l.b16 %v1135
      %v1272 = vunpack.c.l.b16 %v1136
      %v1273 = vunpack.c.l.b16 %v1137
      %v1274 = vunpack.c.l.b16 %v1138
      %v1275 = vunpack.c.l.b16 %v1139
      %v1276 = vunpack.c.l.b16 %v1140
      %v1277 = vunpack.c.l.b16 %v1141
      %v1278 = vpack.c.b16 %v1263, %v1262
      %v1279 = vpack.c.b16 %v1265, %v1264
      %v1280 = vpack.c.b16 %v1267, %v1266
      %v1281 = vpack.c.b16 %v1269, %v1268
      %v1282 = vpack.c.b16 %v1271, %v1270
      %v1283 = vpack.c.b16 %v1273, %v1272
      %v1284 = vpack.c.b16 %v1275, %v1274
      %v1285 = vpack.c.b16 %v1277, %v1276
      %v1302 = vunpack.c.l.b16 %v1110
      %v1303 = vunpack.c.l.b16 %v1111
      %v1304 = vunpack.c.l.b16 %v1112
      %v1305 = vunpack.c.l.b16 %v1113
      %v1306 = vunpack.c.l.b16 %v1114
      %v1307 = vunpack.c.l.b16 %v1115
      %v1308 = vunpack.c.l.b16 %v1116
      %v1309 = vunpack.c.l.b16 %v1117
      %v1310 = vunpack.c.l.b16 %v1118
      %v1311 = vunpack.c.l.b16 %v1119
      %v1312 = vunpack.c.l.b16 %v1120
      %v1313 = vunpack.c.l.b16 %v1121
      %v1314 = vunpack.c.l.b16 %v1122
      %v1315 = vunpack.c.l.b16 %v1123
      %v1316 = vunpack.c.l.b16 %v1124
      %v1317 = vunpack.c.l.b16 %v1125
      %v1318 = vpack.c.b16 %v1303, %v1302
      %v1319 = vpack.c.b16 %v1305, %v1304
      %v1320 = vpack.c.b16 %v1307, %v1306
      %v1321 = vpack.c.b16 %v1309, %v1308
      %v1322 = vpack.c.b16 %v1311, %v1310
      %v1323 = vpack.c.b16 %v1313, %v1312
      %v1324 = vpack.c.b16 %v1315, %v1314
      %v1325 = vpack.c.b16 %v1317, %v1316
      %vm1326 = vcmask 64512
      %v1328 = vsel %vm1326, %v1278, 0
      %v1331 = vsel %vm1326, %v1279, 0
      %v1334 = vsel %vm1326, %v1280, 0
      %v1337 = vsel %vm1326, %v1281, 0
      %v1340 = vsel %vm1326, %v1282, 0
      %v1343 = vsel %vm1326, %v1283, 0
      %v1346 = vsel %vm1326, %v1284, 0
      %v1349 = vsel %vm1326, %v1285, 0
      %v1352 = vsel %vm1326, %v1318, 0
      %v1355 = vsel %vm1326, %v1319, 0
      %v1358 = vsel %vm1326, %v1320, 0
      %v1361 = vsel %vm1326, %v1321, 0
      %v1364 = vsel %vm1326, %v1322, 0
      %v1367 = vsel %vm1326, %v1323, 0
      %v1370 = vsel %vm1326, %v1324, 0
      %v1373 = vsel %vm1326, %v1325, 0
      %1375 = vmatpush.bf16.xpose.msra.mxu0 %v1373
      %1376 = vmatpush.bf16.xpose.msra.mxu0 %v1370
      %1377 = vmatpush.bf16.xpose.msra.mxu0 %v1367
      %1378 = vmatpush.bf16.xpose.msra.mxu0 %v1364
      %1379 = vmatpush.bf16.xpose.msra.mxu0 %v1361
      %1380 = vmatpush.bf16.xpose.msra.mxu0 %v1358
      %1381 = vmatpush.bf16.xpose.msra.mxu0 %v1355
      %1382 = vmatpush.bf16.xpose.msra.mxu0 %v1352
      %1383 = vmatmul.bf16.gmra.mxu0 %v1328
      %v1384 = vpop.f32.mrf.mxu0
      %v1385 = vadd.f32 0.0, %v1384
      %v1386 = vpop.f32.mrf.mxu0
      %v1387 = vadd.f32 0.0, %v1386
      %1388 = vmatmul.bf16.gmra.mxu0 %v1331
      %v1389 = vpop.f32.mrf.mxu0
      %v1390 = vadd.f32 0.0, %v1389
      %v1391 = vpop.f32.mrf.mxu0
      %v1392 = vadd.f32 0.0, %v1391
      %1393 = vmatmul.bf16.gmra.mxu0 %v1334
      %v1394 = vpop.f32.mrf.mxu0
      %v1395 = vadd.f32 0.0, %v1394
      %v1396 = vpop.f32.mrf.mxu0
      %v1397 = vadd.f32 0.0, %v1396
      %1398 = vmatmul.bf16.gmra.mxu0 %v1337
      %v1399 = vpop.f32.mrf.mxu0
      %v1400 = vadd.f32 0.0, %v1399
      %v1401 = vpop.f32.mrf.mxu0
      %v1402 = vadd.f32 0.0, %v1401
      %1403 = vmatmul.bf16.gmra.mxu0 %v1340
      %v1404 = vpop.f32.mrf.mxu0
      %v1405 = vadd.f32 0.0, %v1404
      %v1406 = vpop.f32.mrf.mxu0
      %v1407 = vadd.f32 0.0, %v1406
      %1408 = vmatmul.bf16.gmra.mxu0 %v1343
      %v1409 = vpop.f32.mrf.mxu0
      %v1410 = vadd.f32 0.0, %v1409
      %v1411 = vpop.f32.mrf.mxu0
      %v1412 = vadd.f32 0.0, %v1411
      %1413 = vmatmul.bf16.gmra.mxu0 %v1346
      %v1414 = vpop.f32.mrf.mxu0
      %v1415 = vadd.f32 0.0, %v1414
      %v1416 = vpop.f32.mrf.mxu0
      %v1417 = vadd.f32 0.0, %v1416
      %1418 = vmatmul.bf16.gmra.mxu0 %v1349
      %v1419 = vpop.f32.mrf.mxu0
      %v1420 = vadd.f32 0.0, %v1419
      %v1421 = vpop.f32.mrf.mxu0
      %v1422 = vadd.f32 0.0, %v1421
      %1423 = vdwg.mxu0
      %v1424 = vld [vmem:[#allocation7] sm:$0xff]
      %v1425 = vld [vmem:[#allocation7 + $0x8] sm:$0xff]
      %v1426 = vld [vmem:[#allocation7 + $0x10] sm:$0xff]
      %v1427 = vld [vmem:[#allocation7 + $0x18] sm:$0xff]
      %v1428 = vld [vmem:[#allocation7 + $0x20] sm:$0xff]
      %v1429 = vld [vmem:[#allocation7 + $0x28] sm:$0xff]
      %v1430 = vld [vmem:[#allocation7 + $0x30] sm:$0xff]
      %v1431 = vld [vmem:[#allocation7 + $0x38] sm:$0xff]
      %v1432 = vld [vmem:[#allocation7 + $0x40] sm:$0xff]
      %v1433 = vld [vmem:[#allocation7 + $0x48] sm:$0xff]
      %v1434 = vld [vmem:[#allocation7 + $0x50] sm:$0xff]
      %v1435 = vld [vmem:[#allocation7 + $0x58] sm:$0xff]
      %v1436 = vld [vmem:[#allocation7 + $0x60] sm:$0xff]
      %v1437 = vld [vmem:[#allocation7 + $0x68] sm:$0xff]
      %v1438 = vld [vmem:[#allocation7 + $0x70] sm:$0xff]
      %v1439 = vld [vmem:[#allocation7 + $0x78] sm:$0xff]
      %v1440 = vsel %vm1230, %v1385, -1e+30
      %v1441 = vsel %vm1231, %v1387, -1e+30
      %v1442 = vsel %vm1232, %v1390, -1e+30
      %v1443 = vsel %vm1233, %v1392, -1e+30
      %v1444 = vsel %vm1234, %v1395, -1e+30
      %v1445 = vsel %vm1235, %v1397, -1e+30
      %v1446 = vsel %vm1236, %v1400, -1e+30
      %v1447 = vsel %vm1237, %v1402, -1e+30
      %v1448 = vsel %vm1238, %v1405, -1e+30
      %v1449 = vsel %vm1239, %v1407, -1e+30
      %v1450 = vsel %vm1240, %v1410, -1e+30
      %v1451 = vsel %vm1241, %v1412, -1e+30
      %v1452 = vsel %vm1242, %v1415, -1e+30
      %v1453 = vsel %vm1243, %v1417, -1e+30
      %v1454 = vsel %vm1244, %v1420, -1e+30
      %v1455 = vsel %vm1245, %v1422, -1e+30
      %1456 = vmax.xlane.f32.xlu0 %v1440
      %v1457 = vpop.xlane.xlu0 %1456
      %1458 = vmax.xlane.f32.xlu0 %v1441
      %v1459 = vpop.xlane.xlu0 %1458
      %1460 = vmax.xlane.f32.xlu0 %v1442
      %v1461 = vpop.xlane.xlu0 %1460
      %1462 = vmax.xlane.f32.xlu0 %v1443
      %v1463 = vpop.xlane.xlu0 %1462
      %1464 = vmax.xlane.f32.xlu0 %v1444
      %v1465 = vpop.xlane.xlu0 %1464
      %1466 = vmax.xlane.f32.xlu0 %v1445
      %v1467 = vpop.xlane.xlu0 %1466
      %1468 = vmax.xlane.f32.xlu0 %v1446
      %v1469 = vpop.xlane.xlu0 %1468
      %1470 = vmax.xlane.f32.xlu0 %v1447
      %v1471 = vpop.xlane.xlu0 %1470
      %1472 = vmax.xlane.f32.xlu0 %v1448
      %v1473 = vpop.xlane.xlu0 %1472
      %1474 = vmax.xlane.f32.xlu0 %v1449
      %v1475 = vpop.xlane.xlu0 %1474
      %1476 = vmax.xlane.f32.xlu0 %v1450
      %v1477 = vpop.xlane.xlu0 %1476
      %1478 = vmax.xlane.f32.xlu0 %v1451
      %v1479 = vpop.xlane.xlu0 %1478
      %1480 = vmax.xlane.f32.xlu0 %v1452
      %v1481 = vpop.xlane.xlu0 %1480
      %1482 = vmax.xlane.f32.xlu0 %v1453
      %v1483 = vpop.xlane.xlu0 %1482
      %1484 = vmax.xlane.f32.xlu0 %v1454
      %v1485 = vpop.xlane.xlu0 %1484
      %1486 = vmax.xlane.f32.xlu0 %v1455
      %v1487 = vpop.xlane.xlu0 %1486
      %v1488 = vmax.f32 %v1424, %v1457
      %v1489 = vmax.f32 %v1425, %v1459
      %v1490 = vmax.f32 %v1426, %v1461
      %v1491 = vmax.f32 %v1427, %v1463
      %v1492 = vmax.f32 %v1428, %v1465
      %v1493 = vmax.f32 %v1429, %v1467
      %v1494 = vmax.f32 %v1430, %v1469
      %v1495 = vmax.f32 %v1431, %v1471
      %v1496 = vmax.f32 %v1432, %v1473
      %v1497 = vmax.f32 %v1433, %v1475
      %v1498 = vmax.f32 %v1434, %v1477
      %v1499 = vmax.f32 %v1435, %v1479
      %v1500 = vmax.f32 %v1436, %v1481
      %v1501 = vmax.f32 %v1437, %v1483
      %v1502 = vmax.f32 %v1438, %v1485
      %v1503 = vmax.f32 %v1439, %v1487
      %v1504 = vsub.f32 %v1424, %v1488
      %v1505 = vsub.f32 %v1425, %v1489
      %v1506 = vsub.f32 %v1426, %v1490
      %v1507 = vsub.f32 %v1427, %v1491
      %v1508 = vsub.f32 %v1428, %v1492
      %v1509 = vsub.f32 %v1429, %v1493
      %v1510 = vsub.f32 %v1430, %v1494
      %v1511 = vsub.f32 %v1431, %v1495
      %v1512 = vsub.f32 %v1432, %v1496
      %v1513 = vsub.f32 %v1433, %v1497
      %v1514 = vsub.f32 %v1434, %v1498
      %v1515 = vsub.f32 %v1435, %v1499
      %v1516 = vsub.f32 %v1436, %v1500
      %v1517 = vsub.f32 %v1437, %v1501
      %v1518 = vsub.f32 %v1438, %v1502
      %v1519 = vsub.f32 %v1439, %v1503
      %v1520 = vmul.f32 %v1504, 1.442695
      %v1521 = vpow.pop %v1520
      %v1522 = vmul.f32 %v1505, 1.442695
      %v1523 = vpow.pop %v1522
      %v1524 = vmul.f32 %v1506, 1.442695
      %v1525 = vpow.pop %v1524
      %v1526 = vmul.f32 %v1507, 1.442695
      %v1527 = vpow.pop %v1526
      %v1528 = vmul.f32 %v1508, 1.442695
      %v1529 = vpow.pop %v1528
      %v1530 = vmul.f32 %v1509, 1.442695
      %v1531 = vpow.pop %v1530
      %v1532 = vmul.f32 %v1510, 1.442695
      %v1533 = vpow.pop %v1532
      %v1534 = vmul.f32 %v1511, 1.442695
      %v1535 = vpow.pop %v1534
      %v1536 = vmul.f32 %v1512, 1.442695
      %v1537 = vpow.pop %v1536
      %v1538 = vmul.f32 %v1513, 1.442695
      %v1539 = vpow.pop %v1538
      %v1540 = vmul.f32 %v1514, 1.442695
      %v1541 = vpow.pop %v1540
      %v1542 = vmul.f32 %v1515, 1.442695
      %v1543 = vpow.pop %v1542
      %v1544 = vmul.f32 %v1516, 1.442695
      %v1545 = vpow.pop %v1544
      %v1546 = vmul.f32 %v1517, 1.442695
      %v1547 = vpow.pop %v1546
      %v1548 = vmul.f32 %v1518, 1.442695
      %v1549 = vpow.pop %v1548
      %v1550 = vmul.f32 %v1519, 1.442695
      %v1551 = vpow.pop %v1550
      %1553 = vset.pattern.permute.xlu0 0
      %1554 = vperm.xlu0 %1553, %v1488
      %v1555 = vpop.permute.xlu0 %1554
      %1558 = vset.pattern.permute.xlu0 0
      %1559 = vperm.xlu0 %1558, %v1489
      %v1560 = vpop.permute.xlu0 %1559
      %1563 = vset.pattern.permute.xlu0 0
      %1564 = vperm.xlu0 %1563, %v1490
      %v1565 = vpop.permute.xlu0 %1564
      %1568 = vset.pattern.permute.xlu0 0
      %1569 = vperm.xlu0 %1568, %v1491
      %v1570 = vpop.permute.xlu0 %1569
      %1573 = vset.pattern.permute.xlu0 0
      %1574 = vperm.xlu0 %1573, %v1492
      %v1575 = vpop.permute.xlu0 %1574
      %1578 = vset.pattern.permute.xlu0 0
      %1579 = vperm.xlu0 %1578, %v1493
      %v1580 = vpop.permute.xlu0 %1579
      %1583 = vset.pattern.permute.xlu0 0
      %1584 = vperm.xlu0 %1583, %v1494
      %v1585 = vpop.permute.xlu0 %1584
      %1588 = vset.pattern.permute.xlu0 0
      %1589 = vperm.xlu0 %1588, %v1495
      %v1590 = vpop.permute.xlu0 %1589
      %1593 = vset.pattern.permute.xlu0 0
      %1594 = vperm.xlu0 %1593, %v1496
      %v1595 = vpop.permute.xlu0 %1594
      %1598 = vset.pattern.permute.xlu0 0
      %1599 = vperm.xlu0 %1598, %v1497
      %v1600 = vpop.permute.xlu0 %1599
      %1603 = vset.pattern.permute.xlu0 0
      %1604 = vperm.xlu0 %1603, %v1498
      %v1605 = vpop.permute.xlu0 %1604
      %1608 = vset.pattern.permute.xlu0 0
      %1609 = vperm.xlu0 %1608, %v1499
      %v1610 = vpop.permute.xlu0 %1609
      %1613 = vset.pattern.permute.xlu0 0
      %1614 = vperm.xlu0 %1613, %v1500
      %v1615 = vpop.permute.xlu0 %1614
      %1618 = vset.pattern.permute.xlu0 0
      %1619 = vperm.xlu0 %1618, %v1501
      %v1620 = vpop.permute.xlu0 %1619
      %1623 = vset.pattern.permute.xlu0 0
      %1624 = vperm.xlu0 %1623, %v1502
      %v1625 = vpop.permute.xlu0 %1624
      %1628 = vset.pattern.permute.xlu0 0
      %1629 = vperm.xlu0 %1628, %v1503
      %v1630 = vpop.permute.xlu0 %1629
      %v1632 = vsub.f32 %v1385, %v1555
      %v1633 = vsub.f32 %v1387, %v1560
      %v1634 = vsub.f32 %v1390, %v1565
      %v1635 = vsub.f32 %v1392, %v1570
      %v1636 = vsub.f32 %v1395, %v1575
      %v1637 = vsub.f32 %v1397, %v1580
      %v1638 = vsub.f32 %v1400, %v1585
      %v1639 = vsub.f32 %v1402, %v1590
      %v1640 = vsub.f32 %v1405, %v1595
      %v1641 = vsub.f32 %v1407, %v1600
      %v1642 = vsub.f32 %v1410, %v1605
      %v1643 = vsub.f32 %v1412, %v1610
      %v1644 = vsub.f32 %v1415, %v1615
      %v1645 = vsub.f32 %v1417, %v1620
      %v1646 = vsub.f32 %v1420, %v1625
      %v1647 = vsub.f32 %v1422, %v1630
      %v1648 = vmin.f32 %v1632, 0.0
      %v1649 = vmin.f32 %v1633, 0.0
      %v1650 = vmin.f32 %v1634, 0.0
      %v1651 = vmin.f32 %v1635, 0.0
      %v1652 = vmin.f32 %v1636, 0.0
      %v1653 = vmin.f32 %v1637, 0.0
      %v1654 = vmin.f32 %v1638, 0.0
      %v1655 = vmin.f32 %v1639, 0.0
      %v1656 = vmin.f32 %v1640, 0.0
      %v1657 = vmin.f32 %v1641, 0.0
      %v1658 = vmin.f32 %v1642, 0.0
      %v1659 = vmin.f32 %v1643, 0.0
      %v1660 = vmin.f32 %v1644, 0.0
      %v1661 = vmin.f32 %v1645, 0.0
      %v1662 = vmin.f32 %v1646, 0.0
      %v1663 = vmin.f32 %v1647, 0.0
      %v1664 = vmul.f32 %v1648, 1.442695
      %v1665 = vpow.pop %v1664
      %v1666 = vmul.f32 %v1649, 1.442695
      %v1667 = vpow.pop %v1666
      %v1668 = vmul.f32 %v1650, 1.442695
      %v1669 = vpow.pop %v1668
      %v1670 = vmul.f32 %v1651, 1.442695
      %v1671 = vpow.pop %v1670
      %v1672 = vmul.f32 %v1652, 1.442695
      %v1673 = vpow.pop %v1672
      %v1674 = vmul.f32 %v1653, 1.442695
      %v1675 = vpow.pop %v1674
      %v1676 = vmul.f32 %v1654, 1.442695
      %v1677 = vpow.pop %v1676
      %v1678 = vmul.f32 %v1655, 1.442695
      %v1679 = vpow.pop %v1678
      %v1680 = vmul.f32 %v1656, 1.442695
      %v1681 = vpow.pop %v1680
      %v1682 = vmul.f32 %v1657, 1.442695
      %v1683 = vpow.pop %v1682
      %v1684 = vmul.f32 %v1658, 1.442695
      %v1685 = vpow.pop %v1684
      %v1686 = vmul.f32 %v1659, 1.442695
      %v1687 = vpow.pop %v1686
      %v1688 = vmul.f32 %v1660, 1.442695
      %v1689 = vpow.pop %v1688
      %v1690 = vmul.f32 %v1661, 1.442695
      %v1691 = vpow.pop %v1690
      %v1692 = vmul.f32 %v1662, 1.442695
      %v1693 = vpow.pop %v1692
      %v1694 = vmul.f32 %v1663, 1.442695
      %v1695 = vpow.pop %v1694
      %v1696 = vmul.f32 %v1665, %v1182
      %v1697 = vmul.f32 %v1667, %v1183
      %v1698 = vmul.f32 %v1669, %v1184
      %v1699 = vmul.f32 %v1671, %v1185
      %v1700 = vmul.f32 %v1673, %v1186
      %v1701 = vmul.f32 %v1675, %v1187
      %v1702 = vmul.f32 %v1677, %v1188
      %v1703 = vmul.f32 %v1679, %v1189
      %v1704 = vmul.f32 %v1681, %v1190
      %v1705 = vmul.f32 %v1683, %v1191
      %v1706 = vmul.f32 %v1685, %v1192
      %v1707 = vmul.f32 %v1687, %v1193
      %v1708 = vmul.f32 %v1689, %v1194
      %v1709 = vmul.f32 %v1691, %v1195
      %v1710 = vmul.f32 %v1693, %v1196
      %v1711 = vmul.f32 %v1695, %v1197
      %v1712 = vmul.f32 %v1665, %v1198
      %v1713 = vmul.f32 %v1667, %v1199
      %v1714 = vmul.f32 %v1669, %v1200
      %v1715 = vmul.f32 %v1671, %v1201
      %v1716 = vmul.f32 %v1673, %v1202
      %v1717 = vmul.f32 %v1675, %v1203
      %v1718 = vmul.f32 %v1677, %v1204
      %v1719 = vmul.f32 %v1679, %v1205
      %v1720 = vmul.f32 %v1681, %v1206
      %v1721 = vmul.f32 %v1683, %v1207
      %v1722 = vmul.f32 %v1685, %v1208
      %v1723 = vmul.f32 %v1687, %v1209
      %v1724 = vmul.f32 %v1689, %v1210
      %v1725 = vmul.f32 %v1691, %v1211
      %v1726 = vmul.f32 %v1693, %v1212
      %v1727 = vmul.f32 %v1695, %v1213
      %v1728 = vld [vmem:[#allocation5] sm:$0xff]
      %v1729 = vld [vmem:[#allocation5 + $0x8] sm:$0xff]
      %v1730 = vld [vmem:[#allocation5 + $0x10] sm:$0xff]
      %v1731 = vld [vmem:[#allocation5 + $0x18] sm:$0xff]
      %v1732 = vld [vmem:[#allocation5 + $0x20] sm:$0xff]
      %v1733 = vld [vmem:[#allocation5 + $0x28] sm:$0xff]
      %v1734 = vld [vmem:[#allocation5 + $0x30] sm:$0xff]
      %v1735 = vld [vmem:[#allocation5 + $0x38] sm:$0xff]
      %v1736 = vld [vmem:[#allocation5 + $0x40] sm:$0xff]
      %v1737 = vld [vmem:[#allocation5 + $0x48] sm:$0xff]
      %v1738 = vld [vmem:[#allocation5 + $0x50] sm:$0xff]
      %v1739 = vld [vmem:[#allocation5 + $0x58] sm:$0xff]
      %v1740 = vld [vmem:[#allocation5 + $0x60] sm:$0xff]
      %v1741 = vld [vmem:[#allocation5 + $0x68] sm:$0xff]
      %v1742 = vld [vmem:[#allocation5 + $0x70] sm:$0xff]
      %v1743 = vld [vmem:[#allocation5 + $0x78] sm:$0xff]
      %1745 = vset.pattern.permute.xlu0 0
      %1746 = vperm.xlu0 %1745, %v1521
      %v1747 = vpop.permute.xlu0 %1746
      %1750 = vset.pattern.permute.xlu0 0
      %1751 = vperm.xlu0 %1750, %v1523
      %v1752 = vpop.permute.xlu0 %1751
      %1755 = vset.pattern.permute.xlu0 0
      %1756 = vperm.xlu0 %1755, %v1525
      %v1757 = vpop.permute.xlu0 %1756
      %1760 = vset.pattern.permute.xlu0 0
      %1761 = vperm.xlu0 %1760, %v1527
      %v1762 = vpop.permute.xlu0 %1761
      %1765 = vset.pattern.permute.xlu0 0
      %1766 = vperm.xlu0 %1765, %v1529
      %v1767 = vpop.permute.xlu0 %1766
      %1770 = vset.pattern.permute.xlu0 0
      %1771 = vperm.xlu0 %1770, %v1531
      %v1772 = vpop.permute.xlu0 %1771
      %1775 = vset.pattern.permute.xlu0 0
      %1776 = vperm.xlu0 %1775, %v1533
      %v1777 = vpop.permute.xlu0 %1776
      %1780 = vset.pattern.permute.xlu0 0
      %1781 = vperm.xlu0 %1780, %v1535
      %v1782 = vpop.permute.xlu0 %1781
      %1785 = vset.pattern.permute.xlu0 0
      %1786 = vperm.xlu0 %1785, %v1537
      %v1787 = vpop.permute.xlu0 %1786
      %1790 = vset.pattern.permute.xlu0 0
      %1791 = vperm.xlu0 %1790, %v1539
      %v1792 = vpop.permute.xlu0 %1791
      %1795 = vset.pattern.permute.xlu0 0
      %1796 = vperm.xlu0 %1795, %v1541
      %v1797 = vpop.permute.xlu0 %1796
      %1800 = vset.pattern.permute.xlu0 0
      %1801 = vperm.xlu0 %1800, %v1543
      %v1802 = vpop.permute.xlu0 %1801
      %1805 = vset.pattern.permute.xlu0 0
      %1806 = vperm.xlu0 %1805, %v1545
      %v1807 = vpop.permute.xlu0 %1806
      %1810 = vset.pattern.permute.xlu0 0
      %1811 = vperm.xlu0 %1810, %v1547
      %v1812 = vpop.permute.xlu0 %1811
      %1815 = vset.pattern.permute.xlu0 0
      %1816 = vperm.xlu0 %1815, %v1549
      %v1817 = vpop.permute.xlu0 %1816
      %1820 = vset.pattern.permute.xlu0 0
      %1821 = vperm.xlu0 %1820, %v1551
      %v1822 = vpop.permute.xlu0 %1821
      %v1824 = vmul.f32 %v1747, %v1728
      %v1825 = vmul.f32 %v1752, %v1729
      %v1826 = vmul.f32 %v1757, %v1730
      %v1827 = vmul.f32 %v1762, %v1731
      %v1828 = vmul.f32 %v1767, %v1732
      %v1829 = vmul.f32 %v1772, %v1733
      %v1830 = vmul.f32 %v1777, %v1734
      %v1831 = vmul.f32 %v1782, %v1735
      %v1832 = vmul.f32 %v1787, %v1736
      %v1833 = vmul.f32 %v1792, %v1737
      %v1834 = vmul.f32 %v1797, %v1738
      %v1835 = vmul.f32 %v1802, %v1739
      %v1836 = vmul.f32 %v1807, %v1740
      %v1837 = vmul.f32 %v1812, %v1741
      %v1838 = vmul.f32 %v1817, %v1742
      %v1839 = vmul.f32 %v1822, %v1743
      %1840 = vadd.xlane.f32.xlu0 %v1696
      %v1841 = vpop.xlane.xlu0 %1840
      %1842 = vadd.xlane.f32.xlu0 %v1697
      %v1843 = vpop.xlane.xlu0 %1842
      %1844 = vadd.xlane.f32.xlu0 %v1698
      %v1845 = vpop.xlane.xlu0 %1844
      %1846 = vadd.xlane.f32.xlu0 %v1699
      %v1847 = vpop.xlane.xlu0 %1846
      %1848 = vadd.xlane.f32.xlu0 %v1700
      %v1849 = vpop.xlane.xlu0 %1848
      %1850 = vadd.xlane.f32.xlu0 %v1701
      %v1851 = vpop.xlane.xlu0 %1850
      %1852 = vadd.xlane.f32.xlu0 %v1702
      %v1853 = vpop.xlane.xlu0 %1852
      %1854 = vadd.xlane.f32.xlu0 %v1703
      %v1855 = vpop.xlane.xlu0 %1854
      %1856 = vadd.xlane.f32.xlu0 %v1704
      %v1857 = vpop.xlane.xlu0 %1856
      %1858 = vadd.xlane.f32.xlu0 %v1705
      %v1859 = vpop.xlane.xlu0 %1858
      %1860 = vadd.xlane.f32.xlu0 %v1706
      %v1861 = vpop.xlane.xlu0 %1860
      %1862 = vadd.xlane.f32.xlu0 %v1707
      %v1863 = vpop.xlane.xlu0 %1862
      %1864 = vadd.xlane.f32.xlu0 %v1708
      %v1865 = vpop.xlane.xlu0 %1864
      %1866 = vadd.xlane.f32.xlu0 %v1709
      %v1867 = vpop.xlane.xlu0 %1866
      %1868 = vadd.xlane.f32.xlu0 %v1710
      %v1869 = vpop.xlane.xlu0 %1868
      %1870 = vadd.xlane.f32.xlu0 %v1711
      %v1871 = vpop.xlane.xlu0 %1870
      %v1872 = vadd.f32 %v1824, %v1841
      %v1873 = vadd.f32 %v1825, %v1843
      %v1874 = vadd.f32 %v1826, %v1845
      %v1875 = vadd.f32 %v1827, %v1847
      %v1876 = vadd.f32 %v1828, %v1849
      %v1877 = vadd.f32 %v1829, %v1851
      %v1878 = vadd.f32 %v1830, %v1853
      %v1879 = vadd.f32 %v1831, %v1855
      %v1880 = vadd.f32 %v1832, %v1857
      %v1881 = vadd.f32 %v1833, %v1859
      %v1882 = vadd.f32 %v1834, %v1861
      %v1883 = vadd.f32 %v1835, %v1863
      %v1884 = vadd.f32 %v1836, %v1865
      %v1885 = vadd.f32 %v1837, %v1867
      %v1886 = vadd.f32 %v1838, %v1869
      %v1887 = vadd.f32 %v1839, %v1871
      %1888 = vst.msk [vmem:[#allocation5] sm:$0xff] %vm1326, %v1872
      %1889 = vst.msk [vmem:[#allocation5 + $0x8] sm:$0xff] %vm1326, %v1873
      %1890 = vst.msk [vmem:[#allocation5 + $0x10] sm:$0xff] %vm1326, %v1874
      %1891 = vst.msk [vmem:[#allocation5 + $0x18] sm:$0xff] %vm1326, %v1875
      %1892 = vst.msk [vmem:[#allocation5 + $0x20] sm:$0xff] %vm1326, %v1876
      %1893 = vst.msk [vmem:[#allocation5 + $0x28] sm:$0xff] %vm1326, %v1877
      %1894 = vst.msk [vmem:[#allocation5 + $0x30] sm:$0xff] %vm1326, %v1878
      %1895 = vst.msk [vmem:[#allocation5 + $0x38] sm:$0xff] %vm1326, %v1879
      %1896 = vst.msk [vmem:[#allocation5 + $0x40] sm:$0xff] %vm1326, %v1880
      %1897 = vst.msk [vmem:[#allocation5 + $0x48] sm:$0xff] %vm1326, %v1881
      %1898 = vst.msk [vmem:[#allocation5 + $0x50] sm:$0xff] %vm1326, %v1882
      %1899 = vst.msk [vmem:[#allocation5 + $0x58] sm:$0xff] %vm1326, %v1883
      %1900 = vst.msk [vmem:[#allocation5 + $0x60] sm:$0xff] %vm1326, %v1884
      %1901 = vst.msk [vmem:[#allocation5 + $0x68] sm:$0xff] %vm1326, %v1885
      %1902 = vst.msk [vmem:[#allocation5 + $0x70] sm:$0xff] %vm1326, %v1886
      %1903 = vst.msk [vmem:[#allocation5 + $0x78] sm:$0xff] %vm1326, %v1887
      %v1904 = vld [vmem:[#allocation6] sm:$0xff]
      %v1905 = vld [vmem:[#allocation6 + $0x8] sm:$0xff]
      %v1906 = vld [vmem:[#allocation6 + $0x10] sm:$0xff]
      %v1907 = vld [vmem:[#allocation6 + $0x18] sm:$0xff]
      %v1908 = vld [vmem:[#allocation6 + $0x20] sm:$0xff]
      %v1909 = vld [vmem:[#allocation6 + $0x28] sm:$0xff]
      %v1910 = vld [vmem:[#allocation6 + $0x30] sm:$0xff]
      %v1911 = vld [vmem:[#allocation6 + $0x38] sm:$0xff]
      %v1912 = vld [vmem:[#allocation6 + $0x40] sm:$0xff]
      %v1913 = vld [vmem:[#allocation6 + $0x48] sm:$0xff]
      %v1914 = vld [vmem:[#allocation6 + $0x50] sm:$0xff]
      %v1915 = vld [vmem:[#allocation6 + $0x58] sm:$0xff]
      %v1916 = vld [vmem:[#allocation6 + $0x60] sm:$0xff]
      %v1917 = vld [vmem:[#allocation6 + $0x68] sm:$0xff]
      %v1918 = vld [vmem:[#allocation6 + $0x70] sm:$0xff]
      %v1919 = vld [vmem:[#allocation6 + $0x78] sm:$0xff]
      %v1920 = vmul.f32 %v1747, %v1904
      %v1921 = vmul.f32 %v1752, %v1905
      %v1922 = vmul.f32 %v1757, %v1906
      %v1923 = vmul.f32 %v1762, %v1907
      %v1924 = vmul.f32 %v1767, %v1908
      %v1925 = vmul.f32 %v1772, %v1909
      %v1926 = vmul.f32 %v1777, %v1910
      %v1927 = vmul.f32 %v1782, %v1911
      %v1928 = vmul.f32 %v1787, %v1912
      %v1929 = vmul.f32 %v1792, %v1913
      %v1930 = vmul.f32 %v1797, %v1914
      %v1931 = vmul.f32 %v1802, %v1915
      %v1932 = vmul.f32 %v1807, %v1916
      %v1933 = vmul.f32 %v1812, %v1917
      %v1934 = vmul.f32 %v1817, %v1918
      %v1935 = vmul.f32 %v1822, %v1919
      %1936 = vadd.xlane.f32.xlu0 %v1712
      %v1937 = vpop.xlane.xlu0 %1936
      %1938 = vadd.xlane.f32.xlu0 %v1713
      %v1939 = vpop.xlane.xlu0 %1938
      %1940 = vadd.xlane.f32.xlu0 %v1714
      %v1941 = vpop.xlane.xlu0 %1940
      %1942 = vadd.xlane.f32.xlu0 %v1715
      %v1943 = vpop.xlane.xlu0 %1942
      %1944 = vadd.xlane.f32.xlu0 %v1716
      %v1945 = vpop.xlane.xlu0 %1944
      %1946 = vadd.xlane.f32.xlu0 %v1717
      %v1947 = vpop.xlane.xlu0 %1946
      %1948 = vadd.xlane.f32.xlu0 %v1718
      %v1949 = vpop.xlane.xlu0 %1948
      %1950 = vadd.xlane.f32.xlu0 %v1719
      %v1951 = vpop.xlane.xlu0 %1950
      %1952 = vadd.xlane.f32.xlu0 %v1720
      %v1953 = vpop.xlane.xlu0 %1952
      %1954 = vadd.xlane.f32.xlu0 %v1721
      %v1955 = vpop.xlane.xlu0 %1954
      %1956 = vadd.xlane.f32.xlu0 %v1722
      %v1957 = vpop.xlane.xlu0 %1956
      %1958 = vadd.xlane.f32.xlu0 %v1723
      %v1959 = vpop.xlane.xlu0 %1958
      %1960 = vadd.xlane.f32.xlu0 %v1724
      %v1961 = vpop.xlane.xlu0 %1960
      %1962 = vadd.xlane.f32.xlu0 %v1725
      %v1963 = vpop.xlane.xlu0 %1962
      %1964 = vadd.xlane.f32.xlu0 %v1726
      %v1965 = vpop.xlane.xlu0 %1964
      %1966 = vadd.xlane.f32.xlu0 %v1727
      %v1967 = vpop.xlane.xlu0 %1966
      %v1968 = vadd.f32 %v1920, %v1937
      %v1969 = vadd.f32 %v1921, %v1939
      %v1970 = vadd.f32 %v1922, %v1941
      %v1971 = vadd.f32 %v1923, %v1943
      %v1972 = vadd.f32 %v1924, %v1945
      %v1973 = vadd.f32 %v1925, %v1947
      %v1974 = vadd.f32 %v1926, %v1949
      %v1975 = vadd.f32 %v1927, %v1951
      %v1976 = vadd.f32 %v1928, %v1953
      %v1977 = vadd.f32 %v1929, %v1955
      %v1978 = vadd.f32 %v1930, %v1957
      %v1979 = vadd.f32 %v1931, %v1959
      %v1980 = vadd.f32 %v1932, %v1961
      %v1981 = vadd.f32 %v1933, %v1963
      %v1982 = vadd.f32 %v1934, %v1965
      %v1983 = vadd.f32 %v1935, %v1967
      %1984 = vst.msk [vmem:[#allocation6] sm:$0xff] %vm1326, %v1968
      %1985 = vst.msk [vmem:[#allocation6 + $0x8] sm:$0xff] %vm1326, %v1969
      %1986 = vst.msk [vmem:[#allocation6 + $0x10] sm:$0xff] %vm1326, %v1970
      %1987 = vst.msk [vmem:[#allocation6 + $0x18] sm:$0xff] %vm1326, %v1971
      %1988 = vst.msk [vmem:[#allocation6 + $0x20] sm:$0xff] %vm1326, %v1972
      %1989 = vst.msk [vmem:[#allocation6 + $0x28] sm:$0xff] %vm1326, %v1973
      %1990 = vst.msk [vmem:[#allocation6 + $0x30] sm:$0xff] %vm1326, %v1974
      %1991 = vst.msk [vmem:[#allocation6 + $0x38] sm:$0xff] %vm1326, %v1975
      %1992 = vst.msk [vmem:[#allocation6 + $0x40] sm:$0xff] %vm1326, %v1976
      %1993 = vst.msk [vmem:[#allocation6 + $0x48] sm:$0xff] %vm1326, %v1977
      %1994 = vst.msk [vmem:[#allocation6 + $0x50] sm:$0xff] %vm1326, %v1978
      %1995 = vst.msk [vmem:[#allocation6 + $0x58] sm:$0xff] %vm1326, %v1979
      %1996 = vst.msk [vmem:[#allocation6 + $0x60] sm:$0xff] %vm1326, %v1980
      %1997 = vst.msk [vmem:[#allocation6 + $0x68] sm:$0xff] %vm1326, %v1981
      %1998 = vst.msk [vmem:[#allocation6 + $0x70] sm:$0xff] %vm1326, %v1982
      %1999 = vst.msk [vmem:[#allocation6 + $0x78] sm:$0xff] %vm1326, %v1983
      %v2000 = vld [vmem:[#allocation3] sm:$0xff]
      %v2001 = vld [vmem:[#allocation3 + $0x8] sm:$0xff]
      %v2002 = vld [vmem:[#allocation3 + $0x10] sm:$0xff]
      %v2003 = vld [vmem:[#allocation3 + $0x18] sm:$0xff]
      %v2004 = vld [vmem:[#allocation3 + $0x20] sm:$0xff]
      %v2005 = vld [vmem:[#allocation3 + $0x28] sm:$0xff]
      %v2006 = vld [vmem:[#allocation3 + $0x30] sm:$0xff]
      %v2007 = vld [vmem:[#allocation3 + $0x38] sm:$0xff]
      %v2008 = vld [vmem:[#allocation3 + $0x40] sm:$0xff]
      %v2009 = vld [vmem:[#allocation3 + $0x48] sm:$0xff]
      %v2010 = vld [vmem:[#allocation3 + $0x50] sm:$0xff]
      %v2011 = vld [vmem:[#allocation3 + $0x58] sm:$0xff]
      %v2012 = vld [vmem:[#allocation3 + $0x60] sm:$0xff]
      %v2013 = vld [vmem:[#allocation3 + $0x68] sm:$0xff]
      %v2014 = vld [vmem:[#allocation3 + $0x70] sm:$0xff]
      %v2015 = vld [vmem:[#allocation3 + $0x78] sm:$0xff]
      %v2016 = vmul.f32 %v1747, %v2000
      %v2017 = vmul.f32 %v1752, %v2001
      %v2018 = vmul.f32 %v1757, %v2002
      %v2019 = vmul.f32 %v1762, %v2003
      %v2020 = vmul.f32 %v1767, %v2004
      %v2021 = vmul.f32 %v1772, %v2005
      %v2022 = vmul.f32 %v1777, %v2006
      %v2023 = vmul.f32 %v1782, %v2007
      %v2024 = vmul.f32 %v1787, %v2008
      %v2025 = vmul.f32 %v1792, %v2009
      %v2026 = vmul.f32 %v1797, %v2010
      %v2027 = vmul.f32 %v1802, %v2011
      %v2028 = vmul.f32 %v1807, %v2012
      %v2029 = vmul.f32 %v1812, %v2013
      %v2030 = vmul.f32 %v1817, %v2014
      %v2031 = vmul.f32 %v1822, %v2015
      %v2032 = vpack.c.bf16 %v1697, %v1696
      %v2033 = vpack.c.bf16 %v1699, %v1698
      %v2034 = vpack.c.bf16 %v1701, %v1700
      %v2035 = vpack.c.bf16 %v1703, %v1702
      %v2036 = vpack.c.bf16 %v1705, %v1704
      %v2037 = vpack.c.bf16 %v1707, %v1706
      %v2038 = vpack.c.bf16 %v1709, %v1708
      %v2039 = vpack.c.bf16 %v1711, %v1710
      %2040 = vrot.lane.b32.xlu0 %v1318, 96
      %v2041 = vpop.permute.xlu0 %2040
      %2042 = vrot.lane.b32.xlu0 %v1319, 96
      %v2043 = vpop.permute.xlu0 %2042
      %2044 = vrot.lane.b32.xlu0 %v1320, 96
      %v2045 = vpop.permute.xlu0 %2044
      %2046 = vrot.lane.b32.xlu0 %v1321, 96
      %v2047 = vpop.permute.xlu0 %2046
      %2048 = vrot.lane.b32.xlu0 %v1322, 96
      %v2049 = vpop.permute.xlu0 %2048
      %2050 = vrot.lane.b32.xlu0 %v1323, 96
      %v2051 = vpop.permute.xlu0 %2050
      %2052 = vrot.lane.b32.xlu0 %v1324, 96
      %v2053 = vpop.permute.xlu0 %2052
      %2054 = vrot.lane.b32.xlu0 %v1325, 96
      %v2055 = vpop.permute.xlu0 %2054
      %2064 = vmatpush.bf16.msra.mxu0 %v2055
      %2065 = vmatpush.bf16.msra.mxu0 %v2053
      %2066 = vmatpush.bf16.msra.mxu0 %v2051
      %2067 = vmatpush.bf16.msra.mxu0 %v2049
      %2068 = vmatpush.bf16.msra.mxu0 %v2047
      %2069 = vmatpush.bf16.msra.mxu0 %v2045
      %2070 = vmatpush.bf16.msra.mxu0 %v2043
      %2071 = vmatpush.bf16.msra.mxu0 %v2041
      %2072 = vmatmul.bf16.gmra.mxu0 %v2032
      %v2073 = vpop.f32.mrf.mxu0
      %v2074 = vadd.f32 0.0, %v2073
      %v2075 = vpop.f32.mrf.mxu0
      %v2076 = vadd.f32 0.0, %v2075
      %2077 = vmatmul.bf16.gmra.mxu0 %v2033
      %v2078 = vpop.f32.mrf.mxu0
      %v2079 = vadd.f32 0.0, %v2078
      %v2080 = vpop.f32.mrf.mxu0
      %v2081 = vadd.f32 0.0, %v2080
      %2082 = vmatmul.bf16.gmra.mxu0 %v2034
      %v2083 = vpop.f32.mrf.mxu0
      %v2084 = vadd.f32 0.0, %v2083
      %v2085 = vpop.f32.mrf.mxu0
      %v2086 = vadd.f32 0.0, %v2085
      %2087 = vmatmul.bf16.gmra.mxu0 %v2035
      %v2088 = vpop.f32.mrf.mxu0
      %v2089 = vadd.f32 0.0, %v2088
      %v2090 = vpop.f32.mrf.mxu0
      %v2091 = vadd.f32 0.0, %v2090
      %2092 = vmatmul.bf16.gmra.mxu0 %v2036
      %v2093 = vpop.f32.mrf.mxu0
      %v2094 = vadd.f32 0.0, %v2093
      %v2095 = vpop.f32.mrf.mxu0
      %v2096 = vadd.f32 0.0, %v2095
      %2097 = vmatmul.bf16.gmra.mxu0 %v2037
      %v2098 = vpop.f32.mrf.mxu0
      %v2099 = vadd.f32 0.0, %v2098
      %v2100 = vpop.f32.mrf.mxu0
      %v2101 = vadd.f32 0.0, %v2100
      %2102 = vmatmul.bf16.gmra.mxu0 %v2038
      %v2103 = vpop.f32.mrf.mxu0
      %v2104 = vadd.f32 0.0, %v2103
      %v2105 = vpop.f32.mrf.mxu0
      %v2106 = vadd.f32 0.0, %v2105
      %2107 = vmatmul.bf16.gmra.mxu0 %v2039
      %v2108 = vpop.f32.mrf.mxu0
      %v2109 = vadd.f32 0.0, %v2108
      %v2110 = vpop.f32.mrf.mxu0
      %v2111 = vadd.f32 0.0, %v2110
      %2112 = vdwg.mxu0
      %v2113 = vadd.f32 %v2016, %v2074
      %v2114 = vadd.f32 %v2017, %v2076
      %v2115 = vadd.f32 %v2018, %v2079
      %v2116 = vadd.f32 %v2019, %v2081
      %v2117 = vadd.f32 %v2020, %v2084
      %v2118 = vadd.f32 %v2021, %v2086
      %v2119 = vadd.f32 %v2022, %v2089
      %v2120 = vadd.f32 %v2023, %v2091
      %v2121 = vadd.f32 %v2024, %v2094
      %v2122 = vadd.f32 %v2025, %v2096
      %v2123 = vadd.f32 %v2026, %v2099
      %v2124 = vadd.f32 %v2027, %v2101
      %v2125 = vadd.f32 %v2028, %v2104
      %v2126 = vadd.f32 %v2029, %v2106
      %v2127 = vadd.f32 %v2030, %v2109
      %v2128 = vadd.f32 %v2031, %v2111
      %2129 = vst.msk [vmem:[#allocation3] sm:$0xff] %vm1326, %v2113
      %2130 = vst.msk [vmem:[#allocation3 + $0x8] sm:$0xff] %vm1326, %v2114
      %2131 = vst.msk [vmem:[#allocation3 + $0x10] sm:$0xff] %vm1326, %v2115
      %2132 = vst.msk [vmem:[#allocation3 + $0x18] sm:$0xff] %vm1326, %v2116
      %2133 = vst.msk [vmem:[#allocation3 + $0x20] sm:$0xff] %vm1326, %v2117
      %2134 = vst.msk [vmem:[#allocation3 + $0x28] sm:$0xff] %vm1326, %v2118
      %2135 = vst.msk [vmem:[#allocation3 + $0x30] sm:$0xff] %vm1326, %v2119
      %2136 = vst.msk [vmem:[#allocation3 + $0x38] sm:$0xff] %vm1326, %v2120
      %2137 = vst.msk [vmem:[#allocation3 + $0x40] sm:$0xff] %vm1326, %v2121
      %2138 = vst.msk [vmem:[#allocation3 + $0x48] sm:$0xff] %vm1326, %v2122
      %2139 = vst.msk [vmem:[#allocation3 + $0x50] sm:$0xff] %vm1326, %v2123
      %2140 = vst.msk [vmem:[#allocation3 + $0x58] sm:$0xff] %vm1326, %v2124
      %2141 = vst.msk [vmem:[#allocation3 + $0x60] sm:$0xff] %vm1326, %v2125
      %2142 = vst.msk [vmem:[#allocation3 + $0x68] sm:$0xff] %vm1326, %v2126
      %2143 = vst.msk [vmem:[#allocation3 + $0x70] sm:$0xff] %vm1326, %v2127
      %2144 = vst.msk [vmem:[#allocation3 + $0x78] sm:$0xff] %vm1326, %v2128
      %v2145 = vld [vmem:[#allocation4] sm:$0xff]
      %v2146 = vld [vmem:[#allocation4 + $0x8] sm:$0xff]
      %v2147 = vld [vmem:[#allocation4 + $0x10] sm:$0xff]
      %v2148 = vld [vmem:[#allocation4 + $0x18] sm:$0xff]
      %v2149 = vld [vmem:[#allocation4 + $0x20] sm:$0xff]
      %v2150 = vld [vmem:[#allocation4 + $0x28] sm:$0xff]
      %v2151 = vld [vmem:[#allocation4 + $0x30] sm:$0xff]
      %v2152 = vld [vmem:[#allocation4 + $0x38] sm:$0xff]
      %v2153 = vld [vmem:[#allocation4 + $0x40] sm:$0xff]
      %v2154 = vld [vmem:[#allocation4 + $0x48] sm:$0xff]
      %v2155 = vld [vmem:[#allocation4 + $0x50] sm:$0xff]
      %v2156 = vld [vmem:[#allocation4 + $0x58] sm:$0xff]
      %v2157 = vld [vmem:[#allocation4 + $0x60] sm:$0xff]
      %v2158 = vld [vmem:[#allocation4 + $0x68] sm:$0xff]
      %v2159 = vld [vmem:[#allocation4 + $0x70] sm:$0xff]
      %v2160 = vld [vmem:[#allocation4 + $0x78] sm:$0xff]
      %v2161 = vmul.f32 %v1747, %v2145
      %v2162 = vmul.f32 %v1752, %v2146
      %v2163 = vmul.f32 %v1757, %v2147
      %v2164 = vmul.f32 %v1762, %v2148
      %v2165 = vmul.f32 %v1767, %v2149
      %v2166 = vmul.f32 %v1772, %v2150
      %v2167 = vmul.f32 %v1777, %v2151
      %v2168 = vmul.f32 %v1782, %v2152
      %v2169 = vmul.f32 %v1787, %v2153
      %v2170 = vmul.f32 %v1792, %v2154
      %v2171 = vmul.f32 %v1797, %v2155
      %v2172 = vmul.f32 %v1802, %v2156
      %v2173 = vmul.f32 %v1807, %v2157
      %v2174 = vmul.f32 %v1812, %v2158
      %v2175 = vmul.f32 %v1817, %v2159
      %v2176 = vmul.f32 %v1822, %v2160
      %v2177 = vpack.c.bf16 %v1713, %v1712
      %v2178 = vpack.c.bf16 %v1715, %v1714
      %v2179 = vpack.c.bf16 %v1717, %v1716
      %v2180 = vpack.c.bf16 %v1719, %v1718
      %v2181 = vpack.c.bf16 %v1721, %v1720
      %v2182 = vpack.c.bf16 %v1723, %v1722
      %v2183 = vpack.c.bf16 %v1725, %v1724
      %v2184 = vpack.c.bf16 %v1727, %v1726
      %2185 = vmatpush.bf16.msra.mxu0 %v2055
      %2186 = vmatpush.bf16.msra.mxu0 %v2053
      %2187 = vmatpush.bf16.msra.mxu0 %v2051
      %2188 = vmatpush.bf16.msra.mxu0 %v2049
      %2189 = vmatpush.bf16.msra.mxu0 %v2047
      %2190 = vmatpush.bf16.msra.mxu0 %v2045
      %2191 = vmatpush.bf16.msra.mxu0 %v2043
      %2192 = vmatpush.bf16.msra.mxu0 %v2041
      %2193 = vmatmul.bf16.gmra.mxu0 %v2177
      %v2194 = vpop.f32.mrf.mxu0
      %v2195 = vadd.f32 0.0, %v2194
      %v2196 = vpop.f32.mrf.mxu0
      %v2197 = vadd.f32 0.0, %v2196
      %2198 = vmatmul.bf16.gmra.mxu0 %v2178
      %v2199 = vpop.f32.mrf.mxu0
      %v2200 = vadd.f32 0.0, %v2199
      %v2201 = vpop.f32.mrf.mxu0
      %v2202 = vadd.f32 0.0, %v2201
      %2203 = vmatmul.bf16.gmra.mxu0 %v2179
      %v2204 = vpop.f32.mrf.mxu0
      %v2205 = vadd.f32 0.0, %v2204
      %v2206 = vpop.f32.mrf.mxu0
      %v2207 = vadd.f32 0.0, %v2206
      %2208 = vmatmul.bf16.gmra.mxu0 %v2180
      %v2209 = vpop.f32.mrf.mxu0
      %v2210 = vadd.f32 0.0, %v2209
      %v2211 = vpop.f32.mrf.mxu0
      %v2212 = vadd.f32 0.0, %v2211
      %2213 = vmatmul.bf16.gmra.mxu0 %v2181
      %v2214 = vpop.f32.mrf.mxu0
      %v2215 = vadd.f32 0.0, %v2214
      %v2216 = vpop.f32.mrf.mxu0
      %v2217 = vadd.f32 0.0, %v2216
      %2218 = vmatmul.bf16.gmra.mxu0 %v2182
      %v2219 = vpop.f32.mrf.mxu0
      %v2220 = vadd.f32 0.0, %v2219
      %v2221 = vpop.f32.mrf.mxu0
      %v2222 = vadd.f32 0.0, %v2221
      %2223 = vmatmul.bf16.gmra.mxu0 %v2183
      %v2224 = vpop.f32.mrf.mxu0
      %v2225 = vadd.f32 0.0, %v2224
      %v2226 = vpop.f32.mrf.mxu0
      %v2227 = vadd.f32 0.0, %v2226
      %2228 = vmatmul.bf16.gmra.mxu0 %v2184
      %v2229 = vpop.f32.mrf.mxu0
      %v2230 = vadd.f32 0.0, %v2229
      %v2231 = vpop.f32.mrf.mxu0
      %v2232 = vadd.f32 0.0, %v2231
      %2233 = vdwg.mxu0
      %v2234 = vadd.f32 %v2161, %v2195
      %v2235 = vadd.f32 %v2162, %v2197
      %v2236 = vadd.f32 %v2163, %v2200
      %v2237 = vadd.f32 %v2164, %v2202
      %v2238 = vadd.f32 %v2165, %v2205
      %v2239 = vadd.f32 %v2166, %v2207
      %v2240 = vadd.f32 %v2167, %v2210
      %v2241 = vadd.f32 %v2168, %v2212
      %v2242 = vadd.f32 %v2169, %v2215
      %v2243 = vadd.f32 %v2170, %v2217
      %v2244 = vadd.f32 %v2171, %v2220
      %v2245 = vadd.f32 %v2172, %v2222
      %v2246 = vadd.f32 %v2173, %v2225
      %v2247 = vadd.f32 %v2174, %v2227
      %v2248 = vadd.f32 %v2175, %v2230
      %v2249 = vadd.f32 %v2176, %v2232
      %2250 = vst.msk [vmem:[#allocation4] sm:$0xff] %vm1326, %v2234
      %2251 = vst.msk [vmem:[#allocation4 + $0x8] sm:$0xff] %vm1326, %v2235
      %2252 = vst.msk [vmem:[#allocation4 + $0x10] sm:$0xff] %vm1326, %v2236
      %2253 = vst.msk [vmem:[#allocation4 + $0x18] sm:$0xff] %vm1326, %v2237
      %2254 = vst.msk [vmem:[#allocation4 + $0x20] sm:$0xff] %vm1326, %v2238
      %2255 = vst.msk [vmem:[#allocation4 + $0x28] sm:$0xff] %vm1326, %v2239
      %2256 = vst.msk [vmem:[#allocation4 + $0x30] sm:$0xff] %vm1326, %v2240
      %2257 = vst.msk [vmem:[#allocation4 + $0x38] sm:$0xff] %vm1326, %v2241
      %2258 = vst.msk [vmem:[#allocation4 + $0x40] sm:$0xff] %vm1326, %v2242
      %2259 = vst.msk [vmem:[#allocation4 + $0x48] sm:$0xff] %vm1326, %v2243
      %2260 = vst.msk [vmem:[#allocation4 + $0x50] sm:$0xff] %vm1326, %v2244
      %2261 = vst.msk [vmem:[#allocation4 + $0x58] sm:$0xff] %vm1326, %v2245
      %2262 = vst.msk [vmem:[#allocation4 + $0x60] sm:$0xff] %vm1326, %v2246
      %2263 = vst.msk [vmem:[#allocation4 + $0x68] sm:$0xff] %vm1326, %v2247
      %2264 = vst.msk [vmem:[#allocation4 + $0x70] sm:$0xff] %vm1326, %v2248
      %2265 = vst.msk [vmem:[#allocation4 + $0x78] sm:$0xff] %vm1326, %v2249
      %vm2266 = vcmask 7168
      %2267 = vst.msk [vmem:[#allocation7] sm:$0xff] %vm2266, %v1488
      %2268 = vst.msk [vmem:[#allocation7 + $0x8] sm:$0xff] %vm2266, %v1489
      %2269 = vst.msk [vmem:[#allocation7 + $0x10] sm:$0xff] %vm2266, %v1490
      %2270 = vst.msk [vmem:[#allocation7 + $0x18] sm:$0xff] %vm2266, %v1491
      %2271 = vst.msk [vmem:[#allocation7 + $0x20] sm:$0xff] %vm2266, %v1492
      %2272 = vst.msk [vmem:[#allocation7 + $0x28] sm:$0xff] %vm2266, %v1493
      %2273 = vst.msk [vmem:[#allocation7 + $0x30] sm:$0xff] %vm2266, %v1494
      %2274 = vst.msk [vmem:[#allocation7 + $0x38] sm:$0xff] %vm2266, %v1495
      %2275 = vst.msk [vmem:[#allocation7 + $0x40] sm:$0xff] %vm2266, %v1496
      %2276 = vst.msk [vmem:[#allocation7 + $0x48] sm:$0xff] %vm2266, %v1497
      %2277 = vst.msk [vmem:[#allocation7 + $0x50] sm:$0xff] %vm2266, %v1498
      %2278 = vst.msk [vmem:[#allocation7 + $0x58] sm:$0xff] %vm2266, %v1499
      %2279 = vst.msk [vmem:[#allocation7 + $0x60] sm:$0xff] %vm2266, %v1500
      %2280 = vst.msk [vmem:[#allocation7 + $0x68] sm:$0xff] %vm2266, %v1501
      %2281 = vst.msk [vmem:[#allocation7 + $0x70] sm:$0xff] %vm2266, %v1502
      %2282 = vst.msk [vmem:[#allocation7 + $0x78] sm:$0xff] %vm2266, %v1503
      %2283 = vrot.lane.b32.xlu0 %v1278, 120
      %v2284 = vpop.permute.xlu0 %2283
      %2285 = vrot.lane.b32.xlu0 %v1279, 120
      %v2286 = vpop.permute.xlu0 %2285
      %2287 = vrot.lane.b32.xlu0 %v1280, 120
      %v2288 = vpop.permute.xlu0 %2287
      %2289 = vrot.lane.b32.xlu0 %v1281, 120
      %v2290 = vpop.permute.xlu0 %2289
      %2291 = vrot.lane.b32.xlu0 %v1282, 120
      %v2292 = vpop.permute.xlu0 %2291
      %2293 = vrot.lane.b32.xlu0 %v1283, 120
      %v2294 = vpop.permute.xlu0 %2293
      %2295 = vrot.lane.b32.xlu0 %v1284, 120
      %v2296 = vpop.permute.xlu0 %2295
      %2297 = vrot.lane.b32.xlu0 %v1285, 120
      %v2298 = vpop.permute.xlu0 %2297
      %2299 = vrot.lane.b32.xlu0 %v1318, 120
      %v2300 = vpop.permute.xlu0 %2299
      %2301 = vrot.lane.b32.xlu0 %v1319, 120
      %v2302 = vpop.permute.xlu0 %2301
      %2303 = vrot.lane.b32.xlu0 %v1320, 120
      %v2304 = vpop.permute.xlu0 %2303
      %2305 = vrot.lane.b32.xlu0 %v1321, 120
      %v2306 = vpop.permute.xlu0 %2305
      %2307 = vrot.lane.b32.xlu0 %v1322, 120
      %v2308 = vpop.permute.xlu0 %2307
      %2309 = vrot.lane.b32.xlu0 %v1323, 120
      %v2310 = vpop.permute.xlu0 %2309
      %2311 = vrot.lane.b32.xlu0 %v1324, 120
      %v2312 = vpop.permute.xlu0 %2311
      %2313 = vrot.lane.b32.xlu0 %v1325, 120
      %v2314 = vpop.permute.xlu0 %2313
      %v2316 = vsel %vm1326, %v2284, 0
      %v2319 = vsel %vm1326, %v2286, 0
      %v2322 = vsel %vm1326, %v2288, 0
      %v2325 = vsel %vm1326, %v2290, 0
      %v2328 = vsel %vm1326, %v2292, 0
      %v2331 = vsel %vm1326, %v2294, 0
      %v2334 = vsel %vm1326, %v2296, 0
      %v2337 = vsel %vm1326, %v2298, 0
      %v2340 = vsel %vm1326, %v2300, 0
      %v2343 = vsel %vm1326, %v2302, 0
      %v2346 = vsel %vm1326, %v2304, 0
      %v2349 = vsel %vm1326, %v2306, 0
      %v2352 = vsel %vm1326, %v2308, 0
      %v2355 = vsel %vm1326, %v2310, 0
      %v2358 = vsel %vm1326, %v2312, 0
      %v2361 = vsel %vm1326, %v2314, 0
      %2363 = vmatpush.bf16.xpose.msra.mxu0 %v2361
      %2364 = vmatpush.bf16.xpose.msra.mxu0 %v2358
      %2365 = vmatpush.bf16.xpose.msra.mxu0 %v2355
      %2366 = vmatpush.bf16.xpose.msra.mxu0 %v2352
      %2367 = vmatpush.bf16.xpose.msra.mxu0 %v2349
      %2368 = vmatpush.bf16.xpose.msra.mxu0 %v2346
      %2369 = vmatpush.bf16.xpose.msra.mxu0 %v2343
      %2370 = vmatpush.bf16.xpose.msra.mxu0 %v2340
      %2371 = vmatmul.bf16.gmra.mxu0 %v2316
      %v2372 = vpop.f32.mrf.mxu0
      %v2373 = vadd.f32 0.0, %v2372
      %v2374 = vpop.f32.mrf.mxu0
      %v2375 = vadd.f32 0.0, %v2374
      %2376 = vmatmul.bf16.gmra.mxu0 %v2319
      %v2377 = vpop.f32.mrf.mxu0
      %v2378 = vadd.f32 0.0, %v2377
      %v2379 = vpop.f32.mrf.mxu0
      %v2380 = vadd.f32 0.0, %v2379
      %2381 = vmatmul.bf16.gmra.mxu0 %v2322
      %v2382 = vpop.f32.mrf.mxu0
      %v2383 = vadd.f32 0.0, %v2382
      %v2384 = vpop.f32.mrf.mxu0
      %v2385 = vadd.f32 0.0, %v2384
      %2386 = vmatmul.bf16.gmra.mxu0 %v2325
      %v2387 = vpop.f32.mrf.mxu0
      %v2388 = vadd.f32 0.0, %v2387
      %v2389 = vpop.f32.mrf.mxu0
      %v2390 = vadd.f32 0.0, %v2389
      %2391 = vmatmul.bf16.gmra.mxu0 %v2328
      %v2392 = vpop.f32.mrf.mxu0
      %v2393 = vadd.f32 0.0, %v2392
      %v2394 = vpop.f32.mrf.mxu0
      %v2395 = vadd.f32 0.0, %v2394
      %2396 = vmatmul.bf16.gmra.mxu0 %v2331
      %v2397 = vpop.f32.mrf.mxu0
      %v2398 = vadd.f32 0.0, %v2397
      %v2399 = vpop.f32.mrf.mxu0
      %v2400 = vadd.f32 0.0, %v2399
      %2401 = vmatmul.bf16.gmra.mxu0 %v2334
      %v2402 = vpop.f32.mrf.mxu0
      %v2403 = vadd.f32 0.0, %v2402
      %v2404 = vpop.f32.mrf.mxu0
      %v2405 = vadd.f32 0.0, %v2404
      %2406 = vmatmul.bf16.gmra.mxu0 %v2337
      %v2407 = vpop.f32.mrf.mxu0
      %v2408 = vadd.f32 0.0, %v2407
      %v2409 = vpop.f32.mrf.mxu0
      %v2410 = vadd.f32 0.0, %v2409
      %2411 = vdwg.mxu0
      %v2412 = vld [vmem:[#allocation7] sm:$0xff]
      %v2413 = vld [vmem:[#allocation7 + $0x8] sm:$0xff]
      %v2414 = vld [vmem:[#allocation7 + $0x10] sm:$0xff]
      %v2415 = vld [vmem:[#allocation7 + $0x18] sm:$0xff]
      %v2416 = vld [vmem:[#allocation7 + $0x20] sm:$0xff]
      %v2417 = vld [vmem:[#allocation7 + $0x28] sm:$0xff]
      %v2418 = vld [vmem:[#allocation7 + $0x30] sm:$0xff]
      %v2419 = vld [vmem:[#allocation7 + $0x38] sm:$0xff]
      %v2420 = vld [vmem:[#allocation7 + $0x40] sm:$0xff]
      %v2421 = vld [vmem:[#allocation7 + $0x48] sm:$0xff]
      %v2422 = vld [vmem:[#allocation7 + $0x50] sm:$0xff]
      %v2423 = vld [vmem:[#allocation7 + $0x58] sm:$0xff]
      %v2424 = vld [vmem:[#allocation7 + $0x60] sm:$0xff]
      %v2425 = vld [vmem:[#allocation7 + $0x68] sm:$0xff]
      %v2426 = vld [vmem:[#allocation7 + $0x70] sm:$0xff]
      %v2427 = vld [vmem:[#allocation7 + $0x78] sm:$0xff]
      %v2428 = vsel %vm1230, %v2373, -1e+30
      %v2429 = vsel %vm1231, %v2375, -1e+30
      %v2430 = vsel %vm1232, %v2378, -1e+30
      %v2431 = vsel %vm1233, %v2380, -1e+30
      %v2432 = vsel %vm1234, %v2383, -1e+30
      %v2433 = vsel %vm1235, %v2385, -1e+30
      %v2434 = vsel %vm1236, %v2388, -1e+30
      %v2435 = vsel %vm1237, %v2390, -1e+30
      %v2436 = vsel %vm1238, %v2393, -1e+30
      %v2437 = vsel %vm1239, %v2395, -1e+30
      %v2438 = vsel %vm1240, %v2398, -1e+30
      %v2439 = vsel %vm1241, %v2400, -1e+30
      %v2440 = vsel %vm1242, %v2403, -1e+30
      %v2441 = vsel %vm1243, %v2405, -1e+30
      %v2442 = vsel %vm1244, %v2408, -1e+30
      %v2443 = vsel %vm1245, %v2410, -1e+30
      %2444 = vmax.xlane.f32.xlu0 %v2428
      %v2445 = vpop.xlane.xlu0 %2444
      %2446 = vmax.xlane.f32.xlu0 %v2429
      %v2447 = vpop.xlane.xlu0 %2446
      %2448 = vmax.xlane.f32.xlu0 %v2430
      %v2449 = vpop.xlane.xlu0 %2448
      %2450 = vmax.xlane.f32.xlu0 %v2431
      %v2451 = vpop.xlane.xlu0 %2450
      %2452 = vmax.xlane.f32.xlu0 %v2432
      %v2453 = vpop.xlane.xlu0 %2452
      %2454 = vmax.xlane.f32.xlu0 %v2433
      %v2455 = vpop.xlane.xlu0 %2454
      %2456 = vmax.xlane.f32.xlu0 %v2434
      %v2457 = vpop.xlane.xlu0 %2456
      %2458 = vmax.xlane.f32.xlu0 %v2435
      %v2459 = vpop.xlane.xlu0 %2458
      %2460 = vmax.xlane.f32.xlu0 %v2436
      %v2461 = vpop.xlane.xlu0 %2460
      %2462 = vmax.xlane.f32.xlu0 %v2437
      %v2463 = vpop.xlane.xlu0 %2462
      %2464 = vmax.xlane.f32.xlu0 %v2438
      %v2465 = vpop.xlane.xlu0 %2464
      %2466 = vmax.xlane.f32.xlu0 %v2439
      %v2467 = vpop.xlane.xlu0 %2466
      %2468 = vmax.xlane.f32.xlu0 %v2440
      %v2469 = vpop.xlane.xlu0 %2468
      %2470 = vmax.xlane.f32.xlu0 %v2441
      %v2471 = vpop.xlane.xlu0 %2470
      %2472 = vmax.xlane.f32.xlu0 %v2442
      %v2473 = vpop.xlane.xlu0 %2472
      %2474 = vmax.xlane.f32.xlu0 %v2443
      %v2475 = vpop.xlane.xlu0 %2474
      %v2476 = vmax.f32 %v2412, %v2445
      %v2477 = vmax.f32 %v2413, %v2447
      %v2478 = vmax.f32 %v2414, %v2449
      %v2479 = vmax.f32 %v2415, %v2451
      %v2480 = vmax.f32 %v2416, %v2453
      %v2481 = vmax.f32 %v2417, %v2455
      %v2482 = vmax.f32 %v2418, %v2457
      %v2483 = vmax.f32 %v2419, %v2459
      %v2484 = vmax.f32 %v2420, %v2461
      %v2485 = vmax.f32 %v2421, %v2463
      %v2486 = vmax.f32 %v2422, %v2465
      %v2487 = vmax.f32 %v2423, %v2467
      %v2488 = vmax.f32 %v2424, %v2469
      %v2489 = vmax.f32 %v2425, %v2471
      %v2490 = vmax.f32 %v2426, %v2473
      %v2491 = vmax.f32 %v2427, %v2475
      %v2492 = vsub.f32 %v2412, %v2476
      %v2493 = vsub.f32 %v2413, %v2477
      %v2494 = vsub.f32 %v2414, %v2478
      %v2495 = vsub.f32 %v2415, %v2479
      %v2496 = vsub.f32 %v2416, %v2480
      %v2497 = vsub.f32 %v2417, %v2481
      %v2498 = vsub.f32 %v2418, %v2482
      %v2499 = vsub.f32 %v2419, %v2483
      %v2500 = vsub.f32 %v2420, %v2484
      %v2501 = vsub.f32 %v2421, %v2485
      %v2502 = vsub.f32 %v2422, %v2486
      %v2503 = vsub.f32 %v2423, %v2487
      %v2504 = vsub.f32 %v2424, %v2488
      %v2505 = vsub.f32 %v2425, %v2489
      %v2506 = vsub.f32 %v2426, %v2490
      %v2507 = vsub.f32 %v2427, %v2491
      %v2508 = vmul.f32 %v2492, 1.442695
      %v2509 = vpow.pop %v2508
      %v2510 = vmul.f32 %v2493, 1.442695
      %v2511 = vpow.pop %v2510
      %v2512 = vmul.f32 %v2494, 1.442695
      %v2513 = vpow.pop %v2512
      %v2514 = vmul.f32 %v2495, 1.442695
      %v2515 = vpow.pop %v2514
      %v2516 = vmul.f32 %v2496, 1.442695
      %v2517 = vpow.pop %v2516
      %v2518 = vmul.f32 %v2497, 1.442695
      %v2519 = vpow.pop %v2518
      %v2520 = vmul.f32 %v2498, 1.442695
      %v2521 = vpow.pop %v2520
      %v2522 = vmul.f32 %v2499, 1.442695
      %v2523 = vpow.pop %v2522
      %v2524 = vmul.f32 %v2500, 1.442695
      %v2525 = vpow.pop %v2524
      %v2526 = vmul.f32 %v2501, 1.442695
      %v2527 = vpow.pop %v2526
      %v2528 = vmul.f32 %v2502, 1.442695
      %v2529 = vpow.pop %v2528
      %v2530 = vmul.f32 %v2503, 1.442695
      %v2531 = vpow.pop %v2530
      %v2532 = vmul.f32 %v2504, 1.442695
      %v2533 = vpow.pop %v2532
      %v2534 = vmul.f32 %v2505, 1.442695
      %v2535 = vpow.pop %v2534
      %v2536 = vmul.f32 %v2506, 1.442695
      %v2537 = vpow.pop %v2536
      %v2538 = vmul.f32 %v2507, 1.442695
      %v2539 = vpow.pop %v2538
      %2541 = vset.pattern.permute.xlu0 1
      %2542 = vperm.xlu0 %2541, %v2476
      %v2543 = vpop.permute.xlu0 %2542
      %2546 = vset.pattern.permute.xlu0 1
      %2547 = vperm.xlu0 %2546, %v2477
      %v2548 = vpop.permute.xlu0 %2547
      %2551 = vset.pattern.permute.xlu0 1
      %2552 = vperm.xlu0 %2551, %v2478
      %v2553 = vpop.permute.xlu0 %2552
      %2556 = vset.pattern.permute.xlu0 1
      %2557 = vperm.xlu0 %2556, %v2479
      %v2558 = vpop.permute.xlu0 %2557
      %2561 = vset.pattern.permute.xlu0 1
      %2562 = vperm.xlu0 %2561, %v2480
      %v2563 = vpop.permute.xlu0 %2562
      %2566 = vset.pattern.permute.xlu0 1
      %2567 = vperm.xlu0 %2566, %v2481
      %v2568 = vpop.permute.xlu0 %2567
      %2571 = vset.pattern.permute.xlu0 1
      %2572 = vperm.xlu0 %2571, %v2482
      %v2573 = vpop.permute.xlu0 %2572
      %2576 = vset.pattern.permute.xlu0 1
      %2577 = vperm.xlu0 %2576, %v2483
      %v2578 = vpop.permute.xlu0 %2577
      %2581 = vset.pattern.permute.xlu0 1
      %2582 = vperm.xlu0 %2581, %v2484
      %v2583 = vpop.permute.xlu0 %2582
      %2586 = vset.pattern.permute.xlu0 1
      %2587 = vperm.xlu0 %2586, %v2485
      %v2588 = vpop.permute.xlu0 %2587
      %2591 = vset.pattern.permute.xlu0 1
      %2592 = vperm.xlu0 %2591, %v2486
      %v2593 = vpop.permute.xlu0 %2592
      %2596 = vset.pattern.permute.xlu0 1
      %2597 = vperm.xlu0 %2596, %v2487
      %v2598 = vpop.permute.xlu0 %2597
      %2601 = vset.pattern.permute.xlu0 1
      %2602 = vperm.xlu0 %2601, %v2488
      %v2603 = vpop.permute.xlu0 %2602
      %2606 = vset.pattern.permute.xlu0 1
      %2607 = vperm.xlu0 %2606, %v2489
      %v2608 = vpop.permute.xlu0 %2607
      %2611 = vset.pattern.permute.xlu0 1
      %2612 = vperm.xlu0 %2611, %v2490
      %v2613 = vpop.permute.xlu0 %2612
      %2616 = vset.pattern.permute.xlu0 1
      %2617 = vperm.xlu0 %2616, %v2491
      %v2618 = vpop.permute.xlu0 %2617
      %v2620 = vsub.f32 %v2373, %v2543
      %v2621 = vsub.f32 %v2375, %v2548
      %v2622 = vsub.f32 %v2378, %v2553
      %v2623 = vsub.f32 %v2380, %v2558
      %v2624 = vsub.f32 %v2383, %v2563
      %v2625 = vsub.f32 %v2385, %v2568
      %v2626 = vsub.f32 %v2388, %v2573
      %v2627 = vsub.f32 %v2390, %v2578
      %v2628 = vsub.f32 %v2393, %v2583
      %v2629 = vsub.f32 %v2395, %v2588
      %v2630 = vsub.f32 %v2398, %v2593
      %v2631 = vsub.f32 %v2400, %v2598
      %v2632 = vsub.f32 %v2403, %v2603
      %v2633 = vsub.f32 %v2405, %v2608
      %v2634 = vsub.f32 %v2408, %v2613
      %v2635 = vsub.f32 %v2410, %v2618
      %v2636 = vmin.f32 %v2620, 0.0
      %v2637 = vmin.f32 %v2621, 0.0
      %v2638 = vmin.f32 %v2622, 0.0
      %v2639 = vmin.f32 %v2623, 0.0
      %v2640 = vmin.f32 %v2624, 0.0
      %v2641 = vmin.f32 %v2625, 0.0
      %v2642 = vmin.f32 %v2626, 0.0
      %v2643 = vmin.f32 %v2627, 0.0
      %v2644 = vmin.f32 %v2628, 0.0
      %v2645 = vmin.f32 %v2629, 0.0
      %v2646 = vmin.f32 %v2630, 0.0
      %v2647 = vmin.f32 %v2631, 0.0
      %v2648 = vmin.f32 %v2632, 0.0
      %v2649 = vmin.f32 %v2633, 0.0
      %v2650 = vmin.f32 %v2634, 0.0
      %v2651 = vmin.f32 %v2635, 0.0
      %v2652 = vmul.f32 %v2636, 1.442695
      %v2653 = vpow.pop %v2652
      %v2654 = vmul.f32 %v2637, 1.442695
      %v2655 = vpow.pop %v2654
      %v2656 = vmul.f32 %v2638, 1.442695
      %v2657 = vpow.pop %v2656
      %v2658 = vmul.f32 %v2639, 1.442695
      %v2659 = vpow.pop %v2658
      %v2660 = vmul.f32 %v2640, 1.442695
      %v2661 = vpow.pop %v2660
      %v2662 = vmul.f32 %v2641, 1.442695
      %v2663 = vpow.pop %v2662
      %v2664 = vmul.f32 %v2642, 1.442695
      %v2665 = vpow.pop %v2664
      %v2666 = vmul.f32 %v2643, 1.442695
      %v2667 = vpow.pop %v2666
      %v2668 = vmul.f32 %v2644, 1.442695
      %v2669 = vpow.pop %v2668
      %v2670 = vmul.f32 %v2645, 1.442695
      %v2671 = vpow.pop %v2670
      %v2672 = vmul.f32 %v2646, 1.442695
      %v2673 = vpow.pop %v2672
      %v2674 = vmul.f32 %v2647, 1.442695
      %v2675 = vpow.pop %v2674
      %v2676 = vmul.f32 %v2648, 1.442695
      %v2677 = vpow.pop %v2676
      %v2678 = vmul.f32 %v2649, 1.442695
      %v2679 = vpow.pop %v2678
      %v2680 = vmul.f32 %v2650, 1.442695
      %v2681 = vpow.pop %v2680
      %v2682 = vmul.f32 %v2651, 1.442695
      %v2683 = vpow.pop %v2682
      %v2684 = vmul.f32 %v2653, %v1182
      %v2685 = vmul.f32 %v2655, %v1183
      %v2686 = vmul.f32 %v2657, %v1184
      %v2687 = vmul.f32 %v2659, %v1185
      %v2688 = vmul.f32 %v2661, %v1186
      %v2689 = vmul.f32 %v2663, %v1187
      %v2690 = vmul.f32 %v2665, %v1188
      %v2691 = vmul.f32 %v2667, %v1189
      %v2692 = vmul.f32 %v2669, %v1190
      %v2693 = vmul.f32 %v2671, %v1191
      %v2694 = vmul.f32 %v2673, %v1192
      %v2695 = vmul.f32 %v2675, %v1193
      %v2696 = vmul.f32 %v2677, %v1194
      %v2697 = vmul.f32 %v2679, %v1195
      %v2698 = vmul.f32 %v2681, %v1196
      %v2699 = vmul.f32 %v2683, %v1197
      %v2700 = vmul.f32 %v2653, %v1198
      %v2701 = vmul.f32 %v2655, %v1199
      %v2702 = vmul.f32 %v2657, %v1200
      %v2703 = vmul.f32 %v2659, %v1201
      %v2704 = vmul.f32 %v2661, %v1202
      %v2705 = vmul.f32 %v2663, %v1203
      %v2706 = vmul.f32 %v2665, %v1204
      %v2707 = vmul.f32 %v2667, %v1205
      %v2708 = vmul.f32 %v2669, %v1206
      %v2709 = vmul.f32 %v2671, %v1207
      %v2710 = vmul.f32 %v2673, %v1208
      %v2711 = vmul.f32 %v2675, %v1209
      %v2712 = vmul.f32 %v2677, %v1210
      %v2713 = vmul.f32 %v2679, %v1211
      %v2714 = vmul.f32 %v2681, %v1212
      %v2715 = vmul.f32 %v2683, %v1213
      %v2716 = vld [vmem:[#allocation5] sm:$0xff]
      %v2717 = vld [vmem:[#allocation5 + $0x8] sm:$0xff]
      %v2718 = vld [vmem:[#allocation5 + $0x10] sm:$0xff]
      %v2719 = vld [vmem:[#allocation5 + $0x18] sm:$0xff]
      %v2720 = vld [vmem:[#allocation5 + $0x20] sm:$0xff]
      %v2721 = vld [vmem:[#allocation5 + $0x28] sm:$0xff]
      %v2722 = vld [vmem:[#allocation5 + $0x30] sm:$0xff]
      %v2723 = vld [vmem:[#allocation5 + $0x38] sm:$0xff]
      %v2724 = vld [vmem:[#allocation5 + $0x40] sm:$0xff]
      %v2725 = vld [vmem:[#allocation5 + $0x48] sm:$0xff]
      %v2726 = vld [vmem:[#allocation5 + $0x50] sm:$0xff]
      %v2727 = vld [vmem:[#allocation5 + $0x58] sm:$0xff]
      %v2728 = vld [vmem:[#allocation5 + $0x60] sm:$0xff]
      %v2729 = vld [vmem:[#allocation5 + $0x68] sm:$0xff]
      %v2730 = vld [vmem:[#allocation5 + $0x70] sm:$0xff]
      %v2731 = vld [vmem:[#allocation5 + $0x78] sm:$0xff]
      %2733 = vset.pattern.permute.xlu0 1
      %2734 = vperm.xlu0 %2733, %v2509
      %v2735 = vpop.permute.xlu0 %2734
      %2738 = vset.pattern.permute.xlu0 1
      %2739 = vperm.xlu0 %2738, %v2511
      %v2740 = vpop.permute.xlu0 %2739
      %2743 = vset.pattern.permute.xlu0 1
      %2744 = vperm.xlu0 %2743, %v2513
      %v2745 = vpop.permute.xlu0 %2744
      %2748 = vset.pattern.permute.xlu0 1
      %2749 = vperm.xlu0 %2748, %v2515
      %v2750 = vpop.permute.xlu0 %2749
      %2753 = vset.pattern.permute.xlu0 1
      %2754 = vperm.xlu0 %2753, %v2517
      %v2755 = vpop.permute.xlu0 %2754
      %2758 = vset.pattern.permute.xlu0 1
      %2759 = vperm.xlu0 %2758, %v2519
      %v2760 = vpop.permute.xlu0 %2759
      %2763 = vset.pattern.permute.xlu0 1
      %2764 = vperm.xlu0 %2763, %v2521
      %v2765 = vpop.permute.xlu0 %2764
      %2768 = vset.pattern.permute.xlu0 1
      %2769 = vperm.xlu0 %2768, %v2523
      %v2770 = vpop.permute.xlu0 %2769
      %2773 = vset.pattern.permute.xlu0 1
      %2774 = vperm.xlu0 %2773, %v2525
      %v2775 = vpop.permute.xlu0 %2774
      %2778 = vset.pattern.permute.xlu0 1
      %2779 = vperm.xlu0 %2778, %v2527
      %v2780 = vpop.permute.xlu0 %2779
      %2783 = vset.pattern.permute.xlu0 1
      %2784 = vperm.xlu0 %2783, %v2529
      %v2785 = vpop.permute.xlu0 %2784
      %2788 = vset.pattern.permute.xlu0 1
      %2789 = vperm.xlu0 %2788, %v2531
      %v2790 = vpop.permute.xlu0 %2789
      %2793 = vset.pattern.permute.xlu0 1
      %2794 = vperm.xlu0 %2793, %v2533
      %v2795 = vpop.permute.xlu0 %2794
      %2798 = vset.pattern.permute.xlu0 1
      %2799 = vperm.xlu0 %2798, %v2535
      %v2800 = vpop.permute.xlu0 %2799
      %2803 = vset.pattern.permute.xlu0 1
      %2804 = vperm.xlu0 %2803, %v2537
      %v2805 = vpop.permute.xlu0 %2804
      %2808 = vset.pattern.permute.xlu0 1
      %2809 = vperm.xlu0 %2808, %v2539
      %v2810 = vpop.permute.xlu0 %2809
      %v2812 = vmul.f32 %v2735, %v2716
      %v2813 = vmul.f32 %v2740, %v2717
      %v2814 = vmul.f32 %v2745, %v2718
      %v2815 = vmul.f32 %v2750, %v2719
      %v2816 = vmul.f32 %v2755, %v2720
      %v2817 = vmul.f32 %v2760, %v2721
      %v2818 = vmul.f32 %v2765, %v2722
      %v2819 = vmul.f32 %v2770, %v2723
      %v2820 = vmul.f32 %v2775, %v2724
      %v2821 = vmul.f32 %v2780, %v2725
      %v2822 = vmul.f32 %v2785, %v2726
      %v2823 = vmul.f32 %v2790, %v2727
      %v2824 = vmul.f32 %v2795, %v2728
      %v2825 = vmul.f32 %v2800, %v2729
      %v2826 = vmul.f32 %v2805, %v2730
      %v2827 = vmul.f32 %v2810, %v2731
      %2828 = vadd.xlane.f32.xlu0 %v2684
      %v2829 = vpop.xlane.xlu0 %2828
      %2830 = vadd.xlane.f32.xlu0 %v2685
      %v2831 = vpop.xlane.xlu0 %2830
      %2832 = vadd.xlane.f32.xlu0 %v2686
      %v2833 = vpop.xlane.xlu0 %2832
      %2834 = vadd.xlane.f32.xlu0 %v2687
      %v2835 = vpop.xlane.xlu0 %2834
      %2836 = vadd.xlane.f32.xlu0 %v2688
      %v2837 = vpop.xlane.xlu0 %2836
      %2838 = vadd.xlane.f32.xlu0 %v2689
      %v2839 = vpop.xlane.xlu0 %2838
      %2840 = vadd.xlane.f32.xlu0 %v2690
      %v2841 = vpop.xlane.xlu0 %2840
      %2842 = vadd.xlane.f32.xlu0 %v2691
      %v2843 = vpop.xlane.xlu0 %2842
      %2844 = vadd.xlane.f32.xlu0 %v2692
      %v2845 = vpop.xlane.xlu0 %2844
      %2846 = vadd.xlane.f32.xlu0 %v2693
      %v2847 = vpop.xlane.xlu0 %2846
      %2848 = vadd.xlane.f32.xlu0 %v2694
      %v2849 = vpop.xlane.xlu0 %2848
      %2850 = vadd.xlane.f32.xlu0 %v2695
      %v2851 = vpop.xlane.xlu0 %2850
      %2852 = vadd.xlane.f32.xlu0 %v2696
      %v2853 = vpop.xlane.xlu0 %2852
      %2854 = vadd.xlane.f32.xlu0 %v2697
      %v2855 = vpop.xlane.xlu0 %2854
      %2856 = vadd.xlane.f32.xlu0 %v2698
      %v2857 = vpop.xlane.xlu0 %2856
      %2858 = vadd.xlane.f32.xlu0 %v2699
      %v2859 = vpop.xlane.xlu0 %2858
      %v2860 = vadd.f32 %v2812, %v2829
      %v2861 = vadd.f32 %v2813, %v2831
      %v2862 = vadd.f32 %v2814, %v2833
      %v2863 = vadd.f32 %v2815, %v2835
      %v2864 = vadd.f32 %v2816, %v2837
      %v2865 = vadd.f32 %v2817, %v2839
      %v2866 = vadd.f32 %v2818, %v2841
      %v2867 = vadd.f32 %v2819, %v2843
      %v2868 = vadd.f32 %v2820, %v2845
      %v2869 = vadd.f32 %v2821, %v2847
      %v2870 = vadd.f32 %v2822, %v2849
      %v2871 = vadd.f32 %v2823, %v2851
      %v2872 = vadd.f32 %v2824, %v2853
      %v2873 = vadd.f32 %v2825, %v2855
      %v2874 = vadd.f32 %v2826, %v2857
      %v2875 = vadd.f32 %v2827, %v2859
      %vm2876 = vcmask 130112
      %2877 = vst.msk [vmem:[#allocation5] sm:$0xff] %vm2876, %v2860
      %2878 = vst.msk [vmem:[#allocation5 + $0x8] sm:$0xff] %vm2876, %v2861
      %2879 = vst.msk [vmem:[#allocation5 + $0x10] sm:$0xff] %vm2876, %v2862
      %2880 = vst.msk [vmem:[#allocation5 + $0x18] sm:$0xff] %vm2876, %v2863
      %2881 = vst.msk [vmem:[#allocation5 + $0x20] sm:$0xff] %vm2876, %v2864
      %2882 = vst.msk [vmem:[#allocation5 + $0x28] sm:$0xff] %vm2876, %v2865
      %2883 = vst.msk [vmem:[#allocation5 + $0x30] sm:$0xff] %vm2876, %v2866
      %2884 = vst.msk [vmem:[#allocation5 + $0x38] sm:$0xff] %vm2876, %v2867
      %2885 = vst.msk [vmem:[#allocation5 + $0x40] sm:$0xff] %vm2876, %v2868
      %2886 = vst.msk [vmem:[#allocation5 + $0x48] sm:$0xff] %vm2876, %v2869
      %2887 = vst.msk [vmem:[#allocation5 + $0x50] sm:$0xff] %vm2876, %v2870
      %2888 = vst.msk [vmem:[#allocation5 + $0x58] sm:$0xff] %vm2876, %v2871
      %2889 = vst.msk [vmem:[#allocation5 + $0x60] sm:$0xff] %vm2876, %v2872
      %2890 = vst.msk [vmem:[#allocation5 + $0x68] sm:$0xff] %vm2876, %v2873
      %2891 = vst.msk [vmem:[#allocation5 + $0x70] sm:$0xff] %vm2876, %v2874
      %2892 = vst.msk [vmem:[#allocation5 + $0x78] sm:$0xff] %vm2876, %v2875
      %v2893 = vld [vmem:[#allocation6] sm:$0xff]
      %v2894 = vld [vmem:[#allocation6 + $0x8] sm:$0xff]
      %v2895 = vld [vmem:[#allocation6 + $0x10] sm:$0xff]
      %v2896 = vld [vmem:[#allocation6 + $0x18] sm:$0xff]
      %v2897 = vld [vmem:[#allocation6 + $0x20] sm:$0xff]
      %v2898 = vld [vmem:[#allocation6 + $0x28] sm:$0xff]
      %v2899 = vld [vmem:[#allocation6 + $0x30] sm:$0xff]
      %v2900 = vld [vmem:[#allocation6 + $0x38] sm:$0xff]
      %v2901 = vld [vmem:[#allocation6 + $0x40] sm:$0xff]
      %v2902 = vld [vmem:[#allocation6 + $0x48] sm:$0xff]
      %v2903 = vld [vmem:[#allocation6 + $0x50] sm:$0xff]
      %v2904 = vld [vmem:[#allocation6 + $0x58] sm:$0xff]
      %v2905 = vld [vmem:[#allocation6 + $0x60] sm:$0xff]
      %v2906 = vld [vmem:[#allocation6 + $0x68] sm:$0xff]
      %v2907 = vld [vmem:[#allocation6 + $0x70] sm:$0xff]
      %v2908 = vld [vmem:[#allocation6 + $0x78] sm:$0xff]
      %v2909 = vmul.f32 %v2735, %v2893
      %v2910 = vmul.f32 %v2740, %v2894
      %v2911 = vmul.f32 %v2745, %v2895
      %v2912 = vmul.f32 %v2750, %v2896
      %v2913 = vmul.f32 %v2755, %v2897
      %v2914 = vmul.f32 %v2760, %v2898
      %v2915 = vmul.f32 %v2765, %v2899
      %v2916 = vmul.f32 %v2770, %v2900
      %v2917 = vmul.f32 %v2775, %v2901
      %v2918 = vmul.f32 %v2780, %v2902
      %v2919 = vmul.f32 %v2785, %v2903
      %v2920 = vmul.f32 %v2790, %v2904
      %v2921 = vmul.f32 %v2795, %v2905
      %v2922 = vmul.f32 %v2800, %v2906
      %v2923 = vmul.f32 %v2805, %v2907
      %v2924 = vmul.f32 %v2810, %v2908
      %2925 = vadd.xlane.f32.xlu0 %v2700
      %v2926 = vpop.xlane.xlu0 %2925
      %2927 = vadd.xlane.f32.xlu0 %v2701
      %v2928 = vpop.xlane.xlu0 %2927
      %2929 = vadd.xlane.f32.xlu0 %v2702
      %v2930 = vpop.xlane.xlu0 %2929
      %2931 = vadd.xlane.f32.xlu0 %v2703
      %v2932 = vpop.xlane.xlu0 %2931
      %2933 = vadd.xlane.f32.xlu0 %v2704
      %v2934 = vpop.xlane.xlu0 %2933
      %2935 = vadd.xlane.f32.xlu0 %v2705
      %v2936 = vpop.xlane.xlu0 %2935
      %2937 = vadd.xlane.f32.xlu0 %v2706
      %v2938 = vpop.xlane.xlu0 %2937
      %2939 = vadd.xlane.f32.xlu0 %v2707
      %v2940 = vpop.xlane.xlu0 %2939
      %2941 = vadd.xlane.f32.xlu0 %v2708
      %v2942 = vpop.xlane.xlu0 %2941
      %2943 = vadd.xlane.f32.xlu0 %v2709
      %v2944 = vpop.xlane.xlu0 %2943
      %2945 = vadd.xlane.f32.xlu0 %v2710
      %v2946 = vpop.xlane.xlu0 %2945
      %2947 = vadd.xlane.f32.xlu0 %v2711
      %v2948 = vpop.xlane.xlu0 %2947
      %2949 = vadd.xlane.f32.xlu0 %v2712
      %v2950 = vpop.xlane.xlu0 %2949
      %2951 = vadd.xlane.f32.xlu0 %v2713
      %v2952 = vpop.xlane.xlu0 %2951
      %2953 = vadd.xlane.f32.xlu0 %v2714
      %v2954 = vpop.xlane.xlu0 %2953
      %2955 = vadd.xlane.f32.xlu0 %v2715
      %v2956 = vpop.xlane.xlu0 %2955
      %v2957 = vadd.f32 %v2909, %v2926
      %v2958 = vadd.f32 %v2910, %v2928
      %v2959 = vadd.f32 %v2911, %v2930
      %v2960 = vadd.f32 %v2912, %v2932
      %v2961 = vadd.f32 %v2913, %v2934
      %v2962 = vadd.f32 %v2914, %v2936
      %v2963 = vadd.f32 %v2915, %v2938
      %v2964 = vadd.f32 %v2916, %v2940
      %v2965 = vadd.f32 %v2917, %v2942
      %v2966 = vadd.f32 %v2918, %v2944
      %v2967 = vadd.f32 %v2919, %v2946
      %v2968 = vadd.f32 %v2920, %v2948
      %v2969 = vadd.f32 %v2921, %v2950
      %v2970 = vadd.f32 %v2922, %v2952
      %v2971 = vadd.f32 %v2923, %v2954
      %v2972 = vadd.f32 %v2924, %v2956
      %2973 = vst.msk [vmem:[#allocation6] sm:$0xff] %vm2876, %v2957
      %2974 = vst.msk [vmem:[#allocation6 + $0x8] sm:$0xff] %vm2876, %v2958
      %2975 = vst.msk [vmem:[#allocation6 + $0x10] sm:$0xff] %vm2876, %v2959
      %2976 = vst.msk [vmem:[#allocation6 + $0x18] sm:$0xff] %vm2876, %v2960
      %2977 = vst.msk [vmem:[#allocation6 + $0x20] sm:$0xff] %vm2876, %v2961
      %2978 = vst.msk [vmem:[#allocation6 + $0x28] sm:$0xff] %vm2876, %v2962
      %2979 = vst.msk [vmem:[#allocation6 + $0x30] sm:$0xff] %vm2876, %v2963
      %2980 = vst.msk [vmem:[#allocation6 + $0x38] sm:$0xff] %vm2876, %v2964
      %2981 = vst.msk [vmem:[#allocation6 + $0x40] sm:$0xff] %vm2876, %v2965
      %2982 = vst.msk [vmem:[#allocation6 + $0x48] sm:$0xff] %vm2876, %v2966
      %2983 = vst.msk [vmem:[#allocation6 + $0x50] sm:$0xff] %vm2876, %v2967
      %2984 = vst.msk [vmem:[#allocation6 + $0x58] sm:$0xff] %vm2876, %v2968
      %2985 = vst.msk [vmem:[#allocation6 + $0x60] sm:$0xff] %vm2876, %v2969
      %2986 = vst.msk [vmem:[#allocation6 + $0x68] sm:$0xff] %vm2876, %v2970
      %2987 = vst.msk [vmem:[#allocation6 + $0x70] sm:$0xff] %vm2876, %v2971
      %2988 = vst.msk [vmem:[#allocation6 + $0x78] sm:$0xff] %vm2876, %v2972
      %v2989 = vld [vmem:[#allocation3] sm:$0xff]
      %v2990 = vld [vmem:[#allocation3 + $0x8] sm:$0xff]
      %v2991 = vld [vmem:[#allocation3 + $0x10] sm:$0xff]
      %v2992 = vld [vmem:[#allocation3 + $0x18] sm:$0xff]
      %v2993 = vld [vmem:[#allocation3 + $0x20] sm:$0xff]
      %v2994 = vld [vmem:[#allocation3 + $0x28] sm:$0xff]
      %v2995 = vld [vmem:[#allocation3 + $0x30] sm:$0xff]
      %v2996 = vld [vmem:[#allocation3 + $0x38] sm:$0xff]
      %v2997 = vld [vmem:[#allocation3 + $0x40] sm:$0xff]
      %v2998 = vld [vmem:[#allocation3 + $0x48] sm:$0xff]
      %v2999 = vld [vmem:[#allocation3 + $0x50] sm:$0xff]
      %v3000 = vld [vmem:[#allocation3 + $0x58] sm:$0xff]
      %v3001 = vld [vmem:[#allocation3 + $0x60] sm:$0xff]
      %v3002 = vld [vmem:[#allocation3 + $0x68] sm:$0xff]
      %v3003 = vld [vmem:[#allocation3 + $0x70] sm:$0xff]
      %v3004 = vld [vmem:[#allocation3 + $0x78] sm:$0xff]
      %v3005 = vmul.f32 %v2735, %v2989
      %v3006 = vmul.f32 %v2740, %v2990
      %v3007 = vmul.f32 %v2745, %v2991
      %v3008 = vmul.f32 %v2750, %v2992
      %v3009 = vmul.f32 %v2755, %v2993
      %v3010 = vmul.f32 %v2760, %v2994
      %v3011 = vmul.f32 %v2765, %v2995
      %v3012 = vmul.f32 %v2770, %v2996
      %v3013 = vmul.f32 %v2775, %v2997
      %v3014 = vmul.f32 %v2780, %v2998
      %v3015 = vmul.f32 %v2785, %v2999
      %v3016 = vmul.f32 %v2790, %v3000
      %v3017 = vmul.f32 %v2795, %v3001
      %v3018 = vmul.f32 %v2800, %v3002
      %v3019 = vmul.f32 %v2805, %v3003
      %v3020 = vmul.f32 %v2810, %v3004
      %v3021 = vpack.c.bf16 %v2685, %v2684
      %v3022 = vpack.c.bf16 %v2687, %v2686
      %v3023 = vpack.c.bf16 %v2689, %v2688
      %v3024 = vpack.c.bf16 %v2691, %v2690
      %v3025 = vpack.c.bf16 %v2693, %v2692
      %v3026 = vpack.c.bf16 %v2695, %v2694
      %v3027 = vpack.c.bf16 %v2697, %v2696
      %v3028 = vpack.c.bf16 %v2699, %v2698
      %3029 = vrot.lane.b32.xlu0 %v1318, 88
      %v3030 = vpop.permute.xlu0 %3029
      %3031 = vrot.lane.b32.xlu0 %v1319, 88
      %v3032 = vpop.permute.xlu0 %3031
      %3033 = vrot.lane.b32.xlu0 %v1320, 88
      %v3034 = vpop.permute.xlu0 %3033
      %3035 = vrot.lane.b32.xlu0 %v1321, 88
      %v3036 = vpop.permute.xlu0 %3035
      %3037 = vrot.lane.b32.xlu0 %v1322, 88
      %v3038 = vpop.permute.xlu0 %3037
      %3039 = vrot.lane.b32.xlu0 %v1323, 88
      %v3040 = vpop.permute.xlu0 %3039
      %3041 = vrot.lane.b32.xlu0 %v1324, 88
      %v3042 = vpop.permute.xlu0 %3041
      %3043 = vrot.lane.b32.xlu0 %v1325, 88
      %v3044 = vpop.permute.xlu0 %3043
      %3053 = vmatpush.bf16.msra.mxu0 %v3044
      %3054 = vmatpush.bf16.msra.mxu0 %v3042
      %3055 = vmatpush.bf16.msra.mxu0 %v3040
      %3056 = vmatpush.bf16.msra.mxu0 %v3038
      %3057 = vmatpush.bf16.msra.mxu0 %v3036
      %3058 = vmatpush.bf16.msra.mxu0 %v3034
      %3059 = vmatpush.bf16.msra.mxu0 %v3032
      %3060 = vmatpush.bf16.msra.mxu0 %v3030
      %3061 = vmatmul.bf16.gmra.mxu0 %v3021
      %v3062 = vpop.f32.mrf.mxu0
      %v3063 = vadd.f32 0.0, %v3062
      %v3064 = vpop.f32.mrf.mxu0
      %v3065 = vadd.f32 0.0, %v3064
      %3066 = vmatmul.bf16.gmra.mxu0 %v3022
      %v3067 = vpop.f32.mrf.mxu0
      %v3068 = vadd.f32 0.0, %v3067
      %v3069 = vpop.f32.mrf.mxu0
      %v3070 = vadd.f32 0.0, %v3069
      %3071 = vmatmul.bf16.gmra.mxu0 %v3023
      %v3072 = vpop.f32.mrf.mxu0
      %v3073 = vadd.f32 0.0, %v3072
      %v3074 = vpop.f32.mrf.mxu0
      %v3075 = vadd.f32 0.0, %v3074
      %3076 = vmatmul.bf16.gmra.mxu0 %v3024
      %v3077 = vpop.f32.mrf.mxu0
      %v3078 = vadd.f32 0.0, %v3077
      %v3079 = vpop.f32.mrf.mxu0
      %v3080 = vadd.f32 0.0, %v3079
      %3081 = vmatmul.bf16.gmra.mxu0 %v3025
      %v3082 = vpop.f32.mrf.mxu0
      %v3083 = vadd.f32 0.0, %v3082
      %v3084 = vpop.f32.mrf.mxu0
      %v3085 = vadd.f32 0.0, %v3084
      %3086 = vmatmul.bf16.gmra.mxu0 %v3026
      %v3087 = vpop.f32.mrf.mxu0
      %v3088 = vadd.f32 0.0, %v3087
      %v3089 = vpop.f32.mrf.mxu0
      %v3090 = vadd.f32 0.0, %v3089
      %3091 = vmatmul.bf16.gmra.mxu0 %v3027
      %v3092 = vpop.f32.mrf.mxu0
      %v3093 = vadd.f32 0.0, %v3092
      %v3094 = vpop.f32.mrf.mxu0
      %v3095 = vadd.f32 0.0, %v3094
      %3096 = vmatmul.bf16.gmra.mxu0 %v3028
      %v3097 = vpop.f32.mrf.mxu0
      %v3098 = vadd.f32 0.0, %v3097
      %v3099 = vpop.f32.mrf.mxu0
      %v3100 = vadd.f32 0.0, %v3099
      %3101 = vdwg.mxu0
      %3118 = vrot.lane.b32.xlu0 %v3063, 8
      %v3119 = vpop.permute.xlu0 %3118
      %3120 = vrot.lane.b32.xlu0 %v3065, 8
      %v3121 = vpop.permute.xlu0 %3120
      %3122 = vrot.lane.b32.xlu0 %v3068, 8
      %v3123 = vpop.permute.xlu0 %3122
      %3124 = vrot.lane.b32.xlu0 %v3070, 8
      %v3125 = vpop.permute.xlu0 %3124
      %3126 = vrot.lane.b32.xlu0 %v3073, 8
      %v3127 = vpop.permute.xlu0 %3126
      %3128 = vrot.lane.b32.xlu0 %v3075, 8
      %v3129 = vpop.permute.xlu0 %3128
      %3130 = vrot.lane.b32.xlu0 %v3078, 8
      %v3131 = vpop.permute.xlu0 %3130
      %3132 = vrot.lane.b32.xlu0 %v3080, 8
      %v3133 = vpop.permute.xlu0 %3132
      %3134 = vrot.lane.b32.xlu0 %v3083, 8
      %v3135 = vpop.permute.xlu0 %3134
      %3136 = vrot.lane.b32.xlu0 %v3085, 8
      %v3137 = vpop.permute.xlu0 %3136
      %3138 = vrot.lane.b32.xlu0 %v3088, 8
      %v3139 = vpop.permute.xlu0 %3138
      %3140 = vrot.lane.b32.xlu0 %v3090, 8
      %v3141 = vpop.permute.xlu0 %3140
      %3142 = vrot.lane.b32.xlu0 %v3093, 8
      %v3143 = vpop.permute.xlu0 %3142
      %3144 = vrot.lane.b32.xlu0 %v3095, 8
      %v3145 = vpop.permute.xlu0 %3144
      %3146 = vrot.lane.b32.xlu0 %v3098, 8
      %v3147 = vpop.permute.xlu0 %3146
      %3148 = vrot.lane.b32.xlu0 %v3100, 8
      %v3149 = vpop.permute.xlu0 %3148
      %v3166 = vadd.f32 %v3005, %v3119
      %v3167 = vadd.f32 %v3006, %v3121
      %v3168 = vadd.f32 %v3007, %v3123
      %v3169 = vadd.f32 %v3008, %v3125
      %v3170 = vadd.f32 %v3009, %v3127
      %v3171 = vadd.f32 %v3010, %v3129
      %v3172 = vadd.f32 %v3011, %v3131
      %v3173 = vadd.f32 %v3012, %v3133
      %v3174 = vadd.f32 %v3013, %v3135
      %v3175 = vadd.f32 %v3014, %v3137
      %v3176 = vadd.f32 %v3015, %v3139
      %v3177 = vadd.f32 %v3016, %v3141
      %v3178 = vadd.f32 %v3017, %v3143
      %v3179 = vadd.f32 %v3018, %v3145
      %v3180 = vadd.f32 %v3019, %v3147
      %v3181 = vadd.f32 %v3020, %v3149
      %3182 = vst.msk [vmem:[#allocation3] sm:$0xff] %vm2876, %v3166
      %3183 = vst.msk [vmem:[#allocation3 + $0x8] sm:$0xff] %vm2876, %v3167
      %3184 = vst.msk [vmem:[#allocation3 + $0x10] sm:$0xff] %vm2876, %v3168
      %3185 = vst.msk [vmem:[#allocation3 + $0x18] sm:$0xff] %vm2876, %v3169
      %3186 = vst.msk [vmem:[#allocation3 + $0x20] sm:$0xff] %vm2876, %v3170
      %3187 = vst.msk [vmem:[#allocation3 + $0x28] sm:$0xff] %vm2876, %v3171
      %3188 = vst.msk [vmem:[#allocation3 + $0x30] sm:$0xff] %vm2876, %v3172
      %3189 = vst.msk [vmem:[#allocation3 + $0x38] sm:$0xff] %vm2876, %v3173
      %3190 = vst.msk [vmem:[#allocation3 + $0x40] sm:$0xff] %vm2876, %v3174
      %3191 = vst.msk [vmem:[#allocation3 + $0x48] sm:$0xff] %vm2876, %v3175
      %3192 = vst.msk [vmem:[#allocation3 + $0x50] sm:$0xff] %vm2876, %v3176
      %3193 = vst.msk [vmem:[#allocation3 + $0x58] sm:$0xff] %vm2876, %v3177
      %3194 = vst.msk [vmem:[#allocation3 + $0x60] sm:$0xff] %vm2876, %v3178
      %3195 = vst.msk [vmem:[#allocation3 + $0x68] sm:$0xff] %vm2876, %v3179
      %3196 = vst.msk [vmem:[#allocation3 + $0x70] sm:$0xff] %vm2876, %v3180
      %3197 = vst.msk [vmem:[#allocation3 + $0x78] sm:$0xff] %vm2876, %v3181
      %v3198 = vld [vmem:[#allocation4] sm:$0xff]
      %v3199 = vld [vmem:[#allocation4 + $0x8] sm:$0xff]
      %v3200 = vld [vmem:[#allocation4 + $0x10] sm:$0xff]
      %v3201 = vld [vmem:[#allocation4 + $0x18] sm:$0xff]
      %v3202 = vld [vmem:[#allocation4 + $0x20] sm:$0xff]
      %v3203 = vld [vmem:[#allocation4 + $0x28] sm:$0xff]
      %v3204 = vld [vmem:[#allocation4 + $0x30] sm:$0xff]
      %v3205 = vld [vmem:[#allocation4 + $0x38] sm:$0xff]
      %v3206 = vld [vmem:[#allocation4 + $0x40] sm:$0xff]
      %v3207 = vld [vmem:[#allocation4 + $0x48] sm:$0xff]
      %v3208 = vld [vmem:[#allocation4 + $0x50] sm:$0xff]
      %v3209 = vld [vmem:[#allocation4 + $0x58] sm:$0xff]
      %v3210 = vld [vmem:[#allocation4 + $0x60] sm:$0xff]
      %v3211 = vld [vmem:[#allocation4 + $0x68] sm:$0xff]
      %v3212 = vld [vmem:[#allocation4 + $0x70] sm:$0xff]
      %v3213 = vld [vmem:[#allocation4 + $0x78] sm:$0xff]
      %v3214 = vmul.f32 %v2735, %v3198
      %v3215 = vmul.f32 %v2740, %v3199
      %v3216 = vmul.f32 %v2745, %v3200
      %v3217 = vmul.f32 %v2750, %v3201
      %v3218 = vmul.f32 %v2755, %v3202
      %v3219 = vmul.f32 %v2760, %v3203
      %v3220 = vmul.f32 %v2765, %v3204
      %v3221 = vmul.f32 %v2770, %v3205
      %v3222 = vmul.f32 %v2775, %v3206
      %v3223 = vmul.f32 %v2780, %v3207
      %v3224 = vmul.f32 %v2785, %v3208
      %v3225 = vmul.f32 %v2790, %v3209
      %v3226 = vmul.f32 %v2795, %v3210
      %v3227 = vmul.f32 %v2800, %v3211
      %v3228 = vmul.f32 %v2805, %v3212
      %v3229 = vmul.f32 %v2810, %v3213
      %v3230 = vpack.c.bf16 %v2701, %v2700
      %v3231 = vpack.c.bf16 %v2703, %v2702
      %v3232 = vpack.c.bf16 %v2705, %v2704
      %v3233 = vpack.c.bf16 %v2707, %v2706
      %v3234 = vpack.c.bf16 %v2709, %v2708
      %v3235 = vpack.c.bf16 %v2711, %v2710
      %v3236 = vpack.c.bf16 %v2713, %v2712
      %v3237 = vpack.c.bf16 %v2715, %v2714
      %3238 = vmatpush.bf16.msra.mxu0 %v3044
      %3239 = vmatpush.bf16.msra.mxu0 %v3042
      %3240 = vmatpush.bf16.msra.mxu0 %v3040
      %3241 = vmatpush.bf16.msra.mxu0 %v3038
      %3242 = vmatpush.bf16.msra.mxu0 %v3036
      %3243 = vmatpush.bf16.msra.mxu0 %v3034
      %3244 = vmatpush.bf16.msra.mxu0 %v3032
      %3245 = vmatpush.bf16.msra.mxu0 %v3030
      %3246 = vmatmul.bf16.gmra.mxu0 %v3230
      %v3247 = vpop.f32.mrf.mxu0
      %v3248 = vadd.f32 0.0, %v3247
      %v3249 = vpop.f32.mrf.mxu0
      %v3250 = vadd.f32 0.0, %v3249
      %3251 = vmatmul.bf16.gmra.mxu0 %v3231
      %v3252 = vpop.f32.mrf.mxu0
      %v3253 = vadd.f32 0.0, %v3252
      %v3254 = vpop.f32.mrf.mxu0
      %v3255 = vadd.f32 0.0, %v3254
      %3256 = vmatmul.bf16.gmra.mxu0 %v3232
      %v3257 = vpop.f32.mrf.mxu0
      %v3258 = vadd.f32 0.0, %v3257
      %v3259 = vpop.f32.mrf.mxu0
      %v3260 = vadd.f32 0.0, %v3259
      %3261 = vmatmul.bf16.gmra.mxu0 %v3233
      %v3262 = vpop.f32.mrf.mxu0
      %v3263 = vadd.f32 0.0, %v3262
      %v3264 = vpop.f32.mrf.mxu0
      %v3265 = vadd.f32 0.0, %v3264
      %3266 = vmatmul.bf16.gmra.mxu0 %v3234
      %v3267 = vpop.f32.mrf.mxu0
      %v3268 = vadd.f32 0.0, %v3267
      %v3269 = vpop.f32.mrf.mxu0
      %v3270 = vadd.f32 0.0, %v3269
      %3271 = vmatmul.bf16.gmra.mxu0 %v3235
      %v3272 = vpop.f32.mrf.mxu0
      %v3273 = vadd.f32 0.0, %v3272
      %v3274 = vpop.f32.mrf.mxu0
      %v3275 = vadd.f32 0.0, %v3274
      %3276 = vmatmul.bf16.gmra.mxu0 %v3236
      %v3277 = vpop.f32.mrf.mxu0
      %v3278 = vadd.f32 0.0, %v3277
      %v3279 = vpop.f32.mrf.mxu0
      %v3280 = vadd.f32 0.0, %v3279
      %3281 = vmatmul.bf16.gmra.mxu0 %v3237
      %v3282 = vpop.f32.mrf.mxu0
      %v3283 = vadd.f32 0.0, %v3282
      %v3284 = vpop.f32.mrf.mxu0
      %v3285 = vadd.f32 0.0, %v3284
      %3286 = vdwg.mxu0
      %3303 = vrot.lane.b32.xlu0 %v3248, 8
      %v3304 = vpop.permute.xlu0 %3303
      %3305 = vrot.lane.b32.xlu0 %v3250, 8
      %v3306 = vpop.permute.xlu0 %3305
      %3307 = vrot.lane.b32.xlu0 %v3253, 8
      %v3308 = vpop.permute.xlu0 %3307
      %3309 = vrot.lane.b32.xlu0 %v3255, 8
      %v3310 = vpop.permute.xlu0 %3309
      %3311 = vrot.lane.b32.xlu0 %v3258, 8
      %v3312 = vpop.permute.xlu0 %3311
      %3313 = vrot.lane.b32.xlu0 %v3260, 8
      %v3314 = vpop.permute.xlu0 %3313
      %3315 = vrot.lane.b32.xlu0 %v3263, 8
      %v3316 = vpop.permute.xlu0 %3315
      %3317 = vrot.lane.b32.xlu0 %v3265, 8
      %v3318 = vpop.permute.xlu0 %3317
      %3319 = vrot.lane.b32.xlu0 %v3268, 8
      %v3320 = vpop.permute.xlu0 %3319
      %3321 = vrot.lane.b32.xlu0 %v3270, 8
      %v3322 = vpop.permute.xlu0 %3321
      %3323 = vrot.lane.b32.xlu0 %v3273, 8
      %v3324 = vpop.permute.xlu0 %3323
      %3325 = vrot.lane.b32.xlu0 %v3275, 8
      %v3326 = vpop.permute.xlu0 %3325
      %3327 = vrot.lane.b32.xlu0 %v3278, 8
      %v3328 = vpop.permute.xlu0 %3327
      %3329 = vrot.lane.b32.xlu0 %v3280, 8
      %v3330 = vpop.permute.xlu0 %3329
      %3331 = vrot.lane.b32.xlu0 %v3283, 8
      %v3332 = vpop.permute.xlu0 %3331
      %3333 = vrot.lane.b32.xlu0 %v3285, 8
      %v3334 = vpop.permute.xlu0 %3333
      %v3351 = vadd.f32 %v3214, %v3304
      %v3352 = vadd.f32 %v3215, %v3306
      %v3353 = vadd.f32 %v3216, %v3308
      %v3354 = vadd.f32 %v3217, %v3310
      %v3355 = vadd.f32 %v3218, %v3312
      %v3356 = vadd.f32 %v3219, %v3314
      %v3357 = vadd.f32 %v3220, %v3316
      %v3358 = vadd.f32 %v3221, %v3318
      %v3359 = vadd.f32 %v3222, %v3320
      %v3360 = vadd.f32 %v3223, %v3322
      %v3361 = vadd.f32 %v3224, %v3324
      %v3362 = vadd.f32 %v3225, %v3326
      %v3363 = vadd.f32 %v3226, %v3328
      %v3364 = vadd.f32 %v3227, %v3330
      %v3365 = vadd.f32 %v3228, %v3332
      %v3366 = vadd.f32 %v3229, %v3334
      %3367 = vst.msk [vmem:[#allocation4] sm:$0xff] %vm2876, %v3351
      %3368 = vst.msk [vmem:[#allocation4 + $0x8] sm:$0xff] %vm2876, %v3352
      %3369 = vst.msk [vmem:[#allocation4 + $0x10] sm:$0xff] %vm2876, %v3353
      %3370 = vst.msk [vmem:[#allocation4 + $0x18] sm:$0xff] %vm2876, %v3354
      %3371 = vst.msk [vmem:[#allocation4 + $0x20] sm:$0xff] %vm2876, %v3355
      %3372 = vst.msk [vmem:[#allocation4 + $0x28] sm:$0xff] %vm2876, %v3356
      %3373 = vst.msk [vmem:[#allocation4 + $0x30] sm:$0xff] %vm2876, %v3357
      %3374 = vst.msk [vmem:[#allocation4 + $0x38] sm:$0xff] %vm2876, %v3358
      %3375 = vst.msk [vmem:[#allocation4 + $0x40] sm:$0xff] %vm2876, %v3359
      %3376 = vst.msk [vmem:[#allocation4 + $0x48] sm:$0xff] %vm2876, %v3360
      %3377 = vst.msk [vmem:[#allocation4 + $0x50] sm:$0xff] %vm2876, %v3361
      %3378 = vst.msk [vmem:[#allocation4 + $0x58] sm:$0xff] %vm2876, %v3362
      %3379 = vst.msk [vmem:[#allocation4 + $0x60] sm:$0xff] %vm2876, %v3363
      %3380 = vst.msk [vmem:[#allocation4 + $0x68] sm:$0xff] %vm2876, %v3364
      %3381 = vst.msk [vmem:[#allocation4 + $0x70] sm:$0xff] %vm2876, %v3365
      %3382 = vst.msk [vmem:[#allocation4 + $0x78] sm:$0xff] %vm2876, %v3366
      %vm3383 = vcmask 15368
      %3384 = vst.msk [vmem:[#allocation7] sm:$0xff] %vm3383, %v2476
      %3385 = vst.msk [vmem:[#allocation7 + $0x8] sm:$0xff] %vm3383, %v2477
      %3386 = vst.msk [vmem:[#allocation7 + $0x10] sm:$0xff] %vm3383, %v2478
      %3387 = vst.msk [vmem:[#allocation7 + $0x18] sm:$0xff] %vm3383, %v2479
      %3388 = vst.msk [vmem:[#allocation7 + $0x20] sm:$0xff] %vm3383, %v2480
      %3389 = vst.msk [vmem:[#allocation7 + $0x28] sm:$0xff] %vm3383, %v2481
      %3390 = vst.msk [vmem:[#allocation7 + $0x30] sm:$0xff] %vm3383, %v2482
      %3391 = vst.msk [vmem:[#allocation7 + $0x38] sm:$0xff] %vm3383, %v2483
      %3392 = vst.msk [vmem:[#allocation7 + $0x40] sm:$0xff] %vm3383, %v2484
      %3393 = vst.msk [vmem:[#allocation7 + $0x48] sm:$0xff] %vm3383, %v2485
      %3394 = vst.msk [vmem:[#allocation7 + $0x50] sm:$0xff] %vm3383, %v2486
      %3395 = vst.msk [vmem:[#allocation7 + $0x58] sm:$0xff] %vm3383, %v2487
      %3396 = vst.msk [vmem:[#allocation7 + $0x60] sm:$0xff] %vm3383, %v2488
      %3397 = vst.msk [vmem:[#allocation7 + $0x68] sm:$0xff] %vm3383, %v2489
      %3398 = vst.msk [vmem:[#allocation7 + $0x70] sm:$0xff] %vm3383, %v2490
      %3399 = vst.msk [vmem:[#allocation7 + $0x78] sm:$0xff] %vm3383, %v2491
      %3400 = vrot.lane.b32.xlu0 %v1278, 112
      %v3401 = vpop.permute.xlu0 %3400
      %3402 = vrot.lane.b32.xlu0 %v1279, 112
      %v3403 = vpop.permute.xlu0 %3402
      %3404 = vrot.lane.b32.xlu0 %v1280, 112
      %v3405 = vpop.permute.xlu0 %3404
      %3406 = vrot.lane.b32.xlu0 %v1281, 112
      %v3407 = vpop.permute.xlu0 %3406
      %3408 = vrot.lane.b32.xlu0 %v1282, 112
      %v3409 = vpop.permute.xlu0 %3408
      %3410 = vrot.lane.b32.xlu0 %v1283, 112
      %v3411 = vpop.permute.xlu0 %3410
      %3412 = vrot.lane.b32.xlu0 %v1284, 112
      %v3413 = vpop.permute.xlu0 %3412
      %3414 = vrot.lane.b32.xlu0 %v1285, 112
      %v3415 = vpop.permute.xlu0 %3414
      %3416 = vrot.lane.b32.xlu0 %v1318, 112
      %v3417 = vpop.permute.xlu0 %3416
      %3418 = vrot.lane.b32.xlu0 %v1319, 112
      %v3419 = vpop.permute.xlu0 %3418
      %3420 = vrot.lane.b32.xlu0 %v1320, 112
      %v3421 = vpop.permute.xlu0 %3420
      %3422 = vrot.lane.b32.xlu0 %v1321, 112
      %v3423 = vpop.permute.xlu0 %3422
      %3424 = vrot.lane.b32.xlu0 %v1322, 112
      %v3425 = vpop.permute.xlu0 %3424
      %3426 = vrot.lane.b32.xlu0 %v1323, 112
      %v3427 = vpop.permute.xlu0 %3426
      %3428 = vrot.lane.b32.xlu0 %v1324, 112
      %v3429 = vpop.permute.xlu0 %3428
      %3430 = vrot.lane.b32.xlu0 %v1325, 112
      %v3431 = vpop.permute.xlu0 %3430
      %v3433 = vsel %vm1326, %v3401, 0
      %v3436 = vsel %vm1326, %v3403, 0
      %v3439 = vsel %vm1326, %v3405, 0
      %v3442 = vsel %vm1326, %v3407, 0
      %v3445 = vsel %vm1326, %v3409, 0
      %v3448 = vsel %vm1326, %v3411, 0
      %v3451 = vsel %vm1326, %v3413, 0
      %v3454 = vsel %vm1326, %v3415, 0
      %v3457 = vsel %vm1326, %v3417, 0
      %v3460 = vsel %vm1326, %v3419, 0
      %v3463 = vsel %vm1326, %v3421, 0
      %v3466 = vsel %vm1326, %v3423, 0
      %v3469 = vsel %vm1326, %v3425, 0
      %v3472 = vsel %vm1326, %v3427, 0
      %v3475 = vsel %vm1326, %v3429, 0
      %v3478 = vsel %vm1326, %v3431, 0
      %3480 = vmatpush.bf16.xpose.msra.mxu0 %v3478
      %3481 = vmatpush.bf16.xpose.msra.mxu0 %v3475
      %3482 = vmatpush.bf16.xpose.msra.mxu0 %v3472
      %3483 = vmatpush.bf16.xpose.msra.mxu0 %v3469
      %3484 = vmatpush.bf16.xpose.msra.mxu0 %v3466
      %3485 = vmatpush.bf16.xpose.msra.mxu0 %v3463
      %3486 = vmatpush.bf16.xpose.msra.mxu0 %v3460
      %3487 = vmatpush.bf16.xpose.msra.mxu0 %v3457
      %3488 = vmatmul.bf16.gmra.mxu0 %v3433
      %v3489 = vpop.f32.mrf.mxu0
      %v3490 = vadd.f32 0.0, %v3489
      %v3491 = vpop.f32.mrf.mxu0
      %v3492 = vadd.f32 0.0, %v3491
      %3493 = vmatmul.bf16.gmra.mxu0 %v3436
      %v3494 = vpop.f32.mrf.mxu0
      %v3495 = vadd.f32 0.0, %v3494
      %v3496 = vpop.f32.mrf.mxu0
      %v3497 = vadd.f32 0.0, %v3496
      %3498 = vmatmul.bf16.gmra.mxu0 %v3439
      %v3499 = vpop.f32.mrf.mxu0
      %v3500 = vadd.f32 0.0, %v3499
      %v3501 = vpop.f32.mrf.mxu0
      %v3502 = vadd.f32 0.0, %v3501
      %3503 = vmatmul.bf16.gmra.mxu0 %v3442
      %v3504 = vpop.f32.mrf.mxu0
      %v3505 = vadd.f32 0.0, %v3504
      %v3506 = vpop.f32.mrf.mxu0
      %v3507 = vadd.f32 0.0, %v3506
      %3508 = vmatmul.bf16.gmra.mxu0 %v3445
      %v3509 = vpop.f32.mrf.mxu0
      %v3510 = vadd.f32 0.0, %v3509
      %v3511 = vpop.f32.mrf.mxu0
      %v3512 = vadd.f32 0.0, %v3511
      %3513 = vmatmul.bf16.gmra.mxu0 %v3448
      %v3514 = vpop.f32.mrf.mxu0
      %v3515 = vadd.f32 0.0, %v3514
      %v3516 = vpop.f32.mrf.mxu0
      %v3517 = vadd.f32 0.0, %v3516
      %3518 = vmatmul.bf16.gmra.mxu0 %v3451
      %v3519 = vpop.f32.mrf.mxu0
      %v3520 = vadd.f32 0.0, %v3519
      %v3521 = vpop.f32.mrf.mxu0
      %v3522 = vadd.f32 0.0, %v3521
      %3523 = vmatmul.bf16.gmra.mxu0 %v3454
      %v3524 = vpop.f32.mrf.mxu0
      %v3525 = vadd.f32 0.0, %v3524
      %v3526 = vpop.f32.mrf.mxu0
      %v3527 = vadd.f32 0.0, %v3526
      %3528 = vdwg.mxu0
      %v3529 = vld [vmem:[#allocation7] sm:$0xff]
      %v3530 = vld [vmem:[#allocation7 + $0x8] sm:$0xff]
      %v3531 = vld [vmem:[#allocation7 + $0x10] sm:$0xff]
      %v3532 = vld [vmem:[#allocation7 + $0x18] sm:$0xff]
      %v3533 = vld [vmem:[#allocation7 + $0x20] sm:$0xff]
      %v3534 = vld [vmem:[#allocation7 + $0x28] sm:$0xff]
      %v3535 = vld [vmem:[#allocation7 + $0x30] sm:$0xff]
      %v3536 = vld [vmem:[#allocation7 + $0x38] sm:$0xff]
      %v3537 = vld [vmem:[#allocation7 + $0x40] sm:$0xff]
      %v3538 = vld [vmem:[#allocation7 + $0x48] sm:$0xff]
      %v3539 = vld [vmem:[#allocation7 + $0x50] sm:$0xff]
      %v3540 = vld [vmem:[#allocation7 + $0x58] sm:$0xff]
      %v3541 = vld [vmem:[#allocation7 + $0x60] sm:$0xff]
      %v3542 = vld [vmem:[#allocation7 + $0x68] sm:$0xff]
      %v3543 = vld [vmem:[#allocation7 + $0x70] sm:$0xff]
      %v3544 = vld [vmem:[#allocation7 + $0x78] sm:$0xff]
      %v3545 = vsel %vm1230, %v3490, -1e+30
      %v3546 = vsel %vm1231, %v3492, -1e+30
      %v3547 = vsel %vm1232, %v3495, -1e+30
      %v3548 = vsel %vm1233, %v3497, -1e+30
      %v3549 = vsel %vm1234, %v3500, -1e+30
      %v3550 = vsel %vm1235, %v3502, -1e+30
      %v3551 = vsel %vm1236, %v3505, -1e+30
      %v3552 = vsel %vm1237, %v3507, -1e+30
      %v3553 = vsel %vm1238, %v3510, -1e+30
      %v3554 = vsel %vm1239, %v3512, -1e+30
      %v3555 = vsel %vm1240, %v3515, -1e+30
      %v3556 = vsel %vm1241, %v3517, -1e+30
      %v3557 = vsel %vm1242, %v3520, -1e+30
      %v3558 = vsel %vm1243, %v3522, -1e+30
      %v3559 = vsel %vm1244, %v3525, -1e+30
      %v3560 = vsel %vm1245, %v3527, -1e+30
      %3561 = vmax.xlane.f32.xlu0 %v3545
      %v3562 = vpop.xlane.xlu0 %3561
      %3563 = vmax.xlane.f32.xlu0 %v3546
      %v3564 = vpop.xlane.xlu0 %3563
      %3565 = vmax.xlane.f32.xlu0 %v3547
      %v3566 = vpop.xlane.xlu0 %3565
      %3567 = vmax.xlane.f32.xlu0 %v3548
      %v3568 = vpop.xlane.xlu0 %3567
      %3569 = vmax.xlane.f32.xlu0 %v3549
      %v3570 = vpop.xlane.xlu0 %3569
      %3571 = vmax.xlane.f32.xlu0 %v3550
      %v3572 = vpop.xlane.xlu0 %3571
      %3573 = vmax.xlane.f32.xlu0 %v3551
      %v3574 = vpop.xlane.xlu0 %3573
      %3575 = vmax.xlane.f32.xlu0 %v3552
      %v3576 = vpop.xlane.xlu0 %3575
      %3577 = vmax.xlane.f32.xlu0 %v3553
      %v3578 = vpop.xlane.xlu0 %3577
      %3579 = vmax.xlane.f32.xlu0 %v3554
      %v3580 = vpop.xlane.xlu0 %3579
      %3581 = vmax.xlane.f32.xlu0 %v3555
      %v3582 = vpop.xlane.xlu0 %3581
      %3583 = vmax.xlane.f32.xlu0 %v3556
      %v3584 = vpop.xlane.xlu0 %3583
      %3585 = vmax.xlane.f32.xlu0 %v3557
      %v3586 = vpop.xlane.xlu0 %3585
      %3587 = vmax.xlane.f32.xlu0 %v3558
      %v3588 = vpop.xlane.xlu0 %3587
      %3589 = vmax.xlane.f32.xlu0 %v3559
      %v3590 = vpop.xlane.xlu0 %3589
      %3591 = vmax.xlane.f32.xlu0 %v3560
      %v3592 = vpop.xlane.xlu0 %3591
      %v3593 = vmax.f32 %v3529, %v3562
      %v3594 = vmax.f32 %v3530, %v3564
      %v3595 = vmax.f32 %v3531, %v3566
      %v3596 = vmax.f32 %v3532, %v3568
      %v3597 = vmax.f32 %v3533, %v3570
      %v3598 = vmax.f32 %v3534, %v3572
      %v3599 = vmax.f32 %v3535, %v3574
      %v3600 = vmax.f32 %v3536, %v3576
      %v3601 = vmax.f32 %v3537, %v3578
      %v3602 = vmax.f32 %v3538, %v3580
      %v3603 = vmax.f32 %v3539, %v3582
      %v3604 = vmax.f32 %v3540, %v3584
      %v3605 = vmax.f32 %v3541, %v3586
      %v3606 = vmax.f32 %v3542, %v3588
      %v3607 = vmax.f32 %v3543, %v3590
      %v3608 = vmax.f32 %v3544, %v3592
      %v3609 = vsub.f32 %v3529, %v3593
      %v3610 = vsub.f32 %v3530, %v3594
      %v3611 = vsub.f32 %v3531, %v3595
      %v3612 = vsub.f32 %v3532, %v3596
      %v3613 = vsub.f32 %v3533, %v3597
      %v3614 = vsub.f32 %v3534, %v3598
      %v3615 = vsub.f32 %v3535, %v3599
      %v3616 = vsub.f32 %v3536, %v3600
      %v3617 = vsub.f32 %v3537, %v3601
      %v3618 = vsub.f32 %v3538, %v3602
      %v3619 = vsub.f32 %v3539, %v3603
      %v3620 = vsub.f32 %v3540, %v3604
      %v3621 = vsub.f32 %v3541, %v3605
      %v3622 = vsub.f32 %v3542, %v3606
      %v3623 = vsub.f32 %v3543, %v3607
      %v3624 = vsub.f32 %v3544, %v3608
      %v3625 = vmul.f32 %v3609, 1.442695
      %v3626 = vpow.pop %v3625
      %v3627 = vmul.f32 %v3610, 1.442695
      %v3628 = vpow.pop %v3627
      %v3629 = vmul.f32 %v3611, 1.442695
      %v3630 = vpow.pop %v3629
      %v3631 = vmul.f32 %v3612, 1.442695
      %v3632 = vpow.pop %v3631
      %v3633 = vmul.f32 %v3613, 1.442695
      %v3634 = vpow.pop %v3633
      %v3635 = vmul.f32 %v3614, 1.442695
      %v3636 = vpow.pop %v3635
      %v3637 = vmul.f32 %v3615, 1.442695
      %v3638 = vpow.pop %v3637
      %v3639 = vmul.f32 %v3616, 1.442695
      %v3640 = vpow.pop %v3639
      %v3641 = vmul.f32 %v3617, 1.442695
      %v3642 = vpow.pop %v3641
      %v3643 = vmul.f32 %v3618, 1.442695
      %v3644 = vpow.pop %v3643
      %v3645 = vmul.f32 %v3619, 1.442695
      %v3646 = vpow.pop %v3645
      %v3647 = vmul.f32 %v3620, 1.442695
      %v3648 = vpow.pop %v3647
      %v3649 = vmul.f32 %v3621, 1.442695
      %v3650 = vpow.pop %v3649
      %v3651 = vmul.f32 %v3622, 1.442695
      %v3652 = vpow.pop %v3651
      %v3653 = vmul.f32 %v3623, 1.442695
      %v3654 = vpow.pop %v3653
      %v3655 = vmul.f32 %v3624, 1.442695
      %v3656 = vpow.pop %v3655
      %3658 = vset.pattern.permute.xlu0 2
      %3659 = vperm.xlu0 %3658, %v3593
      %v3660 = vpop.permute.xlu0 %3659
      %3663 = vset.pattern.permute.xlu0 2
      %3664 = vperm.xlu0 %3663, %v3594
      %v3665 = vpop.permute.xlu0 %3664
      %3668 = vset.pattern.permute.xlu0 2
      %3669 = vperm.xlu0 %3668, %v3595
      %v3670 = vpop.permute.xlu0 %3669
      %3673 = vset.pattern.permute.xlu0 2
      %3674 = vperm.xlu0 %3673, %v3596
      %v3675 = vpop.permute.xlu0 %3674
      %3678 = vset.pattern.permute.xlu0 2
      %3679 = vperm.xlu0 %3678, %v3597
      %v3680 = vpop.permute.xlu0 %3679
      %3683 = vset.pattern.permute.xlu0 2
      %3684 = vperm.xlu0 %3683, %v3598
      %v3685 = vpop.permute.xlu0 %3684
      %3688 = vset.pattern.permute.xlu0 2
      %3689 = vperm.xlu0 %3688, %v3599
      %v3690 = vpop.permute.xlu0 %3689
      %3693 = vset.pattern.permute.xlu0 2
      %3694 = vperm.xlu0 %3693, %v3600
      %v3695 = vpop.permute.xlu0 %3694
      %3698 = vset.pattern.permute.xlu0 2
      %3699 = vperm.xlu0 %3698, %v3601
      %v3700 = vpop.permute.xlu0 %3699
      %3703 = vset.pattern.permute.xlu0 2
      %3704 = vperm.xlu0 %3703, %v3602
      %v3705 = vpop.permute.xlu0 %3704
      %3708 = vset.pattern.permute.xlu0 2
      %3709 = vperm.xlu0 %3708, %v3603
      %v3710 = vpop.permute.xlu0 %3709
      %3713 = vset.pattern.permute.xlu0 2
      %3714 = vperm.xlu0 %3713, %v3604
      %v3715 = vpop.permute.xlu0 %3714
      %3718 = vset.pattern.permute.xlu0 2
      %3719 = vperm.xlu0 %3718, %v3605
      %v3720 = vpop.permute.xlu0 %3719
      %3723 = vset.pattern.permute.xlu0 2
      %3724 = vperm.xlu0 %3723, %v3606
      %v3725 = vpop.permute.xlu0 %3724
      %3728 = vset.pattern.permute.xlu0 2
      %3729 = vperm.xlu0 %3728, %v3607
      %v3730 = vpop.permute.xlu0 %3729
      %3733 = vset.pattern.permute.xlu0 2
      %3734 = vperm.xlu0 %3733, %v3608
      %v3735 = vpop.permute.xlu0 %3734
      %v3737 = vsub.f32 %v3490, %v3660
      %v3738 = vsub.f32 %v3492, %v3665
      %v3739 = vsub.f32 %v3495, %v3670
      %v3740 = vsub.f32 %v3497, %v3675
      %v3741 = vsub.f32 %v3500, %v3680
      %v3742 = vsub.f32 %v3502, %v3685
      %v3743 = vsub.f32 %v3505, %v3690
      %v3744 = vsub.f32 %v3507, %v3695
      %v3745 = vsub.f32 %v3510, %v3700
      %v3746 = vsub.f32 %v3512, %v3705
      %v3747 = vsub.f32 %v3515, %v3710
      %v3748 = vsub.f32 %v3517, %v3715
      %v3749 = vsub.f32 %v3520, %v3720
      %v3750 = vsub.f32 %v3522, %v3725
      %v3751 = vsub.f32 %v3525, %v3730
      %v3752 = vsub.f32 %v3527, %v3735
      %v3753 = vmin.f32 %v3737, 0.0
      %v3754 = vmin.f32 %v3738, 0.0
      %v3755 = vmin.f32 %v3739, 0.0
      %v3756 = vmin.f32 %v3740, 0.0
      %v3757 = vmin.f32 %v3741, 0.0
      %v3758 = vmin.f32 %v3742, 0.0
      %v3759 = vmin.f32 %v3743, 0.0
      %v3760 = vmin.f32 %v3744, 0.0
      %v3761 = vmin.f32 %v3745, 0.0
      %v3762 = vmin.f32 %v3746, 0.0
      %v3763 = vmin.f32 %v3747, 0.0
      %v3764 = vmin.f32 %v3748, 0.0
      %v3765 = vmin.f32 %v3749, 0.0
      %v3766 = vmin.f32 %v3750, 0.0
      %v3767 = vmin.f32 %v3751, 0.0
      %v3768 = vmin.f32 %v3752, 0.0
      %v3769 = vmul.f32 %v3753, 1.442695
      %v3770 = vpow.pop %v3769
      %v3771 = vmul.f32 %v3754, 1.442695
      %v3772 = vpow.pop %v3771
      %v3773 = vmul.f32 %v3755, 1.442695
      %v3774 = vpow.pop %v3773
      %v3775 = vmul.f32 %v3756, 1.442695
      %v3776 = vpow.pop %v3775
      %v3777 = vmul.f32 %v3757, 1.442695
      %v3778 = vpow.pop %v3777
      %v3779 = vmul.f32 %v3758, 1.442695
      %v3780 = vpow.pop %v3779
      %v3781 = vmul.f32 %v3759, 1.442695
      %v3782 = vpow.pop %v3781
      %v3783 = vmul.f32 %v3760, 1.442695
      %v3784 = vpow.pop %v3783
      %v3785 = vmul.f32 %v3761, 1.442695
      %v3786 = vpow.pop %v3785
      %v3787 = vmul.f32 %v3762, 1.442695
      %v3788 = vpow.pop %v3787
      %v3789 = vmul.f32 %v3763, 1.442695
      %v3790 = vpow.pop %v3789
      %v3791 = vmul.f32 %v3764, 1.442695
      %v3792 = vpow.pop %v3791
      %v3793 = vmul.f32 %v3765, 1.442695
      %v3794 = vpow.pop %v3793
      %v3795 = vmul.f32 %v3766, 1.442695
      %v3796 = vpow.pop %v3795
      %v3797 = vmul.f32 %v3767, 1.442695
      %v3798 = vpow.pop %v3797
      %v3799 = vmul.f32 %v3768, 1.442695
      %v3800 = vpow.pop %v3799
      %v3801 = vmul.f32 %v3770, %v1182
      %v3802 = vmul.f32 %v3772, %v1183
      %v3803 = vmul.f32 %v3774, %v1184
      %v3804 = vmul.f32 %v3776, %v1185
      %v3805 = vmul.f32 %v3778, %v1186
      %v3806 = vmul.f32 %v3780, %v1187
      %v3807 = vmul.f32 %v3782, %v1188
      %v3808 = vmul.f32 %v3784, %v1189
      %v3809 = vmul.f32 %v3786, %v1190
      %v3810 = vmul.f32 %v3788, %v1191
      %v3811 = vmul.f32 %v3790, %v1192
      %v3812 = vmul.f32 %v3792, %v1193
      %v3813 = vmul.f32 %v3794, %v1194
      %v3814 = vmul.f32 %v3796, %v1195
      %v3815 = vmul.f32 %v3798, %v1196
      %v3816 = vmul.f32 %v3800, %v1197
      %v3817 = vmul.f32 %v3770, %v1198
      %v3818 = vmul.f32 %v3772, %v1199
      %v3819 = vmul.f32 %v3774, %v1200
      %v3820 = vmul.f32 %v3776, %v1201
      %v3821 = vmul.f32 %v3778, %v1202
      %v3822 = vmul.f32 %v3780, %v1203
      %v3823 = vmul.f32 %v3782, %v1204
      %v3824 = vmul.f32 %v3784, %v1205
      %v3825 = vmul.f32 %v3786, %v1206
      %v3826 = vmul.f32 %v3788, %v1207
      %v3827 = vmul.f32 %v3790, %v1208
      %v3828 = vmul.f32 %v3792, %v1209
      %v3829 = vmul.f32 %v3794, %v1210
      %v3830 = vmul.f32 %v3796, %v1211
      %v3831 = vmul.f32 %v3798, %v1212
      %v3832 = vmul.f32 %v3800, %v1213
      %v3833 = vld [vmem:[#allocation5] sm:$0xff]
      %v3834 = vld [vmem:[#allocation5 + $0x8] sm:$0xff]
      %v3835 = vld [vmem:[#allocation5 + $0x10] sm:$0xff]
      %v3836 = vld [vmem:[#allocation5 + $0x18] sm:$0xff]
      %v3837 = vld [vmem:[#allocation5 + $0x20] sm:$0xff]
      %v3838 = vld [vmem:[#allocation5 + $0x28] sm:$0xff]
      %v3839 = vld [vmem:[#allocation5 + $0x30] sm:$0xff]
      %v3840 = vld [vmem:[#allocation5 + $0x38] sm:$0xff]
      %v3841 = vld [vmem:[#allocation5 + $0x40] sm:$0xff]
      %v3842 = vld [vmem:[#allocation5 + $0x48] sm:$0xff]
      %v3843 = vld [vmem:[#allocation5 + $0x50] sm:$0xff]
      %v3844 = vld [vmem:[#allocation5 + $0x58] sm:$0xff]
      %v3845 = vld [vmem:[#allocation5 + $0x60] sm:$0xff]
      %v3846 = vld [vmem:[#allocation5 + $0x68] sm:$0xff]
      %v3847 = vld [vmem:[#allocation5 + $0x70] sm:$0xff]
      %v3848 = vld [vmem:[#allocation5 + $0x78] sm:$0xff]
      %3850 = vset.pattern.permute.xlu0 2
      %3851 = vperm.xlu0 %3850, %v3626
      %v3852 = vpop.permute.xlu0 %3851
      %3855 = vset.pattern.permute.xlu0 2
      %3856 = vperm.xlu0 %3855, %v3628
      %v3857 = vpop.permute.xlu0 %3856
      %3860 = vset.pattern.permute.xlu0 2
      %3861 = vperm.xlu0 %3860, %v3630
      %v3862 = vpop.permute.xlu0 %3861
      %3865 = vset.pattern.permute.xlu0 2
      %3866 = vperm.xlu0 %3865, %v3632
      %v3867 = vpop.permute.xlu0 %3866
      %3870 = vset.pattern.permute.xlu0 2
      %3871 = vperm.xlu0 %3870, %v3634
      %v3872 = vpop.permute.xlu0 %3871
      %3875 = vset.pattern.permute.xlu0 2
      %3876 = vperm.xlu0 %3875, %v3636
      %v3877 = vpop.permute.xlu0 %3876
      %3880 = vset.pattern.permute.xlu0 2
      %3881 = vperm.xlu0 %3880, %v3638
      %v3882 = vpop.permute.xlu0 %3881
      %3885 = vset.pattern.permute.xlu0 2
      %3886 = vperm.xlu0 %3885, %v3640
      %v3887 = vpop.permute.xlu0 %3886
      %3890 = vset.pattern.permute.xlu0 2
      %3891 = vperm.xlu0 %3890, %v3642
      %v3892 = vpop.permute.xlu0 %3891
      %3895 = vset.pattern.permute.xlu0 2
      %3896 = vperm.xlu0 %3895, %v3644
      %v3897 = vpop.permute.xlu0 %3896
      %3900 = vset.pattern.permute.xlu0 2
      %3901 = vperm.xlu0 %3900, %v3646
      %v3902 = vpop.permute.xlu0 %3901
      %3905 = vset.pattern.permute.xlu0 2
      %3906 = vperm.xlu0 %3905, %v3648
      %v3907 = vpop.permute.xlu0 %3906
      %3910 = vset.pattern.permute.xlu0 2
      %3911 = vperm.xlu0 %3910, %v3650
      %v3912 = vpop.permute.xlu0 %3911
      %3915 = vset.pattern.permute.xlu0 2
      %3916 = vperm.xlu0 %3915, %v3652
      %v3917 = vpop.permute.xlu0 %3916
      %3920 = vset.pattern.permute.xlu0 2
      %3921 = vperm.xlu0 %3920, %v3654
      %v3922 = vpop.permute.xlu0 %3921
      %3925 = vset.pattern.permute.xlu0 2
      %3926 = vperm.xlu0 %3925, %v3656
      %v3927 = vpop.permute.xlu0 %3926
      %v3929 = vmul.f32 %v3852, %v3833
      %v3930 = vmul.f32 %v3857, %v3834
      %v3931 = vmul.f32 %v3862, %v3835
      %v3932 = vmul.f32 %v3867, %v3836
      %v3933 = vmul.f32 %v3872, %v3837
      %v3934 = vmul.f32 %v3877, %v3838
      %v3935 = vmul.f32 %v3882, %v3839
      %v3936 = vmul.f32 %v3887, %v3840
      %v3937 = vmul.f32 %v3892, %v3841
      %v3938 = vmul.f32 %v3897, %v3842
      %v3939 = vmul.f32 %v3902, %v3843
      %v3940 = vmul.f32 %v3907, %v3844
      %v3941 = vmul.f32 %v3912, %v3845
      %v3942 = vmul.f32 %v3917, %v3846
      %v3943 = vmul.f32 %v3922, %v3847
      %v3944 = vmul.f32 %v3927, %v3848
      %3945 = vadd.xlane.f32.xlu0 %v3801
      %v3946 = vpop.xlane.xlu0 %3945
      %3947 = vadd.xlane.f32.xlu0 %v3802
      %v3948 = vpop.xlane.xlu0 %3947
      %3949 = vadd.xlane.f32.xlu0 %v3803
      %v3950 = vpop.xlane.xlu0 %3949
      %3951 = vadd.xlane.f32.xlu0 %v3804
      %v3952 = vpop.xlane.xlu0 %3951
      %3953 = vadd.xlane.f32.xlu0 %v3805
      %v3954 = vpop.xlane.xlu0 %3953
      %3955 = vadd.xlane.f32.xlu0 %v3806
      %v3956 = vpop.xlane.xlu0 %3955
      %3957 = vadd.xlane.f32.xlu0 %v3807
      %v3958 = vpop.xlane.xlu0 %3957
      %3959 = vadd.xlane.f32.xlu0 %v3808
      %v3960 = vpop.xlane.xlu0 %3959
      %3961 = vadd.xlane.f32.xlu0 %v3809
      %v3962 = vpop.xlane.xlu0 %3961
      %3963 = vadd.xlane.f32.xlu0 %v3810
      %v3964 = vpop.xlane.xlu0 %3963
      %3965 = vadd.xlane.f32.xlu0 %v3811
      %v3966 = vpop.xlane.xlu0 %3965
      %3967 = vadd.xlane.f32.xlu0 %v3812
      %v3968 = vpop.xlane.xlu0 %3967
      %3969 = vadd.xlane.f32.xlu0 %v3813
      %v3970 = vpop.xlane.xlu0 %3969
      %3971 = vadd.xlane.f32.xlu0 %v3814
      %v3972 = vpop.xlane.xlu0 %3971
      %3973 = vadd.xlane.f32.xlu0 %v3815
      %v3974 = vpop.xlane.xlu0 %3973
      %3975 = vadd.xlane.f32.xlu0 %v3816
      %v3976 = vpop.xlane.xlu0 %3975
      %v3977 = vadd.f32 %v3929, %v3946
      %v3978 = vadd.f32 %v3930, %v3948
      %v3979 = vadd.f32 %v3931, %v3950
      %v3980 = vadd.f32 %v3932, %v3952
      %v3981 = vadd.f32 %v3933, %v3954
      %v3982 = vadd.f32 %v3934, %v3956
      %v3983 = vadd.f32 %v3935, %v3958
      %v3984 = vadd.f32 %v3936, %v3960
      %v3985 = vadd.f32 %v3937, %v3962
      %v3986 = vadd.f32 %v3938, %v3964
      %v3987 = vadd.f32 %v3939, %v3966
      %v3988 = vadd.f32 %v3940, %v3968
      %v3989 = vadd.f32 %v3941, %v3970
      %v3990 = vadd.f32 %v3942, %v3972
      %v3991 = vadd.f32 %v3943, %v3974
      %v3992 = vadd.f32 %v3944, %v3976
      %vm3993 = vcmask 195712
      %3994 = vst.msk [vmem:[#allocation5] sm:$0xff] %vm3993, %v3977
      %3995 = vst.msk [vmem:[#allocation5 + $0x8] sm:$0xff] %vm3993, %v3978
      %3996 = vst.msk [vmem:[#allocation5 + $0x10] sm:$0xff] %vm3993, %v3979
      %3997 = vst.msk [vmem:[#allocation5 + $0x18] sm:$0xff] %vm3993, %v3980
      %3998 = vst.msk [vmem:[#allocation5 + $0x20] sm:$0xff] %vm3993, %v3981
      %3999 = vst.msk [vmem:[#allocation5 + $0x28] sm:$0xff] %vm3993, %v3982
      %4000 = vst.msk [vmem:[#allocation5 + $0x30] sm:$0xff] %vm3993, %v3983
      %4001 = vst.msk [vmem:[#allocation5 + $0x38] sm:$0xff] %vm3993, %v3984
      %4002 = vst.msk [vmem:[#allocation5 + $0x40] sm:$0xff] %vm3993, %v3985
      %4003 = vst.msk [vmem:[#allocation5 + $0x48] sm:$0xff] %vm3993, %v3986
      %4004 = vst.msk [vmem:[#allocation5 + $0x50] sm:$0xff] %vm3993, %v3987
      %4005 = vst.msk [vmem:[#allocation5 + $0x58] sm:$0xff] %vm3993, %v3988
      %4006 = vst.msk [vmem:[#allocation5 + $0x60] sm:$0xff] %vm3993, %v3989
      %4007 = vst.msk [vmem:[#allocation5 + $0x68] sm:$0xff] %vm3993, %v3990
      %4008 = vst.msk [vmem:[#allocation5 + $0x70] sm:$0xff] %vm3993, %v3991
      %4009 = vst.msk [vmem:[#allocation5 + $0x78] sm:$0xff] %vm3993, %v3992
      %v4010 = vld [vmem:[#allocation6] sm:$0xff]
      %v4011 = vld [vmem:[#allocation6 + $0x8] sm:$0xff]
      %v4012 = vld [vmem:[#allocation6 + $0x10] sm:$0xff]
      %v4013 = vld [vmem:[#allocation6 + $0x18] sm:$0xff]
      %v4014 = vld [vmem:[#allocation6 + $0x20] sm:$0xff]
      %v4015 = vld [vmem:[#allocation6 + $0x28] sm:$0xff]
      %v4016 = vld [vmem:[#allocation6 + $0x30] sm:$0xff]
      %v4017 = vld [vmem:[#allocation6 + $0x38] sm:$0xff]
      %v4018 = vld [vmem:[#allocation6 + $0x40] sm:$0xff]
      %v4019 = vld [vmem:[#allocation6 + $0x48] sm:$0xff]
      %v4020 = vld [vmem:[#allocation6 + $0x50] sm:$0xff]
      %v4021 = vld [vmem:[#allocation6 + $0x58] sm:$0xff]
      %v4022 = vld [vmem:[#allocation6 + $0x60] sm:$0xff]
      %v4023 = vld [vmem:[#allocation6 + $0x68] sm:$0xff]
      %v4024 = vld [vmem:[#allocation6 + $0x70] sm:$0xff]
      %v4025 = vld [vmem:[#allocation6 + $0x78] sm:$0xff]
      %v4026 = vmul.f32 %v3852, %v4010
      %v4027 = vmul.f32 %v3857, %v4011
      %v4028 = vmul.f32 %v3862, %v4012
      %v4029 = vmul.f32 %v3867, %v4013
      %v4030 = vmul.f32 %v3872, %v4014
      %v4031 = vmul.f32 %v3877, %v4015
      %v4032 = vmul.f32 %v3882, %v4016
      %v4033 = vmul.f32 %v3887, %v4017
      %v4034 = vmul.f32 %v3892, %v4018
      %v4035 = vmul.f32 %v3897, %v4019
      %v4036 = vmul.f32 %v3902, %v4020
      %v4037 = vmul.f32 %v3907, %v4021
      %v4038 = vmul.f32 %v3912, %v4022
      %v4039 = vmul.f32 %v3917, %v4023
      %v4040 = vmul.f32 %v3922, %v4024
      %v4041 = vmul.f32 %v3927, %v4025
      %4042 = vadd.xlane.f32.xlu0 %v3817
      %v4043 = vpop.xlane.xlu0 %4042
      %4044 = vadd.xlane.f32.xlu0 %v3818
      %v4045 = vpop.xlane.xlu0 %4044
      %4046 = vadd.xlane.f32.xlu0 %v3819
      %v4047 = vpop.xlane.xlu0 %4046
      %4048 = vadd.xlane.f32.xlu0 %v3820
      %v4049 = vpop.xlane.xlu0 %4048
      %4050 = vadd.xlane.f32.xlu0 %v3821
      %v4051 = vpop.xlane.xlu0 %4050
      %4052 = vadd.xlane.f32.xlu0 %v3822
      %v4053 = vpop.xlane.xlu0 %4052
      %4054 = vadd.xlane.f32.xlu0 %v3823
      %v4055 = vpop.xlane.xlu0 %4054
      %4056 = vadd.xlane.f32.xlu0 %v3824
      %v4057 = vpop.xlane.xlu0 %4056
      %4058 = vadd.xlane.f32.xlu0 %v3825
      %v4059 = vpop.xlane.xlu0 %4058
      %4060 = vadd.xlane.f32.xlu0 %v3826
      %v4061 = vpop.xlane.xlu0 %4060
      %4062 = vadd.xlane.f32.xlu0 %v3827
      %v4063 = vpop.xlane.xlu0 %4062
      %4064 = vadd.xlane.f32.xlu0 %v3828
      %v4065 = vpop.xlane.xlu0 %4064
      %4066 = vadd.xlane.f32.xlu0 %v3829
      %v4067 = vpop.xlane.xlu0 %4066
      %4068 = vadd.xlane.f32.xlu0 %v3830
      %v4069 = vpop.xlane.xlu0 %4068
      %4070 = vadd.xlane.f32.xlu0 %v3831
      %v4071 = vpop.xlane.xlu0 %4070
      %4072 = vadd.xlane.f32.xlu0 %v3832
      %v4073 = vpop.xlane.xlu0 %4072
      %v4074 = vadd.f32 %v4026, %v4043
      %v4075 = vadd.f32 %v4027, %v4045
      %v4076 = vadd.f32 %v4028, %v4047
      %v4077 = vadd.f32 %v4029, %v4049
      %v4078 = vadd.f32 %v4030, %v4051
      %v4079 = vadd.f32 %v4031, %v4053
      %v4080 = vadd.f32 %v4032, %v4055
      %v4081 = vadd.f32 %v4033, %v4057
      %v4082 = vadd.f32 %v4034, %v4059
      %v4083 = vadd.f32 %v4035, %v4061
      %v4084 = vadd.f32 %v4036, %v4063
      %v4085 = vadd.f32 %v4037, %v4065
      %v4086 = vadd.f32 %v4038, %v4067
      %v4087 = vadd.f32 %v4039, %v4069
      %v4088 = vadd.f32 %v4040, %v4071
      %v4089 = vadd.f32 %v4041, %v4073
      %4090 = vst.msk [vmem:[#allocation6] sm:$0xff] %vm3993, %v4074
      %4091 = vst.msk [vmem:[#allocation6 + $0x8] sm:$0xff] %vm3993, %v4075
      %4092 = vst.msk [vmem:[#allocation6 + $0x10] sm:$0xff] %vm3993, %v4076
      %4093 = vst.msk [vmem:[#allocation6 + $0x18] sm:$0xff] %vm3993, %v4077
      %4094 = vst.msk [vmem:[#allocation6 + $0x20] sm:$0xff] %vm3993, %v4078
      %4095 = vst.msk [vmem:[#allocation6 + $0x28] sm:$0xff] %vm3993, %v4079
      %4096 = vst.msk [vmem:[#allocation6 + $0x30] sm:$0xff] %vm3993, %v4080
      %4097 = vst.msk [vmem:[#allocation6 + $0x38] sm:$0xff] %vm3993, %v4081
      %4098 = vst.msk [vmem:[#allocation6 + $0x40] sm:$0xff] %vm3993, %v4082
      %4099 = vst.msk [vmem:[#allocation6 + $0x48] sm:$0xff] %vm3993, %v4083
      %4100 = vst.msk [vmem:[#allocation6 + $0x50] sm:$0xff] %vm3993, %v4084
      %4101 = vst.msk [vmem:[#allocation6 + $0x58] sm:$0xff] %vm3993, %v4085
      %4102 = vst.msk [vmem:[#allocation6 + $0x60] sm:$0xff] %vm3993, %v4086
      %4103 = vst.msk [vmem:[#allocation6 + $0x68] sm:$0xff] %vm3993, %v4087
      %4104 = vst.msk [vmem:[#allocation6 + $0x70] sm:$0xff] %vm3993, %v4088
      %4105 = vst.msk [vmem:[#allocation6 + $0x78] sm:$0xff] %vm3993, %v4089
      %v4106 = vld [vmem:[#allocation3] sm:$0xff]
      %v4107 = vld [vmem:[#allocation3 + $0x8] sm:$0xff]
      %v4108 = vld [vmem:[#allocation3 + $0x10] sm:$0xff]
      %v4109 = vld [vmem:[#allocation3 + $0x18] sm:$0xff]
      %v4110 = vld [vmem:[#allocation3 + $0x20] sm:$0xff]
      %v4111 = vld [vmem:[#allocation3 + $0x28] sm:$0xff]
      %v4112 = vld [vmem:[#allocation3 + $0x30] sm:$0xff]
      %v4113 = vld [vmem:[#allocation3 + $0x38] sm:$0xff]
      %v4114 = vld [vmem:[#allocation3 + $0x40] sm:$0xff]
      %v4115 = vld [vmem:[#allocation3 + $0x48] sm:$0xff]
      %v4116 = vld [vmem:[#allocation3 + $0x50] sm:$0xff]
      %v4117 = vld [vmem:[#allocation3 + $0x58] sm:$0xff]
      %v4118 = vld [vmem:[#allocation3 + $0x60] sm:$0xff]
      %v4119 = vld [vmem:[#allocation3 + $0x68] sm:$0xff]
      %v4120 = vld [vmem:[#allocation3 + $0x70] sm:$0xff]
      %v4121 = vld [vmem:[#allocation3 + $0x78] sm:$0xff]
      %v4122 = vmul.f32 %v3852, %v4106
      %v4123 = vmul.f32 %v3857, %v4107
      %v4124 = vmul.f32 %v3862, %v4108
      %v4125 = vmul.f32 %v3867, %v4109
      %v4126 = vmul.f32 %v3872, %v4110
      %v4127 = vmul.f32 %v3877, %v4111
      %v4128 = vmul.f32 %v3882, %v4112
      %v4129 = vmul.f32 %v3887, %v4113
      %v4130 = vmul.f32 %v3892, %v4114
      %v4131 = vmul.f32 %v3897, %v4115
      %v4132 = vmul.f32 %v3902, %v4116
      %v4133 = vmul.f32 %v3907, %v4117
      %v4134 = vmul.f32 %v3912, %v4118
      %v4135 = vmul.f32 %v3917, %v4119
      %v4136 = vmul.f32 %v3922, %v4120
      %v4137 = vmul.f32 %v3927, %v4121
      %v4138 = vpack.c.bf16 %v3802, %v3801
      %v4139 = vpack.c.bf16 %v3804, %v3803
      %v4140 = vpack.c.bf16 %v3806, %v3805
      %v4141 = vpack.c.bf16 %v3808, %v3807
      %v4142 = vpack.c.bf16 %v3810, %v3809
      %v4143 = vpack.c.bf16 %v3812, %v3811
      %v4144 = vpack.c.bf16 %v3814, %v3813
      %v4145 = vpack.c.bf16 %v3816, %v3815
      %4146 = vrot.lane.b32.xlu0 %v1318, 80
      %v4147 = vpop.permute.xlu0 %4146
      %4148 = vrot.lane.b32.xlu0 %v1319, 80
      %v4149 = vpop.permute.xlu0 %4148
      %4150 = vrot.lane.b32.xlu0 %v1320, 80
      %v4151 = vpop.permute.xlu0 %4150
      %4152 = vrot.lane.b32.xlu0 %v1321, 80
      %v4153 = vpop.permute.xlu0 %4152
      %4154 = vrot.lane.b32.xlu0 %v1322, 80
      %v4155 = vpop.permute.xlu0 %4154
      %4156 = vrot.lane.b32.xlu0 %v1323, 80
      %v4157 = vpop.permute.xlu0 %4156
      %4158 = vrot.lane.b32.xlu0 %v1324, 80
      %v4159 = vpop.permute.xlu0 %4158
      %4160 = vrot.lane.b32.xlu0 %v1325, 80
      %v4161 = vpop.permute.xlu0 %4160
      %4170 = vmatpush.bf16.msra.mxu0 %v4161
      %4171 = vmatpush.bf16.msra.mxu0 %v4159
      %4172 = vmatpush.bf16.msra.mxu0 %v4157
      %4173 = vmatpush.bf16.msra.mxu0 %v4155
      %4174 = vmatpush.bf16.msra.mxu0 %v4153
      %4175 = vmatpush.bf16.msra.mxu0 %v4151
      %4176 = vmatpush.bf16.msra.mxu0 %v4149
      %4177 = vmatpush.bf16.msra.mxu0 %v4147
      %4178 = vmatmul.bf16.gmra.mxu0 %v4138
      %v4179 = vpop.f32.mrf.mxu0
      %v4180 = vadd.f32 0.0, %v4179
      %v4181 = vpop.f32.mrf.mxu0
      %v4182 = vadd.f32 0.0, %v4181
      %4183 = vmatmul.bf16.gmra.mxu0 %v4139
      %v4184 = vpop.f32.mrf.mxu0
      %v4185 = vadd.f32 0.0, %v4184
      %v4186 = vpop.f32.mrf.mxu0
      %v4187 = vadd.f32 0.0, %v4186
      %4188 = vmatmul.bf16.gmra.mxu0 %v4140
      %v4189 = vpop.f32.mrf.mxu0
      %v4190 = vadd.f32 0.0, %v4189
      %v4191 = vpop.f32.mrf.mxu0
      %v4192 = vadd.f32 0.0, %v4191
      %4193 = vmatmul.bf16.gmra.mxu0 %v4141
      %v4194 = vpop.f32.mrf.mxu0
      %v4195 = vadd.f32 0.0, %v4194
      %v4196 = vpop.f32.mrf.mxu0
      %v4197 = vadd.f32 0.0, %v4196
      %4198 = vmatmul.bf16.gmra.mxu0 %v4142
      %v4199 = vpop.f32.mrf.mxu0
      %v4200 = vadd.f32 0.0, %v4199
      %v4201 = vpop.f32.mrf.mxu0
      %v4202 = vadd.f32 0.0, %v4201
      %4203 = vmatmul.bf16.gmra.mxu0 %v4143
      %v4204 = vpop.f32.mrf.mxu0
      %v4205 = vadd.f32 0.0, %v4204
      %v4206 = vpop.f32.mrf.mxu0
      %v4207 = vadd.f32 0.0, %v4206
      %4208 = vmatmul.bf16.gmra.mxu0 %v4144
      %v4209 = vpop.f32.mrf.mxu0
      %v4210 = vadd.f32 0.0, %v4209
      %v4211 = vpop.f32.mrf.mxu0
      %v4212 = vadd.f32 0.0, %v4211
      %4213 = vmatmul.bf16.gmra.mxu0 %v4145
      %v4214 = vpop.f32.mrf.mxu0
      %v4215 = vadd.f32 0.0, %v4214
      %v4216 = vpop.f32.mrf.mxu0
      %v4217 = vadd.f32 0.0, %v4216
      %4218 = vdwg.mxu0
      %4235 = vrot.lane.b32.xlu0 %v4180, 16
      %v4236 = vpop.permute.xlu0 %4235
      %4237 = vrot.lane.b32.xlu0 %v4182, 16
      %v4238 = vpop.permute.xlu0 %4237
      %4239 = vrot.lane.b32.xlu0 %v4185, 16
      %v4240 = vpop.permute.xlu0 %4239
      %4241 = vrot.lane.b32.xlu0 %v4187, 16
      %v4242 = vpop.permute.xlu0 %4241
      %4243 = vrot.lane.b32.xlu0 %v4190, 16
      %v4244 = vpop.permute.xlu0 %4243
      %4245 = vrot.lane.b32.xlu0 %v4192, 16
      %v4246 = vpop.permute.xlu0 %4245
      %4247 = vrot.lane.b32.xlu0 %v4195, 16
      %v4248 = vpop.permute.xlu0 %4247
      %4249 = vrot.lane.b32.xlu0 %v4197, 16
      %v4250 = vpop.permute.xlu0 %4249
      %4251 = vrot.lane.b32.xlu0 %v4200, 16
      %v4252 = vpop.permute.xlu0 %4251
      %4253 = vrot.lane.b32.xlu0 %v4202, 16
      %v4254 = vpop.permute.xlu0 %4253
      %4255 = vrot.lane.b32.xlu0 %v4205, 16
      %v4256 = vpop.permute.xlu0 %4255
      %4257 = vrot.lane.b32.xlu0 %v4207, 16
      %v4258 = vpop.permute.xlu0 %4257
      %4259 = vrot.lane.b32.xlu0 %v4210, 16
      %v4260 = vpop.permute.xlu0 %4259
      %4261 = vrot.lane.b32.xlu0 %v4212, 16
      %v4262 = vpop.permute.xlu0 %4261
      %4263 = vrot.lane.b32.xlu0 %v4215, 16
      %v4264 = vpop.permute.xlu0 %4263
      %4265 = vrot.lane.b32.xlu0 %v4217, 16
      %v4266 = vpop.permute.xlu0 %4265
      %v4283 = vadd.f32 %v4122, %v4236
      %v4284 = vadd.f32 %v4123, %v4238
      %v4285 = vadd.f32 %v4124, %v4240
      %v4286 = vadd.f32 %v4125, %v4242
      %v4287 = vadd.f32 %v4126, %v4244
      %v4288 = vadd.f32 %v4127, %v4246
      %v4289 = vadd.f32 %v4128, %v4248
      %v4290 = vadd.f32 %v4129, %v4250
      %v4291 = vadd.f32 %v4130, %v4252
      %v4292 = vadd.f32 %v4131, %v4254
      %v4293 = vadd.f32 %v4132, %v4256
      %v4294 = vadd.f32 %v4133, %v4258
      %v4295 = vadd.f32 %v4134, %v4260
      %v4296 = vadd.f32 %v4135, %v4262
      %v4297 = vadd.f32 %v4136, %v4264
      %v4298 = vadd.f32 %v4137, %v4266
      %4299 = vst.msk [vmem:[#allocation3] sm:$0xff] %vm3993, %v4283
      %4300 = vst.msk [vmem:[#allocation3 + $0x8] sm:$0xff] %vm3993, %v4284
      %4301 = vst.msk [vmem:[#allocation3 + $0x10] sm:$0xff] %vm3993, %v4285
      %4302 = vst.msk [vmem:[#allocation3 + $0x18] sm:$0xff] %vm3993, %v4286
      %4303 = vst.msk [vmem:[#allocation3 + $0x20] sm:$0xff] %vm3993, %v4287
      %4304 = vst.msk [vmem:[#allocation3 + $0x28] sm:$0xff] %vm3993, %v4288
      %4305 = vst.msk [vmem:[#allocation3 + $0x30] sm:$0xff] %vm3993, %v4289
      %4306 = vst.msk [vmem:[#allocation3 + $0x38] sm:$0xff] %vm3993, %v4290
      %4307 = vst.msk [vmem:[#allocation3 + $0x40] sm:$0xff] %vm3993, %v4291
      %4308 = vst.msk [vmem:[#allocation3 + $0x48] sm:$0xff] %vm3993, %v4292
      %4309 = vst.msk [vmem:[#allocation3 + $0x50] sm:$0xff] %vm3993, %v4293
      %4310 = vst.msk [vmem:[#allocation3 + $0x58] sm:$0xff] %vm3993, %v4294
      %4311 = vst.msk [vmem:[#allocation3 + $0x60] sm:$0xff] %vm3993, %v4295
      %4312 = vst.msk [vmem:[#allocation3 + $0x68] sm:$0xff] %vm3993, %v4296
      %4313 = vst.msk [vmem:[#allocation3 + $0x70] sm:$0xff] %vm3993, %v4297
      %4314 = vst.msk [vmem:[#allocation3 + $0x78] sm:$0xff] %vm3993, %v4298
      %v4315 = vld [vmem:[#allocation4] sm:$0xff]
      %v4316 = vld [vmem:[#allocation4 + $0x8] sm:$0xff]
      %v4317 = vld [vmem:[#allocation4 + $0x10] sm:$0xff]
      %v4318 = vld [vmem:[#allocation4 + $0x18] sm:$0xff]
      %v4319 = vld [vmem:[#allocation4 + $0x20] sm:$0xff]
      %v4320 = vld [vmem:[#allocation4 + $0x28] sm:$0xff]
      %v4321 = vld [vmem:[#allocation4 + $0x30] sm:$0xff]
      %v4322 = vld [vmem:[#allocation4 + $0x38] sm:$0xff]
      %v4323 = vld [vmem:[#allocation4 + $0x40] sm:$0xff]
      %v4324 = vld [vmem:[#allocation4 + $0x48] sm:$0xff]
      %v4325 = vld [vmem:[#allocation4 + $0x50] sm:$0xff]
      %v4326 = vld [vmem:[#allocation4 + $0x58] sm:$0xff]
      %v4327 = vld [vmem:[#allocation4 + $0x60] sm:$0xff]
      %v4328 = vld [vmem:[#allocation4 + $0x68] sm:$0xff]
      %v4329 = vld [vmem:[#allocation4 + $0x70] sm:$0xff]
      %v4330 = vld [vmem:[#allocation4 + $0x78] sm:$0xff]
      %v4331 = vmul.f32 %v3852, %v4315
      %v4332 = vmul.f32 %v3857, %v4316
      %v4333 = vmul.f32 %v3862, %v4317
      %v4334 = vmul.f32 %v3867, %v4318
      %v4335 = vmul.f32 %v3872, %v4319
      %v4336 = vmul.f32 %v3877, %v4320
      %v4337 = vmul.f32 %v3882, %v4321
      %v4338 = vmul.f32 %v3887, %v4322
      %v4339 = vmul.f32 %v3892, %v4323
      %v4340 = vmul.f32 %v3897, %v4324
      %v4341 = vmul.f32 %v3902, %v4325
      %v4342 = vmul.f32 %v3907, %v4326
      %v4343 = vmul.f32 %v3912, %v4327
      %v4344 = vmul.f32 %v3917, %v4328
      %v4345 = vmul.f32 %v3922, %v4329
      %v4346 = vmul.f32 %v3927, %v4330
      %v4347 = vpack.c.bf16 %v3818, %v3817
      %v4348 = vpack.c.bf16 %v3820, %v3819
      %v4349 = vpack.c.bf16 %v3822, %v3821
      %v4350 = vpack.c.bf16 %v3824, %v3823
      %v4351 = vpack.c.bf16 %v3826, %v3825
      %v4352 = vpack.c.bf16 %v3828, %v3827
      %v4353 = vpack.c.bf16 %v3830, %v3829
      %v4354 = vpack.c.bf16 %v3832, %v3831
      %4355 = vmatpush.bf16.msra.mxu0 %v4161
      %4356 = vmatpush.bf16.msra.mxu0 %v4159
      %4357 = vmatpush.bf16.msra.mxu0 %v4157
      %4358 = vmatpush.bf16.msra.mxu0 %v4155
      %4359 = vmatpush.bf16.msra.mxu0 %v4153
      %4360 = vmatpush.bf16.msra.mxu0 %v4151
      %4361 = vmatpush.bf16.msra.mxu0 %v4149
      %4362 = vmatpush.bf16.msra.mxu0 %v4147
      %4363 = vmatmul.bf16.gmra.mxu0 %v4347
      %v4364 = vpop.f32.mrf.mxu0
      %v4365 = vadd.f32 0.0, %v4364
      %v4366 = vpop.f32.mrf.mxu0
      %v4367 = vadd.f32 0.0, %v4366
      %4368 = vmatmul.bf16.gmra.mxu0 %v4348
      %v4369 = vpop.f32.mrf.mxu0
      %v4370 = vadd.f32 0.0, %v4369
      %v4371 = vpop.f32.mrf.mxu0
      %v4372 = vadd.f32 0.0, %v4371
      %4373 = vmatmul.bf16.gmra.mxu0 %v4349
      %v4374 = vpop.f32.mrf.mxu0
      %v4375 = vadd.f32 0.0, %v4374
      %v4376 = vpop.f32.mrf.mxu0
      %v4377 = vadd.f32 0.0, %v4376
      %4378 = vmatmul.bf16.gmra.mxu0 %v4350
      %v4379 = vpop.f32.mrf.mxu0
      %v4380 = vadd.f32 0.0, %v4379
      %v4381 = vpop.f32.mrf.mxu0
      %v4382 = vadd.f32 0.0, %v4381
      %4383 = vmatmul.bf16.gmra.mxu0 %v4351
      %v4384 = vpop.f32.mrf.mxu0
      %v4385 = vadd.f32 0.0, %v4384
      %v4386 = vpop.f32.mrf.mxu0
      %v4387 = vadd.f32 0.0, %v4386
      %4388 = vmatmul.bf16.gmra.mxu0 %v4352
      %v4389 = vpop.f32.mrf.mxu0
      %v4390 = vadd.f32 0.0, %v4389
      %v4391 = vpop.f32.mrf.mxu0
      %v4392 = vadd.f32 0.0, %v4391
      %4393 = vmatmul.bf16.gmra.mxu0 %v4353
      %v4394 = vpop.f32.mrf.mxu0
      %v4395 = vadd.f32 0.0, %v4394
      %v4396 = vpop.f32.mrf.mxu0
      %v4397 = vadd.f32 0.0, %v4396
      %4398 = vmatmul.bf16.gmra.mxu0 %v4354
      %v4399 = vpop.f32.mrf.mxu0
      %v4400 = vadd.f32 0.0, %v4399
      %v4401 = vpop.f32.mrf.mxu0
      %v4402 = vadd.f32 0.0, %v4401
      %4403 = vdwg.mxu0
      %4420 = vrot.lane.b32.xlu0 %v4365, 16
      %v4421 = vpop.permute.xlu0 %4420
      %4422 = vrot.lane.b32.xlu0 %v4367, 16
      %v4423 = vpop.permute.xlu0 %4422
      %4424 = vrot.lane.b32.xlu0 %v4370, 16
      %v4425 = vpop.permute.xlu0 %4424
      %4426 = vrot.lane.b32.xlu0 %v4372, 16
      %v4427 = vpop.permute.xlu0 %4426
      %4428 = vrot.lane.b32.xlu0 %v4375, 16
      %v4429 = vpop.permute.xlu0 %4428
      %4430 = vrot.lane.b32.xlu0 %v4377, 16
      %v4431 = vpop.permute.xlu0 %4430
      %4432 = vrot.lane.b32.xlu0 %v4380, 16
      %v4433 = vpop.permute.xlu0 %4432
      %4434 = vrot.lane.b32.xlu0 %v4382, 16
      %v4435 = vpop.permute.xlu0 %4434
      %4436 = vrot.lane.b32.xlu0 %v4385, 16
      %v4437 = vpop.permute.xlu0 %4436
      %4438 = vrot.lane.b32.xlu0 %v4387, 16
      %v4439 = vpop.permute.xlu0 %4438
      %4440 = vrot.lane.b32.xlu0 %v4390, 16
      %v4441 = vpop.permute.xlu0 %4440
      %4442 = vrot.lane.b32.xlu0 %v4392, 16
      %v4443 = vpop.permute.xlu0 %4442
      %4444 = vrot.lane.b32.xlu0 %v4395, 16
      %v4445 = vpop.permute.xlu0 %4444
      %4446 = vrot.lane.b32.xlu0 %v4397, 16
      %v4447 = vpop.permute.xlu0 %4446
      %4448 = vrot.lane.b32.xlu0 %v4400, 16
      %v4449 = vpop.permute.xlu0 %4448
      %4450 = vrot.lane.b32.xlu0 %v4402, 16
      %v4451 = vpop.permute.xlu0 %4450
      %v4468 = vadd.f32 %v4331, %v4421
      %v4469 = vadd.f32 %v4332, %v4423
      %v4470 = vadd.f32 %v4333, %v4425
      %v4471 = vadd.f32 %v4334, %v4427
      %v4472 = vadd.f32 %v4335, %v4429
      %v4473 = vadd.f32 %v4336, %v4431
      %v4474 = vadd.f32 %v4337, %v4433
      %v4475 = vadd.f32 %v4338, %v4435
      %v4476 = vadd.f32 %v4339, %v4437
      %v4477 = vadd.f32 %v4340, %v4439
      %v4478 = vadd.f32 %v4341, %v4441
      %v4479 = vadd.f32 %v4342, %v4443
      %v4480 = vadd.f32 %v4343, %v4445
      %v4481 = vadd.f32 %v4344, %v4447
      %v4482 = vadd.f32 %v4345, %v4449
      %v4483 = vadd.f32 %v4346, %v4451
      %4484 = vst.msk [vmem:[#allocation4] sm:$0xff] %vm3993, %v4468
      %4485 = vst.msk [vmem:[#allocation4 + $0x8] sm:$0xff] %vm3993, %v4469
      %4486 = vst.msk [vmem:[#allocation4 + $0x10] sm:$0xff] %vm3993, %v4470
      %4487 = vst.msk [vmem:[#allocation4 + $0x18] sm:$0xff] %vm3993, %v4471
      %4488 = vst.msk [vmem:[#allocation4 + $0x20] sm:$0xff] %vm3993, %v4472
      %4489 = vst.msk [vmem:[#allocation4 + $0x28] sm:$0xff] %vm3993, %v4473
      %4490 = vst.msk [vmem:[#allocation4 + $0x30] sm:$0xff] %vm3993, %v4474
      %4491 = vst.msk [vmem:[#allocation4 + $0x38] sm:$0xff] %vm3993, %v4475
      %4492 = vst.msk [vmem:[#allocation4 + $0x40] sm:$0xff] %vm3993, %v4476
      %4493 = vst.msk [vmem:[#allocation4 + $0x48] sm:$0xff] %vm3993, %v4477
      %4494 = vst.msk [vmem:[#allocation4 + $0x50] sm:$0xff] %vm3993, %v4478
      %4495 = vst.msk [vmem:[#allocation4 + $0x58] sm:$0xff] %vm3993, %v4479
      %4496 = vst.msk [vmem:[#allocation4 + $0x60] sm:$0xff] %vm3993, %v4480
      %4497 = vst.msk [vmem:[#allocation4 + $0x68] sm:$0xff] %vm3993, %v4481
      %4498 = vst.msk [vmem:[#allocation4 + $0x70] sm:$0xff] %vm3993, %v4482
      %4499 = vst.msk [vmem:[#allocation4 + $0x78] sm:$0xff] %vm3993, %v4483
      %vm4500 = vcmask 23568
      %4501 = vst.msk [vmem:[#allocation7] sm:$0xff] %vm4500, %v3593
      %4502 = vst.msk [vmem:[#allocation7 + $0x8] sm:$0xff] %vm4500, %v3594
      %4503 = vst.msk [vmem:[#allocation7 + $0x10] sm:$0xff] %vm4500, %v3595
      %4504 = vst.msk [vmem:[#allocation7 + $0x18] sm:$0xff] %vm4500, %v3596
      %4505 = vst.msk [vmem:[#allocation7 + $0x20] sm:$0xff] %vm4500, %v3597
      %4506 = vst.msk [vmem:[#allocation7 + $0x28] sm:$0xff] %vm4500, %v3598
      %4507 = vst.msk [vmem:[#allocation7 + $0x30] sm:$0xff] %vm4500, %v3599
      %4508 = vst.msk [vmem:[#allocation7 + $0x38] sm:$0xff] %vm4500, %v3600
      %4509 = vst.msk [vmem:[#allocation7 + $0x40] sm:$0xff] %vm4500, %v3601
      %4510 = vst.msk [vmem:[#allocation7 + $0x48] sm:$0xff] %vm4500, %v3602
      %4511 = vst.msk [vmem:[#allocation7 + $0x50] sm:$0xff] %vm4500, %v3603
      %4512 = vst.msk [vmem:[#allocation7 + $0x58] sm:$0xff] %vm4500, %v3604
      %4513 = vst.msk [vmem:[#allocation7 + $0x60] sm:$0xff] %vm4500, %v3605
      %4514 = vst.msk [vmem:[#allocation7 + $0x68] sm:$0xff] %vm4500, %v3606
      %4515 = vst.msk [vmem:[#allocation7 + $0x70] sm:$0xff] %vm4500, %v3607
      %4516 = vst.msk [vmem:[#allocation7 + $0x78] sm:$0xff] %vm4500, %v3608
      %4517 = vrot.lane.b32.xlu0 %v1278, 104
      %v4518 = vpop.permute.xlu0 %4517
      %4519 = vrot.lane.b32.xlu0 %v1279, 104
      %v4520 = vpop.permute.xlu0 %4519
      %4521 = vrot.lane.b32.xlu0 %v1280, 104
      %v4522 = vpop.permute.xlu0 %4521
      %4523 = vrot.lane.b32.xlu0 %v1281, 104
      %v4524 = vpop.permute.xlu0 %4523
      %4525 = vrot.lane.b32.xlu0 %v1282, 104
      %v4526 = vpop.permute.xlu0 %4525
      %4527 = vrot.lane.b32.xlu0 %v1283, 104
      %v4528 = vpop.permute.xlu0 %4527
      %4529 = vrot.lane.b32.xlu0 %v1284, 104
      %v4530 = vpop.permute.xlu0 %4529
      %4531 = vrot.lane.b32.xlu0 %v1285, 104
      %v4532 = vpop.permute.xlu0 %4531
      %4533 = vrot.lane.b32.xlu0 %v1318, 104
      %v4534 = vpop.permute.xlu0 %4533
      %4535 = vrot.lane.b32.xlu0 %v1319, 104
      %v4536 = vpop.permute.xlu0 %4535
      %4537 = vrot.lane.b32.xlu0 %v1320, 104
      %v4538 = vpop.permute.xlu0 %4537
      %4539 = vrot.lane.b32.xlu0 %v1321, 104
      %v4540 = vpop.permute.xlu0 %4539
      %4541 = vrot.lane.b32.xlu0 %v1322, 104
      %v4542 = vpop.permute.xlu0 %4541
      %4543 = vrot.lane.b32.xlu0 %v1323, 104
      %v4544 = vpop.permute.xlu0 %4543
      %4545 = vrot.lane.b32.xlu0 %v1324, 104
      %v4546 = vpop.permute.xlu0 %4545
      %4547 = vrot.lane.b32.xlu0 %v1325, 104
      %v4548 = vpop.permute.xlu0 %4547
      %v4550 = vsel %vm1326, %v4518, 0
      %v4553 = vsel %vm1326, %v4520, 0
      %v4556 = vsel %vm1326, %v4522, 0
      %v4559 = vsel %vm1326, %v4524, 0
      %v4562 = vsel %vm1326, %v4526, 0
      %v4565 = vsel %vm1326, %v4528, 0
      %v4568 = vsel %vm1326, %v4530, 0
      %v4571 = vsel %vm1326, %v4532, 0
      %v4574 = vsel %vm1326, %v4534, 0
      %v4577 = vsel %vm1326, %v4536, 0
      %v4580 = vsel %vm1326, %v4538, 0
      %v4583 = vsel %vm1326, %v4540, 0
      %v4586 = vsel %vm1326, %v4542, 0
      %v4589 = vsel %vm1326, %v4544, 0
      %v4592 = vsel %vm1326, %v4546, 0
      %v4595 = vsel %vm1326, %v4548, 0
      %4597 = vmatpush.bf16.xpose.msra.mxu0 %v4595
      %4598 = vmatpush.bf16.xpose.msra.mxu0 %v4592
      %4599 = vmatpush.bf16.xpose.msra.mxu0 %v4589
      %4600 = vmatpush.bf16.xpose.msra.mxu0 %v4586
      %4601 = vmatpush.bf16.xpose.msra.mxu0 %v4583
      %4602 = vmatpush.bf16.xpose.msra.mxu0 %v4580
      %4603 = vmatpush.bf16.xpose.msra.mxu0 %v4577
      %4604 = vmatpush.bf16.xpose.msra.mxu0 %v4574
      %4605 = vmatmul.bf16.gmra.mxu0 %v4550
      %v4606 = vpop.f32.mrf.mxu0
      %v4607 = vadd.f32 0.0, %v4606
      %v4608 = vpop.f32.mrf.mxu0
      %v4609 = vadd.f32 0.0, %v4608
      %4610 = vmatmul.bf16.gmra.mxu0 %v4553
      %v4611 = vpop.f32.mrf.mxu0
      %v4612 = vadd.f32 0.0, %v4611
      %v4613 = vpop.f32.mrf.mxu0
      %v4614 = vadd.f32 0.0, %v4613
      %4615 = vmatmul.bf16.gmra.mxu0 %v4556
      %v4616 = vpop.f32.mrf.mxu0
      %v4617 = vadd.f32 0.0, %v4616
      %v4618 = vpop.f32.mrf.mxu0
      %v4619 = vadd.f32 0.0, %v4618
      %4620 = vmatmul.bf16.gmra.mxu0 %v4559
      %v4621 = vpop.f32.mrf.mxu0
      %v4622 = vadd.f32 0.0, %v4621
      %v4623 = vpop.f32.mrf.mxu0
      %v4624 = vadd.f32 0.0, %v4623
      %4625 = vmatmul.bf16.gmra.mxu0 %v4562
      %v4626 = vpop.f32.mrf.mxu0
      %v4627 = vadd.f32 0.0, %v4626
      %v4628 = vpop.f32.mrf.mxu0
      %v4629 = vadd.f32 0.0, %v4628
      %4630 = vmatmul.bf16.gmra.mxu0 %v4565
      %v4631 = vpop.f32.mrf.mxu0
      %v4632 = vadd.f32 0.0, %v4631
      %v4633 = vpop.f32.mrf.mxu0
      %v4634 = vadd.f32 0.0, %v4633
      %4635 = vmatmul.bf16.gmra.mxu0 %v4568
      %v4636 = vpop.f32.mrf.mxu0
      %v4637 = vadd.f32 0.0, %v4636
      %v4638 = vpop.f32.mrf.mxu0
      %v4639 = vadd.f32 0.0, %v4638
      %4640 = vmatmul.bf16.gmra.mxu0 %v4571
      %v4641 = vpop.f32.mrf.mxu0
      %v4642 = vadd.f32 0.0, %v4641
      %v4643 = vpop.f32.mrf.mxu0
      %v4644 = vadd.f32 0.0, %v4643
      %4645 = vdwg.mxu0
      %v4646 = vld [vmem:[#allocation7] sm:$0xff]
      %v4647 = vld [vmem:[#allocation7 + $0x8] sm:$0xff]
      %v4648 = vld [vmem:[#allocation7 + $0x10] sm:$0xff]
      %v4649 = vld [vmem:[#allocation7 + $0x18] sm:$0xff]
      %v4650 = vld [vmem:[#allocation7 + $0x20] sm:$0xff]
      %v4651 = vld [vmem:[#allocation7 + $0x28] sm:$0xff]
      %v4652 = vld [vmem:[#allocation7 + $0x30] sm:$0xff]
      %v4653 = vld [vmem:[#allocation7 + $0x38] sm:$0xff]
      %v4654 = vld [vmem:[#allocation7 + $0x40] sm:$0xff]
      %v4655 = vld [vmem:[#allocation7 + $0x48] sm:$0xff]
      %v4656 = vld [vmem:[#allocation7 + $0x50] sm:$0xff]
      %v4657 = vld [vmem:[#allocation7 + $0x58] sm:$0xff]
      %v4658 = vld [vmem:[#allocation7 + $0x60] sm:$0xff]
      %v4659 = vld [vmem:[#allocation7 + $0x68] sm:$0xff]
      %v4660 = vld [vmem:[#allocation7 + $0x70] sm:$0xff]
      %v4661 = vld [vmem:[#allocation7 + $0x78] sm:$0xff]
      %v4662 = vsel %vm1230, %v4607, -1e+30
      %v4663 = vsel %vm1231, %v4609, -1e+30
      %v4664 = vsel %vm1232, %v4612, -1e+30
      %v4665 = vsel %vm1233, %v4614, -1e+30
      %v4666 = vsel %vm1234, %v4617, -1e+30
      %v4667 = vsel %vm1235, %v4619, -1e+30
      %v4668 = vsel %vm1236, %v4622, -1e+30
      %v4669 = vsel %vm1237, %v4624, -1e+30
      %v4670 = vsel %vm1238, %v4627, -1e+30
      %v4671 = vsel %vm1239, %v4629, -1e+30
      %v4672 = vsel %vm1240, %v4632, -1e+30
      %v4673 = vsel %vm1241, %v4634, -1e+30
      %v4674 = vsel %vm1242, %v4637, -1e+30
      %v4675 = vsel %vm1243, %v4639, -1e+30
      %v4676 = vsel %vm1244, %v4642, -1e+30
      %v4677 = vsel %vm1245, %v4644, -1e+30
      %4678 = vmax.xlane.f32.xlu0 %v4662
      %v4679 = vpop.xlane.xlu0 %4678
      %4680 = vmax.xlane.f32.xlu0 %v4663
      %v4681 = vpop.xlane.xlu0 %4680
      %4682 = vmax.xlane.f32.xlu0 %v4664
      %v4683 = vpop.xlane.xlu0 %4682
      %4684 = vmax.xlane.f32.xlu0 %v4665
      %v4685 = vpop.xlane.xlu0 %4684
      %4686 = vmax.xlane.f32.xlu0 %v4666
      %v4687 = vpop.xlane.xlu0 %4686
      %4688 = vmax.xlane.f32.xlu0 %v4667
      %v4689 = vpop.xlane.xlu0 %4688
      %4690 = vmax.xlane.f32.xlu0 %v4668
      %v4691 = vpop.xlane.xlu0 %4690
      %4692 = vmax.xlane.f32.xlu0 %v4669
      %v4693 = vpop.xlane.xlu0 %4692
      %4694 = vmax.xlane.f32.xlu0 %v4670
      %v4695 = vpop.xlane.xlu0 %4694
      %4696 = vmax.xlane.f32.xlu0 %v4671
      %v4697 = vpop.xlane.xlu0 %4696
      %4698 = vmax.xlane.f32.xlu0 %v4672
      %v4699 = vpop.xlane.xlu0 %4698
      %4700 = vmax.xlane.f32.xlu0 %v4673
      %v4701 = vpop.xlane.xlu0 %4700
      %4702 = vmax.xlane.f32.xlu0 %v4674
      %v4703 = vpop.xlane.xlu0 %4702
      %4704 = vmax.xlane.f32.xlu0 %v4675
      %v4705 = vpop.xlane.xlu0 %4704
      %4706 = vmax.xlane.f32.xlu0 %v4676
      %v4707 = vpop.xlane.xlu0 %4706
      %4708 = vmax.xlane.f32.xlu0 %v4677
      %v4709 = vpop.xlane.xlu0 %4708
      %v4710 = vmax.f32 %v4646, %v4679
      %v4711 = vmax.f32 %v4647, %v4681
      %v4712 = vmax.f32 %v4648, %v4683
      %v4713 = vmax.f32 %v4649, %v4685
      %v4714 = vmax.f32 %v4650, %v4687
      %v4715 = vmax.f32 %v4651, %v4689
      %v4716 = vmax.f32 %v4652, %v4691
      %v4717 = vmax.f32 %v4653, %v4693
      %v4718 = vmax.f32 %v4654, %v4695
      %v4719 = vmax.f32 %v4655, %v4697
      %v4720 = vmax.f32 %v4656, %v4699
      %v4721 = vmax.f32 %v4657, %v4701
      %v4722 = vmax.f32 %v4658, %v4703
      %v4723 = vmax.f32 %v4659, %v4705
      %v4724 = vmax.f32 %v4660, %v4707
      %v4725 = vmax.f32 %v4661, %v4709
      %v4726 = vsub.f32 %v4646, %v4710
      %v4727 = vsub.f32 %v4647, %v4711
      %v4728 = vsub.f32 %v4648, %v4712
      %v4729 = vsub.f32 %v4649, %v4713
      %v4730 = vsub.f32 %v4650, %v4714
      %v4731 = vsub.f32 %v4651, %v4715
      %v4732 = vsub.f32 %v4652, %v4716
      %v4733 = vsub.f32 %v4653, %v4717
      %v4734 = vsub.f32 %v4654, %v4718
      %v4735 = vsub.f32 %v4655, %v4719
      %v4736 = vsub.f32 %v4656, %v4720
      %v4737 = vsub.f32 %v4657, %v4721
      %v4738 = vsub.f32 %v4658, %v4722
      %v4739 = vsub.f32 %v4659, %v4723
      %v4740 = vsub.f32 %v4660, %v4724
      %v4741 = vsub.f32 %v4661, %v4725
      %v4742 = vmul.f32 %v4726, 1.442695
      %v4743 = vpow.pop %v4742
      %v4744 = vmul.f32 %v4727, 1.442695
      %v4745 = vpow.pop %v4744
      %v4746 = vmul.f32 %v4728, 1.442695
      %v4747 = vpow.pop %v4746
      %v4748 = vmul.f32 %v4729, 1.442695
      %v4749 = vpow.pop %v4748
      %v4750 = vmul.f32 %v4730, 1.442695
      %v4751 = vpow.pop %v4750
      %v4752 = vmul.f32 %v4731, 1.442695
      %v4753 = vpow.pop %v4752
      %v4754 = vmul.f32 %v4732, 1.442695
      %v4755 = vpow.pop %v4754
      %v4756 = vmul.f32 %v4733, 1.442695
      %v4757 = vpow.pop %v4756
      %v4758 = vmul.f32 %v4734, 1.442695
      %v4759 = vpow.pop %v4758
      %v4760 = vmul.f32 %v4735, 1.442695
      %v4761 = vpow.pop %v4760
      %v4762 = vmul.f32 %v4736, 1.442695
      %v4763 = vpow.pop %v4762
      %v4764 = vmul.f32 %v4737, 1.442695
      %v4765 = vpow.pop %v4764
      %v4766 = vmul.f32 %v4738, 1.442695
      %v4767 = vpow.pop %v4766
      %v4768 = vmul.f32 %v4739, 1.442695
      %v4769 = vpow.pop %v4768
      %v4770 = vmul.f32 %v4740, 1.442695
      %v4771 = vpow.pop %v4770
      %v4772 = vmul.f32 %v4741, 1.442695
      %v4773 = vpow.pop %v4772
      %4775 = vset.pattern.permute.xlu0 3
      %4776 = vperm.xlu0 %4775, %v4710
      %v4777 = vpop.permute.xlu0 %4776
      %4780 = vset.pattern.permute.xlu0 3
      %4781 = vperm.xlu0 %4780, %v4711
      %v4782 = vpop.permute.xlu0 %4781
      %4785 = vset.pattern.permute.xlu0 3
      %4786 = vperm.xlu0 %4785, %v4712
      %v4787 = vpop.permute.xlu0 %4786
      %4790 = vset.pattern.permute.xlu0 3
      %4791 = vperm.xlu0 %4790, %v4713
      %v4792 = vpop.permute.xlu0 %4791
      %4795 = vset.pattern.permute.xlu0 3
      %4796 = vperm.xlu0 %4795, %v4714
      %v4797 = vpop.permute.xlu0 %4796
      %4800 = vset.pattern.permute.xlu0 3
      %4801 = vperm.xlu0 %4800, %v4715
      %v4802 = vpop.permute.xlu0 %4801
      %4805 = vset.pattern.permute.xlu0 3
      %4806 = vperm.xlu0 %4805, %v4716
      %v4807 = vpop.permute.xlu0 %4806
      %4810 = vset.pattern.permute.xlu0 3
      %4811 = vperm.xlu0 %4810, %v4717
      %v4812 = vpop.permute.xlu0 %4811
      %4815 = vset.pattern.permute.xlu0 3
      %4816 = vperm.xlu0 %4815, %v4718
      %v4817 = vpop.permute.xlu0 %4816
      %4820 = vset.pattern.permute.xlu0 3
      %4821 = vperm.xlu0 %4820, %v4719
      %v4822 = vpop.permute.xlu0 %4821
      %4825 = vset.pattern.permute.xlu0 3
      %4826 = vperm.xlu0 %4825, %v4720
      %v4827 = vpop.permute.xlu0 %4826
      %4830 = vset.pattern.permute.xlu0 3
      %4831 = vperm.xlu0 %4830, %v4721
      %v4832 = vpop.permute.xlu0 %4831
      %4835 = vset.pattern.permute.xlu0 3
      %4836 = vperm.xlu0 %4835, %v4722
      %v4837 = vpop.permute.xlu0 %4836
      %4840 = vset.pattern.permute.xlu0 3
      %4841 = vperm.xlu0 %4840, %v4723
      %v4842 = vpop.permute.xlu0 %4841
      %4845 = vset.pattern.permute.xlu0 3
      %4846 = vperm.xlu0 %4845, %v4724
      %v4847 = vpop.permute.xlu0 %4846
      %4850 = vset.pattern.permute.xlu0 3
      %4851 = vperm.xlu0 %4850, %v4725
      %v4852 = vpop.permute.xlu0 %4851
      %v4854 = vsub.f32 %v4607, %v4777
      %v4855 = vsub.f32 %v4609, %v4782
      %v4856 = vsub.f32 %v4612, %v4787
      %v4857 = vsub.f32 %v4614, %v4792
      %v4858 = vsub.f32 %v4617, %v4797
      %v4859 = vsub.f32 %v4619, %v4802
      %v4860 = vsub.f32 %v4622, %v4807
      %v4861 = vsub.f32 %v4624, %v4812
      %v4862 = vsub.f32 %v4627, %v4817
      %v4863 = vsub.f32 %v4629, %v4822
      %v4864 = vsub.f32 %v4632, %v4827
      %v4865 = vsub.f32 %v4634, %v4832
      %v4866 = vsub.f32 %v4637, %v4837
      %v4867 = vsub.f32 %v4639, %v4842
      %v4868 = vsub.f32 %v4642, %v4847
      %v4869 = vsub.f32 %v4644, %v4852
      %v4870 = vmin.f32 %v4854, 0.0
      %v4871 = vmin.f32 %v4855, 0.0
      %v4872 = vmin.f32 %v4856, 0.0
      %v4873 = vmin.f32 %v4857, 0.0
      %v4874 = vmin.f32 %v4858, 0.0
      %v4875 = vmin.f32 %v4859, 0.0
      %v4876 = vmin.f32 %v4860, 0.0
      %v4877 = vmin.f32 %v4861, 0.0
      %v4878 = vmin.f32 %v4862, 0.0
      %v4879 = vmin.f32 %v4863, 0.0
      %v4880 = vmin.f32 %v4864, 0.0
      %v4881 = vmin.f32 %v4865, 0.0
      %v4882 = vmin.f32 %v4866, 0.0
      %v4883 = vmin.f32 %v4867, 0.0
      %v4884 = vmin.f32 %v4868, 0.0
      %v4885 = vmin.f32 %v4869, 0.0
      %v4886 = vmul.f32 %v4870, 1.442695
      %v4887 = vpow.pop %v4886
      %v4888 = vmul.f32 %v4871, 1.442695
      %v4889 = vpow.pop %v4888
      %v4890 = vmul.f32 %v4872, 1.442695
      %v4891 = vpow.pop %v4890
      %v4892 = vmul.f32 %v4873, 1.442695
      %v4893 = vpow.pop %v4892
      %v4894 = vmul.f32 %v4874, 1.442695
      %v4895 = vpow.pop %v4894
      %v4896 = vmul.f32 %v4875, 1.442695
      %v4897 = vpow.pop %v4896
      %v4898 = vmul.f32 %v4876, 1.442695
      %v4899 = vpow.pop %v4898
      %v4900 = vmul.f32 %v4877, 1.442695
      %v4901 = vpow.pop %v4900
      %v4902 = vmul.f32 %v4878, 1.442695
      %v4903 = vpow.pop %v4902
      %v4904 = vmul.f32 %v4879, 1.442695
      %v4905 = vpow.pop %v4904
      %v4906 = vmul.f32 %v4880, 1.442695
      %v4907 = vpow.pop %v4906
      %v4908 = vmul.f32 %v4881, 1.442695
      %v4909 = vpow.pop %v4908
      %v4910 = vmul.f32 %v4882, 1.442695
      %v4911 = vpow.pop %v4910
      %v4912 = vmul.f32 %v4883, 1.442695
      %v4913 = vpow.pop %v4912
      %v4914 = vmul.f32 %v4884, 1.442695
      %v4915 = vpow.pop %v4914
      %v4916 = vmul.f32 %v4885, 1.442695
      %v4917 = vpow.pop %v4916
      %v4918 = vmul.f32 %v4887, %v1182
      %v4919 = vmul.f32 %v4889, %v1183
      %v4920 = vmul.f32 %v4891, %v1184
      %v4921 = vmul.f32 %v4893, %v1185
      %v4922 = vmul.f32 %v4895, %v1186
      %v4923 = vmul.f32 %v4897, %v1187
      %v4924 = vmul.f32 %v4899, %v1188
      %v4925 = vmul.f32 %v4901, %v1189
      %v4926 = vmul.f32 %v4903, %v1190
      %v4927 = vmul.f32 %v4905, %v1191
      %v4928 = vmul.f32 %v4907, %v1192
      %v4929 = vmul.f32 %v4909, %v1193
      %v4930 = vmul.f32 %v4911, %v1194
      %v4931 = vmul.f32 %v4913, %v1195
      %v4932 = vmul.f32 %v4915, %v1196
      %v4933 = vmul.f32 %v4917, %v1197
      %v4934 = vmul.f32 %v4887, %v1198
      %v4935 = vmul.f32 %v4889, %v1199
      %v4936 = vmul.f32 %v4891, %v1200
      %v4937 = vmul.f32 %v4893, %v1201
      %v4938 = vmul.f32 %v4895, %v1202
      %v4939 = vmul.f32 %v4897, %v1203
      %v4940 = vmul.f32 %v4899, %v1204
      %v4941 = vmul.f32 %v4901, %v1205
      %v4942 = vmul.f32 %v4903, %v1206
      %v4943 = vmul.f32 %v4905, %v1207
      %v4944 = vmul.f32 %v4907, %v1208
      %v4945 = vmul.f32 %v4909, %v1209
      %v4946 = vmul.f32 %v4911, %v1210
      %v4947 = vmul.f32 %v4913, %v1211
      %v4948 = vmul.f32 %v4915, %v1212
      %v4949 = vmul.f32 %v4917, %v1213
      %v4950 = vld [vmem:[#allocation5] sm:$0xff]
      %v4951 = vld [vmem:[#allocation5 + $0x8] sm:$0xff]
      %v4952 = vld [vmem:[#allocation5 + $0x10] sm:$0xff]
      %v4953 = vld [vmem:[#allocation5 + $0x18] sm:$0xff]
      %v4954 = vld [vmem:[#allocation5 + $0x20] sm:$0xff]
      %v4955 = vld [vmem:[#allocation5 + $0x28] sm:$0xff]
      %v4956 = vld [vmem:[#allocation5 + $0x30] sm:$0xff]
      %v4957 = vld [vmem:[#allocation5 + $0x38] sm:$0xff]
      %v4958 = vld [vmem:[#allocation5 + $0x40] sm:$0xff]
      %v4959 = vld [vmem:[#allocation5 + $0x48] sm:$0xff]
      %v4960 = vld [vmem:[#allocation5 + $0x50] sm:$0xff]
      %v4961 = vld [vmem:[#allocation5 + $0x58] sm:$0xff]
      %v4962 = vld [vmem:[#allocation5 + $0x60] sm:$0xff]
      %v4963 = vld [vmem:[#allocation5 + $0x68] sm:$0xff]
      %v4964 = vld [vmem:[#allocation5 + $0x70] sm:$0xff]
      %v4965 = vld [vmem:[#allocation5 + $0x78] sm:$0xff]
      %4967 = vset.pattern.permute.xlu0 3
      %4968 = vperm.xlu0 %4967, %v4743
      %v4969 = vpop.permute.xlu0 %4968
      %4972 = vset.pattern.permute.xlu0 3
      %4973 = vperm.xlu0 %4972, %v4745
      %v4974 = vpop.permute.xlu0 %4973
      %4977 = vset.pattern.permute.xlu0 3
      %4978 = vperm.xlu0 %4977, %v4747
      %v4979 = vpop.permute.xlu0 %4978
      %4982 = vset.pattern.permute.xlu0 3
      %4983 = vperm.xlu0 %4982, %v4749
      %v4984 = vpop.permute.xlu0 %4983
      %4987 = vset.pattern.permute.xlu0 3
      %4988 = vperm.xlu0 %4987, %v4751
      %v4989 = vpop.permute.xlu0 %4988
      %4992 = vset.pattern.permute.xlu0 3
      %4993 = vperm.xlu0 %4992, %v4753
      %v4994 = vpop.permute.xlu0 %4993
      %4997 = vset.pattern.permute.xlu0 3
      %4998 = vperm.xlu0 %4997, %v4755
      %v4999 = vpop.permute.xlu0 %4998
      %5002 = vset.pattern.permute.xlu0 3
      %5003 = vperm.xlu0 %5002, %v4757
      %v5004 = vpop.permute.xlu0 %5003
      %5007 = vset.pattern.permute.xlu0 3
      %5008 = vperm.xlu0 %5007, %v4759
      %v5009 = vpop.permute.xlu0 %5008
      %5012 = vset.pattern.permute.xlu0 3
      %5013 = vperm.xlu0 %5012, %v4761
      %v5014 = vpop.permute.xlu0 %5013
      %5017 = vset.pattern.permute.xlu0 3
      %5018 = vperm.xlu0 %5017, %v4763
      %v5019 = vpop.permute.xlu0 %5018
      %5022 = vset.pattern.permute.xlu0 3
      %5023 = vperm.xlu0 %5022, %v4765
      %v5024 = vpop.permute.xlu0 %5023
      %5027 = vset.pattern.permute.xlu0 3
      %5028 = vperm.xlu0 %5027, %v4767
      %v5029 = vpop.permute.xlu0 %5028
      %5032 = vset.pattern.permute.xlu0 3
      %5033 = vperm.xlu0 %5032, %v4769
      %v5034 = vpop.permute.xlu0 %5033
      %5037 = vset.pattern.permute.xlu0 3
      %5038 = vperm.xlu0 %5037, %v4771
      %v5039 = vpop.permute.xlu0 %5038
      %5042 = vset.pattern.permute.xlu0 3
      %5043 = vperm.xlu0 %5042, %v4773
      %v5044 = vpop.permute.xlu0 %5043
      %v5046 = vmul.f32 %v4969, %v4950
      %v5047 = vmul.f32 %v4974, %v4951
      %v5048 = vmul.f32 %v4979, %v4952
      %v5049 = vmul.f32 %v4984, %v4953
      %v5050 = vmul.f32 %v4989, %v4954
      %v5051 = vmul.f32 %v4994, %v4955
      %v5052 = vmul.f32 %v4999, %v4956
      %v5053 = vmul.f32 %v5004, %v4957
      %v5054 = vmul.f32 %v5009, %v4958
      %v5055 = vmul.f32 %v5014, %v4959
      %v5056 = vmul.f32 %v5019, %v4960
      %v5057 = vmul.f32 %v5024, %v4961
      %v5058 = vmul.f32 %v5029, %v4962
      %v5059 = vmul.f32 %v5034, %v4963
      %v5060 = vmul.f32 %v5039, %v4964
      %v5061 = vmul.f32 %v5044, %v4965
      %5062 = vadd.xlane.f32.xlu0 %v4918
      %v5063 = vpop.xlane.xlu0 %5062
      %5064 = vadd.xlane.f32.xlu0 %v4919
      %v5065 = vpop.xlane.xlu0 %5064
      %5066 = vadd.xlane.f32.xlu0 %v4920
      %v5067 = vpop.xlane.xlu0 %5066
      %5068 = vadd.xlane.f32.xlu0 %v4921
      %v5069 = vpop.xlane.xlu0 %5068
      %5070 = vadd.xlane.f32.xlu0 %v4922
      %v5071 = vpop.xlane.xlu0 %5070
      %5072 = vadd.xlane.f32.xlu0 %v4923
      %v5073 = vpop.xlane.xlu0 %5072
      %5074 = vadd.xlane.f32.xlu0 %v4924
      %v5075 = vpop.xlane.xlu0 %5074
      %5076 = vadd.xlane.f32.xlu0 %v4925
      %v5077 = vpop.xlane.xlu0 %5076
      %5078 = vadd.xlane.f32.xlu0 %v4926
      %v5079 = vpop.xlane.xlu0 %5078
      %5080 = vadd.xlane.f32.xlu0 %v4927
      %v5081 = vpop.xlane.xlu0 %5080
      %5082 = vadd.xlane.f32.xlu0 %v4928
      %v5083 = vpop.xlane.xlu0 %5082
      %5084 = vadd.xlane.f32.xlu0 %v4929
      %v5085 = vpop.xlane.xlu0 %5084
      %5086 = vadd.xlane.f32.xlu0 %v4930
      %v5087 = vpop.xlane.xlu0 %5086
      %5088 = vadd.xlane.f32.xlu0 %v4931
      %v5089 = vpop.xlane.xlu0 %5088
      %5090 = vadd.xlane.f32.xlu0 %v4932
      %v5091 = vpop.xlane.xlu0 %5090
      %5092 = vadd.xlane.f32.xlu0 %v4933
      %v5093 = vpop.xlane.xlu0 %5092
      %v5094 = vadd.f32 %v5046, %v5063
      %v5095 = vadd.f32 %v5047, %v5065
      %v5096 = vadd.f32 %v5048, %v5067
      %v5097 = vadd.f32 %v5049, %v5069
      %v5098 = vadd.f32 %v5050, %v5071
      %v5099 = vadd.f32 %v5051, %v5073
      %v5100 = vadd.f32 %v5052, %v5075
      %v5101 = vadd.f32 %v5053, %v5077
      %v5102 = vadd.f32 %v5054, %v5079
      %v5103 = vadd.f32 %v5055, %v5081
      %v5104 = vadd.f32 %v5056, %v5083
      %v5105 = vadd.f32 %v5057, %v5085
      %v5106 = vadd.f32 %v5058, %v5087
      %v5107 = vadd.f32 %v5059, %v5089
      %v5108 = vadd.f32 %v5060, %v5091
      %v5109 = vadd.f32 %v5061, %v5093
      %vm5110 = vcmask 261312
      %5111 = vst.msk [vmem:[#allocation5] sm:$0xff] %vm5110, %v5094
      %5112 = vst.msk [vmem:[#allocation5 + $0x8] sm:$0xff] %vm5110, %v5095
      %5113 = vst.msk [vmem:[#allocation5 + $0x10] sm:$0xff] %vm5110, %v5096
      %5114 = vst.msk [vmem:[#allocation5 + $0x18] sm:$0xff] %vm5110, %v5097
      %5115 = vst.msk [vmem:[#allocation5 + $0x20] sm:$0xff] %vm5110, %v5098
      %5116 = vst.msk [vmem:[#allocation5 + $0x28] sm:$0xff] %vm5110, %v5099
      %5117 = vst.msk [vmem:[#allocation5 + $0x30] sm:$0xff] %vm5110, %v5100
      %5118 = vst.msk [vmem:[#allocation5 + $0x38] sm:$0xff] %vm5110, %v5101
      %5119 = vst.msk [vmem:[#allocation5 + $0x40] sm:$0xff] %vm5110, %v5102
      %5120 = vst.msk [vmem:[#allocation5 + $0x48] sm:$0xff] %vm5110, %v5103
      %5121 = vst.msk [vmem:[#allocation5 + $0x50] sm:$0xff] %vm5110, %v5104
      %5122 = vst.msk [vmem:[#allocation5 + $0x58] sm:$0xff] %vm5110, %v5105
      %5123 = vst.msk [vmem:[#allocation5 + $0x60] sm:$0xff] %vm5110, %v5106
      %5124 = vst.msk [vmem:[#allocation5 + $0x68] sm:$0xff] %vm5110, %v5107
      %5125 = vst.msk [vmem:[#allocation5 + $0x70] sm:$0xff] %vm5110, %v5108
      %5126 = vst.msk [vmem:[#allocation5 + $0x78] sm:$0xff] %vm5110, %v5109
      %v5127 = vld [vmem:[#allocation6] sm:$0xff]
      %v5128 = vld [vmem:[#allocation6 + $0x8] sm:$0xff]
      %v5129 = vld [vmem:[#allocation6 + $0x10] sm:$0xff]
      %v5130 = vld [vmem:[#allocation6 + $0x18] sm:$0xff]
      %v5131 = vld [vmem:[#allocation6 + $0x20] sm:$0xff]
      %v5132 = vld [vmem:[#allocation6 + $0x28] sm:$0xff]
      %v5133 = vld [vmem:[#allocation6 + $0x30] sm:$0xff]
      %v5134 = vld [vmem:[#allocation6 + $0x38] sm:$0xff]
      %v5135 = vld [vmem:[#allocation6 + $0x40] sm:$0xff]
      %v5136 = vld [vmem:[#allocation6 + $0x48] sm:$0xff]
      %v5137 = vld [vmem:[#allocation6 + $0x50] sm:$0xff]
      %v5138 = vld [vmem:[#allocation6 + $0x58] sm:$0xff]
      %v5139 = vld [vmem:[#allocation6 + $0x60] sm:$0xff]
      %v5140 = vld [vmem:[#allocation6 + $0x68] sm:$0xff]
      %v5141 = vld [vmem:[#allocation6 + $0x70] sm:$0xff]
      %v5142 = vld [vmem:[#allocation6 + $0x78] sm:$0xff]
      %v5143 = vmul.f32 %v4969, %v5127
      %v5144 = vmul.f32 %v4974, %v5128
      %v5145 = vmul.f32 %v4979, %v5129
      %v5146 = vmul.f32 %v4984, %v5130
      %v5147 = vmul.f32 %v4989, %v5131
      %v5148 = vmul.f32 %v4994, %v5132
      %v5149 = vmul.f32 %v4999, %v5133
      %v5150 = vmul.f32 %v5004, %v5134
      %v5151 = vmul.f32 %v5009, %v5135
      %v5152 = vmul.f32 %v5014, %v5136
      %v5153 = vmul.f32 %v5019, %v5137
      %v5154 = vmul.f32 %v5024, %v5138
      %v5155 = vmul.f32 %v5029, %v5139
      %v5156 = vmul.f32 %v5034, %v5140
      %v5157 = vmul.f32 %v5039, %v5141
      %v5158 = vmul.f32 %v5044, %v5142
      %5159 = vadd.xlane.f32.xlu0 %v4934
      %v5160 = vpop.xlane.xlu0 %5159
      %5161 = vadd.xlane.f32.xlu0 %v4935
      %v5162 = vpop.xlane.xlu0 %5161
      %5163 = vadd.xlane.f32.xlu0 %v4936
      %v5164 = vpop.xlane.xlu0 %5163
      %5165 = vadd.xlane.f32.xlu0 %v4937
      %v5166 = vpop.xlane.xlu0 %5165
      %5167 = vadd.xlane.f32.xlu0 %v4938
      %v5168 = vpop.xlane.xlu0 %5167
      %5169 = vadd.xlane.f32.xlu0 %v4939
      %v5170 = vpop.xlane.xlu0 %5169
      %5171 = vadd.xlane.f32.xlu0 %v4940
      %v5172 = vpop.xlane.xlu0 %5171
      %5173 = vadd.xlane.f32.xlu0 %v4941
      %v5174 = vpop.xlane.xlu0 %5173
      %5175 = vadd.xlane.f32.xlu0 %v4942
      %v5176 = vpop.xlane.xlu0 %5175
      %5177 = vadd.xlane.f32.xlu0 %v4943
      %v5178 = vpop.xlane.xlu0 %5177
      %5179 = vadd.xlane.f32.xlu0 %v4944
      %v5180 = vpop.xlane.xlu0 %5179
      %5181 = vadd.xlane.f32.xlu0 %v4945
      %v5182 = vpop.xlane.xlu0 %5181
      %5183 = vadd.xlane.f32.xlu0 %v4946
      %v5184 = vpop.xlane.xlu0 %5183
      %5185 = vadd.xlane.f32.xlu0 %v4947
      %v5186 = vpop.xlane.xlu0 %5185
      %5187 = vadd.xlane.f32.xlu0 %v4948
      %v5188 = vpop.xlane.xlu0 %5187
      %5189 = vadd.xlane.f32.xlu0 %v4949
      %v5190 = vpop.xlane.xlu0 %5189
      %v5191 = vadd.f32 %v5143, %v5160
      %v5192 = vadd.f32 %v5144, %v5162
      %v5193 = vadd.f32 %v5145, %v5164
      %v5194 = vadd.f32 %v5146, %v5166
      %v5195 = vadd.f32 %v5147, %v5168
      %v5196 = vadd.f32 %v5148, %v5170
      %v5197 = vadd.f32 %v5149, %v5172
      %v5198 = vadd.f32 %v5150, %v5174
      %v5199 = vadd.f32 %v5151, %v5176
      %v5200 = vadd.f32 %v5152, %v5178
      %v5201 = vadd.f32 %v5153, %v5180
      %v5202 = vadd.f32 %v5154, %v5182
      %v5203 = vadd.f32 %v5155, %v5184
      %v5204 = vadd.f32 %v5156, %v5186
      %v5205 = vadd.f32 %v5157, %v5188
      %v5206 = vadd.f32 %v5158, %v5190
      %5207 = vst.msk [vmem:[#allocation6] sm:$0xff] %vm5110, %v5191
      %5208 = vst.msk [vmem:[#allocation6 + $0x8] sm:$0xff] %vm5110, %v5192
      %5209 = vst.msk [vmem:[#allocation6 + $0x10] sm:$0xff] %vm5110, %v5193
      %5210 = vst.msk [vmem:[#allocation6 + $0x18] sm:$0xff] %vm5110, %v5194
      %5211 = vst.msk [vmem:[#allocation6 + $0x20] sm:$0xff] %vm5110, %v5195
      %5212 = vst.msk [vmem:[#allocation6 + $0x28] sm:$0xff] %vm5110, %v5196
      %5213 = vst.msk [vmem:[#allocation6 + $0x30] sm:$0xff] %vm5110, %v5197
      %5214 = vst.msk [vmem:[#allocation6 + $0x38] sm:$0xff] %vm5110, %v5198
      %5215 = vst.msk [vmem:[#allocation6 + $0x40] sm:$0xff] %vm5110, %v5199
      %5216 = vst.msk [vmem:[#allocation6 + $0x48] sm:$0xff] %vm5110, %v5200
      %5217 = vst.msk [vmem:[#allocation6 + $0x50] sm:$0xff] %vm5110, %v5201
      %5218 = vst.msk [vmem:[#allocation6 + $0x58] sm:$0xff] %vm5110, %v5202
      %5219 = vst.msk [vmem:[#allocation6 + $0x60] sm:$0xff] %vm5110, %v5203
      %5220 = vst.msk [vmem:[#allocation6 + $0x68] sm:$0xff] %vm5110, %v5204
      %5221 = vst.msk [vmem:[#allocation6 + $0x70] sm:$0xff] %vm5110, %v5205
      %5222 = vst.msk [vmem:[#allocation6 + $0x78] sm:$0xff] %vm5110, %v5206
      %v5223 = vld [vmem:[#allocation3] sm:$0xff]
      %v5224 = vld [vmem:[#allocation3 + $0x8] sm:$0xff]
      %v5225 = vld [vmem:[#allocation3 + $0x10] sm:$0xff]
      %v5226 = vld [vmem:[#allocation3 + $0x18] sm:$0xff]
      %v5227 = vld [vmem:[#allocation3 + $0x20] sm:$0xff]
      %v5228 = vld [vmem:[#allocation3 + $0x28] sm:$0xff]
      %v5229 = vld [vmem:[#allocation3 + $0x30] sm:$0xff]
      %v5230 = vld [vmem:[#allocation3 + $0x38] sm:$0xff]
      %v5231 = vld [vmem:[#allocation3 + $0x40] sm:$0xff]
      %v5232 = vld [vmem:[#allocation3 + $0x48] sm:$0xff]
      %v5233 = vld [vmem:[#allocation3 + $0x50] sm:$0xff]
      %v5234 = vld [vmem:[#allocation3 + $0x58] sm:$0xff]
      %v5235 = vld [vmem:[#allocation3 + $0x60] sm:$0xff]
      %v5236 = vld [vmem:[#allocation3 + $0x68] sm:$0xff]
      %v5237 = vld [vmem:[#allocation3 + $0x70] sm:$0xff]
      %v5238 = vld [vmem:[#allocation3 + $0x78] sm:$0xff]
      %v5239 = vmul.f32 %v4969, %v5223
      %v5240 = vmul.f32 %v4974, %v5224
      %v5241 = vmul.f32 %v4979, %v5225
      %v5242 = vmul.f32 %v4984, %v5226
      %v5243 = vmul.f32 %v4989, %v5227
      %v5244 = vmul.f32 %v4994, %v5228
      %v5245 = vmul.f32 %v4999, %v5229
      %v5246 = vmul.f32 %v5004, %v5230
      %v5247 = vmul.f32 %v5009, %v5231
      %v5248 = vmul.f32 %v5014, %v5232
      %v5249 = vmul.f32 %v5019, %v5233
      %v5250 = vmul.f32 %v5024, %v5234
      %v5251 = vmul.f32 %v5029, %v5235
      %v5252 = vmul.f32 %v5034, %v5236
      %v5253 = vmul.f32 %v5039, %v5237
      %v5254 = vmul.f32 %v5044, %v5238
      %v5255 = vpack.c.bf16 %v4919, %v4918
      %v5256 = vpack.c.bf16 %v4921, %v4920
      %v5257 = vpack.c.bf16 %v4923, %v4922
      %v5258 = vpack.c.bf16 %v4925, %v4924
      %v5259 = vpack.c.bf16 %v4927, %v4926
      %v5260 = vpack.c.bf16 %v4929, %v4928
      %v5261 = vpack.c.bf16 %v4931, %v4930
      %v5262 = vpack.c.bf16 %v4933, %v4932
      %5263 = vrot.lane.b32.xlu0 %v1318, 72
      %v5264 = vpop.permute.xlu0 %5263
      %5265 = vrot.lane.b32.xlu0 %v1319, 72
      %v5266 = vpop.permute.xlu0 %5265
      %5267 = vrot.lane.b32.xlu0 %v1320, 72
      %v5268 = vpop.permute.xlu0 %5267
      %5269 = vrot.lane.b32.xlu0 %v1321, 72
      %v5270 = vpop.permute.xlu0 %5269
      %5271 = vrot.lane.b32.xlu0 %v1322, 72
      %v5272 = vpop.permute.xlu0 %5271
      %5273 = vrot.lane.b32.xlu0 %v1323, 72
      %v5274 = vpop.permute.xlu0 %5273
      %5275 = vrot.lane.b32.xlu0 %v1324, 72
      %v5276 = vpop.permute.xlu0 %5275
      %5277 = vrot.lane.b32.xlu0 %v1325, 72
      %v5278 = vpop.permute.xlu0 %5277
      %5287 = vmatpush.bf16.msra.mxu0 %v5278
      %5288 = vmatpush.bf16.msra.mxu0 %v5276
      %5289 = vmatpush.bf16.msra.mxu0 %v5274
      %5290 = vmatpush.bf16.msra.mxu0 %v5272
      %5291 = vmatpush.bf16.msra.mxu0 %v5270
      %5292 = vmatpush.bf16.msra.mxu0 %v5268
      %5293 = vmatpush.bf16.msra.mxu0 %v5266
      %5294 = vmatpush.bf16.msra.mxu0 %v5264
      %5295 = vmatmul.bf16.gmra.mxu0 %v5255
      %v5296 = vpop.f32.mrf.mxu0
      %v5297 = vadd.f32 0.0, %v5296
      %v5298 = vpop.f32.mrf.mxu0
      %v5299 = vadd.f32 0.0, %v5298
      %5300 = vmatmul.bf16.gmra.mxu0 %v5256
      %v5301 = vpop.f32.mrf.mxu0
      %v5302 = vadd.f32 0.0, %v5301
      %v5303 = vpop.f32.mrf.mxu0
      %v5304 = vadd.f32 0.0, %v5303
      %5305 = vmatmul.bf16.gmra.mxu0 %v5257
      %v5306 = vpop.f32.mrf.mxu0
      %v5307 = vadd.f32 0.0, %v5306
      %v5308 = vpop.f32.mrf.mxu0
      %v5309 = vadd.f32 0.0, %v5308
      %5310 = vmatmul.bf16.gmra.mxu0 %v5258
      %v5311 = vpop.f32.mrf.mxu0
      %v5312 = vadd.f32 0.0, %v5311
      %v5313 = vpop.f32.mrf.mxu0
      %v5314 = vadd.f32 0.0, %v5313
      %5315 = vmatmul.bf16.gmra.mxu0 %v5259
      %v5316 = vpop.f32.mrf.mxu0
      %v5317 = vadd.f32 0.0, %v5316
      %v5318 = vpop.f32.mrf.mxu0
      %v5319 = vadd.f32 0.0, %v5318
      %5320 = vmatmul.bf16.gmra.mxu0 %v5260
      %v5321 = vpop.f32.mrf.mxu0
      %v5322 = vadd.f32 0.0, %v5321
      %v5323 = vpop.f32.mrf.mxu0
      %v5324 = vadd.f32 0.0, %v5323
      %5325 = vmatmul.bf16.gmra.mxu0 %v5261
      %v5326 = vpop.f32.mrf.mxu0
      %v5327 = vadd.f32 0.0, %v5326
      %v5328 = vpop.f32.mrf.mxu0
      %v5329 = vadd.f32 0.0, %v5328
      %5330 = vmatmul.bf16.gmra.mxu0 %v5262
      %v5331 = vpop.f32.mrf.mxu0
      %v5332 = vadd.f32 0.0, %v5331
      %v5333 = vpop.f32.mrf.mxu0
      %v5334 = vadd.f32 0.0, %v5333
      %5335 = vdwg.mxu0
      %5352 = vrot.lane.b32.xlu0 %v5297, 24
      %v5353 = vpop.permute.xlu0 %5352
      %5354 = vrot.lane.b32.xlu0 %v5299, 24
      %v5355 = vpop.permute.xlu0 %5354
      %5356 = vrot.lane.b32.xlu0 %v5302, 24
      %v5357 = vpop.permute.xlu0 %5356
      %5358 = vrot.lane.b32.xlu0 %v5304, 24
      %v5359 = vpop.permute.xlu0 %5358
      %5360 = vrot.lane.b32.xlu0 %v5307, 24
      %v5361 = vpop.permute.xlu0 %5360
      %5362 = vrot.lane.b32.xlu0 %v5309, 24
      %v5363 = vpop.permute.xlu0 %5362
      %5364 = vrot.lane.b32.xlu0 %v5312, 24
      %v5365 = vpop.permute.xlu0 %5364
      %5366 = vrot.lane.b32.xlu0 %v5314, 24
      %v5367 = vpop.permute.xlu0 %5366
      %5368 = vrot.lane.b32.xlu0 %v5317, 24
      %v5369 = vpop.permute.xlu0 %5368
      %5370 = vrot.lane.b32.xlu0 %v5319, 24
      %v5371 = vpop.permute.xlu0 %5370
      %5372 = vrot.lane.b32.xlu0 %v5322, 24
      %v5373 = vpop.permute.xlu0 %5372
      %5374 = vrot.lane.b32.xlu0 %v5324, 24
      %v5375 = vpop.permute.xlu0 %5374
      %5376 = vrot.lane.b32.xlu0 %v5327, 24
      %v5377 = vpop.permute.xlu0 %5376
      %5378 = vrot.lane.b32.xlu0 %v5329, 24
      %v5379 = vpop.permute.xlu0 %5378
      %5380 = vrot.lane.b32.xlu0 %v5332, 24
      %v5381 = vpop.permute.xlu0 %5380
      %5382 = vrot.lane.b32.xlu0 %v5334, 24
      %v5383 = vpop.permute.xlu0 %5382
      %v5400 = vadd.f32 %v5239, %v5353
      %v5401 = vadd.f32 %v5240, %v5355
      %v5402 = vadd.f32 %v5241, %v5357
      %v5403 = vadd.f32 %v5242, %v5359
      %v5404 = vadd.f32 %v5243, %v5361
      %v5405 = vadd.f32 %v5244, %v5363
      %v5406 = vadd.f32 %v5245, %v5365
      %v5407 = vadd.f32 %v5246, %v5367
      %v5408 = vadd.f32 %v5247, %v5369
      %v5409 = vadd.f32 %v5248, %v5371
      %v5410 = vadd.f32 %v5249, %v5373
      %v5411 = vadd.f32 %v5250, %v5375
      %v5412 = vadd.f32 %v5251, %v5377
      %v5413 = vadd.f32 %v5252, %v5379
      %v5414 = vadd.f32 %v5253, %v5381
      %v5415 = vadd.f32 %v5254, %v5383
      %5416 = vst.msk [vmem:[#allocation3] sm:$0xff] %vm5110, %v5400
      %5417 = vst.msk [vmem:[#allocation3 + $0x8] sm:$0xff] %vm5110, %v5401
      %5418 = vst.msk [vmem:[#allocation3 + $0x10] sm:$0xff] %vm5110, %v5402
      %5419 = vst.msk [vmem:[#allocation3 + $0x18] sm:$0xff] %vm5110, %v5403
      %5420 = vst.msk [vmem:[#allocation3 + $0x20] sm:$0xff] %vm5110, %v5404
      %5421 = vst.msk [vmem:[#allocation3 + $0x28] sm:$0xff] %vm5110, %v5405
      %5422 = vst.msk [vmem:[#allocation3 + $0x30] sm:$0xff] %vm5110, %v5406
      %5423 = vst.msk [vmem:[#allocation3 + $0x38] sm:$0xff] %vm5110, %v5407
      %5424 = vst.msk [vmem:[#allocation3 + $0x40] sm:$0xff] %vm5110, %v5408
      %5425 = vst.msk [vmem:[#allocation3 + $0x48] sm:$0xff] %vm5110, %v5409
      %5426 = vst.msk [vmem:[#allocation3 + $0x50] sm:$0xff] %vm5110, %v5410
      %5427 = vst.msk [vmem:[#allocation3 + $0x58] sm:$0xff] %vm5110, %v5411
      %5428 = vst.msk [vmem:[#allocation3 + $0x60] sm:$0xff] %vm5110, %v5412
      %5429 = vst.msk [vmem:[#allocation3 + $0x68] sm:$0xff] %vm5110, %v5413
      %5430 = vst.msk [vmem:[#allocation3 + $0x70] sm:$0xff] %vm5110, %v5414
      %5431 = vst.msk [vmem:[#allocation3 + $0x78] sm:$0xff] %vm5110, %v5415
      %v5432 = vld [vmem:[#allocation4] sm:$0xff]
      %v5433 = vld [vmem:[#allocation4 + $0x8] sm:$0xff]
      %v5434 = vld [vmem:[#allocation4 + $0x10] sm:$0xff]
      %v5435 = vld [vmem:[#allocation4 + $0x18] sm:$0xff]
      %v5436 = vld [vmem:[#allocation4 + $0x20] sm:$0xff]
      %v5437 = vld [vmem:[#allocation4 + $0x28] sm:$0xff]
      %v5438 = vld [vmem:[#allocation4 + $0x30] sm:$0xff]
      %v5439 = vld [vmem:[#allocation4 + $0x38] sm:$0xff]
      %v5440 = vld [vmem:[#allocation4 + $0x40] sm:$0xff]
      %v5441 = vld [vmem:[#allocation4 + $0x48] sm:$0xff]
      %v5442 = vld [vmem:[#allocation4 + $0x50] sm:$0xff]
      %v5443 = vld [vmem:[#allocation4 + $0x58] sm:$0xff]
      %v5444 = vld [vmem:[#allocation4 + $0x60] sm:$0xff]
      %v5445 = vld [vmem:[#allocation4 + $0x68] sm:$0xff]
      %v5446 = vld [vmem:[#allocation4 + $0x70] sm:$0xff]
      %v5447 = vld [vmem:[#allocation4 + $0x78] sm:$0xff]
      %v5448 = vmul.f32 %v4969, %v5432
      %v5449 = vmul.f32 %v4974, %v5433
      %v5450 = vmul.f32 %v4979, %v5434
      %v5451 = vmul.f32 %v4984, %v5435
      %v5452 = vmul.f32 %v4989, %v5436
      %v5453 = vmul.f32 %v4994, %v5437
      %v5454 = vmul.f32 %v4999, %v5438
      %v5455 = vmul.f32 %v5004, %v5439
      %v5456 = vmul.f32 %v5009, %v5440
      %v5457 = vmul.f32 %v5014, %v5441
      %v5458 = vmul.f32 %v5019, %v5442
      %v5459 = vmul.f32 %v5024, %v5443
      %v5460 = vmul.f32 %v5029, %v5444
      %v5461 = vmul.f32 %v5034, %v5445
      %v5462 = vmul.f32 %v5039, %v5446
      %v5463 = vmul.f32 %v5044, %v5447
      %v5464 = vpack.c.bf16 %v4935, %v4934
      %v5465 = vpack.c.bf16 %v4937, %v4936
      %v5466 = vpack.c.bf16 %v4939, %v4938
      %v5467 = vpack.c.bf16 %v4941, %v4940
      %v5468 = vpack.c.bf16 %v4943, %v4942
      %v5469 = vpack.c.bf16 %v4945, %v4944
      %v5470 = vpack.c.bf16 %v4947, %v4946
      %v5471 = vpack.c.bf16 %v4949, %v4948
      %5472 = vmatpush.bf16.msra.mxu0 %v5278
      %5473 = vmatpush.bf16.msra.mxu0 %v5276
      %5474 = vmatpush.bf16.msra.mxu0 %v5274
      %5475 = vmatpush.bf16.msra.mxu0 %v5272
      %5476 = vmatpush.bf16.msra.mxu0 %v5270
      %5477 = vmatpush.bf16.msra.mxu0 %v5268
      %5478 = vmatpush.bf16.msra.mxu0 %v5266
      %5479 = vmatpush.bf16.msra.mxu0 %v5264
      %5480 = vmatmul.bf16.gmra.mxu0 %v5464
      %v5481 = vpop.f32.mrf.mxu0
      %v5482 = vadd.f32 0.0, %v5481
      %v5483 = vpop.f32.mrf.mxu0
      %v5484 = vadd.f32 0.0, %v5483
      %5485 = vmatmul.bf16.gmra.mxu0 %v5465
      %v5486 = vpop.f32.mrf.mxu0
      %v5487 = vadd.f32 0.0, %v5486
      %v5488 = vpop.f32.mrf.mxu0
      %v5489 = vadd.f32 0.0, %v5488
      %5490 = vmatmul.bf16.gmra.mxu0 %v5466
      %v5491 = vpop.f32.mrf.mxu0
      %v5492 = vadd.f32 0.0, %v5491
      %v5493 = vpop.f32.mrf.mxu0
      %v5494 = vadd.f32 0.0, %v5493
      %5495 = vmatmul.bf16.gmra.mxu0 %v5467
      %v5496 = vpop.f32.mrf.mxu0
      %v5497 = vadd.f32 0.0, %v5496
      %v5498 = vpop.f32.mrf.mxu0
      %v5499 = vadd.f32 0.0, %v5498
      %5500 = vmatmul.bf16.gmra.mxu0 %v5468
      %v5501 = vpop.f32.mrf.mxu0
      %v5502 = vadd.f32 0.0, %v5501
      %v5503 = vpop.f32.mrf.mxu0
      %v5504 = vadd.f32 0.0, %v5503
      %5505 = vmatmul.bf16.gmra.mxu0 %v5469
      %v5506 = vpop.f32.mrf.mxu0
      %v5507 = vadd.f32 0.0, %v5506
      %v5508 = vpop.f32.mrf.mxu0
      %v5509 = vadd.f32 0.0, %v5508
      %5510 = vmatmul.bf16.gmra.mxu0 %v5470
      %v5511 = vpop.f32.mrf.mxu0
      %v5512 = vadd.f32 0.0, %v5511
      %v5513 = vpop.f32.mrf.mxu0
      %v5514 = vadd.f32 0.0, %v5513
      %5515 = vmatmul.bf16.gmra.mxu0 %v5471
      %v5516 = vpop.f32.mrf.mxu0
      %v5517 = vadd.f32 0.0, %v5516
      %v5518 = vpop.f32.mrf.mxu0
      %v5519 = vadd.f32 0.0, %v5518
      %5520 = vdwg.mxu0
      %5537 = vrot.lane.b32.xlu0 %v5482, 24
      %v5538 = vpop.permute.xlu0 %5537
      %5539 = vrot.lane.b32.xlu0 %v5484, 24
      %v5540 = vpop.permute.xlu0 %5539
      %5541 = vrot.lane.b32.xlu0 %v5487, 24
      %v5542 = vpop.permute.xlu0 %5541
      %5543 = vrot.lane.b32.xlu0 %v5489, 24
      %v5544 = vpop.permute.xlu0 %5543
      %5545 = vrot.lane.b32.xlu0 %v5492, 24
      %v5546 = vpop.permute.xlu0 %5545
      %5547 = vrot.lane.b32.xlu0 %v5494, 24
      %v5548 = vpop.permute.xlu0 %5547
      %5549 = vrot.lane.b32.xlu0 %v5497, 24
      %v5550 = vpop.permute.xlu0 %5549
      %5551 = vrot.lane.b32.xlu0 %v5499, 24
      %v5552 = vpop.permute.xlu0 %5551
      %5553 = vrot.lane.b32.xlu0 %v5502, 24
      %v5554 = vpop.permute.xlu0 %5553
      %5555 = vrot.lane.b32.xlu0 %v5504, 24
      %v5556 = vpop.permute.xlu0 %5555
      %5557 = vrot.lane.b32.xlu0 %v5507, 24
      %v5558 = vpop.permute.xlu0 %5557
      %5559 = vrot.lane.b32.xlu0 %v5509, 24
      %v5560 = vpop.permute.xlu0 %5559
      %5561 = vrot.lane.b32.xlu0 %v5512, 24
      %v5562 = vpop.permute.xlu0 %5561
      %5563 = vrot.lane.b32.xlu0 %v5514, 24
      %v5564 = vpop.permute.xlu0 %5563
      %5565 = vrot.lane.b32.xlu0 %v5517, 24
      %v5566 = vpop.permute.xlu0 %5565
      %5567 = vrot.lane.b32.xlu0 %v5519, 24
      %v5568 = vpop.permute.xlu0 %5567
      %v5585 = vadd.f32 %v5448, %v5538
      %v5586 = vadd.f32 %v5449, %v5540
      %v5587 = vadd.f32 %v5450, %v5542
      %v5588 = vadd.f32 %v5451, %v5544
      %v5589 = vadd.f32 %v5452, %v5546
      %v5590 = vadd.f32 %v5453, %v5548
      %v5591 = vadd.f32 %v5454, %v5550
      %v5592 = vadd.f32 %v5455, %v5552
      %v5593 = vadd.f32 %v5456, %v5554
      %v5594 = vadd.f32 %v5457, %v5556
      %v5595 = vadd.f32 %v5458, %v5558
      %v5596 = vadd.f32 %v5459, %v5560
      %v5597 = vadd.f32 %v5460, %v5562
      %v5598 = vadd.f32 %v5461, %v5564
      %v5599 = vadd.f32 %v5462, %v5566
      %v5600 = vadd.f32 %v5463, %v5568
      %5601 = vst.msk [vmem:[#allocation4] sm:$0xff] %vm5110, %v5585
      %5602 = vst.msk [vmem:[#allocation4 + $0x8] sm:$0xff] %vm5110, %v5586
      %5603 = vst.msk [vmem:[#allocation4 + $0x10] sm:$0xff] %vm5110, %v5587
      %5604 = vst.msk [vmem:[#allocation4 + $0x18] sm:$0xff] %vm5110, %v5588
      %5605 = vst.msk [vmem:[#allocation4 + $0x20] sm:$0xff] %vm5110, %v5589
      %5606 = vst.msk [vmem:[#allocation4 + $0x28] sm:$0xff] %vm5110, %v5590
      %5607 = vst.msk [vmem:[#allocation4 + $0x30] sm:$0xff] %vm5110, %v5591
      %5608 = vst.msk [vmem:[#allocation4 + $0x38] sm:$0xff] %vm5110, %v5592
      %5609 = vst.msk [vmem:[#allocation4 + $0x40] sm:$0xff] %vm5110, %v5593
      %5610 = vst.msk [vmem:[#allocation4 + $0x48] sm:$0xff] %vm5110, %v5594
      %5611 = vst.msk [vmem:[#allocation4 + $0x50] sm:$0xff] %vm5110, %v5595
      %5612 = vst.msk [vmem:[#allocation4 + $0x58] sm:$0xff] %vm5110, %v5596
      %5613 = vst.msk [vmem:[#allocation4 + $0x60] sm:$0xff] %vm5110, %v5597
      %5614 = vst.msk [vmem:[#allocation4 + $0x68] sm:$0xff] %vm5110, %v5598
      %5615 = vst.msk [vmem:[#allocation4 + $0x70] sm:$0xff] %vm5110, %v5599
      %5616 = vst.msk [vmem:[#allocation4 + $0x78] sm:$0xff] %vm5110, %v5600
      %vm5617 = vcmask 31768
      %5618 = vst.msk [vmem:[#allocation7] sm:$0xff] %vm5617, %v4710
      %5619 = vst.msk [vmem:[#allocation7 + $0x8] sm:$0xff] %vm5617, %v4711
      %5620 = vst.msk [vmem:[#allocation7 + $0x10] sm:$0xff] %vm5617, %v4712
      %5621 = vst.msk [vmem:[#allocation7 + $0x18] sm:$0xff] %vm5617, %v4713
      %5622 = vst.msk [vmem:[#allocation7 + $0x20] sm:$0xff] %vm5617, %v4714
      %5623 = vst.msk [vmem:[#allocation7 + $0x28] sm:$0xff] %vm5617, %v4715
      %5624 = vst.msk [vmem:[#allocation7 + $0x30] sm:$0xff] %vm5617, %v4716
      %5625 = vst.msk [vmem:[#allocation7 + $0x38] sm:$0xff] %vm5617, %v4717
      %5626 = vst.msk [vmem:[#allocation7 + $0x40] sm:$0xff] %vm5617, %v4718
      %5627 = vst.msk [vmem:[#allocation7 + $0x48] sm:$0xff] %vm5617, %v4719
      %5628 = vst.msk [vmem:[#allocation7 + $0x50] sm:$0xff] %vm5617, %v4720
      %5629 = vst.msk [vmem:[#allocation7 + $0x58] sm:$0xff] %vm5617, %v4721
      %5630 = vst.msk [vmem:[#allocation7 + $0x60] sm:$0xff] %vm5617, %v4722
      %5631 = vst.msk [vmem:[#allocation7 + $0x68] sm:$0xff] %vm5617, %v4723
      %5632 = vst.msk [vmem:[#allocation7 + $0x70] sm:$0xff] %vm5617, %v4724
      %5633 = vst.msk [vmem:[#allocation7 + $0x78] sm:$0xff] %vm5617, %v4725
      // Predicated region
      $region85: #{decoder_layer_forward.1} parent=79 // pred_check
        %p5634 = pneg %p788
      $region86: #{decoder_layer_forward.1} parent=79 // pred_check_branch
        %5636 = sbr.rel (%p5634) target = $region88
      $region87: #{decoder_layer_forward.1} parent=79 // pred_region
        %v5637 = vld [vmem:[#allocation5] sm:$0xff]
        %v5638 = vld [vmem:[#allocation5 + $0x8] sm:$0xff]
        %v5639 = vld [vmem:[#allocation5 + $0x10] sm:$0xff]
        %v5640 = vld [vmem:[#allocation5 + $0x18] sm:$0xff]
        %v5641 = vld [vmem:[#allocation5 + $0x20] sm:$0xff]
        %v5642 = vld [vmem:[#allocation5 + $0x28] sm:$0xff]
        %v5643 = vld [vmem:[#allocation5 + $0x30] sm:$0xff]
        %v5644 = vld [vmem:[#allocation5 + $0x38] sm:$0xff]
        %v5645 = vld [vmem:[#allocation5 + $0x40] sm:$0xff]
        %v5646 = vld [vmem:[#allocation5 + $0x48] sm:$0xff]
        %v5647 = vld [vmem:[#allocation5 + $0x50] sm:$0xff]
        %v5648 = vld [vmem:[#allocation5 + $0x58] sm:$0xff]
        %v5649 = vld [vmem:[#allocation5 + $0x60] sm:$0xff]
        %v5650 = vld [vmem:[#allocation5 + $0x68] sm:$0xff]
        %v5651 = vld [vmem:[#allocation5 + $0x70] sm:$0xff]
        %v5652 = vld [vmem:[#allocation5 + $0x78] sm:$0xff]
        %v5653 = vld [vmem:[#allocation6] sm:$0xff]
        %v5654 = vld [vmem:[#allocation6 + $0x8] sm:$0xff]
        %v5655 = vld [vmem:[#allocation6 + $0x10] sm:$0xff]
        %v5656 = vld [vmem:[#allocation6 + $0x18] sm:$0xff]
        %v5657 = vld [vmem:[#allocation6 + $0x20] sm:$0xff]
        %v5658 = vld [vmem:[#allocation6 + $0x28] sm:$0xff]
        %v5659 = vld [vmem:[#allocation6 + $0x30] sm:$0xff]
        %v5660 = vld [vmem:[#allocation6 + $0x38] sm:$0xff]
        %v5661 = vld [vmem:[#allocation6 + $0x40] sm:$0xff]
        %v5662 = vld [vmem:[#allocation6 + $0x48] sm:$0xff]
        %v5663 = vld [vmem:[#allocation6 + $0x50] sm:$0xff]
        %v5664 = vld [vmem:[#allocation6 + $0x58] sm:$0xff]
        %v5665 = vld [vmem:[#allocation6 + $0x60] sm:$0xff]
        %v5666 = vld [vmem:[#allocation6 + $0x68] sm:$0xff]
        %v5667 = vld [vmem:[#allocation6 + $0x70] sm:$0xff]
        %v5668 = vld [vmem:[#allocation6 + $0x78] sm:$0xff]
        %vm5669 = vcmp.gt.f32.partialorder %v5637, 0.0
        %vm5670 = vcmp.gt.f32.partialorder %v5638, 0.0
        %vm5671 = vcmp.gt.f32.partialorder %v5639, 0.0
        %vm5672 = vcmp.gt.f32.partialorder %v5640, 0.0
        %vm5673 = vcmp.gt.f32.partialorder %v5641, 0.0
        %vm5674 = vcmp.gt.f32.partialorder %v5642, 0.0
        %vm5675 = vcmp.gt.f32.partialorder %v5643, 0.0
        %vm5676 = vcmp.gt.f32.partialorder %v5644, 0.0
        %vm5677 = vcmp.gt.f32.partialorder %v5645, 0.0
        %vm5678 = vcmp.gt.f32.partialorder %v5646, 0.0
        %vm5679 = vcmp.gt.f32.partialorder %v5647, 0.0
        %vm5680 = vcmp.gt.f32.partialorder %v5648, 0.0
        %vm5681 = vcmp.gt.f32.partialorder %v5649, 0.0
        %vm5682 = vcmp.gt.f32.partialorder %v5650, 0.0
        %vm5683 = vcmp.gt.f32.partialorder %v5651, 0.0
        %vm5684 = vcmp.gt.f32.partialorder %v5652, 0.0
        %v5685 = vld [vmem:[#allocation3] sm:$0xff]
        %v5686 = vld [vmem:[#allocation3 + $0x8] sm:$0xff]
        %v5687 = vld [vmem:[#allocation3 + $0x10] sm:$0xff]
        %v5688 = vld [vmem:[#allocation3 + $0x18] sm:$0xff]
        %v5689 = vld [vmem:[#allocation3 + $0x20] sm:$0xff]
        %v5690 = vld [vmem:[#allocation3 + $0x28] sm:$0xff]
        %v5691 = vld [vmem:[#allocation3 + $0x30] sm:$0xff]
        %v5692 = vld [vmem:[#allocation3 + $0x38] sm:$0xff]
        %v5693 = vld [vmem:[#allocation3 + $0x40] sm:$0xff]
        %v5694 = vld [vmem:[#allocation3 + $0x48] sm:$0xff]
        %v5695 = vld [vmem:[#allocation3 + $0x50] sm:$0xff]
        %v5696 = vld [vmem:[#allocation3 + $0x58] sm:$0xff]
        %v5697 = vld [vmem:[#allocation3 + $0x60] sm:$0xff]
        %v5698 = vld [vmem:[#allocation3 + $0x68] sm:$0xff]
        %v5699 = vld [vmem:[#allocation3 + $0x70] sm:$0xff]
        %v5700 = vld [vmem:[#allocation3 + $0x78] sm:$0xff]
        %v5701 = vmax.f32 %v5637, 1e-30
        %v5702 = vmax.f32 %v5638, 1e-30
        %v5703 = vmax.f32 %v5639, 1e-30
        %v5704 = vmax.f32 %v5640, 1e-30
        %v5705 = vmax.f32 %v5641, 1e-30
        %v5706 = vmax.f32 %v5642, 1e-30
        %v5707 = vmax.f32 %v5643, 1e-30
        %v5708 = vmax.f32 %v5644, 1e-30
        %v5709 = vmax.f32 %v5645, 1e-30
        %v5710 = vmax.f32 %v5646, 1e-30
        %v5711 = vmax.f32 %v5647, 1e-30
        %v5712 = vmax.f32 %v5648, 1e-30
        %v5713 = vmax.f32 %v5649, 1e-30
        %v5714 = vmax.f32 %v5650, 1e-30
        %v5715 = vmax.f32 %v5651, 1e-30
        %v5716 = vmax.f32 %v5652, 1e-30
        %v5717 = vrcp.pop %v5701
        %v5718 = vrcp.pop %v5702
        %v5719 = vrcp.pop %v5703
        %v5720 = vrcp.pop %v5704
        %v5721 = vrcp.pop %v5705
        %v5722 = vrcp.pop %v5706
        %v5723 = vrcp.pop %v5707
        %v5724 = vrcp.pop %v5708
        %v5725 = vrcp.pop %v5709
        %v5726 = vrcp.pop %v5710
        %v5727 = vrcp.pop %v5711
        %v5728 = vrcp.pop %v5712
        %v5729 = vrcp.pop %v5713
        %v5730 = vrcp.pop %v5714
        %v5731 = vrcp.pop %v5715
        %v5732 = vrcp.pop %v5716
        %v5733 = vmul.f32 %v5685, %v5717
        %v5734 = vmul.f32 %v5686, %v5718
        %v5735 = vmul.f32 %v5687, %v5719
        %v5736 = vmul.f32 %v5688, %v5720
        %v5737 = vmul.f32 %v5689, %v5721
        %v5738 = vmul.f32 %v5690, %v5722
        %v5739 = vmul.f32 %v5691, %v5723
        %v5740 = vmul.f32 %v5692, %v5724
        %v5741 = vmul.f32 %v5693, %v5725
        %v5742 = vmul.f32 %v5694, %v5726
        %v5743 = vmul.f32 %v5695, %v5727
        %v5744 = vmul.f32 %v5696, %v5728
        %v5745 = vmul.f32 %v5697, %v5729
        %v5746 = vmul.f32 %v5698, %v5730
        %v5747 = vmul.f32 %v5699, %v5731
        %v5748 = vmul.f32 %v5700, %v5732
        %v5749 = vsel %vm5669, %v5733, 0.0
        %v5750 = vsel %vm5670, %v5734, 0.0
        %v5751 = vsel %vm5671, %v5735, 0.0
        %v5752 = vsel %vm5672, %v5736, 0.0
        %v5753 = vsel %vm5673, %v5737, 0.0
        %v5754 = vsel %vm5674, %v5738, 0.0
        %v5755 = vsel %vm5675, %v5739, 0.0
        %v5756 = vsel %vm5676, %v5740, 0.0
        %v5757 = vsel %vm5677, %v5741, 0.0
        %v5758 = vsel %vm5678, %v5742, 0.0
        %v5759 = vsel %vm5679, %v5743, 0.0
        %v5760 = vsel %vm5680, %v5744, 0.0
        %v5761 = vsel %vm5681, %v5745, 0.0
        %v5762 = vsel %vm5682, %v5746, 0.0
        %v5763 = vsel %vm5683, %v5747, 0.0
        %v5764 = vsel %vm5684, %v5748, 0.0
        %vm5765 = vcmp.gt.f32.partialorder %v5653, 0.0
        %vm5766 = vcmp.gt.f32.partialorder %v5654, 0.0
        %vm5767 = vcmp.gt.f32.partialorder %v5655, 0.0
        %vm5768 = vcmp.gt.f32.partialorder %v5656, 0.0
        %vm5769 = vcmp.gt.f32.partialorder %v5657, 0.0
        %vm5770 = vcmp.gt.f32.partialorder %v5658, 0.0
        %vm5771 = vcmp.gt.f32.partialorder %v5659, 0.0
        %vm5772 = vcmp.gt.f32.partialorder %v5660, 0.0
        %vm5773 = vcmp.gt.f32.partialorder %v5661, 0.0
        %vm5774 = vcmp.gt.f32.partialorder %v5662, 0.0
        %vm5775 = vcmp.gt.f32.partialorder %v5663, 0.0
        %vm5776 = vcmp.gt.f32.partialorder %v5664, 0.0
        %vm5777 = vcmp.gt.f32.partialorder %v5665, 0.0
        %vm5778 = vcmp.gt.f32.partialorder %v5666, 0.0
        %vm5779 = vcmp.gt.f32.partialorder %v5667, 0.0
        %vm5780 = vcmp.gt.f32.partialorder %v5668, 0.0
        %v5781 = vld [vmem:[#allocation4] sm:$0xff]
        %v5782 = vld [vmem:[#allocation4 + $0x8] sm:$0xff]
        %v5783 = vld [vmem:[#allocation4 + $0x10] sm:$0xff]
        %v5784 = vld [vmem:[#allocation4 + $0x18] sm:$0xff]
        %v5785 = vld [vmem:[#allocation4 + $0x20] sm:$0xff]
        %v5786 = vld [vmem:[#allocation4 + $0x28] sm:$0xff]
        %v5787 = vld [vmem:[#allocation4 + $0x30] sm:$0xff]
        %v5788 = vld [vmem:[#allocation4 + $0x38] sm:$0xff]
        %v5789 = vld [vmem:[#allocation4 + $0x40] sm:$0xff]
        %v5790 = vld [vmem:[#allocation4 + $0x48] sm:$0xff]
        %v5791 = vld [vmem:[#allocation4 + $0x50] sm:$0xff]
        %v5792 = vld [vmem:[#allocation4 + $0x58] sm:$0xff]
        %v5793 = vld [vmem:[#allocation4 + $0x60] sm:$0xff]
        %v5794 = vld [vmem:[#allocation4 + $0x68] sm:$0xff]
        %v5795 = vld [vmem:[#allocation4 + $0x70] sm:$0xff]
        %v5796 = vld [vmem:[#allocation4 + $0x78] sm:$0xff]
        %v5797 = vmax.f32 %v5653, 1e-30
        %v5798 = vmax.f32 %v5654, 1e-30
        %v5799 = vmax.f32 %v5655, 1e-30
        %v5800 = vmax.f32 %v5656, 1e-30
        %v5801 = vmax.f32 %v5657, 1e-30
        %v5802 = vmax.f32 %v5658, 1e-30
        %v5803 = vmax.f32 %v5659, 1e-30
        %v5804 = vmax.f32 %v5660, 1e-30
        %v5805 = vmax.f32 %v5661, 1e-30
        %v5806 = vmax.f32 %v5662, 1e-30
        %v5807 = vmax.f32 %v5663, 1e-30
        %v5808 = vmax.f32 %v5664, 1e-30
        %v5809 = vmax.f32 %v5665, 1e-30
        %v5810 = vmax.f32 %v5666, 1e-30
        %v5811 = vmax.f32 %v5667, 1e-30
        %v5812 = vmax.f32 %v5668, 1e-30
        %v5813 = vrcp.pop %v5797
        %v5814 = vrcp.pop %v5798
        %v5815 = vrcp.pop %v5799
        %v5816 = vrcp.pop %v5800
        %v5817 = vrcp.pop %v5801
        %v5818 = vrcp.pop %v5802
        %v5819 = vrcp.pop %v5803
        %v5820 = vrcp.pop %v5804
        %v5821 = vrcp.pop %v5805
        %v5822 = vrcp.pop %v5806
        %v5823 = vrcp.pop %v5807
        %v5824 = vrcp.pop %v5808
        %v5825 = vrcp.pop %v5809
        %v5826 = vrcp.pop %v5810
        %v5827 = vrcp.pop %v5811
        %v5828 = vrcp.pop %v5812
        %v5829 = vmul.f32 %v5781, %v5813
        %v5830 = vmul.f32 %v5782, %v5814
        %v5831 = vmul.f32 %v5783, %v5815
        %v5832 = vmul.f32 %v5784, %v5816
        %v5833 = vmul.f32 %v5785, %v5817
        %v5834 = vmul.f32 %v5786, %v5818
        %v5835 = vmul.f32 %v5787, %v5819
        %v5836 = vmul.f32 %v5788, %v5820
        %v5837 = vmul.f32 %v5789, %v5821
        %v5838 = vmul.f32 %v5790, %v5822
        %v5839 = vmul.f32 %v5791, %v5823
        %v5840 = vmul.f32 %v5792, %v5824
        %v5841 = vmul.f32 %v5793, %v5825
        %v5842 = vmul.f32 %v5794, %v5826
        %v5843 = vmul.f32 %v5795, %v5827
        %v5844 = vmul.f32 %v5796, %v5828
        %v5845 = vsel %vm5765, %v5829, 0.0
        %v5846 = vsel %vm5766, %v5830, 0.0
        %v5847 = vsel %vm5767, %v5831, 0.0
        %v5848 = vsel %vm5768, %v5832, 0.0
        %v5849 = vsel %vm5769, %v5833, 0.0
        %v5850 = vsel %vm5770, %v5834, 0.0
        %v5851 = vsel %vm5771, %v5835, 0.0
        %v5852 = vsel %vm5772, %v5836, 0.0
        %v5853 = vsel %vm5773, %v5837, 0.0
        %v5854 = vsel %vm5774, %v5838, 0.0
        %v5855 = vsel %vm5775, %v5839, 0.0
        %v5856 = vsel %vm5776, %v5840, 0.0
        %v5857 = vsel %vm5777, %v5841, 0.0
        %v5858 = vsel %vm5778, %v5842, 0.0
        %v5859 = vsel %vm5779, %v5843, 0.0
        %v5860 = vsel %vm5780, %v5844, 0.0
        %v5861 = vadd.f32 %v5749, %v5845
        %v5862 = vadd.f32 %v5750, %v5846
        %v5863 = vadd.f32 %v5751, %v5847
        %v5864 = vadd.f32 %v5752, %v5848
        %v5865 = vadd.f32 %v5753, %v5849
        %v5866 = vadd.f32 %v5754, %v5850
        %v5867 = vadd.f32 %v5755, %v5851
        %v5868 = vadd.f32 %v5756, %v5852
        %v5869 = vadd.f32 %v5757, %v5853
        %v5870 = vadd.f32 %v5758, %v5854
        %v5871 = vadd.f32 %v5759, %v5855
        %v5872 = vadd.f32 %v5760, %v5856
        %v5873 = vadd.f32 %v5761, %v5857
        %v5874 = vadd.f32 %v5762, %v5858
        %v5875 = vadd.f32 %v5763, %v5859
        %v5876 = vadd.f32 %v5764, %v5860
        %v5877 = vadd.f32 %v5861, %v756
        %v5878 = vadd.f32 %v5862, %v757
        %v5879 = vadd.f32 %v5863, %v758
        %v5880 = vadd.f32 %v5864, %v759
        %v5881 = vadd.f32 %v5865, %v760
        %v5882 = vadd.f32 %v5866, %v761
        %v5883 = vadd.f32 %v5867, %v762
        %v5884 = vadd.f32 %v5868, %v763
        %v5885 = vadd.f32 %v5869, %v764
        %v5886 = vadd.f32 %v5870, %v765
        %v5887 = vadd.f32 %v5871, %v766
        %v5888 = vadd.f32 %v5872, %v767
        %v5889 = vadd.f32 %v5873, %v768
        %v5890 = vadd.f32 %v5874, %v769
        %v5891 = vadd.f32 %v5875, %v770
        %v5892 = vadd.f32 %v5876, %v771
        %v5893 = vld [vmem:[%s735] sm:$0x1]
        %v5894 = vld [vmem:[%s738] sm:$0x1]
        %v5895 = vsel %vm1036, %v5877, 0.0
        %5896 = vadd.xlane.f32.xlu0 %v5895
        %v5897 = vpop.xlane.xlu0 %5896
        %v5898 = vsel %vm1036, %v5878, 0.0
        %5899 = vadd.xlane.f32.xlu0 %v5898
        %v5900 = vpop.xlane.xlu0 %5899
        %v5901 = vsel %vm1036, %v5879, 0.0
        %5902 = vadd.xlane.f32.xlu0 %v5901
        %v5903 = vpop.xlane.xlu0 %5902
        %v5904 = vsel %vm1036, %v5880, 0.0
        %5905 = vadd.xlane.f32.xlu0 %v5904
        %v5906 = vpop.xlane.xlu0 %5905
        %v5907 = vsel %vm1036, %v5881, 0.0
        %5908 = vadd.xlane.f32.xlu0 %v5907
        %v5909 = vpop.xlane.xlu0 %5908
        %v5910 = vsel %vm1036, %v5882, 0.0
        %5911 = vadd.xlane.f32.xlu0 %v5910
        %v5912 = vpop.xlane.xlu0 %5911
        %v5913 = vsel %vm1036, %v5883, 0.0
        %5914 = vadd.xlane.f32.xlu0 %v5913
        %v5915 = vpop.xlane.xlu0 %5914
        %v5916 = vsel %vm1036, %v5884, 0.0
        %5917 = vadd.xlane.f32.xlu0 %v5916
        %v5918 = vpop.xlane.xlu0 %5917
        %v5919 = vsel %vm1036, %v5885, 0.0
        %5920 = vadd.xlane.f32.xlu0 %v5919
        %v5921 = vpop.xlane.xlu0 %5920
        %v5922 = vsel %vm1036, %v5886, 0.0
        %5923 = vadd.xlane.f32.xlu0 %v5922
        %v5924 = vpop.xlane.xlu0 %5923
        %v5925 = vsel %vm1036, %v5887, 0.0
        %5926 = vadd.xlane.f32.xlu0 %v5925
        %v5927 = vpop.xlane.xlu0 %5926
        %v5928 = vsel %vm1036, %v5888, 0.0
        %5929 = vadd.xlane.f32.xlu0 %v5928
        %v5930 = vpop.xlane.xlu0 %5929
        %v5931 = vsel %vm1036, %v5889, 0.0
        %5932 = vadd.xlane.f32.xlu0 %v5931
        %v5933 = vpop.xlane.xlu0 %5932
        %v5934 = vsel %vm1036, %v5890, 0.0
        %5935 = vadd.xlane.f32.xlu0 %v5934
        %v5936 = vpop.xlane.xlu0 %5935
        %v5937 = vsel %vm1036, %v5891, 0.0
        %5938 = vadd.xlane.f32.xlu0 %v5937
        %v5939 = vpop.xlane.xlu0 %5938
        %v5940 = vsel %vm1036, %v5892, 0.0
        %5941 = vadd.xlane.f32.xlu0 %v5940
        %v5942 = vpop.xlane.xlu0 %5941
        %v5943 = vrcp.pop 32.0
        %v5944 = vmul.f32 32.0, %v5943
        %v5945 = vsub.f32 1.0, %v5944
        %v5946 = vmul.f32 %v5943, %v5945
        %v5947 = vadd.f32 %v5943, %v5946
        %vm5948 = vweird.f32 %v5943
        %v5949 = vsel %vm5948, %v5943, %v5947
        %v5950 = vmul.f32 %v5897, %v5949
        %v5951 = vmul.f32 %v5900, %v5949
        %v5952 = vmul.f32 %v5903, %v5949
        %v5953 = vmul.f32 %v5906, %v5949
        %v5954 = vmul.f32 %v5909, %v5949
        %v5955 = vmul.f32 %v5912, %v5949
        %v5956 = vmul.f32 %v5915, %v5949
        %v5957 = vmul.f32 %v5918, %v5949
        %v5958 = vmul.f32 %v5921, %v5949
        %v5959 = vmul.f32 %v5924, %v5949
        %v5960 = vmul.f32 %v5927, %v5949
        %v5961 = vmul.f32 %v5930, %v5949
        %v5962 = vmul.f32 %v5933, %v5949
        %v5963 = vmul.f32 %v5936, %v5949
        %v5964 = vmul.f32 %v5939, %v5949
        %v5965 = vmul.f32 %v5942, %v5949
        %v5966 = vsub.f32 %v5877, %v5950
        %v5967 = vsub.f32 %v5878, %v5951
        %v5968 = vsub.f32 %v5879, %v5952
        %v5969 = vsub.f32 %v5880, %v5953
        %v5970 = vsub.f32 %v5881, %v5954
        %v5971 = vsub.f32 %v5882, %v5955
        %v5972 = vsub.f32 %v5883, %v5956
        %v5973 = vsub.f32 %v5884, %v5957
        %v5974 = vsub.f32 %v5885, %v5958
        %v5975 = vsub.f32 %v5886, %v5959
        %v5976 = vsub.f32 %v5887, %v5960
        %v5977 = vsub.f32 %v5888, %v5961
        %v5978 = vsub.f32 %v5889, %v5962
        %v5979 = vsub.f32 %v5890, %v5963
        %v5980 = vsub.f32 %v5891, %v5964
        %v5981 = vsub.f32 %v5892, %v5965
        %v5982 = vmul.f32 %v5966, %v5966
        %v5983 = vmul.f32 %v5967, %v5967
        %v5984 = vmul.f32 %v5968, %v5968
        %v5985 = vmul.f32 %v5969, %v5969
        %v5986 = vmul.f32 %v5970, %v5970
        %v5987 = vmul.f32 %v5971, %v5971
        %v5988 = vmul.f32 %v5972, %v5972
        %v5989 = vmul.f32 %v5973, %v5973
        %v5990 = vmul.f32 %v5974, %v5974
        %v5991 = vmul.f32 %v5975, %v5975
        %v5992 = vmul.f32 %v5976, %v5976
        %v5993 = vmul.f32 %v5977, %v5977
        %v5994 = vmul.f32 %v5978, %v5978
        %v5995 = vmul.f32 %v5979, %v5979
        %v5996 = vmul.f32 %v5980, %v5980
        %v5997 = vmul.f32 %v5981, %v5981
        %v5998 = vsel %vm1036, %v5982, 0.0
        %5999 = vadd.xlane.f32.xlu0 %v5998
        %v6000 = vpop.xlane.xlu0 %5999
        %v6001 = vsel %vm1036, %v5983, 0.0
        %6002 = vadd.xlane.f32.xlu0 %v6001
        %v6003 = vpop.xlane.xlu0 %6002
        %v6004 = vsel %vm1036, %v5984, 0.0
        %6005 = vadd.xlane.f32.xlu0 %v6004
        %v6006 = vpop.xlane.xlu0 %6005
        %v6007 = vsel %vm1036, %v5985, 0.0
        %6008 = vadd.xlane.f32.xlu0 %v6007
        %v6009 = vpop.xlane.xlu0 %6008
        %v6010 = vsel %vm1036, %v5986, 0.0
        %6011 = vadd.xlane.f32.xlu0 %v6010
        %v6012 = vpop.xlane.xlu0 %6011
        %v6013 = vsel %vm1036, %v5987, 0.0
        %6014 = vadd.xlane.f32.xlu0 %v6013
        %v6015 = vpop.xlane.xlu0 %6014
        %v6016 = vsel %vm1036, %v5988, 0.0
        %6017 = vadd.xlane.f32.xlu0 %v6016
        %v6018 = vpop.xlane.xlu0 %6017
        %v6019 = vsel %vm1036, %v5989, 0.0
        %6020 = vadd.xlane.f32.xlu0 %v6019
        %v6021 = vpop.xlane.xlu0 %6020
        %v6022 = vsel %vm1036, %v5990, 0.0
        %6023 = vadd.xlane.f32.xlu0 %v6022
        %v6024 = vpop.xlane.xlu0 %6023
        %v6025 = vsel %vm1036, %v5991, 0.0
        %6026 = vadd.xlane.f32.xlu0 %v6025
        %v6027 = vpop.xlane.xlu0 %6026
        %v6028 = vsel %vm1036, %v5992, 0.0
        %6029 = vadd.xlane.f32.xlu0 %v6028
        %v6030 = vpop.xlane.xlu0 %6029
        %v6031 = vsel %vm1036, %v5993, 0.0
        %6032 = vadd.xlane.f32.xlu0 %v6031
        %v6033 = vpop.xlane.xlu0 %6032
        %v6034 = vsel %vm1036, %v5994, 0.0
        %6035 = vadd.xlane.f32.xlu0 %v6034
        %v6036 = vpop.xlane.xlu0 %6035
        %v6037 = vsel %vm1036, %v5995, 0.0
        %6038 = vadd.xlane.f32.xlu0 %v6037
        %v6039 = vpop.xlane.xlu0 %6038
        %v6040 = vsel %vm1036, %v5996, 0.0
        %6041 = vadd.xlane.f32.xlu0 %v6040
        %v6042 = vpop.xlane.xlu0 %6041
        %v6043 = vsel %vm1036, %v5997, 0.0
        %6044 = vadd.xlane.f32.xlu0 %v6043
        %v6045 = vpop.xlane.xlu0 %6044
        %v6046 = vmul.f32 %v6000, %v5949
        %v6047 = vmul.f32 %v6003, %v5949
        %v6048 = vmul.f32 %v6006, %v5949
        %v6049 = vmul.f32 %v6009, %v5949
        %v6050 = vmul.f32 %v6012, %v5949
        %v6051 = vmul.f32 %v6015, %v5949
        %v6052 = vmul.f32 %v6018, %v5949
        %v6053 = vmul.f32 %v6021, %v5949
        %v6054 = vmul.f32 %v6024, %v5949
        %v6055 = vmul.f32 %v6027, %v5949
        %v6056 = vmul.f32 %v6030, %v5949
        %v6057 = vmul.f32 %v6033, %v5949
        %v6058 = vmul.f32 %v6036, %v5949
        %v6059 = vmul.f32 %v6039, %v5949
        %v6060 = vmul.f32 %v6042, %v5949
        %v6061 = vmul.f32 %v6045, %v5949
        %v6062 = vadd.f32 %v6046, 1e-05
        %v6063 = vadd.f32 %v6047, 1e-05
        %v6064 = vadd.f32 %v6048, 1e-05
        %v6065 = vadd.f32 %v6049, 1e-05
        %v6066 = vadd.f32 %v6050, 1e-05
        %v6067 = vadd.f32 %v6051, 1e-05
        %v6068 = vadd.f32 %v6052, 1e-05
        %v6069 = vadd.f32 %v6053, 1e-05
        %v6070 = vadd.f32 %v6054, 1e-05
        %v6071 = vadd.f32 %v6055, 1e-05
        %v6072 = vadd.f32 %v6056, 1e-05
        %v6073 = vadd.f32 %v6057, 1e-05
        %v6074 = vadd.f32 %v6058, 1e-05
        %v6075 = vadd.f32 %v6059, 1e-05
        %v6076 = vadd.f32 %v6060, 1e-05
        %v6077 = vadd.f32 %v6061, 1e-05
        %v6078 = vrsqrt.pop %v6062
        %v6079 = vmul.f32 %v6078, %v6062
        %v6080 = vmul.f32 %v6079, %v6078
        %v6081 = vmul.f32 0.5, %v6080
        %v6082 = vsub.f32 1.5, %v6081
        %v6083 = vmul.f32 %v6078, %v6082
        %vm6084 = vweird.f32 %v6062
        %vm6085 = vweird.f32 %v6078
        %vm6086 = vmor %vm6084, %vm6085
        %v6087 = vsel %vm6086, %v6078, %v6083
        %v6088 = vrsqrt.pop %v6063
        %v6089 = vmul.f32 %v6088, %v6063
        %v6090 = vmul.f32 %v6089, %v6088
        %v6091 = vmul.f32 0.5, %v6090
        %v6092 = vsub.f32 1.5, %v6091
        %v6093 = vmul.f32 %v6088, %v6092
        %vm6094 = vweird.f32 %v6063
        %vm6095 = vweird.f32 %v6088
        %vm6096 = vmor %vm6094, %vm6095
        %v6097 = vsel %vm6096, %v6088, %v6093
        %v6098 = vrsqrt.pop %v6064
        %v6099 = vmul.f32 %v6098, %v6064
        %v6100 = vmul.f32 %v6099, %v6098
        %v6101 = vmul.f32 0.5, %v6100
        %v6102 = vsub.f32 1.5, %v6101
        %v6103 = vmul.f32 %v6098, %v6102
        %vm6104 = vweird.f32 %v6064
        %vm6105 = vweird.f32 %v6098
        %vm6106 = vmor %vm6104, %vm6105
        %v6107 = vsel %vm6106, %v6098, %v6103
        %v6108 = vrsqrt.pop %v6065
        %v6109 = vmul.f32 %v6108, %v6065
        %v6110 = vmul.f32 %v6109, %v6108
        %v6111 = vmul.f32 0.5, %v6110
        %v6112 = vsub.f32 1.5, %v6111
        %v6113 = vmul.f32 %v6108, %v6112
        %vm6114 = vweird.f32 %v6065
        %vm6115 = vweird.f32 %v6108
        %vm6116 = vmor %vm6114, %vm6115
        %v6117 = vsel %vm6116, %v6108, %v6113
        %v6118 = vrsqrt.pop %v6066
        %v6119 = vmul.f32 %v6118, %v6066
        %v6120 = vmul.f32 %v6119, %v6118
        %v6121 = vmul.f32 0.5, %v6120
        %v6122 = vsub.f32 1.5, %v6121
        %v6123 = vmul.f32 %v6118, %v6122
        %vm6124 = vweird.f32 %v6066
        %vm6125 = vweird.f32 %v6118
        %vm6126 = vmor %vm6124, %vm6125
        %v6127 = vsel %vm6126, %v6118, %v6123
        %v6128 = vrsqrt.pop %v6067
        %v6129 = vmul.f32 %v6128, %v6067
        %v6130 = vmul.f32 %v6129, %v6128
        %v6131 = vmul.f32 0.5, %v6130
        %v6132 = vsub.f32 1.5, %v6131
        %v6133 = vmul.f32 %v6128, %v6132
        %vm6134 = vweird.f32 %v6067
        %vm6135 = vweird.f32 %v6128
        %vm6136 = vmor %vm6134, %vm6135
        %v6137 = vsel %vm6136, %v6128, %v6133
        %v6138 = vrsqrt.pop %v6068
        %v6139 = vmul.f32 %v6138, %v6068
        %v6140 = vmul.f32 %v6139, %v6138
        %v6141 = vmul.f32 0.5, %v6140
        %v6142 = vsub.f32 1.5, %v6141
        %v6143 = vmul.f32 %v6138, %v6142
        %vm6144 = vweird.f32 %v6068
        %vm6145 = vweird.f32 %v6138
        %vm6146 = vmor %vm6144, %vm6145
        %v6147 = vsel %vm6146, %v6138, %v6143
        %v6148 = vrsqrt.pop %v6069
        %v6149 = vmul.f32 %v6148, %v6069
        %v6150 = vmul.f32 %v6149, %v6148
        %v6151 = vmul.f32 0.5, %v6150
        %v6152 = vsub.f32 1.5, %v6151
        %v6153 = vmul.f32 %v6148, %v6152
        %vm6154 = vweird.f32 %v6069
        %vm6155 = vweird.f32 %v6148
        %vm6156 = vmor %vm6154, %vm6155
        %v6157 = vsel %vm6156, %v6148, %v6153
        %v6158 = vrsqrt.pop %v6070
        %v6159 = vmul.f32 %v6158, %v6070
        %v6160 = vmul.f32 %v6159, %v6158
        %v6161 = vmul.f32 0.5, %v6160
        %v6162 = vsub.f32 1.5, %v6161
        %v6163 = vmul.f32 %v6158, %v6162
        %vm6164 = vweird.f32 %v6070
        %vm6165 = vweird.f32 %v6158
        %vm6166 = vmor %vm6164, %vm6165
        %v6167 = vsel %vm6166, %v6158, %v6163
        %v6168 = vrsqrt.pop %v6071
        %v6169 = vmul.f32 %v6168, %v6071
        %v6170 = vmul.f32 %v6169, %v6168
        %v6171 = vmul.f32 0.5, %v6170
        %v6172 = vsub.f32 1.5, %v6171
        %v6173 = vmul.f32 %v6168, %v6172
        %vm6174 = vweird.f32 %v6071
        %vm6175 = vweird.f32 %v6168
        %vm6176 = vmor %vm6174, %vm6175
        %v6177 = vsel %vm6176, %v6168, %v6173
        %v6178 = vrsqrt.pop %v6072
        %v6179 = vmul.f32 %v6178, %v6072
        %v6180 = vmul.f32 %v6179, %v6178
        %v6181 = vmul.f32 0.5, %v6180
        %v6182 = vsub.f32 1.5, %v6181
        %v6183 = vmul.f32 %v6178, %v6182
        %vm6184 = vweird.f32 %v6072
        %vm6185 = vweird.f32 %v6178
        %vm6186 = vmor %vm6184, %vm6185
        %v6187 = vsel %vm6186, %v6178, %v6183
        %v6188 = vrsqrt.pop %v6073
        %v6189 = vmul.f32 %v6188, %v6073
        %v6190 = vmul.f32 %v6189, %v6188
        %v6191 = vmul.f32 0.5, %v6190
        %v6192 = vsub.f32 1.5, %v6191
        %v6193 = vmul.f32 %v6188, %v6192
        %vm6194 = vweird.f32 %v6073
        %vm6195 = vweird.f32 %v6188
        %vm6196 = vmor %vm6194, %vm6195
        %v6197 = vsel %vm6196, %v6188, %v6193
        %v6198 = vrsqrt.pop %v6074
        %v6199 = vmul.f32 %v6198, %v6074
        %v6200 = vmul.f32 %v6199, %v6198
        %v6201 = vmul.f32 0.5, %v6200
        %v6202 = vsub.f32 1.5, %v6201
        %v6203 = vmul.f32 %v6198, %v6202
        %vm6204 = vweird.f32 %v6074
        %vm6205 = vweird.f32 %v6198
        %vm6206 = vmor %vm6204, %vm6205
        %v6207 = vsel %vm6206, %v6198, %v6203
        %v6208 = vrsqrt.pop %v6075
        %v6209 = vmul.f32 %v6208, %v6075
        %v6210 = vmul.f32 %v6209, %v6208
        %v6211 = vmul.f32 0.5, %v6210
        %v6212 = vsub.f32 1.5, %v6211
        %v6213 = vmul.f32 %v6208, %v6212
        %vm6214 = vweird.f32 %v6075
        %vm6215 = vweird.f32 %v6208
        %vm6216 = vmor %vm6214, %vm6215
        %v6217 = vsel %vm6216, %v6208, %v6213
        %v6218 = vrsqrt.pop %v6076
        %v6219 = vmul.f32 %v6218, %v6076
        %v6220 = vmul.f32 %v6219, %v6218
        %v6221 = vmul.f32 0.5, %v6220
        %v6222 = vsub.f32 1.5, %v6221
        %v6223 = vmul.f32 %v6218, %v6222
        %vm6224 = vweird.f32 %v6076
        %vm6225 = vweird.f32 %v6218
        %vm6226 = vmor %vm6224, %vm6225
        %v6227 = vsel %vm6226, %v6218, %v6223
        %v6228 = vrsqrt.pop %v6077
        %v6229 = vmul.f32 %v6228, %v6077
        %v6230 = vmul.f32 %v6229, %v6228
        %v6231 = vmul.f32 0.5, %v6230
        %v6232 = vsub.f32 1.5, %v6231
        %v6233 = vmul.f32 %v6228, %v6232
        %vm6234 = vweird.f32 %v6077
        %vm6235 = vweird.f32 %v6228
        %vm6236 = vmor %vm6234, %vm6235
        %v6237 = vsel %vm6236, %v6228, %v6233
        %v6238 = vmul.f32 %v5966, %v6087
        %v6239 = vmul.f32 %v5967, %v6097
        %v6240 = vmul.f32 %v5968, %v6107
        %v6241 = vmul.f32 %v5969, %v6117
        %v6242 = vmul.f32 %v5970, %v6127
        %v6243 = vmul.f32 %v5971, %v6137
        %v6244 = vmul.f32 %v5972, %v6147
        %v6245 = vmul.f32 %v5973, %v6157
        %v6246 = vmul.f32 %v5974, %v6167
        %v6247 = vmul.f32 %v5975, %v6177
        %v6248 = vmul.f32 %v5976, %v6187
        %v6249 = vmul.f32 %v5977, %v6197
        %v6250 = vmul.f32 %v5978, %v6207
        %v6251 = vmul.f32 %v5979, %v6217
        %v6252 = vmul.f32 %v5980, %v6227
        %v6253 = vmul.f32 %v5981, %v6237
        %v6255 = vperm.slane %v5893, 0
        %v6257 = vmul.f32 %v6238, %v6255
        %v6258 = vmul.f32 %v6239, %v6255
        %v6259 = vmul.f32 %v6240, %v6255
        %v6260 = vmul.f32 %v6241, %v6255
        %v6261 = vmul.f32 %v6242, %v6255
        %v6262 = vmul.f32 %v6243, %v6255
        %v6263 = vmul.f32 %v6244, %v6255
        %v6264 = vmul.f32 %v6245, %v6255
        %v6265 = vmul.f32 %v6246, %v6255
        %v6266 = vmul.f32 %v6247, %v6255
        %v6267 = vmul.f32 %v6248, %v6255
        %v6268 = vmul.f32 %v6249, %v6255
        %v6269 = vmul.f32 %v6250, %v6255
        %v6270 = vmul.f32 %v6251, %v6255
        %v6271 = vmul.f32 %v6252, %v6255
        %v6272 = vmul.f32 %v6253, %v6255
        %v6274 = vperm.slane %v5894, 0
        %v6276 = vadd.f32 %v6257, %v6274
        %v6277 = vadd.f32 %v6258, %v6274
        %v6278 = vadd.f32 %v6259, %v6274
        %v6279 = vadd.f32 %v6260, %v6274
        %v6280 = vadd.f32 %v6261, %v6274
        %v6281 = vadd.f32 %v6262, %v6274
        %v6282 = vadd.f32 %v6263, %v6274
        %v6283 = vadd.f32 %v6264, %v6274
        %v6284 = vadd.f32 %v6265, %v6274
        %v6285 = vadd.f32 %v6266, %v6274
        %v6286 = vadd.f32 %v6267, %v6274
        %v6287 = vadd.f32 %v6268, %v6274
        %v6288 = vadd.f32 %v6269, %v6274
        %v6289 = vadd.f32 %v6270, %v6274
        %v6290 = vadd.f32 %v6271, %v6274
        %v6291 = vadd.f32 %v6272, %v6274
        %v6292 = vpack.c.bf16 %v6277, %v6276
        %v6293 = vpack.c.bf16 %v6279, %v6278
        %v6294 = vpack.c.bf16 %v6281, %v6280
        %v6295 = vpack.c.bf16 %v6283, %v6282
        %v6296 = vpack.c.bf16 %v6285, %v6284
        %v6297 = vpack.c.bf16 %v6287, %v6286
        %v6298 = vpack.c.bf16 %v6289, %v6288
        %v6299 = vpack.c.bf16 %v6291, %v6290
        %v6300 = vld [vmem:[%s721] sm:$0xf]
        %v6301 = vld [vmem:[%s721 + $0x4] sm:$0xf]
        %v6302 = vld [vmem:[%s721 + $0x8] sm:$0xf]
        %v6303 = vld [vmem:[%s721 + $0xc] sm:$0xf]
        %v6304 = vld [vmem:[%s724] sm:$0x1]
        %v6306 = vperm.slane %v6304, 0
        %v6312 = vunpack.c.l.b16 %v6300
        %v6313 = vunpack.c.l.b16 %v6301
        %v6314 = vunpack.c.l.b16 %v6302
        %v6315 = vunpack.c.l.b16 %v6303
        %v6316 = vpack.c.b16 %v6313, %v6312
        %v6317 = vpack.c.b16 %v6315, %v6314
        %v6321 = vsel %vm1036, %v6292, 0
        %v6324 = vsel %vm1036, %v6293, 0
        %v6327 = vsel %vm1036, %v6294, 0
        %v6330 = vsel %vm1036, %v6295, 0
        %v6333 = vsel %vm1036, %v6296, 0
        %v6336 = vsel %vm1036, %v6297, 0
        %v6339 = vsel %vm1036, %v6298, 0
        %v6342 = vsel %vm1036, %v6299, 0
        %6344 = vmatpush.bf16.msra.mxu0 0
        %6345 = vmatpush.bf16.msra.mxu0 0
        %6346 = vmatpush.bf16.msra.mxu0 0
        %6347 = vmatpush.bf16.msra.mxu0 0
        %6348 = vmatpush.bf16.msra.mxu0 0
        %6349 = vmatpush.bf16.msra.mxu0 0
        %6350 = vmatpush.bf16.msra.mxu0 %v6317
        %6351 = vmatpush.bf16.msra.mxu0 %v6316
        %6352 = vmatmul.bf16.gmra.mxu0 %v6321
        %v6353 = vpop.f32.mrf.mxu0
        %v6354 = vadd.f32 %v6306, %v6353
        %v6355 = vpop.f32.mrf.mxu0
        %v6356 = vadd.f32 %v6306, %v6355
        %6357 = vmatmul.bf16.gmra.mxu0 %v6324
        %v6358 = vpop.f32.mrf.mxu0
        %v6359 = vadd.f32 %v6306, %v6358
        %v6360 = vpop.f32.mrf.mxu0
        %v6361 = vadd.f32 %v6306, %v6360
        %6362 = vmatmul.bf16.gmra.mxu0 %v6327
        %v6363 = vpop.f32.mrf.mxu0
        %v6364 = vadd.f32 %v6306, %v6363
        %v6365 = vpop.f32.mrf.mxu0
        %v6366 = vadd.f32 %v6306, %v6365
        %6367 = vmatmul.bf16.gmra.mxu0 %v6330
        %v6368 = vpop.f32.mrf.mxu0
        %v6369 = vadd.f32 %v6306, %v6368
        %v6370 = vpop.f32.mrf.mxu0
        %v6371 = vadd.f32 %v6306, %v6370
        %6372 = vmatmul.bf16.gmra.mxu0 %v6333
        %v6373 = vpop.f32.mrf.mxu0
        %v6374 = vadd.f32 %v6306, %v6373
        %v6375 = vpop.f32.mrf.mxu0
        %v6376 = vadd.f32 %v6306, %v6375
        %6377 = vmatmul.bf16.gmra.mxu0 %v6336
        %v6378 = vpop.f32.mrf.mxu0
        %v6379 = vadd.f32 %v6306, %v6378
        %v6380 = vpop.f32.mrf.mxu0
        %v6381 = vadd.f32 %v6306, %v6380
        %6382 = vmatmul.bf16.gmra.mxu0 %v6339
        %v6383 = vpop.f32.mrf.mxu0
        %v6384 = vadd.f32 %v6306, %v6383
        %v6385 = vpop.f32.mrf.mxu0
        %v6386 = vadd.f32 %v6306, %v6385
        %6387 = vmatmul.bf16.gmra.mxu0 %v6342
        %v6388 = vpop.f32.mrf.mxu0
        %v6389 = vadd.f32 %v6306, %v6388
        %v6390 = vpop.f32.mrf.mxu0
        %v6391 = vadd.f32 %v6306, %v6390
        %6392 = vdwg.mxu0
        %v6393 = vmul.f32 %v6354, 0.5
        %v6394 = vmul.f32 %v6356, 0.5
        %v6395 = vmul.f32 %v6359, 0.5
        %v6396 = vmul.f32 %v6361, 0.5
        %v6397 = vmul.f32 %v6364, 0.5
        %v6398 = vmul.f32 %v6366, 0.5
        %v6399 = vmul.f32 %v6369, 0.5
        %v6400 = vmul.f32 %v6371, 0.5
        %v6401 = vmul.f32 %v6374, 0.5
        %v6402 = vmul.f32 %v6376, 0.5
        %v6403 = vmul.f32 %v6379, 0.5
        %v6404 = vmul.f32 %v6381, 0.5
        %v6405 = vmul.f32 %v6384, 0.5
        %v6406 = vmul.f32 %v6386, 0.5
        %v6407 = vmul.f32 %v6389, 0.5
        %v6408 = vmul.f32 %v6391, 0.5
        %v6409 = vmul.f32 %v6354, 0.70710677
        %v6410 = vmul.f32 %v6356, 0.70710677
        %v6411 = vmul.f32 %v6359, 0.70710677
        %v6412 = vmul.f32 %v6361, 0.70710677
        %v6413 = vmul.f32 %v6364, 0.70710677
        %v6414 = vmul.f32 %v6366, 0.70710677
        %v6415 = vmul.f32 %v6369, 0.70710677
        %v6416 = vmul.f32 %v6371, 0.70710677
        %v6417 = vmul.f32 %v6374, 0.70710677
        %v6418 = vmul.f32 %v6376, 0.70710677
        %v6419 = vmul.f32 %v6379, 0.70710677
        %v6420 = vmul.f32 %v6381, 0.70710677
        %v6421 = vmul.f32 %v6384, 0.70710677
        %v6422 = vmul.f32 %v6386, 0.70710677
        %v6423 = vmul.f32 %v6389, 0.70710677
        %v6424 = vmul.f32 %v6391, 0.70710677
        %v6425 = vmul.f32 %v6409, %v6409
        %v6426 = vmin.f32 16.0, %v6425
        %v6427 = vmul.f32 %v6426, 2.1237322e-06
        %v6428 = vadd.f32 %v6427, 0.00028619796
        %v6429 = vmul.f32 %v6426, %v6428
        %v6430 = vadd.f32 %v6429, 0.0036580483
        %v6431 = vmul.f32 %v6426, %v6430
        %v6432 = vadd.f32 %v6431, 0.05243302
        %v6433 = vmul.f32 %v6426, %v6432
        %v6434 = vadd.f32 %v6433, 0.18741608
        %v6435 = vmul.f32 %v6426, %v6434
        %v6436 = vadd.f32 %v6435, 1.1283791
        %v6437 = vmul.f32 %v6409, %v6436
        %v6438 = vmul.f32 %v6426, 3.8918573e-05
        %v6439 = vadd.f32 %v6438, 0.001143296
        %v6440 = vmul.f32 %v6426, %v6439
        %v6441 = vadd.f32 %v6440, 0.014752088
        %v6442 = vmul.f32 %v6426, %v6441
        %v6443 = vadd.f32 %v6442, 0.112945676
        %v6444 = vmul.f32 %v6426, %v6443
        %v6445 = vadd.f32 %v6444, 0.4994258
        %v6446 = vmul.f32 %v6426, %v6445
        %v6447 = vadd.f32 %v6446, 1.0
        %v6448 = vrcp.pop %v6447
        %v6449 = vmul.f32 %v6447, %v6448
        %v6450 = vsub.f32 1.0, %v6449
        %v6451 = vmul.f32 %v6448, %v6450
        %v6452 = vadd.f32 %v6448, %v6451
        %vm6453 = vweird.f32 %v6447
        %vm6454 = vweird.f32 %v6448
        %vm6455 = vmor %vm6453, %vm6454
        %v6456 = vsel %vm6455, %v6448, %v6452
        %v6457 = vand.u32 2147483647, %v6447
        %vm6458 = vcmp.eq.f32.partialorder %v6457, 8.507059e+37
        %v6459 = vand.u32 %v6447, 2147483648
        %v6460 = vor.u32 1.1754944e-38, %v6459
        %v6461 = vsel %vm6458, %v6460, %v6456
        %v6462 = vmul.f32 %v6437, %v6461
        %v6463 = vmin.f32 %v6462, 1.0
        %v6464 = vmax.f32 %v6463, -1.0
        %v6465 = vmul.f32 %v6410, %v6410
        %v6466 = vmin.f32 16.0, %v6465
        %v6467 = vmul.f32 %v6466, 2.1237322e-06
        %v6468 = vadd.f32 %v6467, 0.00028619796
        %v6469 = vmul.f32 %v6466, %v6468
        %v6470 = vadd.f32 %v6469, 0.0036580483
        %v6471 = vmul.f32 %v6466, %v6470
        %v6472 = vadd.f32 %v6471, 0.05243302
        %v6473 = vmul.f32 %v6466, %v6472
        %v6474 = vadd.f32 %v6473, 0.18741608
        %v6475 = vmul.f32 %v6466, %v6474
        %v6476 = vadd.f32 %v6475, 1.1283791
        %v6477 = vmul.f32 %v6410, %v6476
        %v6478 = vmul.f32 %v6466, 3.8918573e-05
        %v6479 = vadd.f32 %v6478, 0.001143296
        %v6480 = vmul.f32 %v6466, %v6479
        %v6481 = vadd.f32 %v6480, 0.014752088
        %v6482 = vmul.f32 %v6466, %v6481
        %v6483 = vadd.f32 %v6482, 0.112945676
        %v6484 = vmul.f32 %v6466, %v6483
        %v6485 = vadd.f32 %v6484, 0.4994258
        %v6486 = vmul.f32 %v6466, %v6485
        %v6487 = vadd.f32 %v6486, 1.0
        %v6488 = vrcp.pop %v6487
        %v6489 = vmul.f32 %v6487, %v6488
        %v6490 = vsub.f32 1.0, %v6489
        %v6491 = vmul.f32 %v6488, %v6490
        %v6492 = vadd.f32 %v6488, %v6491
        %vm6493 = vweird.f32 %v6487
        %vm6494 = vweird.f32 %v6488
        %vm6495 = vmor %vm6493, %vm6494
        %v6496 = vsel %vm6495, %v6488, %v6492
        %v6497 = vand.u32 2147483647, %v6487
        %vm6498 = vcmp.eq.f32.partialorder %v6497, 8.507059e+37
        %v6499 = vand.u32 %v6487, 2147483648
        %v6500 = vor.u32 1.1754944e-38, %v6499
        %v6501 = vsel %vm6498, %v6500, %v6496
        %v6502 = vmul.f32 %v6477, %v6501
        %v6503 = vmin.f32 %v6502, 1.0
        %v6504 = vmax.f32 %v6503, -1.0
        %v6505 = vmul.f32 %v6411, %v6411
        %v6506 = vmin.f32 16.0, %v6505
        %v6507 = vmul.f32 %v6506, 2.1237322e-06
        %v6508 = vadd.f32 %v6507, 0.00028619796
        %v6509 = vmul.f32 %v6506, %v6508
        %v6510 = vadd.f32 %v6509, 0.0036580483
        %v6511 = vmul.f32 %v6506, %v6510
        %v6512 = vadd.f32 %v6511, 0.05243302
        %v6513 = vmul.f32 %v6506, %v6512
        %v6514 = vadd.f32 %v6513, 0.18741608
        %v6515 = vmul.f32 %v6506, %v6514
        %v6516 = vadd.f32 %v6515, 1.1283791
        %v6517 = vmul.f32 %v6411, %v6516
        %v6518 = vmul.f32 %v6506, 3.8918573e-05
        %v6519 = vadd.f32 %v6518, 0.001143296
        %v6520 = vmul.f32 %v6506, %v6519
        %v6521 = vadd.f32 %v6520, 0.014752088
        %v6522 = vmul.f32 %v6506, %v6521
        %v6523 = vadd.f32 %v6522, 0.112945676
        %v6524 = vmul.f32 %v6506, %v6523
        %v6525 = vadd.f32 %v6524, 0.4994258
        %v6526 = vmul.f32 %v6506, %v6525
        %v6527 = vadd.f32 %v6526, 1.0
        %v6528 = vrcp.pop %v6527
        %v6529 = vmul.f32 %v6527, %v6528
        %v6530 = vsub.f32 1.0, %v6529
        %v6531 = vmul.f32 %v6528, %v6530
        %v6532 = vadd.f32 %v6528, %v6531
        %vm6533 = vweird.f32 %v6527
        %vm6534 = vweird.f32 %v6528
        %vm6535 = vmor %vm6533, %vm6534
        %v6536 = vsel %vm6535, %v6528, %v6532
        %v6537 = vand.u32 2147483647, %v6527
        %vm6538 = vcmp.eq.f32.partialorder %v6537, 8.507059e+37
        %v6539 = vand.u32 %v6527, 2147483648
        %v6540 = vor.u32 1.1754944e-38, %v6539
        %v6541 = vsel %vm6538, %v6540, %v6536
        %v6542 = vmul.f32 %v6517, %v6541
        %v6543 = vmin.f32 %v6542, 1.0
        %v6544 = vmax.f32 %v6543, -1.0
        %v6545 = vmul.f32 %v6412, %v6412
        %v6546 = vmin.f32 16.0, %v6545
        %v6547 = vmul.f32 %v6546, 2.1237322e-06
        %v6548 = vadd.f32 %v6547, 0.00028619796
        %v6549 = vmul.f32 %v6546, %v6548
        %v6550 = vadd.f32 %v6549, 0.0036580483
        %v6551 = vmul.f32 %v6546, %v6550
        %v6552 = vadd.f32 %v6551, 0.05243302
        %v6553 = vmul.f32 %v6546, %v6552
        %v6554 = vadd.f32 %v6553, 0.18741608
        %v6555 = vmul.f32 %v6546, %v6554
        %v6556 = vadd.f32 %v6555, 1.1283791
        %v6557 = vmul.f32 %v6412, %v6556
        %v6558 = vmul.f32 %v6546, 3.8918573e-05
        %v6559 = vadd.f32 %v6558, 0.001143296
        %v6560 = vmul.f32 %v6546, %v6559
        %v6561 = vadd.f32 %v6560, 0.014752088
        %v6562 = vmul.f32 %v6546, %v6561
        %v6563 = vadd.f32 %v6562, 0.112945676
        %v6564 = vmul.f32 %v6546, %v6563
        %v6565 = vadd.f32 %v6564, 0.4994258
        %v6566 = vmul.f32 %v6546, %v6565
        %v6567 = vadd.f32 %v6566, 1.0
        %v6568 = vrcp.pop %v6567
        %v6569 = vmul.f32 %v6567, %v6568
        %v6570 = vsub.f32 1.0, %v6569
        %v6571 = vmul.f32 %v6568, %v6570
        %v6572 = vadd.f32 %v6568, %v6571
        %vm6573 = vweird.f32 %v6567
        %vm6574 = vweird.f32 %v6568
        %vm6575 = vmor %vm6573, %vm6574
        %v6576 = vsel %vm6575, %v6568, %v6572
        %v6577 = vand.u32 2147483647, %v6567
        %vm6578 = vcmp.eq.f32.partialorder %v6577, 8.507059e+37
        %v6579 = vand.u32 %v6567, 2147483648
        %v6580 = vor.u32 1.1754944e-38, %v6579
        %v6581 = vsel %vm6578, %v6580, %v6576
        %v6582 = vmul.f32 %v6557, %v6581
        %v6583 = vmin.f32 %v6582, 1.0
        %v6584 = vmax.f32 %v6583, -1.0
        %v6585 = vmul.f32 %v6413, %v6413
        %v6586 = vmin.f32 16.0, %v6585
        %v6587 = vmul.f32 %v6586, 2.1237322e-06
        %v6588 = vadd.f32 %v6587, 0.00028619796
        %v6589 = vmul.f32 %v6586, %v6588
        %v6590 = vadd.f32 %v6589, 0.0036580483
        %v6591 = vmul.f32 %v6586, %v6590
        %v6592 = vadd.f32 %v6591, 0.05243302
        %v6593 = vmul.f32 %v6586, %v6592
        %v6594 = vadd.f32 %v6593, 0.18741608
        %v6595 = vmul.f32 %v6586, %v6594
        %v6596 = vadd.f32 %v6595, 1.1283791
        %v6597 = vmul.f32 %v6413, %v6596
        %v6598 = vmul.f32 %v6586, 3.8918573e-05
        %v6599 = vadd.f32 %v6598, 0.001143296
        %v6600 = vmul.f32 %v6586, %v6599
        %v6601 = vadd.f32 %v6600, 0.014752088
        %v6602 = vmul.f32 %v6586, %v6601
        %v6603 = vadd.f32 %v6602, 0.112945676
        %v6604 = vmul.f32 %v6586, %v6603
        %v6605 = vadd.f32 %v6604, 0.4994258
        %v6606 = vmul.f32 %v6586, %v6605
        %v6607 = vadd.f32 %v6606, 1.0
        %v6608 = vrcp.pop %v6607
        %v6609 = vmul.f32 %v6607, %v6608
        %v6610 = vsub.f32 1.0, %v6609
        %v6611 = vmul.f32 %v6608, %v6610
        %v6612 = vadd.f32 %v6608, %v6611
        %vm6613 = vweird.f32 %v6607
        %vm6614 = vweird.f32 %v6608
        %vm6615 = vmor %vm6613, %vm6614
        %v6616 = vsel %vm6615, %v6608, %v6612
        %v6617 = vand.u32 2147483647, %v6607
        %vm6618 = vcmp.eq.f32.partialorder %v6617, 8.507059e+37
        %v6619 = vand.u32 %v6607, 2147483648
        %v6620 = vor.u32 1.1754944e-38, %v6619
        %v6621 = vsel %vm6618, %v6620, %v6616
        %v6622 = vmul.f32 %v6597, %v6621
        %v6623 = vmin.f32 %v6622, 1.0
        %v6624 = vmax.f32 %v6623, -1.0
        %v6625 = vmul.f32 %v6414, %v6414
        %v6626 = vmin.f32 16.0, %v6625
        %v6627 = vmul.f32 %v6626, 2.1237322e-06
        %v6628 = vadd.f32 %v6627, 0.00028619796
        %v6629 = vmul.f32 %v6626, %v6628
        %v6630 = vadd.f32 %v6629, 0.0036580483
        %v6631 = vmul.f32 %v6626, %v6630
        %v6632 = vadd.f32 %v6631, 0.05243302
        %v6633 = vmul.f32 %v6626, %v6632
        %v6634 = vadd.f32 %v6633, 0.18741608
        %v6635 = vmul.f32 %v6626, %v6634
        %v6636 = vadd.f32 %v6635, 1.1283791
        %v6637 = vmul.f32 %v6414, %v6636
        %v6638 = vmul.f32 %v6626, 3.8918573e-05
        %v6639 = vadd.f32 %v6638, 0.001143296
        %v6640 = vmul.f32 %v6626, %v6639
        %v6641 = vadd.f32 %v6640, 0.014752088
        %v6642 = vmul.f32 %v6626, %v6641
        %v6643 = vadd.f32 %v6642, 0.112945676
        %v6644 = vmul.f32 %v6626, %v6643
        %v6645 = vadd.f32 %v6644, 0.4994258
        %v6646 = vmul.f32 %v6626, %v6645
        %v6647 = vadd.f32 %v6646, 1.0
        %v6648 = vrcp.pop %v6647
        %v6649 = vmul.f32 %v6647, %v6648
        %v6650 = vsub.f32 1.0, %v6649
        %v6651 = vmul.f32 %v6648, %v6650
        %v6652 = vadd.f32 %v6648, %v6651
        %vm6653 = vweird.f32 %v6647
        %vm6654 = vweird.f32 %v6648
        %vm6655 = vmor %vm6653, %vm6654
        %v6656 = vsel %vm6655, %v6648, %v6652
        %v6657 = vand.u32 2147483647, %v6647
        %vm6658 = vcmp.eq.f32.partialorder %v6657, 8.507059e+37
        %v6659 = vand.u32 %v6647, 2147483648
        %v6660 = vor.u32 1.1754944e-38, %v6659
        %v6661 = vsel %vm6658, %v6660, %v6656
        %v6662 = vmul.f32 %v6637, %v6661
        %v6663 = vmin.f32 %v6662, 1.0
        %v6664 = vmax.f32 %v6663, -1.0
        %v6665 = vmul.f32 %v6415, %v6415
        %v6666 = vmin.f32 16.0, %v6665
        %v6667 = vmul.f32 %v6666, 2.1237322e-06
        %v6668 = vadd.f32 %v6667, 0.00028619796
        %v6669 = vmul.f32 %v6666, %v6668
        %v6670 = vadd.f32 %v6669, 0.0036580483
        %v6671 = vmul.f32 %v6666, %v6670
        %v6672 = vadd.f32 %v6671, 0.05243302
        %v6673 = vmul.f32 %v6666, %v6672
        %v6674 = vadd.f32 %v6673, 0.18741608
        %v6675 = vmul.f32 %v6666, %v6674
        %v6676 = vadd.f32 %v6675, 1.1283791
        %v6677 = vmul.f32 %v6415, %v6676
        %v6678 = vmul.f32 %v6666, 3.8918573e-05
        %v6679 = vadd.f32 %v6678, 0.001143296
        %v6680 = vmul.f32 %v6666, %v6679
        %v6681 = vadd.f32 %v6680, 0.014752088
        %v6682 = vmul.f32 %v6666, %v6681
        %v6683 = vadd.f32 %v6682, 0.112945676
        %v6684 = vmul.f32 %v6666, %v6683
        %v6685 = vadd.f32 %v6684, 0.4994258
        %v6686 = vmul.f32 %v6666, %v6685
        %v6687 = vadd.f32 %v6686, 1.0
        %v6688 = vrcp.pop %v6687
        %v6689 = vmul.f32 %v6687, %v6688
        %v6690 = vsub.f32 1.0, %v6689
        %v6691 = vmul.f32 %v6688, %v6690
        %v6692 = vadd.f32 %v6688, %v6691
        %vm6693 = vweird.f32 %v6687
        %vm6694 = vweird.f32 %v6688
        %vm6695 = vmor %vm6693, %vm6694
        %v6696 = vsel %vm6695, %v6688, %v6692
        %v6697 = vand.u32 2147483647, %v6687
        %vm6698 = vcmp.eq.f32.partialorder %v6697, 8.507059e+37
        %v6699 = vand.u32 %v6687, 2147483648
        %v6700 = vor.u32 1.1754944e-38, %v6699
        %v6701 = vsel %vm6698, %v6700, %v6696
        %v6702 = vmul.f32 %v6677, %v6701
        %v6703 = vmin.f32 %v6702, 1.0
        %v6704 = vmax.f32 %v6703, -1.0
        %v6705 = vmul.f32 %v6416, %v6416
        %v6706 = vmin.f32 16.0, %v6705
        %v6707 = vmul.f32 %v6706, 2.1237322e-06
        %v6708 = vadd.f32 %v6707, 0.00028619796
        %v6709 = vmul.f32 %v6706, %v6708
        %v6710 = vadd.f32 %v6709, 0.0036580483
        %v6711 = vmul.f32 %v6706, %v6710
        %v6712 = vadd.f32 %v6711, 0.05243302
        %v6713 = vmul.f32 %v6706, %v6712
        %v6714 = vadd.f32 %v6713, 0.18741608
        %v6715 = vmul.f32 %v6706, %v6714
        %v6716 = vadd.f32 %v6715, 1.1283791
        %v6717 = vmul.f32 %v6416, %v6716
        %v6718 = vmul.f32 %v6706, 3.8918573e-05
        %v6719 = vadd.f32 %v6718, 0.001143296
        %v6720 = vmul.f32 %v6706, %v6719
        %v6721 = vadd.f32 %v6720, 0.014752088
        %v6722 = vmul.f32 %v6706, %v6721
        %v6723 = vadd.f32 %v6722, 0.112945676
        %v6724 = vmul.f32 %v6706, %v6723
        %v6725 = vadd.f32 %v6724, 0.4994258
        %v6726 = vmul.f32 %v6706, %v6725
        %v6727 = vadd.f32 %v6726, 1.0
        %v6728 = vrcp.pop %v6727
        %v6729 = vmul.f32 %v6727, %v6728
        %v6730 = vsub.f32 1.0, %v6729
        %v6731 = vmul.f32 %v6728, %v6730
        %v6732 = vadd.f32 %v6728, %v6731
        %vm6733 = vweird.f32 %v6727
        %vm6734 = vweird.f32 %v6728
        %vm6735 = vmor %vm6733, %vm6734
        %v6736 = vsel %vm6735, %v6728, %v6732
        %v6737 = vand.u32 2147483647, %v6727
        %vm6738 = vcmp.eq.f32.partialorder %v6737, 8.507059e+37
        %v6739 = vand.u32 %v6727, 2147483648
        %v6740 = vor.u32 1.1754944e-38, %v6739
        %v6741 = vsel %vm6738, %v6740, %v6736
        %v6742 = vmul.f32 %v6717, %v6741
        %v6743 = vmin.f32 %v6742, 1.0
        %v6744 = vmax.f32 %v6743, -1.0
        %v6745 = vmul.f32 %v6417, %v6417
        %v6746 = vmin.f32 16.0, %v6745
        %v6747 = vmul.f32 %v6746, 2.1237322e-06
        %v6748 = vadd.f32 %v6747, 0.00028619796
        %v6749 = vmul.f32 %v6746, %v6748
        %v6750 = vadd.f32 %v6749, 0.0036580483
        %v6751 = vmul.f32 %v6746, %v6750
        %v6752 = vadd.f32 %v6751, 0.05243302
        %v6753 = vmul.f32 %v6746, %v6752
        %v6754 = vadd.f32 %v6753, 0.18741608
        %v6755 = vmul.f32 %v6746, %v6754
        %v6756 = vadd.f32 %v6755, 1.1283791
        %v6757 = vmul.f32 %v6417, %v6756
        %v6758 = vmul.f32 %v6746, 3.8918573e-05
        %v6759 = vadd.f32 %v6758, 0.001143296
        %v6760 = vmul.f32 %v6746, %v6759
        %v6761 = vadd.f32 %v6760, 0.014752088
        %v6762 = vmul.f32 %v6746, %v6761
        %v6763 = vadd.f32 %v6762, 0.112945676
        %v6764 = vmul.f32 %v6746, %v6763
        %v6765 = vadd.f32 %v6764, 0.4994258
        %v6766 = vmul.f32 %v6746, %v6765
        %v6767 = vadd.f32 %v6766, 1.0
        %v6768 = vrcp.pop %v6767
        %v6769 = vmul.f32 %v6767, %v6768
        %v6770 = vsub.f32 1.0, %v6769
        %v6771 = vmul.f32 %v6768, %v6770
        %v6772 = vadd.f32 %v6768, %v6771
        %vm6773 = vweird.f32 %v6767
        %vm6774 = vweird.f32 %v6768
        %vm6775 = vmor %vm6773, %vm6774
        %v6776 = vsel %vm6775, %v6768, %v6772
        %v6777 = vand.u32 2147483647, %v6767
        %vm6778 = vcmp.eq.f32.partialorder %v6777, 8.507059e+37
        %v6779 = vand.u32 %v6767, 2147483648
        %v6780 = vor.u32 1.1754944e-38, %v6779
        %v6781 = vsel %vm6778, %v6780, %v6776
        %v6782 = vmul.f32 %v6757, %v6781
        %v6783 = vmin.f32 %v6782, 1.0
        %v6784 = vmax.f32 %v6783, -1.0
        %v6785 = vmul.f32 %v6418, %v6418
        %v6786 = vmin.f32 16.0, %v6785
        %v6787 = vmul.f32 %v6786, 2.1237322e-06
        %v6788 = vadd.f32 %v6787, 0.00028619796
        %v6789 = vmul.f32 %v6786, %v6788
        %v6790 = vadd.f32 %v6789, 0.0036580483
        %v6791 = vmul.f32 %v6786, %v6790
        %v6792 = vadd.f32 %v6791, 0.05243302
        %v6793 = vmul.f32 %v6786, %v6792
        %v6794 = vadd.f32 %v6793, 0.18741608
        %v6795 = vmul.f32 %v6786, %v6794
        %v6796 = vadd.f32 %v6795, 1.1283791
        %v6797 = vmul.f32 %v6418, %v6796
        %v6798 = vmul.f32 %v6786, 3.8918573e-05
        %v6799 = vadd.f32 %v6798, 0.001143296
        %v6800 = vmul.f32 %v6786, %v6799
        %v6801 = vadd.f32 %v6800, 0.014752088
        %v6802 = vmul.f32 %v6786, %v6801
        %v6803 = vadd.f32 %v6802, 0.112945676
        %v6804 = vmul.f32 %v6786, %v6803
        %v6805 = vadd.f32 %v6804, 0.4994258
        %v6806 = vmul.f32 %v6786, %v6805
        %v6807 = vadd.f32 %v6806, 1.0
        %v6808 = vrcp.pop %v6807
        %v6809 = vmul.f32 %v6807, %v6808
        %v6810 = vsub.f32 1.0, %v6809
        %v6811 = vmul.f32 %v6808, %v6810
        %v6812 = vadd.f32 %v6808, %v6811
        %vm6813 = vweird.f32 %v6807
        %vm6814 = vweird.f32 %v6808
        %vm6815 = vmor %vm6813, %vm6814
        %v6816 = vsel %vm6815, %v6808, %v6812
        %v6817 = vand.u32 2147483647, %v6807
        %vm6818 = vcmp.eq.f32.partialorder %v6817, 8.507059e+37
        %v6819 = vand.u32 %v6807, 2147483648
        %v6820 = vor.u32 1.1754944e-38, %v6819
        %v6821 = vsel %vm6818, %v6820, %v6816
        %v6822 = vmul.f32 %v6797, %v6821
        %v6823 = vmin.f32 %v6822, 1.0
        %v6824 = vmax.f32 %v6823, -1.0
        %v6825 = vmul.f32 %v6419, %v6419
        %v6826 = vmin.f32 16.0, %v6825
        %v6827 = vmul.f32 %v6826, 2.1237322e-06
        %v6828 = vadd.f32 %v6827, 0.00028619796
        %v6829 = vmul.f32 %v6826, %v6828
        %v6830 = vadd.f32 %v6829, 0.0036580483
        %v6831 = vmul.f32 %v6826, %v6830
        %v6832 = vadd.f32 %v6831, 0.05243302
        %v6833 = vmul.f32 %v6826, %v6832
        %v6834 = vadd.f32 %v6833, 0.18741608
        %v6835 = vmul.f32 %v6826, %v6834
        %v6836 = vadd.f32 %v6835, 1.1283791
        %v6837 = vmul.f32 %v6419, %v6836
        %v6838 = vmul.f32 %v6826, 3.8918573e-05
        %v6839 = vadd.f32 %v6838, 0.001143296
        %v6840 = vmul.f32 %v6826, %v6839
        %v6841 = vadd.f32 %v6840, 0.014752088
        %v6842 = vmul.f32 %v6826, %v6841
        %v6843 = vadd.f32 %v6842, 0.112945676
        %v6844 = vmul.f32 %v6826, %v6843
        %v6845 = vadd.f32 %v6844, 0.4994258
        %v6846 = vmul.f32 %v6826, %v6845
        %v6847 = vadd.f32 %v6846, 1.0
        %v6848 = vrcp.pop %v6847
        %v6849 = vmul.f32 %v6847, %v6848
        %v6850 = vsub.f32 1.0, %v6849
        %v6851 = vmul.f32 %v6848, %v6850
        %v6852 = vadd.f32 %v6848, %v6851
        %vm6853 = vweird.f32 %v6847
        %vm6854 = vweird.f32 %v6848
        %vm6855 = vmor %vm6853, %vm6854
        %v6856 = vsel %vm6855, %v6848, %v6852
        %v6857 = vand.u32 2147483647, %v6847
        %vm6858 = vcmp.eq.f32.partialorder %v6857, 8.507059e+37
        %v6859 = vand.u32 %v6847, 2147483648
        %v6860 = vor.u32 1.1754944e-38, %v6859
        %v6861 = vsel %vm6858, %v6860, %v6856
        %v6862 = vmul.f32 %v6837, %v6861
        %v6863 = vmin.f32 %v6862, 1.0
        %v6864 = vmax.f32 %v6863, -1.0
        %v6865 = vmul.f32 %v6420, %v6420
        %v6866 = vmin.f32 16.0, %v6865
        %v6867 = vmul.f32 %v6866, 2.1237322e-06
        %v6868 = vadd.f32 %v6867, 0.00028619796
        %v6869 = vmul.f32 %v6866, %v6868
        %v6870 = vadd.f32 %v6869, 0.0036580483
        %v6871 = vmul.f32 %v6866, %v6870
        %v6872 = vadd.f32 %v6871, 0.05243302
        %v6873 = vmul.f32 %v6866, %v6872
        %v6874 = vadd.f32 %v6873, 0.18741608
        %v6875 = vmul.f32 %v6866, %v6874
        %v6876 = vadd.f32 %v6875, 1.1283791
        %v6877 = vmul.f32 %v6420, %v6876
        %v6878 = vmul.f32 %v6866, 3.8918573e-05
        %v6879 = vadd.f32 %v6878, 0.001143296
        %v6880 = vmul.f32 %v6866, %v6879
        %v6881 = vadd.f32 %v6880, 0.014752088
        %v6882 = vmul.f32 %v6866, %v6881
        %v6883 = vadd.f32 %v6882, 0.112945676
        %v6884 = vmul.f32 %v6866, %v6883
        %v6885 = vadd.f32 %v6884, 0.4994258
        %v6886 = vmul.f32 %v6866, %v6885
        %v6887 = vadd.f32 %v6886, 1.0
        %v6888 = vrcp.pop %v6887
        %v6889 = vmul.f32 %v6887, %v6888
        %v6890 = vsub.f32 1.0, %v6889
        %v6891 = vmul.f32 %v6888, %v6890
        %v6892 = vadd.f32 %v6888, %v6891
        %vm6893 = vweird.f32 %v6887
        %vm6894 = vweird.f32 %v6888
        %vm6895 = vmor %vm6893, %vm6894
        %v6896 = vsel %vm6895, %v6888, %v6892
        %v6897 = vand.u32 2147483647, %v6887
        %vm6898 = vcmp.eq.f32.partialorder %v6897, 8.507059e+37
        %v6899 = vand.u32 %v6887, 2147483648
        %v6900 = vor.u32 1.1754944e-38, %v6899
        %v6901 = vsel %vm6898, %v6900, %v6896
        %v6902 = vmul.f32 %v6877, %v6901
        %v6903 = vmin.f32 %v6902, 1.0
        %v6904 = vmax.f32 %v6903, -1.0
        %v6905 = vmul.f32 %v6421, %v6421
        %v6906 = vmin.f32 16.0, %v6905
        %v6907 = vmul.f32 %v6906, 2.1237322e-06
        %v6908 = vadd.f32 %v6907, 0.00028619796
        %v6909 = vmul.f32 %v6906, %v6908
        %v6910 = vadd.f32 %v6909, 0.0036580483
        %v6911 = vmul.f32 %v6906, %v6910
        %v6912 = vadd.f32 %v6911, 0.05243302
        %v6913 = vmul.f32 %v6906, %v6912
        %v6914 = vadd.f32 %v6913, 0.18741608
        %v6915 = vmul.f32 %v6906, %v6914
        %v6916 = vadd.f32 %v6915, 1.1283791
        %v6917 = vmul.f32 %v6421, %v6916
        %v6918 = vmul.f32 %v6906, 3.8918573e-05
        %v6919 = vadd.f32 %v6918, 0.001143296
        %v6920 = vmul.f32 %v6906, %v6919
        %v6921 = vadd.f32 %v6920, 0.014752088
        %v6922 = vmul.f32 %v6906, %v6921
        %v6923 = vadd.f32 %v6922, 0.112945676
        %v6924 = vmul.f32 %v6906, %v6923
        %v6925 = vadd.f32 %v6924, 0.4994258
        %v6926 = vmul.f32 %v6906, %v6925
        %v6927 = vadd.f32 %v6926, 1.0
        %v6928 = vrcp.pop %v6927
        %v6929 = vmul.f32 %v6927, %v6928
        %v6930 = vsub.f32 1.0, %v6929
        %v6931 = vmul.f32 %v6928, %v6930
        %v6932 = vadd.f32 %v6928, %v6931
        %vm6933 = vweird.f32 %v6927
        %vm6934 = vweird.f32 %v6928
        %vm6935 = vmor %vm6933, %vm6934
        %v6936 = vsel %vm6935, %v6928, %v6932
        %v6937 = vand.u32 2147483647, %v6927
        %vm6938 = vcmp.eq.f32.partialorder %v6937, 8.507059e+37
        %v6939 = vand.u32 %v6927, 2147483648
        %v6940 = vor.u32 1.1754944e-38, %v6939
        %v6941 = vsel %vm6938, %v6940, %v6936
        %v6942 = vmul.f32 %v6917, %v6941
        %v6943 = vmin.f32 %v6942, 1.0
        %v6944 = vmax.f32 %v6943, -1.0
        %v6945 = vmul.f32 %v6422, %v6422
        %v6946 = vmin.f32 16.0, %v6945
        %v6947 = vmul.f32 %v6946, 2.1237322e-06
        %v6948 = vadd.f32 %v6947, 0.00028619796
        %v6949 = vmul.f32 %v6946, %v6948
        %v6950 = vadd.f32 %v6949, 0.0036580483
        %v6951 = vmul.f32 %v6946, %v6950
        %v6952 = vadd.f32 %v6951, 0.05243302
        %v6953 = vmul.f32 %v6946, %v6952
        %v6954 = vadd.f32 %v6953, 0.18741608
        %v6955 = vmul.f32 %v6946, %v6954
        %v6956 = vadd.f32 %v6955, 1.1283791
        %v6957 = vmul.f32 %v6422, %v6956
        %v6958 = vmul.f32 %v6946, 3.8918573e-05
        %v6959 = vadd.f32 %v6958, 0.001143296
        %v6960 = vmul.f32 %v6946, %v6959
        %v6961 = vadd.f32 %v6960, 0.014752088
        %v6962 = vmul.f32 %v6946, %v6961
        %v6963 = vadd.f32 %v6962, 0.112945676
        %v6964 = vmul.f32 %v6946, %v6963
        %v6965 = vadd.f32 %v6964, 0.4994258
        %v6966 = vmul.f32 %v6946, %v6965
        %v6967 = vadd.f32 %v6966, 1.0
        %v6968 = vrcp.pop %v6967
        %v6969 = vmul.f32 %v6967, %v6968
        %v6970 = vsub.f32 1.0, %v6969
        %v6971 = vmul.f32 %v6968, %v6970
        %v6972 = vadd.f32 %v6968, %v6971
        %vm6973 = vweird.f32 %v6967
        %vm6974 = vweird.f32 %v6968
        %vm6975 = vmor %vm6973, %vm6974
        %v6976 = vsel %vm6975, %v6968, %v6972
        %v6977 = vand.u32 2147483647, %v6967
        %vm6978 = vcmp.eq.f32.partialorder %v6977, 8.507059e+37
        %v6979 = vand.u32 %v6967, 2147483648
        %v6980 = vor.u32 1.1754944e-38, %v6979
        %v6981 = vsel %vm6978, %v6980, %v6976
        %v6982 = vmul.f32 %v6957, %v6981
        %v6983 = vmin.f32 %v6982, 1.0
        %v6984 = vmax.f32 %v6983, -1.0
        %v6985 = vmul.f32 %v6423, %v6423
        %v6986 = vmin.f32 16.0, %v6985
        %v6987 = vmul.f32 %v6986, 2.1237322e-06
        %v6988 = vadd.f32 %v6987, 0.00028619796
        %v6989 = vmul.f32 %v6986, %v6988
        %v6990 = vadd.f32 %v6989, 0.0036580483
        %v6991 = vmul.f32 %v6986, %v6990
        %v6992 = vadd.f32 %v6991, 0.05243302
        %v6993 = vmul.f32 %v6986, %v6992
        %v6994 = vadd.f32 %v6993, 0.18741608
        %v6995 = vmul.f32 %v6986, %v6994
        %v6996 = vadd.f32 %v6995, 1.1283791
        %v6997 = vmul.f32 %v6423, %v6996
        %v6998 = vmul.f32 %v6986, 3.8918573e-05
        %v6999 = vadd.f32 %v6998, 0.001143296
        %v7000 = vmul.f32 %v6986, %v6999
        %v7001 = vadd.f32 %v7000, 0.014752088
        %v7002 = vmul.f32 %v6986, %v7001
        %v7003 = vadd.f32 %v7002, 0.112945676
        %v7004 = vmul.f32 %v6986, %v7003
        %v7005 = vadd.f32 %v7004, 0.4994258
        %v7006 = vmul.f32 %v6986, %v7005
        %v7007 = vadd.f32 %v7006, 1.0
        %v7008 = vrcp.pop %v7007
        %v7009 = vmul.f32 %v7007, %v7008
        %v7010 = vsub.f32 1.0, %v7009
        %v7011 = vmul.f32 %v7008, %v7010
        %v7012 = vadd.f32 %v7008, %v7011
        %vm7013 = vweird.f32 %v7007
        %vm7014 = vweird.f32 %v7008
        %vm7015 = vmor %vm7013, %vm7014
        %v7016 = vsel %vm7015, %v7008, %v7012
        %v7017 = vand.u32 2147483647, %v7007
        %vm7018 = vcmp.eq.f32.partialorder %v7017, 8.507059e+37
        %v7019 = vand.u32 %v7007, 2147483648
        %v7020 = vor.u32 1.1754944e-38, %v7019
        %v7021 = vsel %vm7018, %v7020, %v7016
        %v7022 = vmul.f32 %v6997, %v7021
        %v7023 = vmin.f32 %v7022, 1.0
        %v7024 = vmax.f32 %v7023, -1.0
        %v7025 = vmul.f32 %v6424, %v6424
        %v7026 = vmin.f32 16.0, %v7025
        %v7027 = vmul.f32 %v7026, 2.1237322e-06
        %v7028 = vadd.f32 %v7027, 0.00028619796
        %v7029 = vmul.f32 %v7026, %v7028
        %v7030 = vadd.f32 %v7029, 0.0036580483
        %v7031 = vmul.f32 %v7026, %v7030
        %v7032 = vadd.f32 %v7031, 0.05243302
        %v7033 = vmul.f32 %v7026, %v7032
        %v7034 = vadd.f32 %v7033, 0.18741608
        %v7035 = vmul.f32 %v7026, %v7034
        %v7036 = vadd.f32 %v7035, 1.1283791
        %v7037 = vmul.f32 %v6424, %v7036
        %v7038 = vmul.f32 %v7026, 3.8918573e-05
        %v7039 = vadd.f32 %v7038, 0.001143296
        %v7040 = vmul.f32 %v7026, %v7039
        %v7041 = vadd.f32 %v7040, 0.014752088
        %v7042 = vmul.f32 %v7026, %v7041
        %v7043 = vadd.f32 %v7042, 0.112945676
        %v7044 = vmul.f32 %v7026, %v7043
        %v7045 = vadd.f32 %v7044, 0.4994258
        %v7046 = vmul.f32 %v7026, %v7045
        %v7047 = vadd.f32 %v7046, 1.0
        %v7048 = vrcp.pop %v7047
        %v7049 = vmul.f32 %v7047, %v7048
        %v7050 = vsub.f32 1.0, %v7049
        %v7051 = vmul.f32 %v7048, %v7050
        %v7052 = vadd.f32 %v7048, %v7051
        %vm7053 = vweird.f32 %v7047
        %vm7054 = vweird.f32 %v7048
        %vm7055 = vmor %vm7053, %vm7054
        %v7056 = vsel %vm7055, %v7048, %v7052
        %v7057 = vand.u32 2147483647, %v7047
        %vm7058 = vcmp.eq.f32.partialorder %v7057, 8.507059e+37
        %v7059 = vand.u32 %v7047, 2147483648
        %v7060 = vor.u32 1.1754944e-38, %v7059
        %v7061 = vsel %vm7058, %v7060, %v7056
        %v7062 = vmul.f32 %v7037, %v7061
        %v7063 = vmin.f32 %v7062, 1.0
        %v7064 = vmax.f32 %v7063, -1.0
        %v7065 = vadd.f32 %v6464, 1.0
        %v7066 = vadd.f32 %v6504, 1.0
        %v7067 = vadd.f32 %v6544, 1.0
        %v7068 = vadd.f32 %v6584, 1.0
        %v7069 = vadd.f32 %v6624, 1.0
        %v7070 = vadd.f32 %v6664, 1.0
        %v7071 = vadd.f32 %v6704, 1.0
        %v7072 = vadd.f32 %v6744, 1.0
        %v7073 = vadd.f32 %v6784, 1.0
        %v7074 = vadd.f32 %v6824, 1.0
        %v7075 = vadd.f32 %v6864, 1.0
        %v7076 = vadd.f32 %v6904, 1.0
        %v7077 = vadd.f32 %v6944, 1.0
        %v7078 = vadd.f32 %v6984, 1.0
        %v7079 = vadd.f32 %v7024, 1.0
        %v7080 = vadd.f32 %v7064, 1.0
        %v7081 = vmul.f32 %v6393, %v7065
        %v7082 = vmul.f32 %v6394, %v7066
        %v7083 = vmul.f32 %v6395, %v7067
        %v7084 = vmul.f32 %v6396, %v7068
        %v7085 = vmul.f32 %v6397, %v7069
        %v7086 = vmul.f32 %v6398, %v7070
        %v7087 = vmul.f32 %v6399, %v7071
        %v7088 = vmul.f32 %v6400, %v7072
        %v7089 = vmul.f32 %v6401, %v7073
        %v7090 = vmul.f32 %v6402, %v7074
        %v7091 = vmul.f32 %v6403, %v7075
        %v7092 = vmul.f32 %v6404, %v7076
        %v7093 = vmul.f32 %v6405, %v7077
        %v7094 = vmul.f32 %v6406, %v7078
        %v7095 = vmul.f32 %v6407, %v7079
        %v7096 = vmul.f32 %v6408, %v7080
        %v7097 = vpack.c.bf16 %v7082, %v7081
        %v7098 = vpack.c.bf16 %v7084, %v7083
        %v7099 = vpack.c.bf16 %v7086, %v7085
        %v7100 = vpack.c.bf16 %v7088, %v7087
        %v7101 = vpack.c.bf16 %v7090, %v7089
        %v7102 = vpack.c.bf16 %v7092, %v7091
        %v7103 = vpack.c.bf16 %v7094, %v7093
        %v7104 = vpack.c.bf16 %v7096, %v7095
        %v7105 = vld [vmem:[%s729] sm:$0xf]
        %v7106 = vld [vmem:[%s729 + $0x4] sm:$0xf]
        %v7107 = vld [vmem:[%s729 + $0x8] sm:$0xf]
        %v7108 = vld [vmem:[%s729 + $0xc] sm:$0xf]
        %v7109 = vld [vmem:[%s732] sm:$0x1]
        %v7111 = vperm.slane %v7109, 0
        %v7117 = vunpack.c.l.b16 %v7105
        %v7118 = vunpack.c.l.b16 %v7106
        %v7119 = vunpack.c.l.b16 %v7107
        %v7120 = vunpack.c.l.b16 %v7108
        %v7121 = vpack.c.b16 %v7118, %v7117
        %v7122 = vpack.c.b16 %v7120, %v7119
        %v7126 = vsel %vm1036, %v7097, 0
        %v7129 = vsel %vm1036, %v7098, 0
        %v7132 = vsel %vm1036, %v7099, 0
        %v7135 = vsel %vm1036, %v7100, 0
        %v7138 = vsel %vm1036, %v7101, 0
        %v7141 = vsel %vm1036, %v7102, 0
        %v7144 = vsel %vm1036, %v7103, 0
        %v7147 = vsel %vm1036, %v7104, 0
        %7149 = vmatpush.bf16.msra.mxu0 0
        %7150 = vmatpush.bf16.msra.mxu0 0
        %7151 = vmatpush.bf16.msra.mxu0 0
        %7152 = vmatpush.bf16.msra.mxu0 0
        %7153 = vmatpush.bf16.msra.mxu0 0
        %7154 = vmatpush.bf16.msra.mxu0 0
        %7155 = vmatpush.bf16.msra.mxu0 %v7122
        %7156 = vmatpush.bf16.msra.mxu0 %v7121
        %7157 = vmatmul.bf16.gmra.mxu0 %v7126
        %v7158 = vpop.f32.mrf.mxu0
        %v7159 = vadd.f32 %v7111, %v7158
        %v7160 = vpop.f32.mrf.mxu0
        %v7161 = vadd.f32 %v7111, %v7160
        %7162 = vmatmul.bf16.gmra.mxu0 %v7129
        %v7163 = vpop.f32.mrf.mxu0
        %v7164 = vadd.f32 %v7111, %v7163
        %v7165 = vpop.f32.mrf.mxu0
        %v7166 = vadd.f32 %v7111, %v7165
        %7167 = vmatmul.bf16.gmra.mxu0 %v7132
        %v7168 = vpop.f32.mrf.mxu0
        %v7169 = vadd.f32 %v7111, %v7168
        %v7170 = vpop.f32.mrf.mxu0
        %v7171 = vadd.f32 %v7111, %v7170
        %7172 = vmatmul.bf16.gmra.mxu0 %v7135
        %v7173 = vpop.f32.mrf.mxu0
        %v7174 = vadd.f32 %v7111, %v7173
        %v7175 = vpop.f32.mrf.mxu0
        %v7176 = vadd.f32 %v7111, %v7175
        %7177 = vmatmul.bf16.gmra.mxu0 %v7138
        %v7178 = vpop.f32.mrf.mxu0
        %v7179 = vadd.f32 %v7111, %v7178
        %v7180 = vpop.f32.mrf.mxu0
        %v7181 = vadd.f32 %v7111, %v7180
        %7182 = vmatmul.bf16.gmra.mxu0 %v7141
        %v7183 = vpop.f32.mrf.mxu0
        %v7184 = vadd.f32 %v7111, %v7183
        %v7185 = vpop.f32.mrf.mxu0
        %v7186 = vadd.f32 %v7111, %v7185
        %7187 = vmatmul.bf16.gmra.mxu0 %v7144
        %v7188 = vpop.f32.mrf.mxu0
        %v7189 = vadd.f32 %v7111, %v7188
        %v7190 = vpop.f32.mrf.mxu0
        %v7191 = vadd.f32 %v7111, %v7190
        %7192 = vmatmul.bf16.gmra.mxu0 %v7147
        %v7193 = vpop.f32.mrf.mxu0
        %v7194 = vadd.f32 %v7111, %v7193
        %v7195 = vpop.f32.mrf.mxu0
        %v7196 = vadd.f32 %v7111, %v7195
        %7197 = vdwg.mxu0
        %v7198 = vadd.f32 %v7159, %v6276
        %v7199 = vadd.f32 %v7161, %v6277
        %v7200 = vadd.f32 %v7164, %v6278
        %v7201 = vadd.f32 %v7166, %v6279
        %v7202 = vadd.f32 %v7169, %v6280
        %v7203 = vadd.f32 %v7171, %v6281
        %v7204 = vadd.f32 %v7174, %v6282
        %v7205 = vadd.f32 %v7176, %v6283
        %v7206 = vadd.f32 %v7179, %v6284
        %v7207 = vadd.f32 %v7181, %v6285
        %v7208 = vadd.f32 %v7184, %v6286
        %v7209 = vadd.f32 %v7186, %v6287
        %v7210 = vadd.f32 %v7189, %v6288
        %v7211 = vadd.f32 %v7191, %v6289
        %v7212 = vadd.f32 %v7194, %v6290
        %v7213 = vadd.f32 %v7196, %v6291
        %v7214 = vld [vmem:[%s741] sm:$0x1]
        %v7215 = vld [vmem:[%s744] sm:$0x1]
        %v7216 = vsel %vm1036, %v7198, 0.0
        %7217 = vadd.xlane.f32.xlu0 %v7216
        %v7218 = vpop.xlane.xlu0 %7217
        %v7219 = vsel %vm1036, %v7199, 0.0
        %7220 = vadd.xlane.f32.xlu0 %v7219
        %v7221 = vpop.xlane.xlu0 %7220
        %v7222 = vsel %vm1036, %v7200, 0.0
        %7223 = vadd.xlane.f32.xlu0 %v7222
        %v7224 = vpop.xlane.xlu0 %7223
        %v7225 = vsel %vm1036, %v7201, 0.0
        %7226 = vadd.xlane.f32.xlu0 %v7225
        %v7227 = vpop.xlane.xlu0 %7226
        %v7228 = vsel %vm1036, %v7202, 0.0
        %7229 = vadd.xlane.f32.xlu0 %v7228
        %v7230 = vpop.xlane.xlu0 %7229
        %v7231 = vsel %vm1036, %v7203, 0.0
        %7232 = vadd.xlane.f32.xlu0 %v7231
        %v7233 = vpop.xlane.xlu0 %7232
        %v7234 = vsel %vm1036, %v7204, 0.0
        %7235 = vadd.xlane.f32.xlu0 %v7234
        %v7236 = vpop.xlane.xlu0 %7235
        %v7237 = vsel %vm1036, %v7205, 0.0
        %7238 = vadd.xlane.f32.xlu0 %v7237
        %v7239 = vpop.xlane.xlu0 %7238
        %v7240 = vsel %vm1036, %v7206, 0.0
        %7241 = vadd.xlane.f32.xlu0 %v7240
        %v7242 = vpop.xlane.xlu0 %7241
        %v7243 = vsel %vm1036, %v7207, 0.0
        %7244 = vadd.xlane.f32.xlu0 %v7243
        %v7245 = vpop.xlane.xlu0 %7244
        %v7246 = vsel %vm1036, %v7208, 0.0
        %7247 = vadd.xlane.f32.xlu0 %v7246
        %v7248 = vpop.xlane.xlu0 %7247
        %v7249 = vsel %vm1036, %v7209, 0.0
        %7250 = vadd.xlane.f32.xlu0 %v7249
        %v7251 = vpop.xlane.xlu0 %7250
        %v7252 = vsel %vm1036, %v7210, 0.0
        %7253 = vadd.xlane.f32.xlu0 %v7252
        %v7254 = vpop.xlane.xlu0 %7253
        %v7255 = vsel %vm1036, %v7211, 0.0
        %7256 = vadd.xlane.f32.xlu0 %v7255
        %v7257 = vpop.xlane.xlu0 %7256
        %v7258 = vsel %vm1036, %v7212, 0.0
        %7259 = vadd.xlane.f32.xlu0 %v7258
        %v7260 = vpop.xlane.xlu0 %7259
        %v7261 = vsel %vm1036, %v7213, 0.0
        %7262 = vadd.xlane.f32.xlu0 %v7261
        %v7263 = vpop.xlane.xlu0 %7262
        %v7264 = vmul.f32 %v7218, %v5949
        %v7265 = vmul.f32 %v7221, %v5949
        %v7266 = vmul.f32 %v7224, %v5949
        %v7267 = vmul.f32 %v7227, %v5949
        %v7268 = vmul.f32 %v7230, %v5949
        %v7269 = vmul.f32 %v7233, %v5949
        %v7270 = vmul.f32 %v7236, %v5949
        %v7271 = vmul.f32 %v7239, %v5949
        %v7272 = vmul.f32 %v7242, %v5949
        %v7273 = vmul.f32 %v7245, %v5949
        %v7274 = vmul.f32 %v7248, %v5949
        %v7275 = vmul.f32 %v7251, %v5949
        %v7276 = vmul.f32 %v7254, %v5949
        %v7277 = vmul.f32 %v7257, %v5949
        %v7278 = vmul.f32 %v7260, %v5949
        %v7279 = vmul.f32 %v7263, %v5949
        %v7280 = vsub.f32 %v7198, %v7264
        %v7281 = vsub.f32 %v7199, %v7265
        %v7282 = vsub.f32 %v7200, %v7266
        %v7283 = vsub.f32 %v7201, %v7267
        %v7284 = vsub.f32 %v7202, %v7268
        %v7285 = vsub.f32 %v7203, %v7269
        %v7286 = vsub.f32 %v7204, %v7270
        %v7287 = vsub.f32 %v7205, %v7271
        %v7288 = vsub.f32 %v7206, %v7272
        %v7289 = vsub.f32 %v7207, %v7273
        %v7290 = vsub.f32 %v7208, %v7274
        %v7291 = vsub.f32 %v7209, %v7275
        %v7292 = vsub.f32 %v7210, %v7276
        %v7293 = vsub.f32 %v7211, %v7277
        %v7294 = vsub.f32 %v7212, %v7278
        %v7295 = vsub.f32 %v7213, %v7279
        %v7296 = vmul.f32 %v7280, %v7280
        %v7297 = vmul.f32 %v7281, %v7281
        %v7298 = vmul.f32 %v7282, %v7282
        %v7299 = vmul.f32 %v7283, %v7283
        %v7300 = vmul.f32 %v7284, %v7284
        %v7301 = vmul.f32 %v7285, %v7285
        %v7302 = vmul.f32 %v7286, %v7286
        %v7303 = vmul.f32 %v7287, %v7287
        %v7304 = vmul.f32 %v7288, %v7288
        %v7305 = vmul.f32 %v7289, %v7289
        %v7306 = vmul.f32 %v7290, %v7290
        %v7307 = vmul.f32 %v7291, %v7291
        %v7308 = vmul.f32 %v7292, %v7292
        %v7309 = vmul.f32 %v7293, %v7293
        %v7310 = vmul.f32 %v7294, %v7294
        %v7311 = vmul.f32 %v7295, %v7295
        %v7312 = vsel %vm1036, %v7296, 0.0
        %7313 = vadd.xlane.f32.xlu0 %v7312
        %v7314 = vpop.xlane.xlu0 %7313
        %v7315 = vsel %vm1036, %v7297, 0.0
        %7316 = vadd.xlane.f32.xlu0 %v7315
        %v7317 = vpop.xlane.xlu0 %7316
        %v7318 = vsel %vm1036, %v7298, 0.0
        %7319 = vadd.xlane.f32.xlu0 %v7318
        %v7320 = vpop.xlane.xlu0 %7319
        %v7321 = vsel %vm1036, %v7299, 0.0
        %7322 = vadd.xlane.f32.xlu0 %v7321
        %v7323 = vpop.xlane.xlu0 %7322
        %v7324 = vsel %vm1036, %v7300, 0.0
        %7325 = vadd.xlane.f32.xlu0 %v7324
        %v7326 = vpop.xlane.xlu0 %7325
        %v7327 = vsel %vm1036, %v7301, 0.0
        %7328 = vadd.xlane.f32.xlu0 %v7327
        %v7329 = vpop.xlane.xlu0 %7328
        %v7330 = vsel %vm1036, %v7302, 0.0
        %7331 = vadd.xlane.f32.xlu0 %v7330
        %v7332 = vpop.xlane.xlu0 %7331
        %v7333 = vsel %vm1036, %v7303, 0.0
        %7334 = vadd.xlane.f32.xlu0 %v7333
        %v7335 = vpop.xlane.xlu0 %7334
        %v7336 = vsel %vm1036, %v7304, 0.0
        %7337 = vadd.xlane.f32.xlu0 %v7336
        %v7338 = vpop.xlane.xlu0 %7337
        %v7339 = vsel %vm1036, %v7305, 0.0
        %7340 = vadd.xlane.f32.xlu0 %v7339
        %v7341 = vpop.xlane.xlu0 %7340
        %v7342 = vsel %vm1036, %v7306, 0.0
        %7343 = vadd.xlane.f32.xlu0 %v7342
        %v7344 = vpop.xlane.xlu0 %7343
        %v7345 = vsel %vm1036, %v7307, 0.0
        %7346 = vadd.xlane.f32.xlu0 %v7345
        %v7347 = vpop.xlane.xlu0 %7346
        %v7348 = vsel %vm1036, %v7308, 0.0
        %7349 = vadd.xlane.f32.xlu0 %v7348
        %v7350 = vpop.xlane.xlu0 %7349
        %v7351 = vsel %vm1036, %v7309, 0.0
        %7352 = vadd.xlane.f32.xlu0 %v7351
        %v7353 = vpop.xlane.xlu0 %7352
        %v7354 = vsel %vm1036, %v7310, 0.0
        %7355 = vadd.xlane.f32.xlu0 %v7354
        %v7356 = vpop.xlane.xlu0 %7355
        %v7357 = vsel %vm1036, %v7311, 0.0
        %7358 = vadd.xlane.f32.xlu0 %v7357
        %v7359 = vpop.xlane.xlu0 %7358
        %v7360 = vmul.f32 %v7314, %v5949
        %v7361 = vmul.f32 %v7317, %v5949
        %v7362 = vmul.f32 %v7320, %v5949
        %v7363 = vmul.f32 %v7323, %v5949
        %v7364 = vmul.f32 %v7326, %v5949
        %v7365 = vmul.f32 %v7329, %v5949
        %v7366 = vmul.f32 %v7332, %v5949
        %v7367 = vmul.f32 %v7335, %v5949
        %v7368 = vmul.f32 %v7338, %v5949
        %v7369 = vmul.f32 %v7341, %v5949
        %v7370 = vmul.f32 %v7344, %v5949
        %v7371 = vmul.f32 %v7347, %v5949
        %v7372 = vmul.f32 %v7350, %v5949
        %v7373 = vmul.f32 %v7353, %v5949
        %v7374 = vmul.f32 %v7356, %v5949
        %v7375 = vmul.f32 %v7359, %v5949
        %v7376 = vadd.f32 %v7360, 1e-05
        %v7377 = vadd.f32 %v7361, 1e-05
        %v7378 = vadd.f32 %v7362, 1e-05
        %v7379 = vadd.f32 %v7363, 1e-05
        %v7380 = vadd.f32 %v7364, 1e-05
        %v7381 = vadd.f32 %v7365, 1e-05
        %v7382 = vadd.f32 %v7366, 1e-05
        %v7383 = vadd.f32 %v7367, 1e-05
        %v7384 = vadd.f32 %v7368, 1e-05
        %v7385 = vadd.f32 %v7369, 1e-05
        %v7386 = vadd.f32 %v7370, 1e-05
        %v7387 = vadd.f32 %v7371, 1e-05
        %v7388 = vadd.f32 %v7372, 1e-05
        %v7389 = vadd.f32 %v7373, 1e-05
        %v7390 = vadd.f32 %v7374, 1e-05
        %v7391 = vadd.f32 %v7375, 1e-05
        %v7392 = vrsqrt.pop %v7376
        %v7393 = vmul.f32 %v7392, %v7376
        %v7394 = vmul.f32 %v7393, %v7392
        %v7395 = vmul.f32 0.5, %v7394
        %v7396 = vsub.f32 1.5, %v7395
        %v7397 = vmul.f32 %v7392, %v7396
        %vm7398 = vweird.f32 %v7376
        %vm7399 = vweird.f32 %v7392
        %vm7400 = vmor %vm7398, %vm7399
        %v7401 = vsel %vm7400, %v7392, %v7397
        %v7402 = vrsqrt.pop %v7377
        %v7403 = vmul.f32 %v7402, %v7377
        %v7404 = vmul.f32 %v7403, %v7402
        %v7405 = vmul.f32 0.5, %v7404
        %v7406 = vsub.f32 1.5, %v7405
        %v7407 = vmul.f32 %v7402, %v7406
        %vm7408 = vweird.f32 %v7377
        %vm7409 = vweird.f32 %v7402
        %vm7410 = vmor %vm7408, %vm7409
        %v7411 = vsel %vm7410, %v7402, %v7407
        %v7412 = vrsqrt.pop %v7378
        %v7413 = vmul.f32 %v7412, %v7378
        %v7414 = vmul.f32 %v7413, %v7412
        %v7415 = vmul.f32 0.5, %v7414
        %v7416 = vsub.f32 1.5, %v7415
        %v7417 = vmul.f32 %v7412, %v7416
        %vm7418 = vweird.f32 %v7378
        %vm7419 = vweird.f32 %v7412
        %vm7420 = vmor %vm7418, %vm7419
        %v7421 = vsel %vm7420, %v7412, %v7417
        %v7422 = vrsqrt.pop %v7379
        %v7423 = vmul.f32 %v7422, %v7379
        %v7424 = vmul.f32 %v7423, %v7422
        %v7425 = vmul.f32 0.5, %v7424
        %v7426 = vsub.f32 1.5, %v7425
        %v7427 = vmul.f32 %v7422, %v7426
        %vm7428 = vweird.f32 %v7379
        %vm7429 = vweird.f32 %v7422
        %vm7430 = vmor %vm7428, %vm7429
        %v7431 = vsel %vm7430, %v7422, %v7427
        %v7432 = vrsqrt.pop %v7380
        %v7433 = vmul.f32 %v7432, %v7380
        %v7434 = vmul.f32 %v7433, %v7432
        %v7435 = vmul.f32 0.5, %v7434
        %v7436 = vsub.f32 1.5, %v7435
        %v7437 = vmul.f32 %v7432, %v7436
        %vm7438 = vweird.f32 %v7380
        %vm7439 = vweird.f32 %v7432
        %vm7440 = vmor %vm7438, %vm7439
        %v7441 = vsel %vm7440, %v7432, %v7437
        %v7442 = vrsqrt.pop %v7381
        %v7443 = vmul.f32 %v7442, %v7381
        %v7444 = vmul.f32 %v7443, %v7442
        %v7445 = vmul.f32 0.5, %v7444
        %v7446 = vsub.f32 1.5, %v7445
        %v7447 = vmul.f32 %v7442, %v7446
        %vm7448 = vweird.f32 %v7381
        %vm7449 = vweird.f32 %v7442
        %vm7450 = vmor %vm7448, %vm7449
        %v7451 = vsel %vm7450, %v7442, %v7447
        %v7452 = vrsqrt.pop %v7382
        %v7453 = vmul.f32 %v7452, %v7382
        %v7454 = vmul.f32 %v7453, %v7452
        %v7455 = vmul.f32 0.5, %v7454
        %v7456 = vsub.f32 1.5, %v7455
        %v7457 = vmul.f32 %v7452, %v7456
        %vm7458 = vweird.f32 %v7382
        %vm7459 = vweird.f32 %v7452
        %vm7460 = vmor %vm7458, %vm7459
        %v7461 = vsel %vm7460, %v7452, %v7457
        %v7462 = vrsqrt.pop %v7383
        %v7463 = vmul.f32 %v7462, %v7383
        %v7464 = vmul.f32 %v7463, %v7462
        %v7465 = vmul.f32 0.5, %v7464
        %v7466 = vsub.f32 1.5, %v7465
        %v7467 = vmul.f32 %v7462, %v7466
        %vm7468 = vweird.f32 %v7383
        %vm7469 = vweird.f32 %v7462
        %vm7470 = vmor %vm7468, %vm7469
        %v7471 = vsel %vm7470, %v7462, %v7467
        %v7472 = vrsqrt.pop %v7384
        %v7473 = vmul.f32 %v7472, %v7384
        %v7474 = vmul.f32 %v7473, %v7472
        %v7475 = vmul.f32 0.5, %v7474
        %v7476 = vsub.f32 1.5, %v7475
        %v7477 = vmul.f32 %v7472, %v7476
        %vm7478 = vweird.f32 %v7384
        %vm7479 = vweird.f32 %v7472
        %vm7480 = vmor %vm7478, %vm7479
        %v7481 = vsel %vm7480, %v7472, %v7477
        %v7482 = vrsqrt.pop %v7385
        %v7483 = vmul.f32 %v7482, %v7385
        %v7484 = vmul.f32 %v7483, %v7482
        %v7485 = vmul.f32 0.5, %v7484
        %v7486 = vsub.f32 1.5, %v7485
        %v7487 = vmul.f32 %v7482, %v7486
        %vm7488 = vweird.f32 %v7385
        %vm7489 = vweird.f32 %v7482
        %vm7490 = vmor %vm7488, %vm7489
        %v7491 = vsel %vm7490, %v7482, %v7487
        %v7492 = vrsqrt.pop %v7386
        %v7493 = vmul.f32 %v7492, %v7386
        %v7494 = vmul.f32 %v7493, %v7492
        %v7495 = vmul.f32 0.5, %v7494
        %v7496 = vsub.f32 1.5, %v7495
        %v7497 = vmul.f32 %v7492, %v7496
        %vm7498 = vweird.f32 %v7386
        %vm7499 = vweird.f32 %v7492
        %vm7500 = vmor %vm7498, %vm7499
        %v7501 = vsel %vm7500, %v7492, %v7497
        %v7502 = vrsqrt.pop %v7387
        %v7503 = vmul.f32 %v7502, %v7387
        %v7504 = vmul.f32 %v7503, %v7502
        %v7505 = vmul.f32 0.5, %v7504
        %v7506 = vsub.f32 1.5, %v7505
        %v7507 = vmul.f32 %v7502, %v7506
        %vm7508 = vweird.f32 %v7387
        %vm7509 = vweird.f32 %v7502
        %vm7510 = vmor %vm7508, %vm7509
        %v7511 = vsel %vm7510, %v7502, %v7507
        %v7512 = vrsqrt.pop %v7388
        %v7513 = vmul.f32 %v7512, %v7388
        %v7514 = vmul.f32 %v7513, %v7512
        %v7515 = vmul.f32 0.5, %v7514
        %v7516 = vsub.f32 1.5, %v7515
        %v7517 = vmul.f32 %v7512, %v7516
        %vm7518 = vweird.f32 %v7388
        %vm7519 = vweird.f32 %v7512
        %vm7520 = vmor %vm7518, %vm7519
        %v7521 = vsel %vm7520, %v7512, %v7517
        %v7522 = vrsqrt.pop %v7389
        %v7523 = vmul.f32 %v7522, %v7389
        %v7524 = vmul.f32 %v7523, %v7522
        %v7525 = vmul.f32 0.5, %v7524
        %v7526 = vsub.f32 1.5, %v7525
        %v7527 = vmul.f32 %v7522, %v7526
        %vm7528 = vweird.f32 %v7389
        %vm7529 = vweird.f32 %v7522
        %vm7530 = vmor %vm7528, %vm7529
        %v7531 = vsel %vm7530, %v7522, %v7527
        %v7532 = vrsqrt.pop %v7390
        %v7533 = vmul.f32 %v7532, %v7390
        %v7534 = vmul.f32 %v7533, %v7532
        %v7535 = vmul.f32 0.5, %v7534
        %v7536 = vsub.f32 1.5, %v7535
        %v7537 = vmul.f32 %v7532, %v7536
        %vm7538 = vweird.f32 %v7390
        %vm7539 = vweird.f32 %v7532
        %vm7540 = vmor %vm7538, %vm7539
        %v7541 = vsel %vm7540, %v7532, %v7537
        %v7542 = vrsqrt.pop %v7391
        %v7543 = vmul.f32 %v7542, %v7391
        %v7544 = vmul.f32 %v7543, %v7542
        %v7545 = vmul.f32 0.5, %v7544
        %v7546 = vsub.f32 1.5, %v7545
        %v7547 = vmul.f32 %v7542, %v7546
        %vm7548 = vweird.f32 %v7391
        %vm7549 = vweird.f32 %v7542
        %vm7550 = vmor %vm7548, %vm7549
        %v7551 = vsel %vm7550, %v7542, %v7547
        %v7552 = vmul.f32 %v7280, %v7401
        %v7553 = vmul.f32 %v7281, %v7411
        %v7554 = vmul.f32 %v7282, %v7421
        %v7555 = vmul.f32 %v7283, %v7431
        %v7556 = vmul.f32 %v7284, %v7441
        %v7557 = vmul.f32 %v7285, %v7451
        %v7558 = vmul.f32 %v7286, %v7461
        %v7559 = vmul.f32 %v7287, %v7471
        %v7560 = vmul.f32 %v7288, %v7481
        %v7561 = vmul.f32 %v7289, %v7491
        %v7562 = vmul.f32 %v7290, %v7501
        %v7563 = vmul.f32 %v7291, %v7511
        %v7564 = vmul.f32 %v7292, %v7521
        %v7565 = vmul.f32 %v7293, %v7531
        %v7566 = vmul.f32 %v7294, %v7541
        %v7567 = vmul.f32 %v7295, %v7551
        %v7569 = vperm.slane %v7214, 0
        %v7571 = vmul.f32 %v7552, %v7569
        %v7572 = vmul.f32 %v7553, %v7569
        %v7573 = vmul.f32 %v7554, %v7569
        %v7574 = vmul.f32 %v7555, %v7569
        %v7575 = vmul.f32 %v7556, %v7569
        %v7576 = vmul.f32 %v7557, %v7569
        %v7577 = vmul.f32 %v7558, %v7569
        %v7578 = vmul.f32 %v7559, %v7569
        %v7579 = vmul.f32 %v7560, %v7569
        %v7580 = vmul.f32 %v7561, %v7569
        %v7581 = vmul.f32 %v7562, %v7569
        %v7582 = vmul.f32 %v7563, %v7569
        %v7583 = vmul.f32 %v7564, %v7569
        %v7584 = vmul.f32 %v7565, %v7569
        %v7585 = vmul.f32 %v7566, %v7569
        %v7586 = vmul.f32 %v7567, %v7569
        %v7588 = vperm.slane %v7215, 0
        %v7590 = vadd.f32 %v7571, %v7588
        %v7591 = vadd.f32 %v7572, %v7588
        %v7592 = vadd.f32 %v7573, %v7588
        %v7593 = vadd.f32 %v7574, %v7588
        %v7594 = vadd.f32 %v7575, %v7588
        %v7595 = vadd.f32 %v7576, %v7588
        %v7596 = vadd.f32 %v7577, %v7588
        %v7597 = vadd.f32 %v7578, %v7588
        %v7598 = vadd.f32 %v7579, %v7588
        %v7599 = vadd.f32 %v7580, %v7588
        %v7600 = vadd.f32 %v7581, %v7588
        %v7601 = vadd.f32 %v7582, %v7588
        %v7602 = vadd.f32 %v7583, %v7588
        %v7603 = vadd.f32 %v7584, %v7588
        %v7604 = vadd.f32 %v7585, %v7588
        %v7605 = vadd.f32 %v7586, %v7588
        %7606 = vst.msk [vmem:[%s753] sm:$0xff] %vm1036, %v7590
        %7607 = vst.msk [vmem:[%s753 + $0x8] sm:$0xff] %vm1036, %v7591
        %7608 = vst.msk [vmem:[%s753 + $0x10] sm:$0xff] %vm1036, %v7592
        %7609 = vst.msk [vmem:[%s753 + $0x18] sm:$0xff] %vm1036, %v7593
        %7610 = vst.msk [vmem:[%s753 + $0x20] sm:$0xff] %vm1036, %v7594
        %7611 = vst.msk [vmem:[%s753 + $0x28] sm:$0xff] %vm1036, %v7595
        %7612 = vst.msk [vmem:[%s753 + $0x30] sm:$0xff] %vm1036, %v7596
        %7613 = vst.msk [vmem:[%s753 + $0x38] sm:$0xff] %vm1036, %v7597
        %7614 = vst.msk [vmem:[%s753 + $0x40] sm:$0xff] %vm1036, %v7598
        %7615 = vst.msk [vmem:[%s753 + $0x48] sm:$0xff] %vm1036, %v7599
        %7616 = vst.msk [vmem:[%s753 + $0x50] sm:$0xff] %vm1036, %v7600
        %7617 = vst.msk [vmem:[%s753 + $0x58] sm:$0xff] %vm1036, %v7601
        %7618 = vst.msk [vmem:[%s753 + $0x60] sm:$0xff] %vm1036, %v7602
        %7619 = vst.msk [vmem:[%s753 + $0x68] sm:$0xff] %vm1036, %v7603
        %7620 = vst.msk [vmem:[%s753 + $0x70] sm:$0xff] %vm1036, %v7604
        %7621 = vst.msk [vmem:[%s753 + $0x78] sm:$0xff] %vm1036, %v7605
      $region88: #{decoder_layer_forward.1} parent=79 // pred_fallthru
        _
      %s7622 = smul.u32 16, %s32
      %p7623 = scmp.lt.s32.totalorder %s31, 1
      %s7624 = scalar_select %p7623, %s31, 1
      %p7625 = scmp.lt.s32.totalorder %s7622, 15
      %s7626 = scalar_select %p7625, %s7622, 15
      %s7627 = smul.addr %s7624, 16
      %s7628 = sadd.s32 %s7626, %s7627
      %s7629 = smul.addr %s7628, 8
      %s7630 = scalar_lea.vmem %s15, %s7629
      // Predicated region
      $region89: #{decoder_layer_forward.1} parent=79 // pred_check
        %p7631 = pneg %p445
      $region90: #{decoder_layer_forward.1} parent=79 // pred_check_branch
        %7633 = sbr.rel (%p7631) target = $region92
      $region91: #{decoder_layer_forward.1} parent=79 // pred_region
        %s7634 = smul.u32 16, %s32
      $region92: #{decoder_layer_forward.1} parent=79 // pred_fallthru
        _
    $region80: #{decoder_layer_forward.1} parent=5 // pred_fallthru
      _
    %p7635 = scmp.le.s32.totalorder 2, %s21
    // Predicated region
    $region93: #{decoder_layer_forward.1} parent=5 // pred_check
      %p7636 = pneg %p7635
    $region94: #{decoder_layer_forward.1} parent=5 // pred_check_branch
      %7638 = sbr.rel (%p7636) target = $region96
    $region95: #{decoder_layer_forward.1} parent=5 // pred_region
      %s7639 = ssub.s32 %s21, 2
      // Predicated region
      $region97: #{decoder_layer_forward.1} parent=95 // pred_check
        %p7640 = pneg %p451
      $region98: #{decoder_layer_forward.1} parent=95 // pred_check_branch
        %7642 = sbr.rel (%p7640) target = $region100
      $region99: #{decoder_layer_forward.1} parent=95 // pred_region
        %s7643 = smul.u32 16, %s35
        %p7644 = scmp.lt.s32.totalorder %s34, 1
        %s7645 = scalar_select %p7644, %s34, 1
        %p7646 = scmp.lt.s32.totalorder %s7643, 15
        %s7647 = scalar_select %p7646, %s7643, 15
        %s7648 = smul.addr %s7645, 16
        %s7649 = sadd.s32 %s7647, %s7648
        %s7650 = smul.addr %s7649, 8
        %s7651 = scalar_lea.vmem %s15, %s7650
      $region100: #{decoder_layer_forward.1} parent=95 // pred_fallthru
        _
    $region96: #{decoder_layer_forward.1} parent=5 // pred_fallthru
      _
  $region6: #{decoder_layer_forward.1} parent=0 // loop_footer
    %s25 = sadd.s32 1, %s21
  $region7: #{decoder_layer_forward.1} parent=0 // loop_footer_branch
    %20 = sbr.rel target = $region3
  $region8: #{decoder_layer_forward.1} parent=0 // loop_exit
    _

</llo_original>
